<compile_context>
chip_gen: v5e
topology: v5e:2x2
jax: 0.10.0
libtpu: 0.0.40
codegen_flags: <defaults>
</compile_context>

<pallas_src>
import functools

import jax
import jax.numpy as jnp
from jax.experimental import pallas as pl
from jax.experimental.pallas import tpu as pltpu

HIDDEN = (1240, 930, 610, 320)
LANE = 128


def _round_up(n, m):
  return ((n + m - 1) // m) * m


def qnet_kernel(x_ref,
                w1_ref, b1_ref,
                w2_ref, b2_ref,
                w3_ref, b3_ref,
                w4_ref, b4_ref,
                w5_ref, b5_ref,
                o_ref):
  """Fused 5-layer MLP on one batch tile.

  Inputs/weights are bf16, accumulation is f32 (MXU-native), biases are f32.
  """
  def layer(h_bf16, w_ref, b_ref, relu):
    acc = jnp.dot(h_bf16, w_ref[...],
                  preferred_element_type=jnp.float32) + b_ref[...]
    if relu:
      acc = jnp.maximum(acc, 0.0)
    return acc

  h = x_ref[...]                                   # (TB, in_pad) bf16
  h = layer(h, w1_ref, b1_ref, True).astype(jnp.bfloat16)
  h = layer(h, w2_ref, b2_ref, True).astype(jnp.bfloat16)
  h = layer(h, w3_ref, b3_ref, True).astype(jnp.bfloat16)
  h = layer(h, w4_ref, b4_ref, True).astype(jnp.bfloat16)
  out = layer(h, w5_ref, b5_ref, False)            # (TB, out_pad) f32
  o_ref[...] = out.astype(o_ref.dtype)


def init_qnet_params(key, in_dim, out_dim):
  """Init mimicking nn.Linear's U(-1/sqrt(fan_in), 1/sqrt(fan_in)).

  Weights are returned transposed to (in_features, out_features), zero-padded
  to 128-aligned shapes, and cast to bf16.  Biases stay f32, shape (1, F_pad).
  """
  dims = (in_dim,) + HIDDEN + (out_dim,)
  pdims = tuple(_round_up(d, LANE) for d in dims)
  params = []
  for i in range(len(dims) - 1):
    fan_in, fan_out = dims[i], dims[i + 1]
    pin, pout = pdims[i], pdims[i + 1]
    key, kw, kb = jax.random.split(key, 3)
    bound = 1.0 / (float(fan_in) ** 0.5)
    w = jax.random.uniform(kw, (fan_in, fan_out), jnp.float32, -bound, bound)
    b = jax.random.uniform(kb, (1, fan_out), jnp.float32, -bound, bound)
    w_p = jnp.pad(w, ((0, pin - fan_in), (0, pout - fan_out))).astype(jnp.bfloat16)
    b_p = jnp.pad(b, ((0, 0), (0, pout - fan_out)))  # f32
    params.append((w_p, b_p))
  return params


@functools.partial(jax.jit, static_argnames=("out_dim",))
def qnet_forward(x, params, out_dim):
  """x: (B, in_dim) float32 -> (B, out_dim) float32."""
  b, in_dim = x.shape
  in_pad = params[0][0].shape[0]
  out_pad = params[-1][0].shape[1]

  # Batch tiling: TB rows per grid step (lane-/MXU-friendly, "parallel" axis).
  if b <= 128:
    tb = _round_up(max(b, 8), 8)
    b_pad = tb
  else:
    tb = 128
    b_pad = _round_up(b, tb)

  x_p = jnp.pad(x.astype(jnp.bfloat16),
                ((0, b_pad - b), (0, in_pad - in_dim)))

  flat_args = [x_p]
  in_specs = [pl.BlockSpec((tb, in_pad), lambda i: (i, 0))]
  for w, bias in params:
    flat_args.extend([w, bias])
    # Constant block index: weights/biases are loaded once and stay resident.
    in_specs.append(pl.BlockSpec(w.shape, lambda i: (0, 0)))
    in_specs.append(pl.BlockSpec(bias.shape, lambda i: (0, 0)))
  out_spec = pl.BlockSpec((tb, out_pad), lambda i: (i, 0))

  # Advisory cost estimate: DMA-heavy (weight streaming), matmul flops.
  feat = [in_pad] + [w.shape[1] for w, _ in params]
  flops = 2 * b_pad * sum(feat[i] * feat[i + 1] for i in range(len(feat) - 1))
  weight_bytes = sum(w.size * w.dtype.itemsize + bb.size * bb.dtype.itemsize
                     for w, bb in params)
  bytes_accessed = weight_bytes + x_p.size * x_p.dtype.itemsize + b_pad * out_pad * 4
  cost = pl.CostEstimate(flops=flops, transcendentals=0,
                         bytes_accessed=bytes_accessed)

  out = pl.pallas_call(
      qnet_kernel,
      out_shape=jax.ShapeDtypeStruct((b_pad, out_pad), jnp.float32),
      grid_spec=pltpu.PrefetchScalarGridSpec(
          num_scalar_prefetch=0,
          grid=(b_pad // tb,),
          in_specs=in_specs,
          out_specs=out_spec),
      compiler_params=pltpu.CompilerParams(
          dimension_semantics=("parallel",),
          vmem_limit_bytes=32 << 20),
      cost_estimate=cost,
  )(*flat_args)
  return out[:b, :out_dim]


def qnet_reference(x, params, out_dim):
  """Pure-JAX mirror of the kernel math (bf16 operands, f32 accumulation)."""
  in_pad = params[0][0].shape[0]
  b, in_dim = x.shape
  h = jnp.pad(x, ((0, 0), (0, in_pad - in_dim))).astype(jnp.bfloat16)
  for i, (w, bias) in enumerate(params):
    h = jnp.dot(h, w, preferred_element_type=jnp.float32) + bias
    if i < len(params) - 1:
      h = jnp.maximum(h, 0.0).astype(jnp.bfloat16)
  return h[:, :out_dim]


if __name__ == "__main__":
  key = jax.random.PRNGKey(0)
  k_params, k_x = jax.random.split(key)

  batch, in_dim, out_dim = 2, 128, 16
  params = init_qnet_params(k_params, in_dim, out_dim)
  x = jax.random.normal(k_x, (batch, in_dim), jnp.float32)

  y = qnet_forward(x, params, out_dim)
  y = jax.block_until_ready(y)

  y_ref = qnet_reference(x, params, out_dim)
  assert y.shape == (batch, out_dim), y.shape
  assert jnp.allclose(y, y_ref, atol=2e-2, rtol=2e-2), \
      float(jnp.max(jnp.abs(y - y_ref)))

  print("KERNEL_OK")
</pallas_src>

<mosaic_0001>
module attributes {stable_mosaic.version = 11 : i64} {
  func.func @qnet_kernel(%arg0: i32, %arg1: memref<8x128xbf16, #tpu.memory_space<vmem>>, %arg2: memref<128x1280xbf16, #tpu.memory_space<vmem>>, %arg3: memref<1x1280xf32, #tpu.memory_space<vmem>>, %arg4: memref<1280x1024xbf16, #tpu.memory_space<vmem>>, %arg5: memref<1x1024xf32, #tpu.memory_space<vmem>>, %arg6: memref<1024x640xbf16, #tpu.memory_space<vmem>>, %arg7: memref<1x640xf32, #tpu.memory_space<vmem>>, %arg8: memref<640x384xbf16, #tpu.memory_space<vmem>>, %arg9: memref<1x384xf32, #tpu.memory_space<vmem>>, %arg10: memref<384x128xbf16, #tpu.memory_space<vmem>>, %arg11: memref<1x128xf32, #tpu.memory_space<vmem>>, %arg12: memref<8x128xf32, #tpu.memory_space<vmem>>) attributes {dimension_semantics = [#tpu.dimension_semantics<parallel>], iteration_bounds = array<i64: 1>, scalar_prefetch = 0 : i64, scratch_operands = 0 : i64, tpu.core_type = #tpu.core_type<tc>, window_params = [{transform_indices = @transform_0, window_bounds = array<i64: 8, 128>}, {pipeline_mode = #tpu.pipeline_mode<synchronous>, transform_indices = @transform_1, window_bounds = array<i64: 128, 1280>}, {pipeline_mode = #tpu.pipeline_mode<synchronous>, transform_indices = @transform_2, window_bounds = array<i64: 1, 1280>}, {pipeline_mode = #tpu.pipeline_mode<synchronous>, transform_indices = @transform_3, window_bounds = array<i64: 1280, 1024>}, {pipeline_mode = #tpu.pipeline_mode<synchronous>, transform_indices = @transform_4, window_bounds = array<i64: 1, 1024>}, {pipeline_mode = #tpu.pipeline_mode<synchronous>, transform_indices = @transform_5, window_bounds = array<i64: 1024, 640>}, {pipeline_mode = #tpu.pipeline_mode<synchronous>, transform_indices = @transform_6, window_bounds = array<i64: 1, 640>}, {pipeline_mode = #tpu.pipeline_mode<synchronous>, transform_indices = @transform_7, window_bounds = array<i64: 640, 384>}, {pipeline_mode = #tpu.pipeline_mode<synchronous>, transform_indices = @transform_8, window_bounds = array<i64: 1, 384>}, {pipeline_mode = #tpu.pipeline_mode<synchronous>, transform_indices = @transform_9, window_bounds = array<i64: 384, 128>}, {pipeline_mode = #tpu.pipeline_mode<synchronous>, transform_indices = @transform_10, window_bounds = array<i64: 1, 128>}, {transform_indices = @transform_11, window_bounds = array<i64: 8, 128>}]} {
    %c0 = arith.constant 0 : index
    %c0_0 = arith.constant 0 : index
    %0 = vector.load %arg1[%c0, %c0_0] : memref<8x128xbf16, #tpu.memory_space<vmem>>, vector<8x128xbf16>
    %c0_1 = arith.constant 0 : index
    %c0_2 = arith.constant 0 : index
    %1 = vector.load %arg2[%c0_1, %c0_2] : memref<128x1280xbf16, #tpu.memory_space<vmem>>, vector<128x1280xbf16>
    %cst = arith.constant dense<0.000000e+00> : vector<8x1280xf32>
    %2 = tpu.matmul %0, %1, %cst {dimension_numbers = #tpu.dot_dimension_numbers<[1], [0], [0], [1], [0, 0, 1, 1], [], []>} : vector<8x128xbf16>, vector<128x1280xbf16>, vector<8x1280xf32> -> vector<8x1280xf32>
    %c0_3 = arith.constant 0 : index
    %c0_4 = arith.constant 0 : index
    %3 = vector.load %arg3[%c0_3, %c0_4] : memref<1x1280xf32, #tpu.memory_space<vmem>>, vector<1x1280xf32>
    %4 = vector.broadcast %3 : vector<1x1280xf32> to vector<8x1280xf32>
    %5 = arith.addf %2, %4 : vector<8x1280xf32>
    %cst_5 = arith.constant 0.000000e+00 : f32
    %6 = vector.broadcast %cst_5 : f32 to vector<8x1280xf32>
    %7 = arith.maximumf %5, %6 : vector<8x1280xf32>
    %8 = arith.truncf %7 : vector<8x1280xf32> to vector<8x1280xbf16>
    %c0_6 = arith.constant 0 : index
    %c0_7 = arith.constant 0 : index
    %9 = vector.load %arg4[%c0_6, %c0_7] : memref<1280x1024xbf16, #tpu.memory_space<vmem>>, vector<1280x1024xbf16>
    %cst_8 = arith.constant dense<0.000000e+00> : vector<8x1024xf32>
    %10 = tpu.matmul %8, %9, %cst_8 {dimension_numbers = #tpu.dot_dimension_numbers<[1], [0], [0], [1], [0, 0, 1, 1], [], []>} : vector<8x1280xbf16>, vector<1280x1024xbf16>, vector<8x1024xf32> -> vector<8x1024xf32>
    %c0_9 = arith.constant 0 : index
    %c0_10 = arith.constant 0 : index
    %11 = vector.load %arg5[%c0_9, %c0_10] : memref<1x1024xf32, #tpu.memory_space<vmem>>, vector<1x1024xf32>
    %12 = vector.broadcast %11 : vector<1x1024xf32> to vector<8x1024xf32>
    %13 = arith.addf %10, %12 : vector<8x1024xf32>
    %cst_11 = arith.constant 0.000000e+00 : f32
    %14 = vector.broadcast %cst_11 : f32 to vector<8x1024xf32>
    %15 = arith.maximumf %13, %14 : vector<8x1024xf32>
    %16 = arith.truncf %15 : vector<8x1024xf32> to vector<8x1024xbf16>
    %c0_12 = arith.constant 0 : index
    %c0_13 = arith.constant 0 : index
    %17 = vector.load %arg6[%c0_12, %c0_13] : memref<1024x640xbf16, #tpu.memory_space<vmem>>, vector<1024x640xbf16>
    %cst_14 = arith.constant dense<0.000000e+00> : vector<8x640xf32>
    %18 = tpu.matmul %16, %17, %cst_14 {dimension_numbers = #tpu.dot_dimension_numbers<[1], [0], [0], [1], [0, 0, 1, 1], [], []>} : vector<8x1024xbf16>, vector<1024x640xbf16>, vector<8x640xf32> -> vector<8x640xf32>
    %c0_15 = arith.constant 0 : index
    %c0_16 = arith.constant 0 : index
    %19 = vector.load %arg7[%c0_15, %c0_16] : memref<1x640xf32, #tpu.memory_space<vmem>>, vector<1x640xf32>
    %20 = vector.broadcast %19 : vector<1x640xf32> to vector<8x640xf32>
    %21 = arith.addf %18, %20 : vector<8x640xf32>
    %cst_17 = arith.constant 0.000000e+00 : f32
    %22 = vector.broadcast %cst_17 : f32 to vector<8x640xf32>
    %23 = arith.maximumf %21, %22 : vector<8x640xf32>
    %24 = arith.truncf %23 : vector<8x640xf32> to vector<8x640xbf16>
    %c0_18 = arith.constant 0 : index
    %c0_19 = arith.constant 0 : index
    %25 = vector.load %arg8[%c0_18, %c0_19] : memref<640x384xbf16, #tpu.memory_space<vmem>>, vector<640x384xbf16>
    %cst_20 = arith.constant dense<0.000000e+00> : vector<8x384xf32>
    %26 = tpu.matmul %24, %25, %cst_20 {dimension_numbers = #tpu.dot_dimension_numbers<[1], [0], [0], [1], [0, 0, 1, 1], [], []>} : vector<8x640xbf16>, vector<640x384xbf16>, vector<8x384xf32> -> vector<8x384xf32>
    %c0_21 = arith.constant 0 : index
    %c0_22 = arith.constant 0 : index
    %27 = vector.load %arg9[%c0_21, %c0_22] : memref<1x384xf32, #tpu.memory_space<vmem>>, vector<1x384xf32>
    %28 = vector.broadcast %27 : vector<1x384xf32> to vector<8x384xf32>
    %29 = arith.addf %26, %28 : vector<8x384xf32>
    %cst_23 = arith.constant 0.000000e+00 : f32
    %30 = vector.broadcast %cst_23 : f32 to vector<8x384xf32>
    %31 = arith.maximumf %29, %30 : vector<8x384xf32>
    %32 = arith.truncf %31 : vector<8x384xf32> to vector<8x384xbf16>
    %c0_24 = arith.constant 0 : index
    %c0_25 = arith.constant 0 : index
    %33 = vector.load %arg10[%c0_24, %c0_25] : memref<384x128xbf16, #tpu.memory_space<vmem>>, vector<384x128xbf16>
    %cst_26 = arith.constant dense<0.000000e+00> : vector<8x128xf32>
    %34 = tpu.matmul %32, %33, %cst_26 {dimension_numbers = #tpu.dot_dimension_numbers<[1], [0], [0], [1], [0, 0, 1, 1], [], []>} : vector<8x384xbf16>, vector<384x128xbf16>, vector<8x128xf32> -> vector<8x128xf32>
    %c0_27 = arith.constant 0 : index
    %c0_28 = arith.constant 0 : index
    %35 = vector.load %arg11[%c0_27, %c0_28] : memref<1x128xf32, #tpu.memory_space<vmem>>, vector<1x128xf32>
    %36 = vector.broadcast %35 : vector<1x128xf32> to vector<8x128xf32>
    %37 = arith.addf %34, %36 : vector<8x128xf32>
    %c0_29 = arith.constant 0 : index
    %c0_30 = arith.constant 0 : index
    %38 = vector.load %arg12[%c0_29, %c0_30] : memref<8x128xf32, #tpu.memory_space<vmem>>, vector<8x128xf32>
    tpu.vector_store %arg12[%c0_29, %c0_30], %37 {strides = array<i32>} : memref<8x128xf32, #tpu.memory_space<vmem>>, vector<8x128xf32>,
    return
  }
  func.func @transform_0(%arg0: i32) -> (i32, i32) {
    %c0_i32 = arith.constant 0 : i32
    %c0_i32_0 = arith.constant 0 : i32
    return %arg0, %c0_i32 : i32, i32
  }
  func.func @transform_1(%arg0: i32) -> (i32, i32) {
    %c0_i32 = arith.constant 0 : i32
    %c0_i32_0 = arith.constant 0 : i32
    %c0_i32_1 = arith.constant 0 : i32
    return %c0_i32, %c0_i32_0 : i32, i32
  }
  func.func @transform_2(%arg0: i32) -> (i32, i32) {
    %c0_i32 = arith.constant 0 : i32
    %c0_i32_0 = arith.constant 0 : i32
    %c0_i32_1 = arith.constant 0 : i32
    return %c0_i32, %c0_i32_0 : i32, i32
  }
  func.func @transform_3(%arg0: i32) -> (i32, i32) {
    %c0_i32 = arith.constant 0 : i32
    %c0_i32_0 = arith.constant 0 : i32
    %c0_i32_1 = arith.constant 0 : i32
    return %c0_i32, %c0_i32_0 : i32, i32
  }
  func.func @transform_4(%arg0: i32) -> (i32, i32) {
    %c0_i32 = arith.constant 0 : i32
    %c0_i32_0 = arith.constant 0 : i32
    %c0_i32_1 = arith.constant 0 : i32
    return %c0_i32, %c0_i32_0 : i32, i32
  }
  func.func @transform_5(%arg0: i32) -> (i32, i32) {
    %c0_i32 = arith.constant 0 : i32
    %c0_i32_0 = arith.constant 0 : i32
    %c0_i32_1 = arith.constant 0 : i32
    return %c0_i32, %c0_i32_0 : i32, i32
  }
  func.func @transform_6(%arg0: i32) -> (i32, i32) {
    %c0_i32 = arith.constant 0 : i32
    %c0_i32_0 = arith.constant 0 : i32
    %c0_i32_1 = arith.constant 0 : i32
    return %c0_i32, %c0_i32_0 : i32, i32
  }
  func.func @transform_7(%arg0: i32) -> (i32, i32) {
    %c0_i32 = arith.constant 0 : i32
    %c0_i32_0 = arith.constant 0 : i32
    %c0_i32_1 = arith.constant 0 : i32
    return %c0_i32, %c0_i32_0 : i32, i32
  }
  func.func @transform_8(%arg0: i32) -> (i32, i32) {
    %c0_i32 = arith.constant 0 : i32
    %c0_i32_0 = arith.constant 0 : i32
    %c0_i32_1 = arith.constant 0 : i32
    return %c0_i32, %c0_i32_0 : i32, i32
  }
  func.func @transform_9(%arg0: i32) -> (i32, i32) {
    %c0_i32 = arith.constant 0 : i32
    %c0_i32_0 = arith.constant 0 : i32
    %c0_i32_1 = arith.constant 0 : i32
    return %c0_i32, %c0_i32_0 : i32, i32
  }
  func.func @transform_10(%arg0: i32) -> (i32, i32) {
    %c0_i32 = arith.constant 0 : i32
    %c0_i32_0 = arith.constant 0 : i32
    %c0_i32_1 = arith.constant 0 : i32
    return %c0_i32, %c0_i32_0 : i32, i32
  }
  func.func @transform_11(%arg0: i32) -> (i32, i32) {
    %c0_i32 = arith.constant 0 : i32
    %c0_i32_0 = arith.constant 0 : i32
    return %arg0, %c0_i32 : i32, i32
  }
}

</mosaic_0001>

<llo_original>
// kernel: qnet_forward.1
$region0: #{qnet_forward.1}
  #allocation0 [shape = 'u32[]', space=smem, size = 0x4, offset = 0x4, fixed_abs, tag = 'smem constant byte address 0x4 - core index']
  #allocation1 [shape = 'u32[72,128]{1,0:T(1,128)}', space=vmem, size = 0x9000, scoped, tag = 'internal scratch']
  %s0 = inlined_call_operand.vmem [shape: bf16[8,128], index: 0, kind: input, shape index: {}]
  %s1 = inlined_call_operand.hbm [shape: bf16[128,1280], index: 1, kind: input, shape index: {}]
  %s2 = inlined_call_operand.hbm [shape: f32[1,1280], index: 2, kind: input, shape index: {}]
  %s3 = inlined_call_operand.hbm [shape: bf16[1280,1024], index: 3, kind: input, shape index: {}]
  %s4 = inlined_call_operand.hbm [shape: f32[1,1024], index: 4, kind: input, shape index: {}]
  %s5 = inlined_call_operand.hbm [shape: bf16[1024,640], index: 5, kind: input, shape index: {}]
  %s6 = inlined_call_operand.hbm [shape: f32[1,640], index: 6, kind: input, shape index: {}]
  %s7 = inlined_call_operand.hbm [shape: bf16[640,384], index: 7, kind: input, shape index: {}]
  %s8 = inlined_call_operand.hbm [shape: f32[1,384], index: 8, kind: input, shape index: {}]
  %s9 = inlined_call_operand.hbm [shape: bf16[384,128], index: 9, kind: input, shape index: {}]
  %s10 = inlined_call_operand.hbm [shape: f32[1,128], index: 10, kind: input, shape index: {}]
  %s11 = inlined_call_operand.vmem [shape: f32[8,128], index: 11, kind: output, shape index: {}]
  %s12 = sld [smem:[#allocation0]]
  $region94: #{qnet_forward.1} parent=0
    _
  %s14 = ssub.s32 1, %s12
  %s15 = scalar_select 0, %s14, %s12
  $region1: #{qnet_forward.1} parent=0
    #allocation2 [shape = 'u8[327680]{0}', space=vmem, size = 0x50000, scoped, tag = 'input window, operand 1, single buffered']
    #allocation3 [shape = 's32[1]{0}', space=sflag, size = 0x4, scoped, tag = 'scoped memory for qnet_forward.1']
    #allocation4 [shape = 'u8[5120]{0}', space=vmem, size = 0x1400, scoped, tag = 'input window, operand 2, single buffered']
    #allocation5 [shape = 's32[1]{0}', space=sflag, size = 0x4, scoped, tag = 'scoped memory for qnet_forward.1']
    #allocation6 [shape = 'u8[2621440]{0}', space=vmem, size = 0x280000, scoped, tag = 'input window, operand 3, single buffered']
    #allocation7 [shape = 'u8[4096]{0}', space=vmem, size = 0x1000, scoped, tag = 'input window, operand 4, single buffered']
    #allocation8 [shape = 's32[1]{0}', space=sflag, size = 0x4, scoped, tag = 'scoped memory for qnet_forward.1']
    #allocation9 [shape = 'u8[1310720]{0}', space=vmem, size = 0x140000, scoped, tag = 'input window, operand 5, single buffered']
    #allocation10 [shape = 'u8[2560]{0}', space=vmem, size = 0xc00, scoped, tag = 'input window, operand 6, single buffered']
    #allocation11 [shape = 's32[1]{0}', space=sflag, size = 0x4, scoped, tag = 'scoped memory for qnet_forward.1']
    #allocation12 [shape = 'u8[491520]{0}', space=vmem, size = 0x78000, scoped, tag = 'input window, operand 7, single buffered']
    #allocation13 [shape = 'u8[1536]{0}', space=vmem, size = 0x800, scoped, tag = 'input window, operand 8, single buffered']
    #allocation14 [shape = 's32[1]{0}', space=sflag, size = 0x4, scoped, tag = 'scoped memory for qnet_forward.1']
    #allocation15 [shape = 'u8[98304]{0}', space=vmem, size = 0x18000, scoped, tag = 'input window, operand 9, single buffered']
    #allocation16 [shape = 'u8[512]{0}', space=vmem, size = 0x400, scoped, tag = 'input window, operand 10, single buffered']
    #allocation17 [shape = 's32[1]{0}', space=sflag, size = 0x4, scoped, tag = 'scoped memory for qnet_forward.1']
    %16 = vsyncpa [#allocation3], 0
    %17 = vsyncpa [#allocation5], 0
    %18 = vsyncpa [#allocation8], 0
    %19 = vsyncpa [#allocation11], 0
    %20 = vsyncpa [#allocation14], 0
    %21 = vsyncpa [#allocation17], 0
    // Predicated region
    $region2: #{qnet_forward.1} parent=1 // pred_check
      _
    $region3: #{qnet_forward.1} parent=1 // pred_check_branch
      %23 = sbr.rel (0) target = $region5
    $region4: #{qnet_forward.1} parent=1 // pred_region
      _
    $region5: #{qnet_forward.1} parent=1 // pred_fallthru
      _
    // Predicated region
    $region6: #{qnet_forward.1} parent=1 // pred_check
      _
    $region7: #{qnet_forward.1} parent=1 // pred_check_branch
      %25 = sbr.rel (0) target = $region9
    $region8: #{qnet_forward.1} parent=1 // pred_region
      %27 = vsyncadd [#allocation3], 0
      %s28 = sshll.u32 %s1, 4
      %s29 = int_to_ptr.hbm [resolvable:$true] %s28
      %s30 = sshll.u32 [#allocation2], 4
      %s31 = int_to_ptr.vmem [resolvable:$true] %s30
      %36 = dma.hbm_to_vmem [thread:$0]  %s29, 10240, %s31, [#allocation3], 640, 640, 40
    $region9: #{qnet_forward.1} parent=1 // pred_fallthru
      _
    // Predicated region
    $region10: #{qnet_forward.1} parent=1 // pred_check
      _
    $region11: #{qnet_forward.1} parent=1 // pred_check_branch
      %38 = sbr.rel (0) target = $region13
    $region12: #{qnet_forward.1} parent=1 // pred_region
      %40 = vsyncadd [#allocation5], 0
      %s42 = sshll.u32 %s2, 4
      %s43 = int_to_ptr.hbm [resolvable:$true] %s42
      %s44 = sshll.u32 [#allocation4], 4
      %s45 = int_to_ptr.vmem [resolvable:$true] %s44
      %47 = dma.hbm_to_vmem [thread:$0]  %s43, 160, %s45, [#allocation5]
    $region13: #{qnet_forward.1} parent=1 // pred_fallthru
      _
    // Predicated region
    $region14: #{qnet_forward.1} parent=1 // pred_check
      _
    $region15: #{qnet_forward.1} parent=1 // pred_check_branch
      %49 = sbr.rel (0) target = $region17
    $region16: #{qnet_forward.1} parent=1 // pred_region
      %51 = vsyncadd [#allocation5], 0
      %s52 = sshll.u32 %s3, 4
      %s53 = int_to_ptr.hbm [resolvable:$true] %s52
      %s54 = sshll.u32 [#allocation6], 4
      %s55 = int_to_ptr.vmem [resolvable:$true] %s54
      %60 = dma.hbm_to_vmem [thread:$0]  %s53, 81920, %s55, [#allocation5], 512, 512, 32
    $region17: #{qnet_forward.1} parent=1 // pred_fallthru
      _
    // Predicated region
    $region18: #{qnet_forward.1} parent=1 // pred_check
      _
    $region19: #{qnet_forward.1} parent=1 // pred_check_branch
      %62 = sbr.rel (0) target = $region21
    $region20: #{qnet_forward.1} parent=1 // pred_region
      %64 = vsyncadd [#allocation8], 0
      %s66 = sshll.u32 %s4, 4
      %s67 = int_to_ptr.hbm [resolvable:$true] %s66
      %s68 = sshll.u32 [#allocation7], 4
      %s69 = int_to_ptr.vmem [resolvable:$true] %s68
      %71 = dma.hbm_to_vmem [thread:$0]  %s67, 128, %s69, [#allocation8]
    $region21: #{qnet_forward.1} parent=1 // pred_fallthru
      _
    // Predicated region
    $region22: #{qnet_forward.1} parent=1 // pred_check
      _
    $region23: #{qnet_forward.1} parent=1 // pred_check_branch
      %73 = sbr.rel (0) target = $region25
    $region24: #{qnet_forward.1} parent=1 // pred_region
      %75 = vsyncadd [#allocation8], 0
      %s76 = sshll.u32 %s5, 4
      %s77 = int_to_ptr.hbm [resolvable:$true] %s76
      %s78 = sshll.u32 [#allocation9], 4
      %s79 = int_to_ptr.vmem [resolvable:$true] %s78
      %84 = dma.hbm_to_vmem [thread:$0]  %s77, 40960, %s79, [#allocation8], 320, 320, 20
    $region25: #{qnet_forward.1} parent=1 // pred_fallthru
      _
    // Predicated region
    $region26: #{qnet_forward.1} parent=1 // pred_check
      _
    $region27: #{qnet_forward.1} parent=1 // pred_check_branch
      %86 = sbr.rel (0) target = $region29
    $region28: #{qnet_forward.1} parent=1 // pred_region
      %88 = vsyncadd [#allocation11], 0
      %s90 = sshll.u32 %s6, 4
      %s91 = int_to_ptr.hbm [resolvable:$true] %s90
      %s92 = sshll.u32 [#allocation10], 4
      %s93 = int_to_ptr.vmem [resolvable:$true] %s92
      %95 = dma.hbm_to_vmem [thread:$0]  %s91, 80, %s93, [#allocation11]
    $region29: #{qnet_forward.1} parent=1 // pred_fallthru
      _
    // Predicated region
    $region30: #{qnet_forward.1} parent=1 // pred_check
      _
    $region31: #{qnet_forward.1} parent=1 // pred_check_branch
      %97 = sbr.rel (0) target = $region33
    $region32: #{qnet_forward.1} parent=1 // pred_region
      %99 = vsyncadd [#allocation11], 0
      %s100 = sshll.u32 %s7, 4
      %s101 = int_to_ptr.hbm [resolvable:$true] %s100
      %s102 = sshll.u32 [#allocation12], 4
      %s103 = int_to_ptr.vmem [resolvable:$true] %s102
      %108 = dma.hbm_to_vmem [thread:$0]  %s101, 15360, %s103, [#allocation11], 192, 192, 12
    $region33: #{qnet_forward.1} parent=1 // pred_fallthru
      _
    // Predicated region
    $region34: #{qnet_forward.1} parent=1 // pred_check
      _
    $region35: #{qnet_forward.1} parent=1 // pred_check_branch
      %110 = sbr.rel (0) target = $region37
    $region36: #{qnet_forward.1} parent=1 // pred_region
      %112 = vsyncadd [#allocation14], 0
      %s114 = sshll.u32 %s8, 4
      %s115 = int_to_ptr.hbm [resolvable:$true] %s114
      %s116 = sshll.u32 [#allocation13], 4
      %s117 = int_to_ptr.vmem [resolvable:$true] %s116
      %119 = dma.hbm_to_vmem [thread:$0]  %s115, 48, %s117, [#allocation14]
    $region37: #{qnet_forward.1} parent=1 // pred_fallthru
      _
    // Predicated region
    $region38: #{qnet_forward.1} parent=1 // pred_check
      _
    $region39: #{qnet_forward.1} parent=1 // pred_check_branch
      %121 = sbr.rel (0) target = $region41
    $region40: #{qnet_forward.1} parent=1 // pred_region
      %123 = vsyncadd [#allocation14], 0
      %s124 = sshll.u32 %s9, 4
      %s125 = int_to_ptr.hbm [resolvable:$true] %s124
      %s126 = sshll.u32 [#allocation15], 4
      %s127 = int_to_ptr.vmem [resolvable:$true] %s126
      %132 = dma.hbm_to_vmem [thread:$0]  %s125, 3072, %s127, [#allocation14], 64, 64, 4
    $region41: #{qnet_forward.1} parent=1 // pred_fallthru
      _
    // Predicated region
    $region42: #{qnet_forward.1} parent=1 // pred_check
      _
    $region43: #{qnet_forward.1} parent=1 // pred_check_branch
      %134 = sbr.rel (0) target = $region45
    $region44: #{qnet_forward.1} parent=1 // pred_region
      %136 = vsyncadd [#allocation17], 0
      %s138 = sshll.u32 %s10, 4
      %s139 = int_to_ptr.hbm [resolvable:$true] %s138
      %s140 = sshll.u32 [#allocation16], 4
      %s141 = int_to_ptr.vmem [resolvable:$true] %s140
      %143 = dma.hbm_to_vmem [thread:$0]  %s139, 16, %s141, [#allocation17]
    $region45: #{qnet_forward.1} parent=1 // pred_fallthru
      _
    // Predicated region
    $region46: #{qnet_forward.1} parent=1 // pred_check
      _
    $region47: #{qnet_forward.1} parent=1 // pred_check_branch
      %145 = sbr.rel (0) target = $region49
    $region48: #{qnet_forward.1} parent=1 // pred_region
      %147 = dma.done [#allocation3], 10240
    $region49: #{qnet_forward.1} parent=1 // pred_fallthru
      _
    // Predicated region
    $region50: #{qnet_forward.1} parent=1 // pred_check
      _
    $region51: #{qnet_forward.1} parent=1 // pred_check_branch
      %149 = sbr.rel (0) target = $region53
    $region52: #{qnet_forward.1} parent=1 // pred_region
      %151 = dma.done [#allocation5], 160
    $region53: #{qnet_forward.1} parent=1 // pred_fallthru
      _
    // Predicated region
    $region54: #{qnet_forward.1} parent=1 // pred_check
      _
    $region55: #{qnet_forward.1} parent=1 // pred_check_branch
      %153 = sbr.rel (0) target = $region57
    $region56: #{qnet_forward.1} parent=1 // pred_region
      %155 = dma.done [#allocation5], 81920
    $region57: #{qnet_forward.1} parent=1 // pred_fallthru
      _
    // Predicated region
    $region58: #{qnet_forward.1} parent=1 // pred_check
      _
    $region59: #{qnet_forward.1} parent=1 // pred_check_branch
      %157 = sbr.rel (0) target = $region61
    $region60: #{qnet_forward.1} parent=1 // pred_region
      %159 = dma.done [#allocation8], 128
    $region61: #{qnet_forward.1} parent=1 // pred_fallthru
      _
    // Predicated region
    $region62: #{qnet_forward.1} parent=1 // pred_check
      _
    $region63: #{qnet_forward.1} parent=1 // pred_check_branch
      %161 = sbr.rel (0) target = $region65
    $region64: #{qnet_forward.1} parent=1 // pred_region
      %163 = dma.done [#allocation8], 40960
    $region65: #{qnet_forward.1} parent=1 // pred_fallthru
      _
    // Predicated region
    $region66: #{qnet_forward.1} parent=1 // pred_check
      _
    $region67: #{qnet_forward.1} parent=1 // pred_check_branch
      %165 = sbr.rel (0) target = $region69
    $region68: #{qnet_forward.1} parent=1 // pred_region
      %167 = dma.done [#allocation11], 80
    $region69: #{qnet_forward.1} parent=1 // pred_fallthru
      _
    // Predicated region
    $region70: #{qnet_forward.1} parent=1 // pred_check
      _
    $region71: #{qnet_forward.1} parent=1 // pred_check_branch
      %169 = sbr.rel (0) target = $region73
    $region72: #{qnet_forward.1} parent=1 // pred_region
      %171 = dma.done [#allocation11], 15360
    $region73: #{qnet_forward.1} parent=1 // pred_fallthru
      _
    // Predicated region
    $region74: #{qnet_forward.1} parent=1 // pred_check
      _
    $region75: #{qnet_forward.1} parent=1 // pred_check_branch
      %173 = sbr.rel (0) target = $region77
    $region76: #{qnet_forward.1} parent=1 // pred_region
      %175 = dma.done [#allocation14], 48
    $region77: #{qnet_forward.1} parent=1 // pred_fallthru
      _
    // Predicated region
    $region78: #{qnet_forward.1} parent=1 // pred_check
      _
    $region79: #{qnet_forward.1} parent=1 // pred_check_branch
      %177 = sbr.rel (0) target = $region81
    $region80: #{qnet_forward.1} parent=1 // pred_region
      %179 = dma.done [#allocation14], 3072
    $region81: #{qnet_forward.1} parent=1 // pred_fallthru
      _
    // Predicated region
    $region82: #{qnet_forward.1} parent=1 // pred_check
      _
    $region83: #{qnet_forward.1} parent=1 // pred_check_branch
      %181 = sbr.rel (0) target = $region85
    $region84: #{qnet_forward.1} parent=1 // pred_region
      %183 = dma.done [#allocation17], 16
    $region85: #{qnet_forward.1} parent=1 // pred_fallthru
      _
    %v184 = vld [vmem:[%s0] sm:$0xf]
    %v185 = vld [vmem:[#allocation2] sm:$0xff]
    %v186 = vld [vmem:[#allocation2 + $0x8] sm:$0xff]
    %v187 = vld [vmem:[#allocation2 + $0x10] sm:$0xff]
    %v188 = vld [vmem:[#allocation2 + $0x18] sm:$0xff]
    %v189 = vld [vmem:[#allocation2 + $0x20] sm:$0xff]
    %v190 = vld [vmem:[#allocation2 + $0x28] sm:$0xff]
    %v191 = vld [vmem:[#allocation2 + $0x30] sm:$0xff]
    %v192 = vld [vmem:[#allocation2 + $0x38] sm:$0xff]
    %v193 = vld [vmem:[#allocation2 + $0x40] sm:$0xff]
    %v194 = vld [vmem:[#allocation2 + $0x48] sm:$0xff]
    %v195 = vld [vmem:[#allocation2 + $0x50] sm:$0xff]
    %v196 = vld [vmem:[#allocation2 + $0x58] sm:$0xff]
    %v197 = vld [vmem:[#allocation2 + $0x60] sm:$0xff]
    %v198 = vld [vmem:[#allocation2 + $0x68] sm:$0xff]
    %v199 = vld [vmem:[#allocation2 + $0x70] sm:$0xff]
    %v200 = vld [vmem:[#allocation2 + $0x78] sm:$0xff]
    %v201 = vld [vmem:[#allocation2 + $0x80] sm:$0xff]
    %v202 = vld [vmem:[#allocation2 + $0x88] sm:$0xff]
    %v203 = vld [vmem:[#allocation2 + $0x90] sm:$0xff]
    %v204 = vld [vmem:[#allocation2 + $0x98] sm:$0xff]
    %v205 = vld [vmem:[#allocation2 + $0xa0] sm:$0xff]
    %v206 = vld [vmem:[#allocation2 + $0xa8] sm:$0xff]
    %v207 = vld [vmem:[#allocation2 + $0xb0] sm:$0xff]
    %v208 = vld [vmem:[#allocation2 + $0xb8] sm:$0xff]
    %v209 = vld [vmem:[#allocation2 + $0xc0] sm:$0xff]
    %v210 = vld [vmem:[#allocation2 + $0xc8] sm:$0xff]
    %v211 = vld [vmem:[#allocation2 + $0xd0] sm:$0xff]
    %v212 = vld [vmem:[#allocation2 + $0xd8] sm:$0xff]
    %v213 = vld [vmem:[#allocation2 + $0xe0] sm:$0xff]
    %v214 = vld [vmem:[#allocation2 + $0xe8] sm:$0xff]
    %v215 = vld [vmem:[#allocation2 + $0xf0] sm:$0xff]
    %v216 = vld [vmem:[#allocation2 + $0xf8] sm:$0xff]
    %v217 = vld [vmem:[#allocation2 + $0x100] sm:$0xff]
    %v218 = vld [vmem:[#allocation2 + $0x108] sm:$0xff]
    %v219 = vld [vmem:[#allocation2 + $0x110] sm:$0xff]
    %v220 = vld [vmem:[#allocation2 + $0x118] sm:$0xff]
    %v221 = vld [vmem:[#allocation2 + $0x120] sm:$0xff]
    %v222 = vld [vmem:[#allocation2 + $0x128] sm:$0xff]
    %v223 = vld [vmem:[#allocation2 + $0x130] sm:$0xff]
    %v224 = vld [vmem:[#allocation2 + $0x138] sm:$0xff]
    %v225 = vld [vmem:[#allocation2 + $0x140] sm:$0xff]
    %v226 = vld [vmem:[#allocation2 + $0x148] sm:$0xff]
    %v227 = vld [vmem:[#allocation2 + $0x150] sm:$0xff]
    %v228 = vld [vmem:[#allocation2 + $0x158] sm:$0xff]
    %v229 = vld [vmem:[#allocation2 + $0x160] sm:$0xff]
    %v230 = vld [vmem:[#allocation2 + $0x168] sm:$0xff]
    %v231 = vld [vmem:[#allocation2 + $0x170] sm:$0xff]
    %v232 = vld [vmem:[#allocation2 + $0x178] sm:$0xff]
    %v233 = vld [vmem:[#allocation2 + $0x180] sm:$0xff]
    %v234 = vld [vmem:[#allocation2 + $0x188] sm:$0xff]
    %v235 = vld [vmem:[#allocation2 + $0x190] sm:$0xff]
    %v236 = vld [vmem:[#allocation2 + $0x198] sm:$0xff]
    %v237 = vld [vmem:[#allocation2 + $0x1a0] sm:$0xff]
    %v238 = vld [vmem:[#allocation2 + $0x1a8] sm:$0xff]
    %v239 = vld [vmem:[#allocation2 + $0x1b0] sm:$0xff]
    %v240 = vld [vmem:[#allocation2 + $0x1b8] sm:$0xff]
    %v241 = vld [vmem:[#allocation2 + $0x1c0] sm:$0xff]
    %v242 = vld [vmem:[#allocation2 + $0x1c8] sm:$0xff]
    %v243 = vld [vmem:[#allocation2 + $0x1d0] sm:$0xff]
    %v244 = vld [vmem:[#allocation2 + $0x1d8] sm:$0xff]
    %v245 = vld [vmem:[#allocation2 + $0x1e0] sm:$0xff]
    %v246 = vld [vmem:[#allocation2 + $0x1e8] sm:$0xff]
    %v247 = vld [vmem:[#allocation2 + $0x1f0] sm:$0xff]
    %v248 = vld [vmem:[#allocation2 + $0x1f8] sm:$0xff]
    %v249 = vld [vmem:[#allocation2 + $0x200] sm:$0xff]
    %v250 = vld [vmem:[#allocation2 + $0x208] sm:$0xff]
    %v251 = vld [vmem:[#allocation2 + $0x210] sm:$0xff]
    %v252 = vld [vmem:[#allocation2 + $0x218] sm:$0xff]
    %v253 = vld [vmem:[#allocation2 + $0x220] sm:$0xff]
    %v254 = vld [vmem:[#allocation2 + $0x228] sm:$0xff]
    %v255 = vld [vmem:[#allocation2 + $0x230] sm:$0xff]
    %v256 = vld [vmem:[#allocation2 + $0x238] sm:$0xff]
    %v257 = vld [vmem:[#allocation2 + $0x240] sm:$0xff]
    %v258 = vld [vmem:[#allocation2 + $0x248] sm:$0xff]
    %v259 = vld [vmem:[#allocation2 + $0x250] sm:$0xff]
    %v260 = vld [vmem:[#allocation2 + $0x258] sm:$0xff]
    %v261 = vld [vmem:[#allocation2 + $0x260] sm:$0xff]
    %v262 = vld [vmem:[#allocation2 + $0x268] sm:$0xff]
    %v263 = vld [vmem:[#allocation2 + $0x270] sm:$0xff]
    %v264 = vld [vmem:[#allocation2 + $0x278] sm:$0xff]
    %v265 = vld [vmem:[#allocation4] sm:$0xff]
    %v266 = vld [vmem:[#allocation4 + $0x8] sm:$0x3]
    %v269 = vperm.slane %v265, 0
    %v270 = vperm.slane %v265, 1
    %v271 = vperm.slane %v265, 2
    %v272 = vperm.slane %v265, 3
    %v273 = vperm.slane %v265, 4
    %v274 = vperm.slane %v265, 5
    %v275 = vperm.slane %v265, 6
    %v276 = vperm.slane %v265, 7
    %v277 = vperm.slane %v266, 0
    %v278 = vperm.slane %v266, 1
    %v369 = vunpack.c.l.b16 %v185
    %v370 = vunpack.c.h.b16 %v185
    %v371 = vunpack.c.l.b16 %v186
    %v372 = vunpack.c.h.b16 %v186
    %v373 = vunpack.c.l.b16 %v187
    %v374 = vunpack.c.h.b16 %v187
    %v375 = vunpack.c.l.b16 %v188
    %v376 = vunpack.c.h.b16 %v188
    %v377 = vunpack.c.l.b16 %v189
    %v378 = vunpack.c.h.b16 %v189
    %v379 = vunpack.c.l.b16 %v190
    %v380 = vunpack.c.h.b16 %v190
    %v381 = vunpack.c.l.b16 %v191
    %v382 = vunpack.c.h.b16 %v191
    %v383 = vunpack.c.l.b16 %v192
    %v384 = vunpack.c.h.b16 %v192
    %v385 = vunpack.c.l.b16 %v193
    %v386 = vunpack.c.h.b16 %v193
    %v387 = vunpack.c.l.b16 %v194
    %v388 = vunpack.c.h.b16 %v194
    %v389 = vunpack.c.l.b16 %v195
    %v390 = vunpack.c.h.b16 %v195
    %v391 = vunpack.c.l.b16 %v196
    %v392 = vunpack.c.h.b16 %v196
    %v393 = vunpack.c.l.b16 %v197
    %v394 = vunpack.c.h.b16 %v197
    %v395 = vunpack.c.l.b16 %v198
    %v396 = vunpack.c.h.b16 %v198
    %v397 = vunpack.c.l.b16 %v199
    %v398 = vunpack.c.h.b16 %v199
    %v399 = vunpack.c.l.b16 %v200
    %v400 = vunpack.c.h.b16 %v200
    %v401 = vunpack.c.l.b16 %v201
    %v402 = vunpack.c.h.b16 %v201
    %v403 = vunpack.c.l.b16 %v202
    %v404 = vunpack.c.h.b16 %v202
    %v405 = vunpack.c.l.b16 %v203
    %v406 = vunpack.c.h.b16 %v203
    %v407 = vunpack.c.l.b16 %v204
    %v408 = vunpack.c.h.b16 %v204
    %v409 = vunpack.c.l.b16 %v205
    %v410 = vunpack.c.h.b16 %v205
    %v411 = vunpack.c.l.b16 %v206
    %v412 = vunpack.c.h.b16 %v206
    %v413 = vunpack.c.l.b16 %v207
    %v414 = vunpack.c.h.b16 %v207
    %v415 = vunpack.c.l.b16 %v208
    %v416 = vunpack.c.h.b16 %v208
    %v417 = vunpack.c.l.b16 %v209
    %v418 = vunpack.c.h.b16 %v209
    %v419 = vunpack.c.l.b16 %v210
    %v420 = vunpack.c.h.b16 %v210
    %v421 = vunpack.c.l.b16 %v211
    %v422 = vunpack.c.h.b16 %v211
    %v423 = vunpack.c.l.b16 %v212
    %v424 = vunpack.c.h.b16 %v212
    %v425 = vunpack.c.l.b16 %v213
    %v426 = vunpack.c.h.b16 %v213
    %v427 = vunpack.c.l.b16 %v214
    %v428 = vunpack.c.h.b16 %v214
    %v429 = vunpack.c.l.b16 %v215
    %v430 = vunpack.c.h.b16 %v215
    %v431 = vunpack.c.l.b16 %v216
    %v432 = vunpack.c.h.b16 %v216
    %v433 = vunpack.c.l.b16 %v217
    %v434 = vunpack.c.h.b16 %v217
    %v435 = vunpack.c.l.b16 %v218
    %v436 = vunpack.c.h.b16 %v218
    %v437 = vunpack.c.l.b16 %v219
    %v438 = vunpack.c.h.b16 %v219
    %v439 = vunpack.c.l.b16 %v220
    %v440 = vunpack.c.h.b16 %v220
    %v441 = vunpack.c.l.b16 %v221
    %v442 = vunpack.c.h.b16 %v221
    %v443 = vunpack.c.l.b16 %v222
    %v444 = vunpack.c.h.b16 %v222
    %v445 = vunpack.c.l.b16 %v223
    %v446 = vunpack.c.h.b16 %v223
    %v447 = vunpack.c.l.b16 %v224
    %v448 = vunpack.c.h.b16 %v224
    %v449 = vunpack.c.l.b16 %v225
    %v450 = vunpack.c.h.b16 %v225
    %v451 = vunpack.c.l.b16 %v226
    %v452 = vunpack.c.h.b16 %v226
    %v453 = vunpack.c.l.b16 %v227
    %v454 = vunpack.c.h.b16 %v227
    %v455 = vunpack.c.l.b16 %v228
    %v456 = vunpack.c.h.b16 %v228
    %v457 = vunpack.c.l.b16 %v229
    %v458 = vunpack.c.h.b16 %v229
    %v459 = vunpack.c.l.b16 %v230
    %v460 = vunpack.c.h.b16 %v230
    %v461 = vunpack.c.l.b16 %v231
    %v462 = vunpack.c.h.b16 %v231
    %v463 = vunpack.c.l.b16 %v232
    %v464 = vunpack.c.h.b16 %v232
    %v465 = vunpack.c.l.b16 %v233
    %v466 = vunpack.c.h.b16 %v233
    %v467 = vunpack.c.l.b16 %v234
    %v468 = vunpack.c.h.b16 %v234
    %v469 = vunpack.c.l.b16 %v235
    %v470 = vunpack.c.h.b16 %v235
    %v471 = vunpack.c.l.b16 %v236
    %v472 = vunpack.c.h.b16 %v236
    %v473 = vunpack.c.l.b16 %v237
    %v474 = vunpack.c.h.b16 %v237
    %v475 = vunpack.c.l.b16 %v238
    %v476 = vunpack.c.h.b16 %v238
    %v477 = vunpack.c.l.b16 %v239
    %v478 = vunpack.c.h.b16 %v239
    %v479 = vunpack.c.l.b16 %v240
    %v480 = vunpack.c.h.b16 %v240
    %v481 = vunpack.c.l.b16 %v241
    %v482 = vunpack.c.h.b16 %v241
    %v483 = vunpack.c.l.b16 %v242
    %v484 = vunpack.c.h.b16 %v242
    %v485 = vunpack.c.l.b16 %v243
    %v486 = vunpack.c.h.b16 %v243
    %v487 = vunpack.c.l.b16 %v244
    %v488 = vunpack.c.h.b16 %v244
    %v489 = vunpack.c.l.b16 %v245
    %v490 = vunpack.c.h.b16 %v245
    %v491 = vunpack.c.l.b16 %v246
    %v492 = vunpack.c.h.b16 %v246
    %v493 = vunpack.c.l.b16 %v247
    %v494 = vunpack.c.h.b16 %v247
    %v495 = vunpack.c.l.b16 %v248
    %v496 = vunpack.c.h.b16 %v248
    %v497 = vunpack.c.l.b16 %v249
    %v498 = vunpack.c.h.b16 %v249
    %v499 = vunpack.c.l.b16 %v250
    %v500 = vunpack.c.h.b16 %v250
    %v501 = vunpack.c.l.b16 %v251
    %v502 = vunpack.c.h.b16 %v251
    %v503 = vunpack.c.l.b16 %v252
    %v504 = vunpack.c.h.b16 %v252
    %v505 = vunpack.c.l.b16 %v253
    %v506 = vunpack.c.h.b16 %v253
    %v507 = vunpack.c.l.b16 %v254
    %v508 = vunpack.c.h.b16 %v254
    %v509 = vunpack.c.l.b16 %v255
    %v510 = vunpack.c.h.b16 %v255
    %v511 = vunpack.c.l.b16 %v256
    %v512 = vunpack.c.h.b16 %v256
    %v513 = vunpack.c.l.b16 %v257
    %v514 = vunpack.c.h.b16 %v257
    %v515 = vunpack.c.l.b16 %v258
    %v516 = vunpack.c.h.b16 %v258
    %v517 = vunpack.c.l.b16 %v259
    %v518 = vunpack.c.h.b16 %v259
    %v519 = vunpack.c.l.b16 %v260
    %v520 = vunpack.c.h.b16 %v260
    %v521 = vunpack.c.l.b16 %v261
    %v522 = vunpack.c.h.b16 %v261
    %v523 = vunpack.c.l.b16 %v262
    %v524 = vunpack.c.h.b16 %v262
    %v525 = vunpack.c.l.b16 %v263
    %v526 = vunpack.c.h.b16 %v263
    %v527 = vunpack.c.l.b16 %v264
    %v528 = vunpack.c.h.b16 %v264
    %v529 = vpack.c.b16 %v379, %v369
    %v530 = vpack.c.b16 %v380, %v370
    %v531 = vpack.c.b16 %v381, %v371
    %v532 = vpack.c.b16 %v382, %v372
    %v533 = vpack.c.b16 %v383, %v373
    %v534 = vpack.c.b16 %v384, %v374
    %v535 = vpack.c.b16 %v385, %v375
    %v536 = vpack.c.b16 %v386, %v376
    %v537 = vpack.c.b16 %v387, %v377
    %v538 = vpack.c.b16 %v388, %v378
    %v539 = vpack.c.b16 %v399, %v389
    %v540 = vpack.c.b16 %v400, %v390
    %v541 = vpack.c.b16 %v401, %v391
    %v542 = vpack.c.b16 %v402, %v392
    %v543 = vpack.c.b16 %v403, %v393
    %v544 = vpack.c.b16 %v404, %v394
    %v545 = vpack.c.b16 %v405, %v395
    %v546 = vpack.c.b16 %v406, %v396
    %v547 = vpack.c.b16 %v407, %v397
    %v548 = vpack.c.b16 %v408, %v398
    %v549 = vpack.c.b16 %v419, %v409
    %v550 = vpack.c.b16 %v420, %v410
    %v551 = vpack.c.b16 %v421, %v411
    %v552 = vpack.c.b16 %v422, %v412
    %v553 = vpack.c.b16 %v423, %v413
    %v554 = vpack.c.b16 %v424, %v414
    %v555 = vpack.c.b16 %v425, %v415
    %v556 = vpack.c.b16 %v426, %v416
    %v557 = vpack.c.b16 %v427, %v417
    %v558 = vpack.c.b16 %v428, %v418
    %v559 = vpack.c.b16 %v439, %v429
    %v560 = vpack.c.b16 %v440, %v430
    %v561 = vpack.c.b16 %v441, %v431
    %v562 = vpack.c.b16 %v442, %v432
    %v563 = vpack.c.b16 %v443, %v433
    %v564 = vpack.c.b16 %v444, %v434
    %v565 = vpack.c.b16 %v445, %v435
    %v566 = vpack.c.b16 %v446, %v436
    %v567 = vpack.c.b16 %v447, %v437
    %v568 = vpack.c.b16 %v448, %v438
    %v569 = vpack.c.b16 %v459, %v449
    %v570 = vpack.c.b16 %v460, %v450
    %v571 = vpack.c.b16 %v461, %v451
    %v572 = vpack.c.b16 %v462, %v452
    %v573 = vpack.c.b16 %v463, %v453
    %v574 = vpack.c.b16 %v464, %v454
    %v575 = vpack.c.b16 %v465, %v455
    %v576 = vpack.c.b16 %v466, %v456
    %v577 = vpack.c.b16 %v467, %v457
    %v578 = vpack.c.b16 %v468, %v458
    %v579 = vpack.c.b16 %v479, %v469
    %v580 = vpack.c.b16 %v480, %v470
    %v581 = vpack.c.b16 %v481, %v471
    %v582 = vpack.c.b16 %v482, %v472
    %v583 = vpack.c.b16 %v483, %v473
    %v584 = vpack.c.b16 %v484, %v474
    %v585 = vpack.c.b16 %v485, %v475
    %v586 = vpack.c.b16 %v486, %v476
    %v587 = vpack.c.b16 %v487, %v477
    %v588 = vpack.c.b16 %v488, %v478
    %v589 = vpack.c.b16 %v499, %v489
    %v590 = vpack.c.b16 %v500, %v490
    %v591 = vpack.c.b16 %v501, %v491
    %v592 = vpack.c.b16 %v502, %v492
    %v593 = vpack.c.b16 %v503, %v493
    %v594 = vpack.c.b16 %v504, %v494
    %v595 = vpack.c.b16 %v505, %v495
    %v596 = vpack.c.b16 %v506, %v496
    %v597 = vpack.c.b16 %v507, %v497
    %v598 = vpack.c.b16 %v508, %v498
    %v599 = vpack.c.b16 %v519, %v509
    %v600 = vpack.c.b16 %v520, %v510
    %v601 = vpack.c.b16 %v521, %v511
    %v602 = vpack.c.b16 %v522, %v512
    %v603 = vpack.c.b16 %v523, %v513
    %v604 = vpack.c.b16 %v524, %v514
    %v605 = vpack.c.b16 %v525, %v515
    %v606 = vpack.c.b16 %v526, %v516
    %v607 = vpack.c.b16 %v527, %v517
    %v608 = vpack.c.b16 %v528, %v518
    %689 = vmatpush.bf16.msra.mxu0 %v599
    %690 = vmatpush.bf16.msra.mxu0 %v589
    %691 = vmatpush.bf16.msra.mxu0 %v579
    %692 = vmatpush.bf16.msra.mxu0 %v569
    %693 = vmatpush.bf16.msra.mxu0 %v559
    %694 = vmatpush.bf16.msra.mxu0 %v549
    %695 = vmatpush.bf16.msra.mxu0 %v539
    %696 = vmatpush.bf16.msra.mxu0 %v529
    %697 = vmatmul.bf16.gmra.mxu0 %v184
    %v698 = vpop.f32.mrf.mxu0
    %v699 = vadd.f32 %v269, %v698
    %v700 = vpop.f32.mrf.mxu0
    %701 = vdwg.mxu0
    %702 = vmatpush.bf16.msra.mxu0 %v600
    %703 = vmatpush.bf16.msra.mxu0 %v590
    %704 = vmatpush.bf16.msra.mxu0 %v580
    %705 = vmatpush.bf16.msra.mxu0 %v570
    %706 = vmatpush.bf16.msra.mxu0 %v560
    %707 = vmatpush.bf16.msra.mxu0 %v550
    %708 = vmatpush.bf16.msra.mxu0 %v540
    %709 = vmatpush.bf16.msra.mxu0 %v530
    %710 = vmatmul.bf16.gmra.mxu0 %v184
    %v711 = vpop.f32.mrf.mxu0
    %v712 = vadd.f32 %v270, %v711
    %v713 = vpop.f32.mrf.mxu0
    %714 = vdwg.mxu0
    %715 = vmatpush.bf16.msra.mxu0 %v601
    %716 = vmatpush.bf16.msra.mxu0 %v591
    %717 = vmatpush.bf16.msra.mxu0 %v581
    %718 = vmatpush.bf16.msra.mxu0 %v571
    %719 = vmatpush.bf16.msra.mxu0 %v561
    %720 = vmatpush.bf16.msra.mxu0 %v551
    %721 = vmatpush.bf16.msra.mxu0 %v541
    %722 = vmatpush.bf16.msra.mxu0 %v531
    %723 = vmatmul.bf16.gmra.mxu0 %v184
    %v724 = vpop.f32.mrf.mxu0
    %v725 = vadd.f32 %v271, %v724
    %v726 = vpop.f32.mrf.mxu0
    %727 = vdwg.mxu0
    %728 = vmatpush.bf16.msra.mxu0 %v602
    %729 = vmatpush.bf16.msra.mxu0 %v592
    %730 = vmatpush.bf16.msra.mxu0 %v582
    %731 = vmatpush.bf16.msra.mxu0 %v572
    %732 = vmatpush.bf16.msra.mxu0 %v562
    %733 = vmatpush.bf16.msra.mxu0 %v552
    %734 = vmatpush.bf16.msra.mxu0 %v542
    %735 = vmatpush.bf16.msra.mxu0 %v532
    %736 = vmatmul.bf16.gmra.mxu0 %v184
    %v737 = vpop.f32.mrf.mxu0
    %v738 = vadd.f32 %v272, %v737
    %v739 = vpop.f32.mrf.mxu0
    %740 = vdwg.mxu0
    %741 = vmatpush.bf16.msra.mxu0 %v603
    %742 = vmatpush.bf16.msra.mxu0 %v593
    %743 = vmatpush.bf16.msra.mxu0 %v583
    %744 = vmatpush.bf16.msra.mxu0 %v573
    %745 = vmatpush.bf16.msra.mxu0 %v563
    %746 = vmatpush.bf16.msra.mxu0 %v553
    %747 = vmatpush.bf16.msra.mxu0 %v543
    %748 = vmatpush.bf16.msra.mxu0 %v533
    %749 = vmatmul.bf16.gmra.mxu0 %v184
    %v750 = vpop.f32.mrf.mxu0
    %v751 = vadd.f32 %v273, %v750
    %v752 = vpop.f32.mrf.mxu0
    %753 = vdwg.mxu0
    %754 = vmatpush.bf16.msra.mxu0 %v604
    %755 = vmatpush.bf16.msra.mxu0 %v594
    %756 = vmatpush.bf16.msra.mxu0 %v584
    %757 = vmatpush.bf16.msra.mxu0 %v574
    %758 = vmatpush.bf16.msra.mxu0 %v564
    %759 = vmatpush.bf16.msra.mxu0 %v554
    %760 = vmatpush.bf16.msra.mxu0 %v544
    %761 = vmatpush.bf16.msra.mxu0 %v534
    %762 = vmatmul.bf16.gmra.mxu0 %v184
    %v763 = vpop.f32.mrf.mxu0
    %v764 = vadd.f32 %v274, %v763
    %v765 = vpop.f32.mrf.mxu0
    %766 = vdwg.mxu0
    %767 = vmatpush.bf16.msra.mxu0 %v605
    %768 = vmatpush.bf16.msra.mxu0 %v595
    %769 = vmatpush.bf16.msra.mxu0 %v585
    %770 = vmatpush.bf16.msra.mxu0 %v575
    %771 = vmatpush.bf16.msra.mxu0 %v565
    %772 = vmatpush.bf16.msra.mxu0 %v555
    %773 = vmatpush.bf16.msra.mxu0 %v545
    %774 = vmatpush.bf16.msra.mxu0 %v535
    %775 = vmatmul.bf16.gmra.mxu0 %v184
    %v776 = vpop.f32.mrf.mxu0
    %v777 = vadd.f32 %v275, %v776
    %v778 = vpop.f32.mrf.mxu0
    %779 = vdwg.mxu0
    %780 = vmatpush.bf16.msra.mxu0 %v606
    %781 = vmatpush.bf16.msra.mxu0 %v596
    %782 = vmatpush.bf16.msra.mxu0 %v586
    %783 = vmatpush.bf16.msra.mxu0 %v576
    %784 = vmatpush.bf16.msra.mxu0 %v566
    %785 = vmatpush.bf16.msra.mxu0 %v556
    %786 = vmatpush.bf16.msra.mxu0 %v546
    %787 = vmatpush.bf16.msra.mxu0 %v536
    %788 = vmatmul.bf16.gmra.mxu0 %v184
    %v789 = vpop.f32.mrf.mxu0
    %v790 = vadd.f32 %v276, %v789
    %v791 = vpop.f32.mrf.mxu0
    %792 = vdwg.mxu0
    %793 = vmatpush.bf16.msra.mxu0 %v607
    %794 = vmatpush.bf16.msra.mxu0 %v597
    %795 = vmatpush.bf16.msra.mxu0 %v587
    %796 = vmatpush.bf16.msra.mxu0 %v577
    %797 = vmatpush.bf16.msra.mxu0 %v567
    %798 = vmatpush.bf16.msra.mxu0 %v557
    %799 = vmatpush.bf16.msra.mxu0 %v547
    %800 = vmatpush.bf16.msra.mxu0 %v537
    %801 = vmatmul.bf16.gmra.mxu0 %v184
    %v802 = vpop.f32.mrf.mxu0
    %v803 = vadd.f32 %v277, %v802
    %v804 = vpop.f32.mrf.mxu0
    %805 = vdwg.mxu0
    %806 = vmatpush.bf16.msra.mxu0 %v608
    %807 = vmatpush.bf16.msra.mxu0 %v598
    %808 = vmatpush.bf16.msra.mxu0 %v588
    %809 = vmatpush.bf16.msra.mxu0 %v578
    %810 = vmatpush.bf16.msra.mxu0 %v568
    %811 = vmatpush.bf16.msra.mxu0 %v558
    %812 = vmatpush.bf16.msra.mxu0 %v548
    %813 = vmatpush.bf16.msra.mxu0 %v538
    %814 = vmatmul.bf16.gmra.mxu0 %v184
    %v815 = vpop.f32.mrf.mxu0
    %v816 = vadd.f32 %v278, %v815
    %v817 = vpop.f32.mrf.mxu0
    %818 = vdwg.mxu0
    %v819 = vmax.f32 %v699, 0.0
    %v820 = vmax.f32 %v712, 0.0
    %v821 = vmax.f32 %v725, 0.0
    %v822 = vmax.f32 %v738, 0.0
    %v823 = vmax.f32 %v751, 0.0
    %v824 = vmax.f32 %v764, 0.0
    %v825 = vmax.f32 %v777, 0.0
    %v826 = vmax.f32 %v790, 0.0
    %v827 = vmax.f32 %v803, 0.0
    %v828 = vmax.f32 %v816, 0.0
    %v829 = vpack.c.bf16 %v819, %v819
    %v830 = vpack.c.bf16 %v820, %v820
    %v831 = vpack.c.bf16 %v821, %v821
    %v832 = vpack.c.bf16 %v822, %v822
    %v833 = vpack.c.bf16 %v823, %v823
    %v834 = vpack.c.bf16 %v824, %v824
    %v835 = vpack.c.bf16 %v825, %v825
    %v836 = vpack.c.bf16 %v826, %v826
    %v837 = vpack.c.bf16 %v827, %v827
    %v838 = vpack.c.bf16 %v828, %v828
    %v839 = vld [vmem:[#allocation6] sm:$0xff]
    %v840 = vld [vmem:[#allocation6 + $0x8] sm:$0xff]
    %v841 = vld [vmem:[#allocation6 + $0x10] sm:$0xff]
    %v842 = vld [vmem:[#allocation6 + $0x18] sm:$0xff]
    %v843 = vld [vmem:[#allocation6 + $0x20] sm:$0xff]
    %v844 = vld [vmem:[#allocation6 + $0x28] sm:$0xff]
    %v845 = vld [vmem:[#allocation6 + $0x30] sm:$0xff]
    %v846 = vld [vmem:[#allocation6 + $0x38] sm:$0xff]
    %v847 = vld [vmem:[#allocation6 + $0x40] sm:$0xff]
    %v848 = vld [vmem:[#allocation6 + $0x48] sm:$0xff]
    %v849 = vld [vmem:[#allocation6 + $0x50] sm:$0xff]
    %v850 = vld [vmem:[#allocation6 + $0x58] sm:$0xff]
    %v851 = vld [vmem:[#allocation6 + $0x60] sm:$0xff]
    %v852 = vld [vmem:[#allocation6 + $0x68] sm:$0xff]
    %v853 = vld [vmem:[#allocation6 + $0x70] sm:$0xff]
    %v854 = vld [vmem:[#allocation6 + $0x78] sm:$0xff]
    %v855 = vld [vmem:[#allocation6 + $0x80] sm:$0xff]
    %v856 = vld [vmem:[#allocation6 + $0x88] sm:$0xff]
    %v857 = vld [vmem:[#allocation6 + $0x90] sm:$0xff]
    %v858 = vld [vmem:[#allocation6 + $0x98] sm:$0xff]
    %v859 = vld [vmem:[#allocation6 + $0xa0] sm:$0xff]
    %v860 = vld [vmem:[#allocation6 + $0xa8] sm:$0xff]
    %v861 = vld [vmem:[#allocation6 + $0xb0] sm:$0xff]
    %v862 = vld [vmem:[#allocation6 + $0xb8] sm:$0xff]
    %v863 = vld [vmem:[#allocation6 + $0xc0] sm:$0xff]
    %v864 = vld [vmem:[#allocation6 + $0xc8] sm:$0xff]
    %v865 = vld [vmem:[#allocation6 + $0xd0] sm:$0xff]
    %v866 = vld [vmem:[#allocation6 + $0xd8] sm:$0xff]
    %v867 = vld [vmem:[#allocation6 + $0xe0] sm:$0xff]
    %v868 = vld [vmem:[#allocation6 + $0xe8] sm:$0xff]
    %v869 = vld [vmem:[#allocation6 + $0xf0] sm:$0xff]
    %v870 = vld [vmem:[#allocation6 + $0xf8] sm:$0xff]
    %v871 = vld [vmem:[#allocation6 + $0x100] sm:$0xff]
    %v872 = vld [vmem:[#allocation6 + $0x108] sm:$0xff]
    %v873 = vld [vmem:[#allocation6 + $0x110] sm:$0xff]
    %v874 = vld [vmem:[#allocation6 + $0x118] sm:$0xff]
    %v875 = vld [vmem:[#allocation6 + $0x120] sm:$0xff]
    %v876 = vld [vmem:[#allocation6 + $0x128] sm:$0xff]
    %v877 = vld [vmem:[#allocation6 + $0x130] sm:$0xff]
    %v878 = vld [vmem:[#allocation6 + $0x138] sm:$0xff]
    %v879 = vld [vmem:[#allocation6 + $0x140] sm:$0xff]
    %v880 = vld [vmem:[#allocation6 + $0x148] sm:$0xff]
    %v881 = vld [vmem:[#allocation6 + $0x150] sm:$0xff]
    %v882 = vld [vmem:[#allocation6 + $0x158] sm:$0xff]
    %v883 = vld [vmem:[#allocation6 + $0x160] sm:$0xff]
    %v884 = vld [vmem:[#allocation6 + $0x168] sm:$0xff]
    %v885 = vld [vmem:[#allocation6 + $0x170] sm:$0xff]
    %v886 = vld [vmem:[#allocation6 + $0x178] sm:$0xff]
    %v887 = vld [vmem:[#allocation6 + $0x180] sm:$0xff]
    %v888 = vld [vmem:[#allocation6 + $0x188] sm:$0xff]
    %v889 = vld [vmem:[#allocation6 + $0x190] sm:$0xff]
    %v890 = vld [vmem:[#allocation6 + $0x198] sm:$0xff]
    %v891 = vld [vmem:[#allocation6 + $0x1a0] sm:$0xff]
    %v892 = vld [vmem:[#allocation6 + $0x1a8] sm:$0xff]
    %v893 = vld [vmem:[#allocation6 + $0x1b0] sm:$0xff]
    %v894 = vld [vmem:[#allocation6 + $0x1b8] sm:$0xff]
    %v895 = vld [vmem:[#allocation6 + $0x1c0] sm:$0xff]
    %v896 = vld [vmem:[#allocation6 + $0x1c8] sm:$0xff]
    %v897 = vld [vmem:[#allocation6 + $0x1d0] sm:$0xff]
    %v898 = vld [vmem:[#allocation6 + $0x1d8] sm:$0xff]
    %v899 = vld [vmem:[#allocation6 + $0x1e0] sm:$0xff]
    %v900 = vld [vmem:[#allocation6 + $0x1e8] sm:$0xff]
    %v901 = vld [vmem:[#allocation6 + $0x1f0] sm:$0xff]
    %v902 = vld [vmem:[#allocation6 + $0x1f8] sm:$0xff]
    %v903 = vld [vmem:[#allocation6 + $0x200] sm:$0xff]
    %v904 = vld [vmem:[#allocation6 + $0x208] sm:$0xff]
    %v905 = vld [vmem:[#allocation6 + $0x210] sm:$0xff]
    %v906 = vld [vmem:[#allocation6 + $0x218] sm:$0xff]
    %v907 = vld [vmem:[#allocation6 + $0x220] sm:$0xff]
    %v908 = vld [vmem:[#allocation6 + $0x228] sm:$0xff]
    %v909 = vld [vmem:[#allocation6 + $0x230] sm:$0xff]
    %v910 = vld [vmem:[#allocation6 + $0x238] sm:$0xff]
    %v911 = vld [vmem:[#allocation6 + $0x240] sm:$0xff]
    %v912 = vld [vmem:[#allocation6 + $0x248] sm:$0xff]
    %v913 = vld [vmem:[#allocation6 + $0x250] sm:$0xff]
    %v914 = vld [vmem:[#allocation6 + $0x258] sm:$0xff]
    %v915 = vld [vmem:[#allocation6 + $0x260] sm:$0xff]
    %v916 = vld [vmem:[#allocation6 + $0x268] sm:$0xff]
    %v917 = vld [vmem:[#allocation6 + $0x270] sm:$0xff]
    %v918 = vld [vmem:[#allocation6 + $0x278] sm:$0xff]
    %v919 = vld [vmem:[#allocation6 + $0x280] sm:$0xff]
    %v920 = vld [vmem:[#allocation6 + $0x288] sm:$0xff]
    %v921 = vld [vmem:[#allocation6 + $0x290] sm:$0xff]
    %v922 = vld [vmem:[#allocation6 + $0x298] sm:$0xff]
    %v923 = vld [vmem:[#allocation6 + $0x2a0] sm:$0xff]
    %v924 = vld [vmem:[#allocation6 + $0x2a8] sm:$0xff]
    %v925 = vld [vmem:[#allocation6 + $0x2b0] sm:$0xff]
    %v926 = vld [vmem:[#allocation6 + $0x2b8] sm:$0xff]
    %v927 = vld [vmem:[#allocation6 + $0x2c0] sm:$0xff]
    %v928 = vld [vmem:[#allocation6 + $0x2c8] sm:$0xff]
    %v929 = vld [vmem:[#allocation6 + $0x2d0] sm:$0xff]
    %v930 = vld [vmem:[#allocation6 + $0x2d8] sm:$0xff]
    %v931 = vld [vmem:[#allocation6 + $0x2e0] sm:$0xff]
    %v932 = vld [vmem:[#allocation6 + $0x2e8] sm:$0xff]
    %v933 = vld [vmem:[#allocation6 + $0x2f0] sm:$0xff]
    %v934 = vld [vmem:[#allocation6 + $0x2f8] sm:$0xff]
    %v935 = vld [vmem:[#allocation6 + $0x300] sm:$0xff]
    %v936 = vld [vmem:[#allocation6 + $0x308] sm:$0xff]
    %v937 = vld [vmem:[#allocation6 + $0x310] sm:$0xff]
    %v938 = vld [vmem:[#allocation6 + $0x318] sm:$0xff]
    %v939 = vld [vmem:[#allocation6 + $0x320] sm:$0xff]
    %v940 = vld [vmem:[#allocation6 + $0x328] sm:$0xff]
    %v941 = vld [vmem:[#allocation6 + $0x330] sm:$0xff]
    %v942 = vld [vmem:[#allocation6 + $0x338] sm:$0xff]
    %v943 = vld [vmem:[#allocation6 + $0x340] sm:$0xff]
    %v944 = vld [vmem:[#allocation6 + $0x348] sm:$0xff]
    %v945 = vld [vmem:[#allocation6 + $0x350] sm:$0xff]
    %v946 = vld [vmem:[#allocation6 + $0x358] sm:$0xff]
    %v947 = vld [vmem:[#allocation6 + $0x360] sm:$0xff]
    %v948 = vld [vmem:[#allocation6 + $0x368] sm:$0xff]
    %v949 = vld [vmem:[#allocation6 + $0x370] sm:$0xff]
    %v950 = vld [vmem:[#allocation6 + $0x378] sm:$0xff]
    %v951 = vld [vmem:[#allocation6 + $0x380] sm:$0xff]
    %v952 = vld [vmem:[#allocation6 + $0x388] sm:$0xff]
    %v953 = vld [vmem:[#allocation6 + $0x390] sm:$0xff]
    %v954 = vld [vmem:[#allocation6 + $0x398] sm:$0xff]
    %v955 = vld [vmem:[#allocation6 + $0x3a0] sm:$0xff]
    %v956 = vld [vmem:[#allocation6 + $0x3a8] sm:$0xff]
    %v957 = vld [vmem:[#allocation6 + $0x3b0] sm:$0xff]
    %v958 = vld [vmem:[#allocation6 + $0x3b8] sm:$0xff]
    %v959 = vld [vmem:[#allocation6 + $0x3c0] sm:$0xff]
    %v960 = vld [vmem:[#allocation6 + $0x3c8] sm:$0xff]
    %v961 = vld [vmem:[#allocation6 + $0x3d0] sm:$0xff]
    %v962 = vld [vmem:[#allocation6 + $0x3d8] sm:$0xff]
    %v963 = vld [vmem:[#allocation6 + $0x3e0] sm:$0xff]
    %v964 = vld [vmem:[#allocation6 + $0x3e8] sm:$0xff]
    %v965 = vld [vmem:[#allocation6 + $0x3f0] sm:$0xff]
    %v966 = vld [vmem:[#allocation6 + $0x3f8] sm:$0xff]
    %v967 = vld [vmem:[#allocation6 + $0x400] sm:$0xff]
    %v968 = vld [vmem:[#allocation6 + $0x408] sm:$0xff]
    %v969 = vld [vmem:[#allocation6 + $0x410] sm:$0xff]
    %v970 = vld [vmem:[#allocation6 + $0x418] sm:$0xff]
    %v971 = vld [vmem:[#allocation6 + $0x420] sm:$0xff]
    %v972 = vld [vmem:[#allocation6 + $0x428] sm:$0xff]
    %v973 = vld [vmem:[#allocation6 + $0x430] sm:$0xff]
    %v974 = vld [vmem:[#allocation6 + $0x438] sm:$0xff]
    %v975 = vld [vmem:[#allocation6 + $0x440] sm:$0xff]
    %v976 = vld [vmem:[#allocation6 + $0x448] sm:$0xff]
    %v977 = vld [vmem:[#allocation6 + $0x450] sm:$0xff]
    %v978 = vld [vmem:[#allocation6 + $0x458] sm:$0xff]
    %v979 = vld [vmem:[#allocation6 + $0x460] sm:$0xff]
    %v980 = vld [vmem:[#allocation6 + $0x468] sm:$0xff]
    %v981 = vld [vmem:[#allocation6 + $0x470] sm:$0xff]
    %v982 = vld [vmem:[#allocation6 + $0x478] sm:$0xff]
    %v983 = vld [vmem:[#allocation6 + $0x480] sm:$0xff]
    %v984 = vld [vmem:[#allocation6 + $0x488] sm:$0xff]
    %v985 = vld [vmem:[#allocation6 + $0x490] sm:$0xff]
    %v986 = vld [vmem:[#allocation6 + $0x498] sm:$0xff]
    %v987 = vld [vmem:[#allocation6 + $0x4a0] sm:$0xff]
    %v988 = vld [vmem:[#allocation6 + $0x4a8] sm:$0xff]
    %v989 = vld [vmem:[#allocation6 + $0x4b0] sm:$0xff]
    %v990 = vld [vmem:[#allocation6 + $0x4b8] sm:$0xff]
    %v991 = vld [vmem:[#allocation6 + $0x4c0] sm:$0xff]
    %v992 = vld [vmem:[#allocation6 + $0x4c8] sm:$0xff]
    %v993 = vld [vmem:[#allocation6 + $0x4d0] sm:$0xff]
    %v994 = vld [vmem:[#allocation6 + $0x4d8] sm:$0xff]
    %v995 = vld [vmem:[#allocation6 + $0x4e0] sm:$0xff]
    %v996 = vld [vmem:[#allocation6 + $0x4e8] sm:$0xff]
    %v997 = vld [vmem:[#allocation6 + $0x4f0] sm:$0xff]
    %v998 = vld [vmem:[#allocation6 + $0x4f8] sm:$0xff]
    %v999 = vld [vmem:[#allocation6 + $0x500] sm:$0xff]
    %v1000 = vld [vmem:[#allocation6 + $0x508] sm:$0xff]
    %v1001 = vld [vmem:[#allocation6 + $0x510] sm:$0xff]
    %v1002 = vld [vmem:[#allocation6 + $0x518] sm:$0xff]
    %v1003 = vld [vmem:[#allocation6 + $0x520] sm:$0xff]
    %v1004 = vld [vmem:[#allocation6 + $0x528] sm:$0xff]
    %v1005 = vld [vmem:[#allocation6 + $0x530] sm:$0xff]
    %v1006 = vld [vmem:[#allocation6 + $0x538] sm:$0xff]
    %v1007 = vld [vmem:[#allocation6 + $0x540] sm:$0xff]
    %v1008 = vld [vmem:[#allocation6 + $0x548] sm:$0xff]
    %v1009 = vld [vmem:[#allocation6 + $0x550] sm:$0xff]
    %v1010 = vld [vmem:[#allocation6 + $0x558] sm:$0xff]
    %v1011 = vld [vmem:[#allocation6 + $0x560] sm:$0xff]
    %v1012 = vld [vmem:[#allocation6 + $0x568] sm:$0xff]
    %v1013 = vld [vmem:[#allocation6 + $0x570] sm:$0xff]
    %v1014 = vld [vmem:[#allocation6 + $0x578] sm:$0xff]
    %v1015 = vld [vmem:[#allocation6 + $0x580] sm:$0xff]
    %v1016 = vld [vmem:[#allocation6 + $0x588] sm:$0xff]
    %v1017 = vld [vmem:[#allocation6 + $0x590] sm:$0xff]
    %v1018 = vld [vmem:[#allocation6 + $0x598] sm:$0xff]
    %v1019 = vld [vmem:[#allocation6 + $0x5a0] sm:$0xff]
    %v1020 = vld [vmem:[#allocation6 + $0x5a8] sm:$0xff]
    %v1021 = vld [vmem:[#allocation6 + $0x5b0] sm:$0xff]
    %v1022 = vld [vmem:[#allocation6 + $0x5b8] sm:$0xff]
    %v1023 = vld [vmem:[#allocation6 + $0x5c0] sm:$0xff]
    %v1024 = vld [vmem:[#allocation6 + $0x5c8] sm:$0xff]
    %v1025 = vld [vmem:[#allocation6 + $0x5d0] sm:$0xff]
    %v1026 = vld [vmem:[#allocation6 + $0x5d8] sm:$0xff]
    %v1027 = vld [vmem:[#allocation6 + $0x5e0] sm:$0xff]
    %v1028 = vld [vmem:[#allocation6 + $0x5e8] sm:$0xff]
    %v1029 = vld [vmem:[#allocation6 + $0x5f0] sm:$0xff]
    %v1030 = vld [vmem:[#allocation6 + $0x5f8] sm:$0xff]
    %v1031 = vld [vmem:[#allocation6 + $0x600] sm:$0xff]
    %v1032 = vld [vmem:[#allocation6 + $0x608] sm:$0xff]
    %v1033 = vld [vmem:[#allocation6 + $0x610] sm:$0xff]
    %v1034 = vld [vmem:[#allocation6 + $0x618] sm:$0xff]
    %v1035 = vld [vmem:[#allocation6 + $0x620] sm:$0xff]
    %v1036 = vld [vmem:[#allocation6 + $0x628] sm:$0xff]
    %v1037 = vld [vmem:[#allocation6 + $0x630] sm:$0xff]
    %v1038 = vld [vmem:[#allocation6 + $0x638] sm:$0xff]
    %v1039 = vld [vmem:[#allocation6 + $0x640] sm:$0xff]
    %v1040 = vld [vmem:[#allocation6 + $0x648] sm:$0xff]
    %v1041 = vld [vmem:[#allocation6 + $0x650] sm:$0xff]
    %v1042 = vld [vmem:[#allocation6 + $0x658] sm:$0xff]
    %v1043 = vld [vmem:[#allocation6 + $0x660] sm:$0xff]
    %v1044 = vld [vmem:[#allocation6 + $0x668] sm:$0xff]
    %v1045 = vld [vmem:[#allocation6 + $0x670] sm:$0xff]
    %v1046 = vld [vmem:[#allocation6 + $0x678] sm:$0xff]
    %v1047 = vld [vmem:[#allocation6 + $0x680] sm:$0xff]
    %v1048 = vld [vmem:[#allocation6 + $0x688] sm:$0xff]
    %v1049 = vld [vmem:[#allocation6 + $0x690] sm:$0xff]
    %v1050 = vld [vmem:[#allocation6 + $0x698] sm:$0xff]
    %v1051 = vld [vmem:[#allocation6 + $0x6a0] sm:$0xff]
    %v1052 = vld [vmem:[#allocation6 + $0x6a8] sm:$0xff]
    %v1053 = vld [vmem:[#allocation6 + $0x6b0] sm:$0xff]
    %v1054 = vld [vmem:[#allocation6 + $0x6b8] sm:$0xff]
    %v1055 = vld [vmem:[#allocation6 + $0x6c0] sm:$0xff]
    %v1056 = vld [vmem:[#allocation6 + $0x6c8] sm:$0xff]
    %v1057 = vld [vmem:[#allocation6 + $0x6d0] sm:$0xff]
    %v1058 = vld [vmem:[#allocation6 + $0x6d8] sm:$0xff]
    %v1059 = vld [vmem:[#allocation6 + $0x6e0] sm:$0xff]
    %v1060 = vld [vmem:[#allocation6 + $0x6e8] sm:$0xff]
    %v1061 = vld [vmem:[#allocation6 + $0x6f0] sm:$0xff]
    %v1062 = vld [vmem:[#allocation6 + $0x6f8] sm:$0xff]
    %v1063 = vld [vmem:[#allocation6 + $0x700] sm:$0xff]
    %v1064 = vld [vmem:[#allocation6 + $0x708] sm:$0xff]
    %v1065 = vld [vmem:[#allocation6 + $0x710] sm:$0xff]
    %v1066 = vld [vmem:[#allocation6 + $0x718] sm:$0xff]
    %v1067 = vld [vmem:[#allocation6 + $0x720] sm:$0xff]
    %v1068 = vld [vmem:[#allocation6 + $0x728] sm:$0xff]
    %v1069 = vld [vmem:[#allocation6 + $0x730] sm:$0xff]
    %v1070 = vld [vmem:[#allocation6 + $0x738] sm:$0xff]
    %v1071 = vld [vmem:[#allocation6 + $0x740] sm:$0xff]
    %v1072 = vld [vmem:[#allocation6 + $0x748] sm:$0xff]
    %v1073 = vld [vmem:[#allocation6 + $0x750] sm:$0xff]
    %v1074 = vld [vmem:[#allocation6 + $0x758] sm:$0xff]
    %v1075 = vld [vmem:[#allocation6 + $0x760] sm:$0xff]
    %v1076 = vld [vmem:[#allocation6 + $0x768] sm:$0xff]
    %v1077 = vld [vmem:[#allocation6 + $0x770] sm:$0xff]
    %v1078 = vld [vmem:[#allocation6 + $0x778] sm:$0xff]
    %v1079 = vld [vmem:[#allocation6 + $0x780] sm:$0xff]
    %v1080 = vld [vmem:[#allocation6 + $0x788] sm:$0xff]
    %v1081 = vld [vmem:[#allocation6 + $0x790] sm:$0xff]
    %v1082 = vld [vmem:[#allocation6 + $0x798] sm:$0xff]
    %v1083 = vld [vmem:[#allocation6 + $0x7a0] sm:$0xff]
    %v1084 = vld [vmem:[#allocation6 + $0x7a8] sm:$0xff]
    %v1085 = vld [vmem:[#allocation6 + $0x7b0] sm:$0xff]
    %v1086 = vld [vmem:[#allocation6 + $0x7b8] sm:$0xff]
    %v1087 = vld [vmem:[#allocation6 + $0x7c0] sm:$0xff]
    %v1088 = vld [vmem:[#allocation6 + $0x7c8] sm:$0xff]
    %v1089 = vld [vmem:[#allocation6 + $0x7d0] sm:$0xff]
    %v1090 = vld [vmem:[#allocation6 + $0x7d8] sm:$0xff]
    %v1091 = vld [vmem:[#allocation6 + $0x7e0] sm:$0xff]
    %v1092 = vld [vmem:[#allocation6 + $0x7e8] sm:$0xff]
    %v1093 = vld [vmem:[#allocation6 + $0x7f0] sm:$0xff]
    %v1094 = vld [vmem:[#allocation6 + $0x7f8] sm:$0xff]
    %v1095 = vld [vmem:[#allocation6 + $0x800] sm:$0xff]
    %v1096 = vld [vmem:[#allocation6 + $0x808] sm:$0xff]
    %v1097 = vld [vmem:[#allocation6 + $0x810] sm:$0xff]
    %v1098 = vld [vmem:[#allocation6 + $0x818] sm:$0xff]
    %v1099 = vld [vmem:[#allocation6 + $0x820] sm:$0xff]
    %v1100 = vld [vmem:[#allocation6 + $0x828] sm:$0xff]
    %v1101 = vld [vmem:[#allocation6 + $0x830] sm:$0xff]
    %v1102 = vld [vmem:[#allocation6 + $0x838] sm:$0xff]
    %v1103 = vld [vmem:[#allocation6 + $0x840] sm:$0xff]
    %v1104 = vld [vmem:[#allocation6 + $0x848] sm:$0xff]
    %v1105 = vld [vmem:[#allocation6 + $0x850] sm:$0xff]
    %v1106 = vld [vmem:[#allocation6 + $0x858] sm:$0xff]
    %v1107 = vld [vmem:[#allocation6 + $0x860] sm:$0xff]
    %v1108 = vld [vmem:[#allocation6 + $0x868] sm:$0xff]
    %v1109 = vld [vmem:[#allocation6 + $0x870] sm:$0xff]
    %v1110 = vld [vmem:[#allocation6 + $0x878] sm:$0xff]
    %v1111 = vld [vmem:[#allocation6 + $0x880] sm:$0xff]
    %v1112 = vld [vmem:[#allocation6 + $0x888] sm:$0xff]
    %v1113 = vld [vmem:[#allocation6 + $0x890] sm:$0xff]
    %v1114 = vld [vmem:[#allocation6 + $0x898] sm:$0xff]
    %v1115 = vld [vmem:[#allocation6 + $0x8a0] sm:$0xff]
    %v1116 = vld [vmem:[#allocation6 + $0x8a8] sm:$0xff]
    %v1117 = vld [vmem:[#allocation6 + $0x8b0] sm:$0xff]
    %v1118 = vld [vmem:[#allocation6 + $0x8b8] sm:$0xff]
    %v1119 = vld [vmem:[#allocation6 + $0x8c0] sm:$0xff]
    %v1120 = vld [vmem:[#allocation6 + $0x8c8] sm:$0xff]
    %v1121 = vld [vmem:[#allocation6 + $0x8d0] sm:$0xff]
    %v1122 = vld [vmem:[#allocation6 + $0x8d8] sm:$0xff]
    %v1123 = vld [vmem:[#allocation6 + $0x8e0] sm:$0xff]
    %v1124 = vld [vmem:[#allocation6 + $0x8e8] sm:$0xff]
    %v1125 = vld [vmem:[#allocation6 + $0x8f0] sm:$0xff]
    %v1126 = vld [vmem:[#allocation6 + $0x8f8] sm:$0xff]
    %v1127 = vld [vmem:[#allocation6 + $0x900] sm:$0xff]
    %v1128 = vld [vmem:[#allocation6 + $0x908] sm:$0xff]
    %v1129 = vld [vmem:[#allocation6 + $0x910] sm:$0xff]
    %v1130 = vld [vmem:[#allocation6 + $0x918] sm:$0xff]
    %v1131 = vld [vmem:[#allocation6 + $0x920] sm:$0xff]
    %v1132 = vld [vmem:[#allocation6 + $0x928] sm:$0xff]
    %v1133 = vld [vmem:[#allocation6 + $0x930] sm:$0xff]
    %v1134 = vld [vmem:[#allocation6 + $0x938] sm:$0xff]
    %v1135 = vld [vmem:[#allocation6 + $0x940] sm:$0xff]
    %v1136 = vld [vmem:[#allocation6 + $0x948] sm:$0xff]
    %v1137 = vld [vmem:[#allocation6 + $0x950] sm:$0xff]
    %v1138 = vld [vmem:[#allocation6 + $0x958] sm:$0xff]
    %v1139 = vld [vmem:[#allocation6 + $0x960] sm:$0xff]
    %v1140 = vld [vmem:[#allocation6 + $0x968] sm:$0xff]
    %v1141 = vld [vmem:[#allocation6 + $0x970] sm:$0xff]
    %v1142 = vld [vmem:[#allocation6 + $0x978] sm:$0xff]
    %v1143 = vld [vmem:[#allocation6 + $0x980] sm:$0xff]
    %v1144 = vld [vmem:[#allocation6 + $0x988] sm:$0xff]
    %v1145 = vld [vmem:[#allocation6 + $0x990] sm:$0xff]
    %v1146 = vld [vmem:[#allocation6 + $0x998] sm:$0xff]
    %v1147 = vld [vmem:[#allocation6 + $0x9a0] sm:$0xff]
    %v1148 = vld [vmem:[#allocation6 + $0x9a8] sm:$0xff]
    %v1149 = vld [vmem:[#allocation6 + $0x9b0] sm:$0xff]
    %v1150 = vld [vmem:[#allocation6 + $0x9b8] sm:$0xff]
    %v1151 = vld [vmem:[#allocation6 + $0x9c0] sm:$0xff]
    %v1152 = vld [vmem:[#allocation6 + $0x9c8] sm:$0xff]
    %v1153 = vld [vmem:[#allocation6 + $0x9d0] sm:$0xff]
    %v1154 = vld [vmem:[#allocation6 + $0x9d8] sm:$0xff]
    %v1155 = vld [vmem:[#allocation6 + $0x9e0] sm:$0xff]
    %v1156 = vld [vmem:[#allocation6 + $0x9e8] sm:$0xff]
    %v1157 = vld [vmem:[#allocation6 + $0x9f0] sm:$0xff]
    %v1158 = vld [vmem:[#allocation6 + $0x9f8] sm:$0xff]
    %v1159 = vld [vmem:[#allocation6 + $0xa00] sm:$0xff]
    %v1160 = vld [vmem:[#allocation6 + $0xa08] sm:$0xff]
    %v1161 = vld [vmem:[#allocation6 + $0xa10] sm:$0xff]
    %v1162 = vld [vmem:[#allocation6 + $0xa18] sm:$0xff]
    %v1163 = vld [vmem:[#allocation6 + $0xa20] sm:$0xff]
    %v1164 = vld [vmem:[#allocation6 + $0xa28] sm:$0xff]
    %v1165 = vld [vmem:[#allocation6 + $0xa30] sm:$0xff]
    %v1166 = vld [vmem:[#allocation6 + $0xa38] sm:$0xff]
    %v1167 = vld [vmem:[#allocation6 + $0xa40] sm:$0xff]
    %v1168 = vld [vmem:[#allocation6 + $0xa48] sm:$0xff]
    %v1169 = vld [vmem:[#allocation6 + $0xa50] sm:$0xff]
    %v1170 = vld [vmem:[#allocation6 + $0xa58] sm:$0xff]
    %v1171 = vld [vmem:[#allocation6 + $0xa60] sm:$0xff]
    %v1172 = vld [vmem:[#allocation6 + $0xa68] sm:$0xff]
    %v1173 = vld [vmem:[#allocation6 + $0xa70] sm:$0xff]
    %v1174 = vld [vmem:[#allocation6 + $0xa78] sm:$0xff]
    %v1175 = vld [vmem:[#allocation6 + $0xa80] sm:$0xff]
    %v1176 = vld [vmem:[#allocation6 + $0xa88] sm:$0xff]
    %v1177 = vld [vmem:[#allocation6 + $0xa90] sm:$0xff]
    %v1178 = vld [vmem:[#allocation6 + $0xa98] sm:$0xff]
    %v1179 = vld [vmem:[#allocation6 + $0xaa0] sm:$0xff]
    %v1180 = vld [vmem:[#allocation6 + $0xaa8] sm:$0xff]
    %v1181 = vld [vmem:[#allocation6 + $0xab0] sm:$0xff]
    %v1182 = vld [vmem:[#allocation6 + $0xab8] sm:$0xff]
    %v1183 = vld [vmem:[#allocation6 + $0xac0] sm:$0xff]
    %v1184 = vld [vmem:[#allocation6 + $0xac8] sm:$0xff]
    %v1185 = vld [vmem:[#allocation6 + $0xad0] sm:$0xff]
    %v1186 = vld [vmem:[#allocation6 + $0xad8] sm:$0xff]
    %v1187 = vld [vmem:[#allocation6 + $0xae0] sm:$0xff]
    %v1188 = vld [vmem:[#allocation6 + $0xae8] sm:$0xff]
    %v1189 = vld [vmem:[#allocation6 + $0xaf0] sm:$0xff]
    %v1190 = vld [vmem:[#allocation6 + $0xaf8] sm:$0xff]
    %v1191 = vld [vmem:[#allocation6 + $0xb00] sm:$0xff]
    %v1192 = vld [vmem:[#allocation6 + $0xb08] sm:$0xff]
    %v1193 = vld [vmem:[#allocation6 + $0xb10] sm:$0xff]
    %v1194 = vld [vmem:[#allocation6 + $0xb18] sm:$0xff]
    %v1195 = vld [vmem:[#allocation6 + $0xb20] sm:$0xff]
    %v1196 = vld [vmem:[#allocation6 + $0xb28] sm:$0xff]
    %v1197 = vld [vmem:[#allocation6 + $0xb30] sm:$0xff]
    %v1198 = vld [vmem:[#allocation6 + $0xb38] sm:$0xff]
    %v1199 = vld [vmem:[#allocation6 + $0xb40] sm:$0xff]
    %v1200 = vld [vmem:[#allocation6 + $0xb48] sm:$0xff]
    %v1201 = vld [vmem:[#allocation6 + $0xb50] sm:$0xff]
    %v1202 = vld [vmem:[#allocation6 + $0xb58] sm:$0xff]
    %v1203 = vld [vmem:[#allocation6 + $0xb60] sm:$0xff]
    %v1204 = vld [vmem:[#allocation6 + $0xb68] sm:$0xff]
    %v1205 = vld [vmem:[#allocation6 + $0xb70] sm:$0xff]
    %v1206 = vld [vmem:[#allocation6 + $0xb78] sm:$0xff]
    %v1207 = vld [vmem:[#allocation6 + $0xb80] sm:$0xff]
    %v1208 = vld [vmem:[#allocation6 + $0xb88] sm:$0xff]
    %v1209 = vld [vmem:[#allocation6 + $0xb90] sm:$0xff]
    %v1210 = vld [vmem:[#allocation6 + $0xb98] sm:$0xff]
    %v1211 = vld [vmem:[#allocation6 + $0xba0] sm:$0xff]
    %v1212 = vld [vmem:[#allocation6 + $0xba8] sm:$0xff]
    %v1213 = vld [vmem:[#allocation6 + $0xbb0] sm:$0xff]
    %v1214 = vld [vmem:[#allocation6 + $0xbb8] sm:$0xff]
    %v1215 = vld [vmem:[#allocation6 + $0xbc0] sm:$0xff]
    %v1216 = vld [vmem:[#allocation6 + $0xbc8] sm:$0xff]
    %v1217 = vld [vmem:[#allocation6 + $0xbd0] sm:$0xff]
    %v1218 = vld [vmem:[#allocation6 + $0xbd8] sm:$0xff]
    %v1219 = vld [vmem:[#allocation6 + $0xbe0] sm:$0xff]
    %v1220 = vld [vmem:[#allocation6 + $0xbe8] sm:$0xff]
    %v1221 = vld [vmem:[#allocation6 + $0xbf0] sm:$0xff]
    %v1222 = vld [vmem:[#allocation6 + $0xbf8] sm:$0xff]
    %v1223 = vld [vmem:[#allocation6 + $0xc00] sm:$0xff]
    %v1224 = vld [vmem:[#allocation6 + $0xc08] sm:$0xff]
    %v1225 = vld [vmem:[#allocation6 + $0xc10] sm:$0xff]
    %v1226 = vld [vmem:[#allocation6 + $0xc18] sm:$0xff]
    %v1227 = vld [vmem:[#allocation6 + $0xc20] sm:$0xff]
    %v1228 = vld [vmem:[#allocation6 + $0xc28] sm:$0xff]
    %v1229 = vld [vmem:[#allocation6 + $0xc30] sm:$0xff]
    %v1230 = vld [vmem:[#allocation6 + $0xc38] sm:$0xff]
    %v1231 = vld [vmem:[#allocation6 + $0xc40] sm:$0xff]
    %v1232 = vld [vmem:[#allocation6 + $0xc48] sm:$0xff]
    %v1233 = vld [vmem:[#allocation6 + $0xc50] sm:$0xff]
    %v1234 = vld [vmem:[#allocation6 + $0xc58] sm:$0xff]
    %v1235 = vld [vmem:[#allocation6 + $0xc60] sm:$0xff]
    %v1236 = vld [vmem:[#allocation6 + $0xc68] sm:$0xff]
    %v1237 = vld [vmem:[#allocation6 + $0xc70] sm:$0xff]
    %v1238 = vld [vmem:[#allocation6 + $0xc78] sm:$0xff]
    %v1239 = vld [vmem:[#allocation6 + $0xc80] sm:$0xff]
    %v1240 = vld [vmem:[#allocation6 + $0xc88] sm:$0xff]
    %v1241 = vld [vmem:[#allocation6 + $0xc90] sm:$0xff]
    %v1242 = vld [vmem:[#allocation6 + $0xc98] sm:$0xff]
    %v1243 = vld [vmem:[#allocation6 + $0xca0] sm:$0xff]
    %v1244 = vld [vmem:[#allocation6 + $0xca8] sm:$0xff]
    %v1245 = vld [vmem:[#allocation6 + $0xcb0] sm:$0xff]
    %v1246 = vld [vmem:[#allocation6 + $0xcb8] sm:$0xff]
    %v1247 = vld [vmem:[#allocation6 + $0xcc0] sm:$0xff]
    %v1248 = vld [vmem:[#allocation6 + $0xcc8] sm:$0xff]
    %v1249 = vld [vmem:[#allocation6 + $0xcd0] sm:$0xff]
    %v1250 = vld [vmem:[#allocation6 + $0xcd8] sm:$0xff]
    %v1251 = vld [vmem:[#allocation6 + $0xce0] sm:$0xff]
    %v1252 = vld [vmem:[#allocation6 + $0xce8] sm:$0xff]
    %v1253 = vld [vmem:[#allocation6 + $0xcf0] sm:$0xff]
    %v1254 = vld [vmem:[#allocation6 + $0xcf8] sm:$0xff]
    %v1255 = vld [vmem:[#allocation6 + $0xd00] sm:$0xff]
    %v1256 = vld [vmem:[#allocation6 + $0xd08] sm:$0xff]
    %v1257 = vld [vmem:[#allocation6 + $0xd10] sm:$0xff]
    %v1258 = vld [vmem:[#allocation6 + $0xd18] sm:$0xff]
    %v1259 = vld [vmem:[#allocation6 + $0xd20] sm:$0xff]
    %v1260 = vld [vmem:[#allocation6 + $0xd28] sm:$0xff]
    %v1261 = vld [vmem:[#allocation6 + $0xd30] sm:$0xff]
    %v1262 = vld [vmem:[#allocation6 + $0xd38] sm:$0xff]
    %v1263 = vld [vmem:[#allocation6 + $0xd40] sm:$0xff]
    %v1264 = vld [vmem:[#allocation6 + $0xd48] sm:$0xff]
    %v1265 = vld [vmem:[#allocation6 + $0xd50] sm:$0xff]
    %v1266 = vld [vmem:[#allocation6 + $0xd58] sm:$0xff]
    %v1267 = vld [vmem:[#allocation6 + $0xd60] sm:$0xff]
    %v1268 = vld [vmem:[#allocation6 + $0xd68] sm:$0xff]
    %v1269 = vld [vmem:[#allocation6 + $0xd70] sm:$0xff]
    %v1270 = vld [vmem:[#allocation6 + $0xd78] sm:$0xff]
    %v1271 = vld [vmem:[#allocation6 + $0xd80] sm:$0xff]
    %v1272 = vld [vmem:[#allocation6 + $0xd88] sm:$0xff]
    %v1273 = vld [vmem:[#allocation6 + $0xd90] sm:$0xff]
    %v1274 = vld [vmem:[#allocation6 + $0xd98] sm:$0xff]
    %v1275 = vld [vmem:[#allocation6 + $0xda0] sm:$0xff]
    %v1276 = vld [vmem:[#allocation6 + $0xda8] sm:$0xff]
    %v1277 = vld [vmem:[#allocation6 + $0xdb0] sm:$0xff]
    %v1278 = vld [vmem:[#allocation6 + $0xdb8] sm:$0xff]
    %v1279 = vld [vmem:[#allocation6 + $0xdc0] sm:$0xff]
    %v1280 = vld [vmem:[#allocation6 + $0xdc8] sm:$0xff]
    %v1281 = vld [vmem:[#allocation6 + $0xdd0] sm:$0xff]
    %v1282 = vld [vmem:[#allocation6 + $0xdd8] sm:$0xff]
    %v1283 = vld [vmem:[#allocation6 + $0xde0] sm:$0xff]
    %v1284 = vld [vmem:[#allocation6 + $0xde8] sm:$0xff]
    %v1285 = vld [vmem:[#allocation6 + $0xdf0] sm:$0xff]
    %v1286 = vld [vmem:[#allocation6 + $0xdf8] sm:$0xff]
    %v1287 = vld [vmem:[#allocation6 + $0xe00] sm:$0xff]
    %v1288 = vld [vmem:[#allocation6 + $0xe08] sm:$0xff]
    %v1289 = vld [vmem:[#allocation6 + $0xe10] sm:$0xff]
    %v1290 = vld [vmem:[#allocation6 + $0xe18] sm:$0xff]
    %v1291 = vld [vmem:[#allocation6 + $0xe20] sm:$0xff]
    %v1292 = vld [vmem:[#allocation6 + $0xe28] sm:$0xff]
    %v1293 = vld [vmem:[#allocation6 + $0xe30] sm:$0xff]
    %v1294 = vld [vmem:[#allocation6 + $0xe38] sm:$0xff]
    %v1295 = vld [vmem:[#allocation6 + $0xe40] sm:$0xff]
    %v1296 = vld [vmem:[#allocation6 + $0xe48] sm:$0xff]
    %v1297 = vld [vmem:[#allocation6 + $0xe50] sm:$0xff]
    %v1298 = vld [vmem:[#allocation6 + $0xe58] sm:$0xff]
    %v1299 = vld [vmem:[#allocation6 + $0xe60] sm:$0xff]
    %v1300 = vld [vmem:[#allocation6 + $0xe68] sm:$0xff]
    %v1301 = vld [vmem:[#allocation6 + $0xe70] sm:$0xff]
    %v1302 = vld [vmem:[#allocation6 + $0xe78] sm:$0xff]
    %v1303 = vld [vmem:[#allocation6 + $0xe80] sm:$0xff]
    %v1304 = vld [vmem:[#allocation6 + $0xe88] sm:$0xff]
    %v1305 = vld [vmem:[#allocation6 + $0xe90] sm:$0xff]
    %v1306 = vld [vmem:[#allocation6 + $0xe98] sm:$0xff]
    %v1307 = vld [vmem:[#allocation6 + $0xea0] sm:$0xff]
    %v1308 = vld [vmem:[#allocation6 + $0xea8] sm:$0xff]
    %v1309 = vld [vmem:[#allocation6 + $0xeb0] sm:$0xff]
    %v1310 = vld [vmem:[#allocation6 + $0xeb8] sm:$0xff]
    %v1311 = vld [vmem:[#allocation6 + $0xec0] sm:$0xff]
    %v1312 = vld [vmem:[#allocation6 + $0xec8] sm:$0xff]
    %v1313 = vld [vmem:[#allocation6 + $0xed0] sm:$0xff]
    %v1314 = vld [vmem:[#allocation6 + $0xed8] sm:$0xff]
    %v1315 = vld [vmem:[#allocation6 + $0xee0] sm:$0xff]
    %v1316 = vld [vmem:[#allocation6 + $0xee8] sm:$0xff]
    %v1317 = vld [vmem:[#allocation6 + $0xef0] sm:$0xff]
    %v1318 = vld [vmem:[#allocation6 + $0xef8] sm:$0xff]
    %v1319 = vld [vmem:[#allocation6 + $0xf00] sm:$0xff]
    %v1320 = vld [vmem:[#allocation6 + $0xf08] sm:$0xff]
    %v1321 = vld [vmem:[#allocation6 + $0xf10] sm:$0xff]
    %v1322 = vld [vmem:[#allocation6 + $0xf18] sm:$0xff]
    %v1323 = vld [vmem:[#allocation6 + $0xf20] sm:$0xff]
    %v1324 = vld [vmem:[#allocation6 + $0xf28] sm:$0xff]
    %v1325 = vld [vmem:[#allocation6 + $0xf30] sm:$0xff]
    %v1326 = vld [vmem:[#allocation6 + $0xf38] sm:$0xff]
    %v1327 = vld [vmem:[#allocation6 + $0xf40] sm:$0xff]
    %v1328 = vld [vmem:[#allocation6 + $0xf48] sm:$0xff]
    %v1329 = vld [vmem:[#allocation6 + $0xf50] sm:$0xff]
    %v1330 = vld [vmem:[#allocation6 + $0xf58] sm:$0xff]
    %v1331 = vld [vmem:[#allocation6 + $0xf60] sm:$0xff]
    %v1332 = vld [vmem:[#allocation6 + $0xf68] sm:$0xff]
    %v1333 = vld [vmem:[#allocation6 + $0xf70] sm:$0xff]
    %v1334 = vld [vmem:[#allocation6 + $0xf78] sm:$0xff]
    %v1335 = vld [vmem:[#allocation6 + $0xf80] sm:$0xff]
    %v1336 = vld [vmem:[#allocation6 + $0xf88] sm:$0xff]
    %v1337 = vld [vmem:[#allocation6 + $0xf90] sm:$0xff]
    %v1338 = vld [vmem:[#allocation6 + $0xf98] sm:$0xff]
    %v1339 = vld [vmem:[#allocation6 + $0xfa0] sm:$0xff]
    %v1340 = vld [vmem:[#allocation6 + $0xfa8] sm:$0xff]
    %v1341 = vld [vmem:[#allocation6 + $0xfb0] sm:$0xff]
    %v1342 = vld [vmem:[#allocation6 + $0xfb8] sm:$0xff]
    %v1343 = vld [vmem:[#allocation6 + $0xfc0] sm:$0xff]
    %v1344 = vld [vmem:[#allocation6 + $0xfc8] sm:$0xff]
    %v1345 = vld [vmem:[#allocation6 + $0xfd0] sm:$0xff]
    %v1346 = vld [vmem:[#allocation6 + $0xfd8] sm:$0xff]
    %v1347 = vld [vmem:[#allocation6 + $0xfe0] sm:$0xff]
    %v1348 = vld [vmem:[#allocation6 + $0xfe8] sm:$0xff]
    %v1349 = vld [vmem:[#allocation6 + $0xff0] sm:$0xff]
    %v1350 = vld [vmem:[#allocation6 + $0xff8] sm:$0xff]
    %v1351 = vld [vmem:[#allocation6 + $0x1000] sm:$0xff]
    %v1352 = vld [vmem:[#allocation6 + $0x1008] sm:$0xff]
    %v1353 = vld [vmem:[#allocation6 + $0x1010] sm:$0xff]
    %v1354 = vld [vmem:[#allocation6 + $0x1018] sm:$0xff]
    %v1355 = vld [vmem:[#allocation6 + $0x1020] sm:$0xff]
    %v1356 = vld [vmem:[#allocation6 + $0x1028] sm:$0xff]
    %v1357 = vld [vmem:[#allocation6 + $0x1030] sm:$0xff]
    %v1358 = vld [vmem:[#allocation6 + $0x1038] sm:$0xff]
    %v1359 = vld [vmem:[#allocation6 + $0x1040] sm:$0xff]
    %v1360 = vld [vmem:[#allocation6 + $0x1048] sm:$0xff]
    %v1361 = vld [vmem:[#allocation6 + $0x1050] sm:$0xff]
    %v1362 = vld [vmem:[#allocation6 + $0x1058] sm:$0xff]
    %v1363 = vld [vmem:[#allocation6 + $0x1060] sm:$0xff]
    %v1364 = vld [vmem:[#allocation6 + $0x1068] sm:$0xff]
    %v1365 = vld [vmem:[#allocation6 + $0x1070] sm:$0xff]
    %v1366 = vld [vmem:[#allocation6 + $0x1078] sm:$0xff]
    %v1367 = vld [vmem:[#allocation6 + $0x1080] sm:$0xff]
    %v1368 = vld [vmem:[#allocation6 + $0x1088] sm:$0xff]
    %v1369 = vld [vmem:[#allocation6 + $0x1090] sm:$0xff]
    %v1370 = vld [vmem:[#allocation6 + $0x1098] sm:$0xff]
    %v1371 = vld [vmem:[#allocation6 + $0x10a0] sm:$0xff]
    %v1372 = vld [vmem:[#allocation6 + $0x10a8] sm:$0xff]
    %v1373 = vld [vmem:[#allocation6 + $0x10b0] sm:$0xff]
    %v1374 = vld [vmem:[#allocation6 + $0x10b8] sm:$0xff]
    %v1375 = vld [vmem:[#allocation6 + $0x10c0] sm:$0xff]
    %v1376 = vld [vmem:[#allocation6 + $0x10c8] sm:$0xff]
    %v1377 = vld [vmem:[#allocation6 + $0x10d0] sm:$0xff]
    %v1378 = vld [vmem:[#allocation6 + $0x10d8] sm:$0xff]
    %v1379 = vld [vmem:[#allocation6 + $0x10e0] sm:$0xff]
    %v1380 = vld [vmem:[#allocation6 + $0x10e8] sm:$0xff]
    %v1381 = vld [vmem:[#allocation6 + $0x10f0] sm:$0xff]
    %v1382 = vld [vmem:[#allocation6 + $0x10f8] sm:$0xff]
    %v1383 = vld [vmem:[#allocation6 + $0x1100] sm:$0xff]
    %v1384 = vld [vmem:[#allocation6 + $0x1108] sm:$0xff]
    %v1385 = vld [vmem:[#allocation6 + $0x1110] sm:$0xff]
    %v1386 = vld [vmem:[#allocation6 + $0x1118] sm:$0xff]
    %v1387 = vld [vmem:[#allocation6 + $0x1120] sm:$0xff]
    %v1388 = vld [vmem:[#allocation6 + $0x1128] sm:$0xff]
    %v1389 = vld [vmem:[#allocation6 + $0x1130] sm:$0xff]
    %v1390 = vld [vmem:[#allocation6 + $0x1138] sm:$0xff]
    %v1391 = vld [vmem:[#allocation6 + $0x1140] sm:$0xff]
    %v1392 = vld [vmem:[#allocation6 + $0x1148] sm:$0xff]
    %v1393 = vld [vmem:[#allocation6 + $0x1150] sm:$0xff]
    %v1394 = vld [vmem:[#allocation6 + $0x1158] sm:$0xff]
    %v1395 = vld [vmem:[#allocation6 + $0x1160] sm:$0xff]
    %v1396 = vld [vmem:[#allocation6 + $0x1168] sm:$0xff]
    %v1397 = vld [vmem:[#allocation6 + $0x1170] sm:$0xff]
    %v1398 = vld [vmem:[#allocation6 + $0x1178] sm:$0xff]
    %v1399 = vld [vmem:[#allocation6 + $0x1180] sm:$0xff]
    %v1400 = vld [vmem:[#allocation6 + $0x1188] sm:$0xff]
    %v1401 = vld [vmem:[#allocation6 + $0x1190] sm:$0xff]
    %v1402 = vld [vmem:[#allocation6 + $0x1198] sm:$0xff]
    %v1403 = vld [vmem:[#allocation6 + $0x11a0] sm:$0xff]
    %v1404 = vld [vmem:[#allocation6 + $0x11a8] sm:$0xff]
    %v1405 = vld [vmem:[#allocation6 + $0x11b0] sm:$0xff]
    %v1406 = vld [vmem:[#allocation6 + $0x11b8] sm:$0xff]
    %v1407 = vld [vmem:[#allocation6 + $0x11c0] sm:$0xff]
    %v1408 = vld [vmem:[#allocation6 + $0x11c8] sm:$0xff]
    %v1409 = vld [vmem:[#allocation6 + $0x11d0] sm:$0xff]
    %v1410 = vld [vmem:[#allocation6 + $0x11d8] sm:$0xff]
    %v1411 = vld [vmem:[#allocation6 + $0x11e0] sm:$0xff]
    %v1412 = vld [vmem:[#allocation6 + $0x11e8] sm:$0xff]
    %v1413 = vld [vmem:[#allocation6 + $0x11f0] sm:$0xff]
    %v1414 = vld [vmem:[#allocation6 + $0x11f8] sm:$0xff]
    %v1415 = vld [vmem:[#allocation6 + $0x1200] sm:$0xff]
    %v1416 = vld [vmem:[#allocation6 + $0x1208] sm:$0xff]
    %v1417 = vld [vmem:[#allocation6 + $0x1210] sm:$0xff]
    %v1418 = vld [vmem:[#allocation6 + $0x1218] sm:$0xff]
    %v1419 = vld [vmem:[#allocation6 + $0x1220] sm:$0xff]
    %v1420 = vld [vmem:[#allocation6 + $0x1228] sm:$0xff]
    %v1421 = vld [vmem:[#allocation6 + $0x1230] sm:$0xff]
    %v1422 = vld [vmem:[#allocation6 + $0x1238] sm:$0xff]
    %v1423 = vld [vmem:[#allocation6 + $0x1240] sm:$0xff]
    %v1424 = vld [vmem:[#allocation6 + $0x1248] sm:$0xff]
    %v1425 = vld [vmem:[#allocation6 + $0x1250] sm:$0xff]
    %v1426 = vld [vmem:[#allocation6 + $0x1258] sm:$0xff]
    %v1427 = vld [vmem:[#allocation6 + $0x1260] sm:$0xff]
    %v1428 = vld [vmem:[#allocation6 + $0x1268] sm:$0xff]
    %v1429 = vld [vmem:[#allocation6 + $0x1270] sm:$0xff]
    %v1430 = vld [vmem:[#allocation6 + $0x1278] sm:$0xff]
    %v1431 = vld [vmem:[#allocation6 + $0x1280] sm:$0xff]
    %v1432 = vld [vmem:[#allocation6 + $0x1288] sm:$0xff]
    %v1433 = vld [vmem:[#allocation6 + $0x1290] sm:$0xff]
    %v1434 = vld [vmem:[#allocation6 + $0x1298] sm:$0xff]
    %v1435 = vld [vmem:[#allocation6 + $0x12a0] sm:$0xff]
    %v1436 = vld [vmem:[#allocation6 + $0x12a8] sm:$0xff]
    %v1437 = vld [vmem:[#allocation6 + $0x12b0] sm:$0xff]
    %v1438 = vld [vmem:[#allocation6 + $0x12b8] sm:$0xff]
    %v1439 = vld [vmem:[#allocation6 + $0x12c0] sm:$0xff]
    %v1440 = vld [vmem:[#allocation6 + $0x12c8] sm:$0xff]
    %v1441 = vld [vmem:[#allocation6 + $0x12d0] sm:$0xff]
    %v1442 = vld [vmem:[#allocation6 + $0x12d8] sm:$0xff]
    %v1443 = vld [vmem:[#allocation6 + $0x12e0] sm:$0xff]
    %v1444 = vld [vmem:[#allocation6 + $0x12e8] sm:$0xff]
    %v1445 = vld [vmem:[#allocation6 + $0x12f0] sm:$0xff]
    %v1446 = vld [vmem:[#allocation6 + $0x12f8] sm:$0xff]
    %v1447 = vld [vmem:[#allocation6 + $0x1300] sm:$0xff]
    %v1448 = vld [vmem:[#allocation6 + $0x1308] sm:$0xff]
    %v1449 = vld [vmem:[#allocation6 + $0x1310] sm:$0xff]
    %v1450 = vld [vmem:[#allocation6 + $0x1318] sm:$0xff]
    %v1451 = vld [vmem:[#allocation6 + $0x1320] sm:$0xff]
    %v1452 = vld [vmem:[#allocation6 + $0x1328] sm:$0xff]
    %v1453 = vld [vmem:[#allocation6 + $0x1330] sm:$0xff]
    %v1454 = vld [vmem:[#allocation6 + $0x1338] sm:$0xff]
    %v1455 = vld [vmem:[#allocation6 + $0x1340] sm:$0xff]
    %v1456 = vld [vmem:[#allocation6 + $0x1348] sm:$0xff]
    %v1457 = vld [vmem:[#allocation6 + $0x1350] sm:$0xff]
    %v1458 = vld [vmem:[#allocation6 + $0x1358] sm:$0xff]
    %v1459 = vld [vmem:[#allocation6 + $0x1360] sm:$0xff]
    %v1460 = vld [vmem:[#allocation6 + $0x1368] sm:$0xff]
    %v1461 = vld [vmem:[#allocation6 + $0x1370] sm:$0xff]
    %v1462 = vld [vmem:[#allocation6 + $0x1378] sm:$0xff]
    %v1463 = vld [vmem:[#allocation6 + $0x1380] sm:$0xff]
    %v1464 = vld [vmem:[#allocation6 + $0x1388] sm:$0xff]
    %v1465 = vld [vmem:[#allocation6 + $0x1390] sm:$0xff]
    %v1466 = vld [vmem:[#allocation6 + $0x1398] sm:$0xff]
    %v1467 = vld [vmem:[#allocation6 + $0x13a0] sm:$0xff]
    %v1468 = vld [vmem:[#allocation6 + $0x13a8] sm:$0xff]
    %v1469 = vld [vmem:[#allocation6 + $0x13b0] sm:$0xff]
    %v1470 = vld [vmem:[#allocation6 + $0x13b8] sm:$0xff]
    %v1471 = vld [vmem:[#allocation6 + $0x13c0] sm:$0xff]
    %v1472 = vld [vmem:[#allocation6 + $0x13c8] sm:$0xff]
    %v1473 = vld [vmem:[#allocation6 + $0x13d0] sm:$0xff]
    %v1474 = vld [vmem:[#allocation6 + $0x13d8] sm:$0xff]
    %v1475 = vld [vmem:[#allocation6 + $0x13e0] sm:$0xff]
    %v1476 = vld [vmem:[#allocation6 + $0x13e8] sm:$0xff]
    %v1477 = vld [vmem:[#allocation6 + $0x13f0] sm:$0xff]
    %v1478 = vld [vmem:[#allocation6 + $0x13f8] sm:$0xff]
    %v1479 = vld [vmem:[#allocation7] sm:$0xff]
    %v1481 = vperm.slane %v1479, 0
    %v1482 = vperm.slane %v1479, 1
    %v1483 = vperm.slane %v1479, 2
    %v1484 = vperm.slane %v1479, 3
    %v1485 = vperm.slane %v1479, 4
    %v1486 = vperm.slane %v1479, 5
    %v1487 = vperm.slane %v1479, 6
    %v1488 = vperm.slane %v1479, 7
    %v2137 = vunpack.c.l.b16 %v839
    %v2138 = vunpack.c.h.b16 %v839
    %v2139 = vunpack.c.l.b16 %v840
    %v2140 = vunpack.c.h.b16 %v840
    %v2141 = vunpack.c.l.b16 %v841
    %v2142 = vunpack.c.h.b16 %v841
    %v2143 = vunpack.c.l.b16 %v842
    %v2144 = vunpack.c.h.b16 %v842
    %v2145 = vunpack.c.l.b16 %v843
    %v2146 = vunpack.c.h.b16 %v843
    %v2147 = vunpack.c.l.b16 %v844
    %v2148 = vunpack.c.h.b16 %v844
    %v2149 = vunpack.c.l.b16 %v845
    %v2150 = vunpack.c.h.b16 %v845
    %v2151 = vunpack.c.l.b16 %v846
    %v2152 = vunpack.c.h.b16 %v846
    %v2153 = vunpack.c.l.b16 %v847
    %v2154 = vunpack.c.h.b16 %v847
    %v2155 = vunpack.c.l.b16 %v848
    %v2156 = vunpack.c.h.b16 %v848
    %v2157 = vunpack.c.l.b16 %v849
    %v2158 = vunpack.c.h.b16 %v849
    %v2159 = vunpack.c.l.b16 %v850
    %v2160 = vunpack.c.h.b16 %v850
    %v2161 = vunpack.c.l.b16 %v851
    %v2162 = vunpack.c.h.b16 %v851
    %v2163 = vunpack.c.l.b16 %v852
    %v2164 = vunpack.c.h.b16 %v852
    %v2165 = vunpack.c.l.b16 %v853
    %v2166 = vunpack.c.h.b16 %v853
    %v2167 = vunpack.c.l.b16 %v854
    %v2168 = vunpack.c.h.b16 %v854
    %v2169 = vunpack.c.l.b16 %v855
    %v2170 = vunpack.c.h.b16 %v855
    %v2171 = vunpack.c.l.b16 %v856
    %v2172 = vunpack.c.h.b16 %v856
    %v2173 = vunpack.c.l.b16 %v857
    %v2174 = vunpack.c.h.b16 %v857
    %v2175 = vunpack.c.l.b16 %v858
    %v2176 = vunpack.c.h.b16 %v858
    %v2177 = vunpack.c.l.b16 %v859
    %v2178 = vunpack.c.h.b16 %v859
    %v2179 = vunpack.c.l.b16 %v860
    %v2180 = vunpack.c.h.b16 %v860
    %v2181 = vunpack.c.l.b16 %v861
    %v2182 = vunpack.c.h.b16 %v861
    %v2183 = vunpack.c.l.b16 %v862
    %v2184 = vunpack.c.h.b16 %v862
    %v2185 = vunpack.c.l.b16 %v863
    %v2186 = vunpack.c.h.b16 %v863
    %v2187 = vunpack.c.l.b16 %v864
    %v2188 = vunpack.c.h.b16 %v864
    %v2189 = vunpack.c.l.b16 %v865
    %v2190 = vunpack.c.h.b16 %v865
    %v2191 = vunpack.c.l.b16 %v866
    %v2192 = vunpack.c.h.b16 %v866
    %v2193 = vunpack.c.l.b16 %v867
    %v2194 = vunpack.c.h.b16 %v867
    %v2195 = vunpack.c.l.b16 %v868
    %v2196 = vunpack.c.h.b16 %v868
    %v2197 = vunpack.c.l.b16 %v869
    %v2198 = vunpack.c.h.b16 %v869
    %v2199 = vunpack.c.l.b16 %v870
    %v2200 = vunpack.c.h.b16 %v870
    %v2201 = vunpack.c.l.b16 %v871
    %v2202 = vunpack.c.h.b16 %v871
    %v2203 = vunpack.c.l.b16 %v872
    %v2204 = vunpack.c.h.b16 %v872
    %v2205 = vunpack.c.l.b16 %v873
    %v2206 = vunpack.c.h.b16 %v873
    %v2207 = vunpack.c.l.b16 %v874
    %v2208 = vunpack.c.h.b16 %v874
    %v2209 = vunpack.c.l.b16 %v875
    %v2210 = vunpack.c.h.b16 %v875
    %v2211 = vunpack.c.l.b16 %v876
    %v2212 = vunpack.c.h.b16 %v876
    %v2213 = vunpack.c.l.b16 %v877
    %v2214 = vunpack.c.h.b16 %v877
    %v2215 = vunpack.c.l.b16 %v878
    %v2216 = vunpack.c.h.b16 %v878
    %v2217 = vunpack.c.l.b16 %v879
    %v2218 = vunpack.c.h.b16 %v879
    %v2219 = vunpack.c.l.b16 %v880
    %v2220 = vunpack.c.h.b16 %v880
    %v2221 = vunpack.c.l.b16 %v881
    %v2222 = vunpack.c.h.b16 %v881
    %v2223 = vunpack.c.l.b16 %v882
    %v2224 = vunpack.c.h.b16 %v882
    %v2225 = vunpack.c.l.b16 %v883
    %v2226 = vunpack.c.h.b16 %v883
    %v2227 = vunpack.c.l.b16 %v884
    %v2228 = vunpack.c.h.b16 %v884
    %v2229 = vunpack.c.l.b16 %v885
    %v2230 = vunpack.c.h.b16 %v885
    %v2231 = vunpack.c.l.b16 %v886
    %v2232 = vunpack.c.h.b16 %v886
    %v2233 = vunpack.c.l.b16 %v887
    %v2234 = vunpack.c.h.b16 %v887
    %v2235 = vunpack.c.l.b16 %v888
    %v2236 = vunpack.c.h.b16 %v888
    %v2237 = vunpack.c.l.b16 %v889
    %v2238 = vunpack.c.h.b16 %v889
    %v2239 = vunpack.c.l.b16 %v890
    %v2240 = vunpack.c.h.b16 %v890
    %v2241 = vunpack.c.l.b16 %v891
    %v2242 = vunpack.c.h.b16 %v891
    %v2243 = vunpack.c.l.b16 %v892
    %v2244 = vunpack.c.h.b16 %v892
    %v2245 = vunpack.c.l.b16 %v893
    %v2246 = vunpack.c.h.b16 %v893
    %v2247 = vunpack.c.l.b16 %v894
    %v2248 = vunpack.c.h.b16 %v894
    %v2249 = vunpack.c.l.b16 %v895
    %v2250 = vunpack.c.h.b16 %v895
    %v2251 = vunpack.c.l.b16 %v896
    %v2252 = vunpack.c.h.b16 %v896
    %v2253 = vunpack.c.l.b16 %v897
    %v2254 = vunpack.c.h.b16 %v897
    %v2255 = vunpack.c.l.b16 %v898
    %v2256 = vunpack.c.h.b16 %v898
    %v2257 = vunpack.c.l.b16 %v899
    %v2258 = vunpack.c.h.b16 %v899
    %v2259 = vunpack.c.l.b16 %v900
    %v2260 = vunpack.c.h.b16 %v900
    %v2261 = vunpack.c.l.b16 %v901
    %v2262 = vunpack.c.h.b16 %v901
    %v2263 = vunpack.c.l.b16 %v902
    %v2264 = vunpack.c.h.b16 %v902
    %v2265 = vunpack.c.l.b16 %v903
    %v2266 = vunpack.c.h.b16 %v903
    %v2267 = vunpack.c.l.b16 %v904
    %v2268 = vunpack.c.h.b16 %v904
    %v2269 = vunpack.c.l.b16 %v905
    %v2270 = vunpack.c.h.b16 %v905
    %v2271 = vunpack.c.l.b16 %v906
    %v2272 = vunpack.c.h.b16 %v906
    %v2273 = vunpack.c.l.b16 %v907
    %v2274 = vunpack.c.h.b16 %v907
    %v2275 = vunpack.c.l.b16 %v908
    %v2276 = vunpack.c.h.b16 %v908
    %v2277 = vunpack.c.l.b16 %v909
    %v2278 = vunpack.c.h.b16 %v909
    %v2279 = vunpack.c.l.b16 %v910
    %v2280 = vunpack.c.h.b16 %v910
    %v2281 = vunpack.c.l.b16 %v911
    %v2282 = vunpack.c.h.b16 %v911
    %v2283 = vunpack.c.l.b16 %v912
    %v2284 = vunpack.c.h.b16 %v912
    %v2285 = vunpack.c.l.b16 %v913
    %v2286 = vunpack.c.h.b16 %v913
    %v2287 = vunpack.c.l.b16 %v914
    %v2288 = vunpack.c.h.b16 %v914
    %v2289 = vunpack.c.l.b16 %v915
    %v2290 = vunpack.c.h.b16 %v915
    %v2291 = vunpack.c.l.b16 %v916
    %v2292 = vunpack.c.h.b16 %v916
    %v2293 = vunpack.c.l.b16 %v917
    %v2294 = vunpack.c.h.b16 %v917
    %v2295 = vunpack.c.l.b16 %v918
    %v2296 = vunpack.c.h.b16 %v918
    %v2297 = vunpack.c.l.b16 %v919
    %v2298 = vunpack.c.h.b16 %v919
    %v2299 = vunpack.c.l.b16 %v920
    %v2300 = vunpack.c.h.b16 %v920
    %v2301 = vunpack.c.l.b16 %v921
    %v2302 = vunpack.c.h.b16 %v921
    %v2303 = vunpack.c.l.b16 %v922
    %v2304 = vunpack.c.h.b16 %v922
    %v2305 = vunpack.c.l.b16 %v923
    %v2306 = vunpack.c.h.b16 %v923
    %v2307 = vunpack.c.l.b16 %v924
    %v2308 = vunpack.c.h.b16 %v924
    %v2309 = vunpack.c.l.b16 %v925
    %v2310 = vunpack.c.h.b16 %v925
    %v2311 = vunpack.c.l.b16 %v926
    %v2312 = vunpack.c.h.b16 %v926
    %v2313 = vunpack.c.l.b16 %v927
    %v2314 = vunpack.c.h.b16 %v927
    %v2315 = vunpack.c.l.b16 %v928
    %v2316 = vunpack.c.h.b16 %v928
    %v2317 = vunpack.c.l.b16 %v929
    %v2318 = vunpack.c.h.b16 %v929
    %v2319 = vunpack.c.l.b16 %v930
    %v2320 = vunpack.c.h.b16 %v930
    %v2321 = vunpack.c.l.b16 %v931
    %v2322 = vunpack.c.h.b16 %v931
    %v2323 = vunpack.c.l.b16 %v932
    %v2324 = vunpack.c.h.b16 %v932
    %v2325 = vunpack.c.l.b16 %v933
    %v2326 = vunpack.c.h.b16 %v933
    %v2327 = vunpack.c.l.b16 %v934
    %v2328 = vunpack.c.h.b16 %v934
    %v2329 = vunpack.c.l.b16 %v935
    %v2330 = vunpack.c.h.b16 %v935
    %v2331 = vunpack.c.l.b16 %v936
    %v2332 = vunpack.c.h.b16 %v936
    %v2333 = vunpack.c.l.b16 %v937
    %v2334 = vunpack.c.h.b16 %v937
    %v2335 = vunpack.c.l.b16 %v938
    %v2336 = vunpack.c.h.b16 %v938
    %v2337 = vunpack.c.l.b16 %v939
    %v2338 = vunpack.c.h.b16 %v939
    %v2339 = vunpack.c.l.b16 %v940
    %v2340 = vunpack.c.h.b16 %v940
    %v2341 = vunpack.c.l.b16 %v941
    %v2342 = vunpack.c.h.b16 %v941
    %v2343 = vunpack.c.l.b16 %v942
    %v2344 = vunpack.c.h.b16 %v942
    %v2345 = vunpack.c.l.b16 %v943
    %v2346 = vunpack.c.h.b16 %v943
    %v2347 = vunpack.c.l.b16 %v944
    %v2348 = vunpack.c.h.b16 %v944
    %v2349 = vunpack.c.l.b16 %v945
    %v2350 = vunpack.c.h.b16 %v945
    %v2351 = vunpack.c.l.b16 %v946
    %v2352 = vunpack.c.h.b16 %v946
    %v2353 = vunpack.c.l.b16 %v947
    %v2354 = vunpack.c.h.b16 %v947
    %v2355 = vunpack.c.l.b16 %v948
    %v2356 = vunpack.c.h.b16 %v948
    %v2357 = vunpack.c.l.b16 %v949
    %v2358 = vunpack.c.h.b16 %v949
    %v2359 = vunpack.c.l.b16 %v950
    %v2360 = vunpack.c.h.b16 %v950
    %v2361 = vunpack.c.l.b16 %v951
    %v2362 = vunpack.c.h.b16 %v951
    %v2363 = vunpack.c.l.b16 %v952
    %v2364 = vunpack.c.h.b16 %v952
    %v2365 = vunpack.c.l.b16 %v953
    %v2366 = vunpack.c.h.b16 %v953
    %v2367 = vunpack.c.l.b16 %v954
    %v2368 = vunpack.c.h.b16 %v954
    %v2369 = vunpack.c.l.b16 %v955
    %v2370 = vunpack.c.h.b16 %v955
    %v2371 = vunpack.c.l.b16 %v956
    %v2372 = vunpack.c.h.b16 %v956
    %v2373 = vunpack.c.l.b16 %v957
    %v2374 = vunpack.c.h.b16 %v957
    %v2375 = vunpack.c.l.b16 %v958
    %v2376 = vunpack.c.h.b16 %v958
    %v2377 = vunpack.c.l.b16 %v959
    %v2378 = vunpack.c.h.b16 %v959
    %v2379 = vunpack.c.l.b16 %v960
    %v2380 = vunpack.c.h.b16 %v960
    %v2381 = vunpack.c.l.b16 %v961
    %v2382 = vunpack.c.h.b16 %v961
    %v2383 = vunpack.c.l.b16 %v962
    %v2384 = vunpack.c.h.b16 %v962
    %v2385 = vunpack.c.l.b16 %v963
    %v2386 = vunpack.c.h.b16 %v963
    %v2387 = vunpack.c.l.b16 %v964
    %v2388 = vunpack.c.h.b16 %v964
    %v2389 = vunpack.c.l.b16 %v965
    %v2390 = vunpack.c.h.b16 %v965
    %v2391 = vunpack.c.l.b16 %v966
    %v2392 = vunpack.c.h.b16 %v966
    %v2393 = vunpack.c.l.b16 %v967
    %v2394 = vunpack.c.h.b16 %v967
    %v2395 = vunpack.c.l.b16 %v968
    %v2396 = vunpack.c.h.b16 %v968
    %v2397 = vunpack.c.l.b16 %v969
    %v2398 = vunpack.c.h.b16 %v969
    %v2399 = vunpack.c.l.b16 %v970
    %v2400 = vunpack.c.h.b16 %v970
    %v2401 = vunpack.c.l.b16 %v971
    %v2402 = vunpack.c.h.b16 %v971
    %v2403 = vunpack.c.l.b16 %v972
    %v2404 = vunpack.c.h.b16 %v972
    %v2405 = vunpack.c.l.b16 %v973
    %v2406 = vunpack.c.h.b16 %v973
    %v2407 = vunpack.c.l.b16 %v974
    %v2408 = vunpack.c.h.b16 %v974
    %v2409 = vunpack.c.l.b16 %v975
    %v2410 = vunpack.c.h.b16 %v975
    %v2411 = vunpack.c.l.b16 %v976
    %v2412 = vunpack.c.h.b16 %v976
    %v2413 = vunpack.c.l.b16 %v977
    %v2414 = vunpack.c.h.b16 %v977
    %v2415 = vunpack.c.l.b16 %v978
    %v2416 = vunpack.c.h.b16 %v978
    %v2417 = vunpack.c.l.b16 %v979
    %v2418 = vunpack.c.h.b16 %v979
    %v2419 = vunpack.c.l.b16 %v980
    %v2420 = vunpack.c.h.b16 %v980
    %v2421 = vunpack.c.l.b16 %v981
    %v2422 = vunpack.c.h.b16 %v981
    %v2423 = vunpack.c.l.b16 %v982
    %v2424 = vunpack.c.h.b16 %v982
    %v2425 = vunpack.c.l.b16 %v983
    %v2426 = vunpack.c.h.b16 %v983
    %v2427 = vunpack.c.l.b16 %v984
    %v2428 = vunpack.c.h.b16 %v984
    %v2429 = vunpack.c.l.b16 %v985
    %v2430 = vunpack.c.h.b16 %v985
    %v2431 = vunpack.c.l.b16 %v986
    %v2432 = vunpack.c.h.b16 %v986
    %v2433 = vunpack.c.l.b16 %v987
    %v2434 = vunpack.c.h.b16 %v987
    %v2435 = vunpack.c.l.b16 %v988
    %v2436 = vunpack.c.h.b16 %v988
    %v2437 = vunpack.c.l.b16 %v989
    %v2438 = vunpack.c.h.b16 %v989
    %v2439 = vunpack.c.l.b16 %v990
    %v2440 = vunpack.c.h.b16 %v990
    %v2441 = vunpack.c.l.b16 %v991
    %v2442 = vunpack.c.h.b16 %v991
    %v2443 = vunpack.c.l.b16 %v992
    %v2444 = vunpack.c.h.b16 %v992
    %v2445 = vunpack.c.l.b16 %v993
    %v2446 = vunpack.c.h.b16 %v993
    %v2447 = vunpack.c.l.b16 %v994
    %v2448 = vunpack.c.h.b16 %v994
    %v2449 = vunpack.c.l.b16 %v995
    %v2450 = vunpack.c.h.b16 %v995
    %v2451 = vunpack.c.l.b16 %v996
    %v2452 = vunpack.c.h.b16 %v996
    %v2453 = vunpack.c.l.b16 %v997
    %v2454 = vunpack.c.h.b16 %v997
    %v2455 = vunpack.c.l.b16 %v998
    %v2456 = vunpack.c.h.b16 %v998
    %v2457 = vunpack.c.l.b16 %v999
    %v2458 = vunpack.c.h.b16 %v999
    %v2459 = vunpack.c.l.b16 %v1000
    %v2460 = vunpack.c.h.b16 %v1000
    %v2461 = vunpack.c.l.b16 %v1001
    %v2462 = vunpack.c.h.b16 %v1001
    %v2463 = vunpack.c.l.b16 %v1002
    %v2464 = vunpack.c.h.b16 %v1002
    %v2465 = vunpack.c.l.b16 %v1003
    %v2466 = vunpack.c.h.b16 %v1003
    %v2467 = vunpack.c.l.b16 %v1004
    %v2468 = vunpack.c.h.b16 %v1004
    %v2469 = vunpack.c.l.b16 %v1005
    %v2470 = vunpack.c.h.b16 %v1005
    %v2471 = vunpack.c.l.b16 %v1006
    %v2472 = vunpack.c.h.b16 %v1006
    %v2473 = vunpack.c.l.b16 %v1007
    %v2474 = vunpack.c.h.b16 %v1007
    %v2475 = vunpack.c.l.b16 %v1008
    %v2476 = vunpack.c.h.b16 %v1008
    %v2477 = vunpack.c.l.b16 %v1009
    %v2478 = vunpack.c.h.b16 %v1009
    %v2479 = vunpack.c.l.b16 %v1010
    %v2480 = vunpack.c.h.b16 %v1010
    %v2481 = vunpack.c.l.b16 %v1011
    %v2482 = vunpack.c.h.b16 %v1011
    %v2483 = vunpack.c.l.b16 %v1012
    %v2484 = vunpack.c.h.b16 %v1012
    %v2485 = vunpack.c.l.b16 %v1013
    %v2486 = vunpack.c.h.b16 %v1013
    %v2487 = vunpack.c.l.b16 %v1014
    %v2488 = vunpack.c.h.b16 %v1014
    %v2489 = vunpack.c.l.b16 %v1015
    %v2490 = vunpack.c.h.b16 %v1015
    %v2491 = vunpack.c.l.b16 %v1016
    %v2492 = vunpack.c.h.b16 %v1016
    %v2493 = vunpack.c.l.b16 %v1017
    %v2494 = vunpack.c.h.b16 %v1017
    %v2495 = vunpack.c.l.b16 %v1018
    %v2496 = vunpack.c.h.b16 %v1018
    %v2497 = vunpack.c.l.b16 %v1019
    %v2498 = vunpack.c.h.b16 %v1019
    %v2499 = vunpack.c.l.b16 %v1020
    %v2500 = vunpack.c.h.b16 %v1020
    %v2501 = vunpack.c.l.b16 %v1021
    %v2502 = vunpack.c.h.b16 %v1021
    %v2503 = vunpack.c.l.b16 %v1022
    %v2504 = vunpack.c.h.b16 %v1022
    %v2505 = vunpack.c.l.b16 %v1023
    %v2506 = vunpack.c.h.b16 %v1023
    %v2507 = vunpack.c.l.b16 %v1024
    %v2508 = vunpack.c.h.b16 %v1024
    %v2509 = vunpack.c.l.b16 %v1025
    %v2510 = vunpack.c.h.b16 %v1025
    %v2511 = vunpack.c.l.b16 %v1026
    %v2512 = vunpack.c.h.b16 %v1026
    %v2513 = vunpack.c.l.b16 %v1027
    %v2514 = vunpack.c.h.b16 %v1027
    %v2515 = vunpack.c.l.b16 %v1028
    %v2516 = vunpack.c.h.b16 %v1028
    %v2517 = vunpack.c.l.b16 %v1029
    %v2518 = vunpack.c.h.b16 %v1029
    %v2519 = vunpack.c.l.b16 %v1030
    %v2520 = vunpack.c.h.b16 %v1030
    %v2521 = vunpack.c.l.b16 %v1031
    %v2522 = vunpack.c.h.b16 %v1031
    %v2523 = vunpack.c.l.b16 %v1032
    %v2524 = vunpack.c.h.b16 %v1032
    %v2525 = vunpack.c.l.b16 %v1033
    %v2526 = vunpack.c.h.b16 %v1033
    %v2527 = vunpack.c.l.b16 %v1034
    %v2528 = vunpack.c.h.b16 %v1034
    %v2529 = vunpack.c.l.b16 %v1035
    %v2530 = vunpack.c.h.b16 %v1035
    %v2531 = vunpack.c.l.b16 %v1036
    %v2532 = vunpack.c.h.b16 %v1036
    %v2533 = vunpack.c.l.b16 %v1037
    %v2534 = vunpack.c.h.b16 %v1037
    %v2535 = vunpack.c.l.b16 %v1038
    %v2536 = vunpack.c.h.b16 %v1038
    %v2537 = vunpack.c.l.b16 %v1039
    %v2538 = vunpack.c.h.b16 %v1039
    %v2539 = vunpack.c.l.b16 %v1040
    %v2540 = vunpack.c.h.b16 %v1040
    %v2541 = vunpack.c.l.b16 %v1041
    %v2542 = vunpack.c.h.b16 %v1041
    %v2543 = vunpack.c.l.b16 %v1042
    %v2544 = vunpack.c.h.b16 %v1042
    %v2545 = vunpack.c.l.b16 %v1043
    %v2546 = vunpack.c.h.b16 %v1043
    %v2547 = vunpack.c.l.b16 %v1044
    %v2548 = vunpack.c.h.b16 %v1044
    %v2549 = vunpack.c.l.b16 %v1045
    %v2550 = vunpack.c.h.b16 %v1045
    %v2551 = vunpack.c.l.b16 %v1046
    %v2552 = vunpack.c.h.b16 %v1046
    %v2553 = vunpack.c.l.b16 %v1047
    %v2554 = vunpack.c.h.b16 %v1047
    %v2555 = vunpack.c.l.b16 %v1048
    %v2556 = vunpack.c.h.b16 %v1048
    %v2557 = vunpack.c.l.b16 %v1049
    %v2558 = vunpack.c.h.b16 %v1049
    %v2559 = vunpack.c.l.b16 %v1050
    %v2560 = vunpack.c.h.b16 %v1050
    %v2561 = vunpack.c.l.b16 %v1051
    %v2562 = vunpack.c.h.b16 %v1051
    %v2563 = vunpack.c.l.b16 %v1052
    %v2564 = vunpack.c.h.b16 %v1052
    %v2565 = vunpack.c.l.b16 %v1053
    %v2566 = vunpack.c.h.b16 %v1053
    %v2567 = vunpack.c.l.b16 %v1054
    %v2568 = vunpack.c.h.b16 %v1054
    %v2569 = vunpack.c.l.b16 %v1055
    %v2570 = vunpack.c.h.b16 %v1055
    %v2571 = vunpack.c.l.b16 %v1056
    %v2572 = vunpack.c.h.b16 %v1056
    %v2573 = vunpack.c.l.b16 %v1057
    %v2574 = vunpack.c.h.b16 %v1057
    %v2575 = vunpack.c.l.b16 %v1058
    %v2576 = vunpack.c.h.b16 %v1058
    %v2577 = vunpack.c.l.b16 %v1059
    %v2578 = vunpack.c.h.b16 %v1059
    %v2579 = vunpack.c.l.b16 %v1060
    %v2580 = vunpack.c.h.b16 %v1060
    %v2581 = vunpack.c.l.b16 %v1061
    %v2582 = vunpack.c.h.b16 %v1061
    %v2583 = vunpack.c.l.b16 %v1062
    %v2584 = vunpack.c.h.b16 %v1062
    %v2585 = vunpack.c.l.b16 %v1063
    %v2586 = vunpack.c.h.b16 %v1063
    %v2587 = vunpack.c.l.b16 %v1064
    %v2588 = vunpack.c.h.b16 %v1064
    %v2589 = vunpack.c.l.b16 %v1065
    %v2590 = vunpack.c.h.b16 %v1065
    %v2591 = vunpack.c.l.b16 %v1066
    %v2592 = vunpack.c.h.b16 %v1066
    %v2593 = vunpack.c.l.b16 %v1067
    %v2594 = vunpack.c.h.b16 %v1067
    %v2595 = vunpack.c.l.b16 %v1068
    %v2596 = vunpack.c.h.b16 %v1068
    %v2597 = vunpack.c.l.b16 %v1069
    %v2598 = vunpack.c.h.b16 %v1069
    %v2599 = vunpack.c.l.b16 %v1070
    %v2600 = vunpack.c.h.b16 %v1070
    %v2601 = vunpack.c.l.b16 %v1071
    %v2602 = vunpack.c.h.b16 %v1071
    %v2603 = vunpack.c.l.b16 %v1072
    %v2604 = vunpack.c.h.b16 %v1072
    %v2605 = vunpack.c.l.b16 %v1073
    %v2606 = vunpack.c.h.b16 %v1073
    %v2607 = vunpack.c.l.b16 %v1074
    %v2608 = vunpack.c.h.b16 %v1074
    %v2609 = vunpack.c.l.b16 %v1075
    %v2610 = vunpack.c.h.b16 %v1075
    %v2611 = vunpack.c.l.b16 %v1076
    %v2612 = vunpack.c.h.b16 %v1076
    %v2613 = vunpack.c.l.b16 %v1077
    %v2614 = vunpack.c.h.b16 %v1077
    %v2615 = vunpack.c.l.b16 %v1078
    %v2616 = vunpack.c.h.b16 %v1078
    %v2617 = vunpack.c.l.b16 %v1079
    %v2618 = vunpack.c.h.b16 %v1079
    %v2619 = vunpack.c.l.b16 %v1080
    %v2620 = vunpack.c.h.b16 %v1080
    %v2621 = vunpack.c.l.b16 %v1081
    %v2622 = vunpack.c.h.b16 %v1081
    %v2623 = vunpack.c.l.b16 %v1082
    %v2624 = vunpack.c.h.b16 %v1082
    %v2625 = vunpack.c.l.b16 %v1083
    %v2626 = vunpack.c.h.b16 %v1083
    %v2627 = vunpack.c.l.b16 %v1084
    %v2628 = vunpack.c.h.b16 %v1084
    %v2629 = vunpack.c.l.b16 %v1085
    %v2630 = vunpack.c.h.b16 %v1085
    %v2631 = vunpack.c.l.b16 %v1086
    %v2632 = vunpack.c.h.b16 %v1086
    %v2633 = vunpack.c.l.b16 %v1087
    %v2634 = vunpack.c.h.b16 %v1087
    %v2635 = vunpack.c.l.b16 %v1088
    %v2636 = vunpack.c.h.b16 %v1088
    %v2637 = vunpack.c.l.b16 %v1089
    %v2638 = vunpack.c.h.b16 %v1089
    %v2639 = vunpack.c.l.b16 %v1090
    %v2640 = vunpack.c.h.b16 %v1090
    %v2641 = vunpack.c.l.b16 %v1091
    %v2642 = vunpack.c.h.b16 %v1091
    %v2643 = vunpack.c.l.b16 %v1092
    %v2644 = vunpack.c.h.b16 %v1092
    %v2645 = vunpack.c.l.b16 %v1093
    %v2646 = vunpack.c.h.b16 %v1093
    %v2647 = vunpack.c.l.b16 %v1094
    %v2648 = vunpack.c.h.b16 %v1094
    %v2649 = vunpack.c.l.b16 %v1095
    %v2650 = vunpack.c.h.b16 %v1095
    %v2651 = vunpack.c.l.b16 %v1096
    %v2652 = vunpack.c.h.b16 %v1096
    %v2653 = vunpack.c.l.b16 %v1097
    %v2654 = vunpack.c.h.b16 %v1097
    %v2655 = vunpack.c.l.b16 %v1098
    %v2656 = vunpack.c.h.b16 %v1098
    %v2657 = vunpack.c.l.b16 %v1099
    %v2658 = vunpack.c.h.b16 %v1099
    %v2659 = vunpack.c.l.b16 %v1100
    %v2660 = vunpack.c.h.b16 %v1100
    %v2661 = vunpack.c.l.b16 %v1101
    %v2662 = vunpack.c.h.b16 %v1101
    %v2663 = vunpack.c.l.b16 %v1102
    %v2664 = vunpack.c.h.b16 %v1102
    %v2665 = vunpack.c.l.b16 %v1103
    %v2666 = vunpack.c.h.b16 %v1103
    %v2667 = vunpack.c.l.b16 %v1104
    %v2668 = vunpack.c.h.b16 %v1104
    %v2669 = vunpack.c.l.b16 %v1105
    %v2670 = vunpack.c.h.b16 %v1105
    %v2671 = vunpack.c.l.b16 %v1106
    %v2672 = vunpack.c.h.b16 %v1106
    %v2673 = vunpack.c.l.b16 %v1107
    %v2674 = vunpack.c.h.b16 %v1107
    %v2675 = vunpack.c.l.b16 %v1108
    %v2676 = vunpack.c.h.b16 %v1108
    %v2677 = vunpack.c.l.b16 %v1109
    %v2678 = vunpack.c.h.b16 %v1109
    %v2679 = vunpack.c.l.b16 %v1110
    %v2680 = vunpack.c.h.b16 %v1110
    %v2681 = vunpack.c.l.b16 %v1111
    %v2682 = vunpack.c.h.b16 %v1111
    %v2683 = vunpack.c.l.b16 %v1112
    %v2684 = vunpack.c.h.b16 %v1112
    %v2685 = vunpack.c.l.b16 %v1113
    %v2686 = vunpack.c.h.b16 %v1113
    %v2687 = vunpack.c.l.b16 %v1114
    %v2688 = vunpack.c.h.b16 %v1114
    %v2689 = vunpack.c.l.b16 %v1115
    %v2690 = vunpack.c.h.b16 %v1115
    %v2691 = vunpack.c.l.b16 %v1116
    %v2692 = vunpack.c.h.b16 %v1116
    %v2693 = vunpack.c.l.b16 %v1117
    %v2694 = vunpack.c.h.b16 %v1117
    %v2695 = vunpack.c.l.b16 %v1118
    %v2696 = vunpack.c.h.b16 %v1118
    %v2697 = vunpack.c.l.b16 %v1119
    %v2698 = vunpack.c.h.b16 %v1119
    %v2699 = vunpack.c.l.b16 %v1120
    %v2700 = vunpack.c.h.b16 %v1120
    %v2701 = vunpack.c.l.b16 %v1121
    %v2702 = vunpack.c.h.b16 %v1121
    %v2703 = vunpack.c.l.b16 %v1122
    %v2704 = vunpack.c.h.b16 %v1122
    %v2705 = vunpack.c.l.b16 %v1123
    %v2706 = vunpack.c.h.b16 %v1123
    %v2707 = vunpack.c.l.b16 %v1124
    %v2708 = vunpack.c.h.b16 %v1124
    %v2709 = vunpack.c.l.b16 %v1125
    %v2710 = vunpack.c.h.b16 %v1125
    %v2711 = vunpack.c.l.b16 %v1126
    %v2712 = vunpack.c.h.b16 %v1126
    %v2713 = vunpack.c.l.b16 %v1127
    %v2714 = vunpack.c.h.b16 %v1127
    %v2715 = vunpack.c.l.b16 %v1128
    %v2716 = vunpack.c.h.b16 %v1128
    %v2717 = vunpack.c.l.b16 %v1129
    %v2718 = vunpack.c.h.b16 %v1129
    %v2719 = vunpack.c.l.b16 %v1130
    %v2720 = vunpack.c.h.b16 %v1130
    %v2721 = vunpack.c.l.b16 %v1131
    %v2722 = vunpack.c.h.b16 %v1131
    %v2723 = vunpack.c.l.b16 %v1132
    %v2724 = vunpack.c.h.b16 %v1132
    %v2725 = vunpack.c.l.b16 %v1133
    %v2726 = vunpack.c.h.b16 %v1133
    %v2727 = vunpack.c.l.b16 %v1134
    %v2728 = vunpack.c.h.b16 %v1134
    %v2729 = vunpack.c.l.b16 %v1135
    %v2730 = vunpack.c.h.b16 %v1135
    %v2731 = vunpack.c.l.b16 %v1136
    %v2732 = vunpack.c.h.b16 %v1136
    %v2733 = vunpack.c.l.b16 %v1137
    %v2734 = vunpack.c.h.b16 %v1137
    %v2735 = vunpack.c.l.b16 %v1138
    %v2736 = vunpack.c.h.b16 %v1138
    %v2737 = vunpack.c.l.b16 %v1139
    %v2738 = vunpack.c.h.b16 %v1139
    %v2739 = vunpack.c.l.b16 %v1140
    %v2740 = vunpack.c.h.b16 %v1140
    %v2741 = vunpack.c.l.b16 %v1141
    %v2742 = vunpack.c.h.b16 %v1141
    %v2743 = vunpack.c.l.b16 %v1142
    %v2744 = vunpack.c.h.b16 %v1142
    %v2745 = vunpack.c.l.b16 %v1143
    %v2746 = vunpack.c.h.b16 %v1143
    %v2747 = vunpack.c.l.b16 %v1144
    %v2748 = vunpack.c.h.b16 %v1144
    %v2749 = vunpack.c.l.b16 %v1145
    %v2750 = vunpack.c.h.b16 %v1145
    %v2751 = vunpack.c.l.b16 %v1146
    %v2752 = vunpack.c.h.b16 %v1146
    %v2753 = vunpack.c.l.b16 %v1147
    %v2754 = vunpack.c.h.b16 %v1147
    %v2755 = vunpack.c.l.b16 %v1148
    %v2756 = vunpack.c.h.b16 %v1148
    %v2757 = vunpack.c.l.b16 %v1149
    %v2758 = vunpack.c.h.b16 %v1149
    %v2759 = vunpack.c.l.b16 %v1150
    %v2760 = vunpack.c.h.b16 %v1150
    %v2761 = vunpack.c.l.b16 %v1151
    %v2762 = vunpack.c.h.b16 %v1151
    %v2763 = vunpack.c.l.b16 %v1152
    %v2764 = vunpack.c.h.b16 %v1152
    %v2765 = vunpack.c.l.b16 %v1153
    %v2766 = vunpack.c.h.b16 %v1153
    %v2767 = vunpack.c.l.b16 %v1154
    %v2768 = vunpack.c.h.b16 %v1154
    %v2769 = vunpack.c.l.b16 %v1155
    %v2770 = vunpack.c.h.b16 %v1155
    %v2771 = vunpack.c.l.b16 %v1156
    %v2772 = vunpack.c.h.b16 %v1156
    %v2773 = vunpack.c.l.b16 %v1157
    %v2774 = vunpack.c.h.b16 %v1157
    %v2775 = vunpack.c.l.b16 %v1158
    %v2776 = vunpack.c.h.b16 %v1158
    %v2777 = vunpack.c.l.b16 %v1159
    %v2778 = vunpack.c.h.b16 %v1159
    %v2779 = vunpack.c.l.b16 %v1160
    %v2780 = vunpack.c.h.b16 %v1160
    %v2781 = vunpack.c.l.b16 %v1161
    %v2782 = vunpack.c.h.b16 %v1161
    %v2783 = vunpack.c.l.b16 %v1162
    %v2784 = vunpack.c.h.b16 %v1162
    %v2785 = vunpack.c.l.b16 %v1163
    %v2786 = vunpack.c.h.b16 %v1163
    %v2787 = vunpack.c.l.b16 %v1164
    %v2788 = vunpack.c.h.b16 %v1164
    %v2789 = vunpack.c.l.b16 %v1165
    %v2790 = vunpack.c.h.b16 %v1165
    %v2791 = vunpack.c.l.b16 %v1166
    %v2792 = vunpack.c.h.b16 %v1166
    %v2793 = vunpack.c.l.b16 %v1167
    %v2794 = vunpack.c.h.b16 %v1167
    %v2795 = vunpack.c.l.b16 %v1168
    %v2796 = vunpack.c.h.b16 %v1168
    %v2797 = vunpack.c.l.b16 %v1169
    %v2798 = vunpack.c.h.b16 %v1169
    %v2799 = vunpack.c.l.b16 %v1170
    %v2800 = vunpack.c.h.b16 %v1170
    %v2801 = vunpack.c.l.b16 %v1171
    %v2802 = vunpack.c.h.b16 %v1171
    %v2803 = vunpack.c.l.b16 %v1172
    %v2804 = vunpack.c.h.b16 %v1172
    %v2805 = vunpack.c.l.b16 %v1173
    %v2806 = vunpack.c.h.b16 %v1173
    %v2807 = vunpack.c.l.b16 %v1174
    %v2808 = vunpack.c.h.b16 %v1174
    %v2809 = vunpack.c.l.b16 %v1175
    %v2810 = vunpack.c.h.b16 %v1175
    %v2811 = vunpack.c.l.b16 %v1176
    %v2812 = vunpack.c.h.b16 %v1176
    %v2813 = vunpack.c.l.b16 %v1177
    %v2814 = vunpack.c.h.b16 %v1177
    %v2815 = vunpack.c.l.b16 %v1178
    %v2816 = vunpack.c.h.b16 %v1178
    %v2817 = vunpack.c.l.b16 %v1179
    %v2818 = vunpack.c.h.b16 %v1179
    %v2819 = vunpack.c.l.b16 %v1180
    %v2820 = vunpack.c.h.b16 %v1180
    %v2821 = vunpack.c.l.b16 %v1181
    %v2822 = vunpack.c.h.b16 %v1181
    %v2823 = vunpack.c.l.b16 %v1182
    %v2824 = vunpack.c.h.b16 %v1182
    %v2825 = vunpack.c.l.b16 %v1183
    %v2826 = vunpack.c.h.b16 %v1183
    %v2827 = vunpack.c.l.b16 %v1184
    %v2828 = vunpack.c.h.b16 %v1184
    %v2829 = vunpack.c.l.b16 %v1185
    %v2830 = vunpack.c.h.b16 %v1185
    %v2831 = vunpack.c.l.b16 %v1186
    %v2832 = vunpack.c.h.b16 %v1186
    %v2833 = vunpack.c.l.b16 %v1187
    %v2834 = vunpack.c.h.b16 %v1187
    %v2835 = vunpack.c.l.b16 %v1188
    %v2836 = vunpack.c.h.b16 %v1188
    %v2837 = vunpack.c.l.b16 %v1189
    %v2838 = vunpack.c.h.b16 %v1189
    %v2839 = vunpack.c.l.b16 %v1190
    %v2840 = vunpack.c.h.b16 %v1190
    %v2841 = vunpack.c.l.b16 %v1191
    %v2842 = vunpack.c.h.b16 %v1191
    %v2843 = vunpack.c.l.b16 %v1192
    %v2844 = vunpack.c.h.b16 %v1192
    %v2845 = vunpack.c.l.b16 %v1193
    %v2846 = vunpack.c.h.b16 %v1193
    %v2847 = vunpack.c.l.b16 %v1194
    %v2848 = vunpack.c.h.b16 %v1194
    %v2849 = vunpack.c.l.b16 %v1195
    %v2850 = vunpack.c.h.b16 %v1195
    %v2851 = vunpack.c.l.b16 %v1196
    %v2852 = vunpack.c.h.b16 %v1196
    %v2853 = vunpack.c.l.b16 %v1197
    %v2854 = vunpack.c.h.b16 %v1197
    %v2855 = vunpack.c.l.b16 %v1198
    %v2856 = vunpack.c.h.b16 %v1198
    %v2857 = vunpack.c.l.b16 %v1199
    %v2858 = vunpack.c.h.b16 %v1199
    %v2859 = vunpack.c.l.b16 %v1200
    %v2860 = vunpack.c.h.b16 %v1200
    %v2861 = vunpack.c.l.b16 %v1201
    %v2862 = vunpack.c.h.b16 %v1201
    %v2863 = vunpack.c.l.b16 %v1202
    %v2864 = vunpack.c.h.b16 %v1202
    %v2865 = vunpack.c.l.b16 %v1203
    %v2866 = vunpack.c.h.b16 %v1203
    %v2867 = vunpack.c.l.b16 %v1204
    %v2868 = vunpack.c.h.b16 %v1204
    %v2869 = vunpack.c.l.b16 %v1205
    %v2870 = vunpack.c.h.b16 %v1205
    %v2871 = vunpack.c.l.b16 %v1206
    %v2872 = vunpack.c.h.b16 %v1206
    %v2873 = vunpack.c.l.b16 %v1207
    %v2874 = vunpack.c.h.b16 %v1207
    %v2875 = vunpack.c.l.b16 %v1208
    %v2876 = vunpack.c.h.b16 %v1208
    %v2877 = vunpack.c.l.b16 %v1209
    %v2878 = vunpack.c.h.b16 %v1209
    %v2879 = vunpack.c.l.b16 %v1210
    %v2880 = vunpack.c.h.b16 %v1210
    %v2881 = vunpack.c.l.b16 %v1211
    %v2882 = vunpack.c.h.b16 %v1211
    %v2883 = vunpack.c.l.b16 %v1212
    %v2884 = vunpack.c.h.b16 %v1212
    %v2885 = vunpack.c.l.b16 %v1213
    %v2886 = vunpack.c.h.b16 %v1213
    %v2887 = vunpack.c.l.b16 %v1214
    %v2888 = vunpack.c.h.b16 %v1214
    %v2889 = vunpack.c.l.b16 %v1215
    %v2890 = vunpack.c.h.b16 %v1215
    %v2891 = vunpack.c.l.b16 %v1216
    %v2892 = vunpack.c.h.b16 %v1216
    %v2893 = vunpack.c.l.b16 %v1217
    %v2894 = vunpack.c.h.b16 %v1217
    %v2895 = vunpack.c.l.b16 %v1218
    %v2896 = vunpack.c.h.b16 %v1218
    %v2897 = vunpack.c.l.b16 %v1219
    %v2898 = vunpack.c.h.b16 %v1219
    %v2899 = vunpack.c.l.b16 %v1220
    %v2900 = vunpack.c.h.b16 %v1220
    %v2901 = vunpack.c.l.b16 %v1221
    %v2902 = vunpack.c.h.b16 %v1221
    %v2903 = vunpack.c.l.b16 %v1222
    %v2904 = vunpack.c.h.b16 %v1222
    %v2905 = vunpack.c.l.b16 %v1223
    %v2906 = vunpack.c.h.b16 %v1223
    %v2907 = vunpack.c.l.b16 %v1224
    %v2908 = vunpack.c.h.b16 %v1224
    %v2909 = vunpack.c.l.b16 %v1225
    %v2910 = vunpack.c.h.b16 %v1225
    %v2911 = vunpack.c.l.b16 %v1226
    %v2912 = vunpack.c.h.b16 %v1226
    %v2913 = vunpack.c.l.b16 %v1227
    %v2914 = vunpack.c.h.b16 %v1227
    %v2915 = vunpack.c.l.b16 %v1228
    %v2916 = vunpack.c.h.b16 %v1228
    %v2917 = vunpack.c.l.b16 %v1229
    %v2918 = vunpack.c.h.b16 %v1229
    %v2919 = vunpack.c.l.b16 %v1230
    %v2920 = vunpack.c.h.b16 %v1230
    %v2921 = vunpack.c.l.b16 %v1231
    %v2922 = vunpack.c.h.b16 %v1231
    %v2923 = vunpack.c.l.b16 %v1232
    %v2924 = vunpack.c.h.b16 %v1232
    %v2925 = vunpack.c.l.b16 %v1233
    %v2926 = vunpack.c.h.b16 %v1233
    %v2927 = vunpack.c.l.b16 %v1234
    %v2928 = vunpack.c.h.b16 %v1234
    %v2929 = vunpack.c.l.b16 %v1235
    %v2930 = vunpack.c.h.b16 %v1235
    %v2931 = vunpack.c.l.b16 %v1236
    %v2932 = vunpack.c.h.b16 %v1236
    %v2933 = vunpack.c.l.b16 %v1237
    %v2934 = vunpack.c.h.b16 %v1237
    %v2935 = vunpack.c.l.b16 %v1238
    %v2936 = vunpack.c.h.b16 %v1238
    %v2937 = vunpack.c.l.b16 %v1239
    %v2938 = vunpack.c.h.b16 %v1239
    %v2939 = vunpack.c.l.b16 %v1240
    %v2940 = vunpack.c.h.b16 %v1240
    %v2941 = vunpack.c.l.b16 %v1241
    %v2942 = vunpack.c.h.b16 %v1241
    %v2943 = vunpack.c.l.b16 %v1242
    %v2944 = vunpack.c.h.b16 %v1242
    %v2945 = vunpack.c.l.b16 %v1243
    %v2946 = vunpack.c.h.b16 %v1243
    %v2947 = vunpack.c.l.b16 %v1244
    %v2948 = vunpack.c.h.b16 %v1244
    %v2949 = vunpack.c.l.b16 %v1245
    %v2950 = vunpack.c.h.b16 %v1245
    %v2951 = vunpack.c.l.b16 %v1246
    %v2952 = vunpack.c.h.b16 %v1246
    %v2953 = vunpack.c.l.b16 %v1247
    %v2954 = vunpack.c.h.b16 %v1247
    %v2955 = vunpack.c.l.b16 %v1248
    %v2956 = vunpack.c.h.b16 %v1248
    %v2957 = vunpack.c.l.b16 %v1249
    %v2958 = vunpack.c.h.b16 %v1249
    %v2959 = vunpack.c.l.b16 %v1250
    %v2960 = vunpack.c.h.b16 %v1250
    %v2961 = vunpack.c.l.b16 %v1251
    %v2962 = vunpack.c.h.b16 %v1251
    %v2963 = vunpack.c.l.b16 %v1252
    %v2964 = vunpack.c.h.b16 %v1252
    %v2965 = vunpack.c.l.b16 %v1253
    %v2966 = vunpack.c.h.b16 %v1253
    %v2967 = vunpack.c.l.b16 %v1254
    %v2968 = vunpack.c.h.b16 %v1254
    %v2969 = vunpack.c.l.b16 %v1255
    %v2970 = vunpack.c.h.b16 %v1255
    %v2971 = vunpack.c.l.b16 %v1256
    %v2972 = vunpack.c.h.b16 %v1256
    %v2973 = vunpack.c.l.b16 %v1257
    %v2974 = vunpack.c.h.b16 %v1257
    %v2975 = vunpack.c.l.b16 %v1258
    %v2976 = vunpack.c.h.b16 %v1258
    %v2977 = vunpack.c.l.b16 %v1259
    %v2978 = vunpack.c.h.b16 %v1259
    %v2979 = vunpack.c.l.b16 %v1260
    %v2980 = vunpack.c.h.b16 %v1260
    %v2981 = vunpack.c.l.b16 %v1261
    %v2982 = vunpack.c.h.b16 %v1261
    %v2983 = vunpack.c.l.b16 %v1262
    %v2984 = vunpack.c.h.b16 %v1262
    %v2985 = vunpack.c.l.b16 %v1263
    %v2986 = vunpack.c.h.b16 %v1263
    %v2987 = vunpack.c.l.b16 %v1264
    %v2988 = vunpack.c.h.b16 %v1264
    %v2989 = vunpack.c.l.b16 %v1265
    %v2990 = vunpack.c.h.b16 %v1265
    %v2991 = vunpack.c.l.b16 %v1266
    %v2992 = vunpack.c.h.b16 %v1266
    %v2993 = vunpack.c.l.b16 %v1267
    %v2994 = vunpack.c.h.b16 %v1267
    %v2995 = vunpack.c.l.b16 %v1268
    %v2996 = vunpack.c.h.b16 %v1268
    %v2997 = vunpack.c.l.b16 %v1269
    %v2998 = vunpack.c.h.b16 %v1269
    %v2999 = vunpack.c.l.b16 %v1270
    %v3000 = vunpack.c.h.b16 %v1270
    %v3001 = vunpack.c.l.b16 %v1271
    %v3002 = vunpack.c.h.b16 %v1271
    %v3003 = vunpack.c.l.b16 %v1272
    %v3004 = vunpack.c.h.b16 %v1272
    %v3005 = vunpack.c.l.b16 %v1273
    %v3006 = vunpack.c.h.b16 %v1273
    %v3007 = vunpack.c.l.b16 %v1274
    %v3008 = vunpack.c.h.b16 %v1274
    %v3009 = vunpack.c.l.b16 %v1275
    %v3010 = vunpack.c.h.b16 %v1275
    %v3011 = vunpack.c.l.b16 %v1276
    %v3012 = vunpack.c.h.b16 %v1276
    %v3013 = vunpack.c.l.b16 %v1277
    %v3014 = vunpack.c.h.b16 %v1277
    %v3015 = vunpack.c.l.b16 %v1278
    %v3016 = vunpack.c.h.b16 %v1278
    %v3017 = vunpack.c.l.b16 %v1279
    %v3018 = vunpack.c.h.b16 %v1279
    %v3019 = vunpack.c.l.b16 %v1280
    %v3020 = vunpack.c.h.b16 %v1280
    %v3021 = vunpack.c.l.b16 %v1281
    %v3022 = vunpack.c.h.b16 %v1281
    %v3023 = vunpack.c.l.b16 %v1282
    %v3024 = vunpack.c.h.b16 %v1282
    %v3025 = vunpack.c.l.b16 %v1283
    %v3026 = vunpack.c.h.b16 %v1283
    %v3027 = vunpack.c.l.b16 %v1284
    %v3028 = vunpack.c.h.b16 %v1284
    %v3029 = vunpack.c.l.b16 %v1285
    %v3030 = vunpack.c.h.b16 %v1285
    %v3031 = vunpack.c.l.b16 %v1286
    %v3032 = vunpack.c.h.b16 %v1286
    %v3033 = vunpack.c.l.b16 %v1287
    %v3034 = vunpack.c.h.b16 %v1287
    %v3035 = vunpack.c.l.b16 %v1288
    %v3036 = vunpack.c.h.b16 %v1288
    %v3037 = vunpack.c.l.b16 %v1289
    %v3038 = vunpack.c.h.b16 %v1289
    %v3039 = vunpack.c.l.b16 %v1290
    %v3040 = vunpack.c.h.b16 %v1290
    %v3041 = vunpack.c.l.b16 %v1291
    %v3042 = vunpack.c.h.b16 %v1291
    %v3043 = vunpack.c.l.b16 %v1292
    %v3044 = vunpack.c.h.b16 %v1292
    %v3045 = vunpack.c.l.b16 %v1293
    %v3046 = vunpack.c.h.b16 %v1293
    %v3047 = vunpack.c.l.b16 %v1294
    %v3048 = vunpack.c.h.b16 %v1294
    %v3049 = vunpack.c.l.b16 %v1295
    %v3050 = vunpack.c.h.b16 %v1295
    %v3051 = vunpack.c.l.b16 %v1296
    %v3052 = vunpack.c.h.b16 %v1296
    %v3053 = vunpack.c.l.b16 %v1297
    %v3054 = vunpack.c.h.b16 %v1297
    %v3055 = vunpack.c.l.b16 %v1298
    %v3056 = vunpack.c.h.b16 %v1298
    %v3057 = vunpack.c.l.b16 %v1299
    %v3058 = vunpack.c.h.b16 %v1299
    %v3059 = vunpack.c.l.b16 %v1300
    %v3060 = vunpack.c.h.b16 %v1300
    %v3061 = vunpack.c.l.b16 %v1301
    %v3062 = vunpack.c.h.b16 %v1301
    %v3063 = vunpack.c.l.b16 %v1302
    %v3064 = vunpack.c.h.b16 %v1302
    %v3065 = vunpack.c.l.b16 %v1303
    %v3066 = vunpack.c.h.b16 %v1303
    %v3067 = vunpack.c.l.b16 %v1304
    %v3068 = vunpack.c.h.b16 %v1304
    %v3069 = vunpack.c.l.b16 %v1305
    %v3070 = vunpack.c.h.b16 %v1305
    %v3071 = vunpack.c.l.b16 %v1306
    %v3072 = vunpack.c.h.b16 %v1306
    %v3073 = vunpack.c.l.b16 %v1307
    %v3074 = vunpack.c.h.b16 %v1307
    %v3075 = vunpack.c.l.b16 %v1308
    %v3076 = vunpack.c.h.b16 %v1308
    %v3077 = vunpack.c.l.b16 %v1309
    %v3078 = vunpack.c.h.b16 %v1309
    %v3079 = vunpack.c.l.b16 %v1310
    %v3080 = vunpack.c.h.b16 %v1310
    %v3081 = vunpack.c.l.b16 %v1311
    %v3082 = vunpack.c.h.b16 %v1311
    %v3083 = vunpack.c.l.b16 %v1312
    %v3084 = vunpack.c.h.b16 %v1312
    %v3085 = vunpack.c.l.b16 %v1313
    %v3086 = vunpack.c.h.b16 %v1313
    %v3087 = vunpack.c.l.b16 %v1314
    %v3088 = vunpack.c.h.b16 %v1314
    %v3089 = vunpack.c.l.b16 %v1315
    %v3090 = vunpack.c.h.b16 %v1315
    %v3091 = vunpack.c.l.b16 %v1316
    %v3092 = vunpack.c.h.b16 %v1316
    %v3093 = vunpack.c.l.b16 %v1317
    %v3094 = vunpack.c.h.b16 %v1317
    %v3095 = vunpack.c.l.b16 %v1318
    %v3096 = vunpack.c.h.b16 %v1318
    %v3097 = vunpack.c.l.b16 %v1319
    %v3098 = vunpack.c.h.b16 %v1319
    %v3099 = vunpack.c.l.b16 %v1320
    %v3100 = vunpack.c.h.b16 %v1320
    %v3101 = vunpack.c.l.b16 %v1321
    %v3102 = vunpack.c.h.b16 %v1321
    %v3103 = vunpack.c.l.b16 %v1322
    %v3104 = vunpack.c.h.b16 %v1322
    %v3105 = vunpack.c.l.b16 %v1323
    %v3106 = vunpack.c.h.b16 %v1323
    %v3107 = vunpack.c.l.b16 %v1324
    %v3108 = vunpack.c.h.b16 %v1324
    %v3109 = vunpack.c.l.b16 %v1325
    %v3110 = vunpack.c.h.b16 %v1325
    %v3111 = vunpack.c.l.b16 %v1326
    %v3112 = vunpack.c.h.b16 %v1326
    %v3113 = vunpack.c.l.b16 %v1327
    %v3114 = vunpack.c.h.b16 %v1327
    %v3115 = vunpack.c.l.b16 %v1328
    %v3116 = vunpack.c.h.b16 %v1328
    %v3117 = vunpack.c.l.b16 %v1329
    %v3118 = vunpack.c.h.b16 %v1329
    %v3119 = vunpack.c.l.b16 %v1330
    %v3120 = vunpack.c.h.b16 %v1330
    %v3121 = vunpack.c.l.b16 %v1331
    %v3122 = vunpack.c.h.b16 %v1331
    %v3123 = vunpack.c.l.b16 %v1332
    %v3124 = vunpack.c.h.b16 %v1332
    %v3125 = vunpack.c.l.b16 %v1333
    %v3126 = vunpack.c.h.b16 %v1333
    %v3127 = vunpack.c.l.b16 %v1334
    %v3128 = vunpack.c.h.b16 %v1334
    %v3129 = vunpack.c.l.b16 %v1335
    %v3130 = vunpack.c.h.b16 %v1335
    %v3131 = vunpack.c.l.b16 %v1336
    %v3132 = vunpack.c.h.b16 %v1336
    %v3133 = vunpack.c.l.b16 %v1337
    %v3134 = vunpack.c.h.b16 %v1337
    %v3135 = vunpack.c.l.b16 %v1338
    %v3136 = vunpack.c.h.b16 %v1338
    %v3137 = vunpack.c.l.b16 %v1339
    %v3138 = vunpack.c.h.b16 %v1339
    %v3139 = vunpack.c.l.b16 %v1340
    %v3140 = vunpack.c.h.b16 %v1340
    %v3141 = vunpack.c.l.b16 %v1341
    %v3142 = vunpack.c.h.b16 %v1341
    %v3143 = vunpack.c.l.b16 %v1342
    %v3144 = vunpack.c.h.b16 %v1342
    %v3145 = vunpack.c.l.b16 %v1343
    %v3146 = vunpack.c.h.b16 %v1343
    %v3147 = vunpack.c.l.b16 %v1344
    %v3148 = vunpack.c.h.b16 %v1344
    %v3149 = vunpack.c.l.b16 %v1345
    %v3150 = vunpack.c.h.b16 %v1345
    %v3151 = vunpack.c.l.b16 %v1346
    %v3152 = vunpack.c.h.b16 %v1346
    %v3153 = vunpack.c.l.b16 %v1347
    %v3154 = vunpack.c.h.b16 %v1347
    %v3155 = vunpack.c.l.b16 %v1348
    %v3156 = vunpack.c.h.b16 %v1348
    %v3157 = vunpack.c.l.b16 %v1349
    %v3158 = vunpack.c.h.b16 %v1349
    %v3159 = vunpack.c.l.b16 %v1350
    %v3160 = vunpack.c.h.b16 %v1350
    %v3161 = vunpack.c.l.b16 %v1351
    %v3162 = vunpack.c.h.b16 %v1351
    %v3163 = vunpack.c.l.b16 %v1352
    %v3164 = vunpack.c.h.b16 %v1352
    %v3165 = vunpack.c.l.b16 %v1353
    %v3166 = vunpack.c.h.b16 %v1353
    %v3167 = vunpack.c.l.b16 %v1354
    %v3168 = vunpack.c.h.b16 %v1354
    %v3169 = vunpack.c.l.b16 %v1355
    %v3170 = vunpack.c.h.b16 %v1355
    %v3171 = vunpack.c.l.b16 %v1356
    %v3172 = vunpack.c.h.b16 %v1356
    %v3173 = vunpack.c.l.b16 %v1357
    %v3174 = vunpack.c.h.b16 %v1357
    %v3175 = vunpack.c.l.b16 %v1358
    %v3176 = vunpack.c.h.b16 %v1358
    %v3177 = vunpack.c.l.b16 %v1359
    %v3178 = vunpack.c.h.b16 %v1359
    %v3179 = vunpack.c.l.b16 %v1360
    %v3180 = vunpack.c.h.b16 %v1360
    %v3181 = vunpack.c.l.b16 %v1361
    %v3182 = vunpack.c.h.b16 %v1361
    %v3183 = vunpack.c.l.b16 %v1362
    %v3184 = vunpack.c.h.b16 %v1362
    %v3185 = vunpack.c.l.b16 %v1363
    %v3186 = vunpack.c.h.b16 %v1363
    %v3187 = vunpack.c.l.b16 %v1364
    %v3188 = vunpack.c.h.b16 %v1364
    %v3189 = vunpack.c.l.b16 %v1365
    %v3190 = vunpack.c.h.b16 %v1365
    %v3191 = vunpack.c.l.b16 %v1366
    %v3192 = vunpack.c.h.b16 %v1366
    %v3193 = vunpack.c.l.b16 %v1367
    %v3194 = vunpack.c.h.b16 %v1367
    %v3195 = vunpack.c.l.b16 %v1368
    %v3196 = vunpack.c.h.b16 %v1368
    %v3197 = vunpack.c.l.b16 %v1369
    %v3198 = vunpack.c.h.b16 %v1369
    %v3199 = vunpack.c.l.b16 %v1370
    %v3200 = vunpack.c.h.b16 %v1370
    %v3201 = vunpack.c.l.b16 %v1371
    %v3202 = vunpack.c.h.b16 %v1371
    %v3203 = vunpack.c.l.b16 %v1372
    %v3204 = vunpack.c.h.b16 %v1372
    %v3205 = vunpack.c.l.b16 %v1373
    %v3206 = vunpack.c.h.b16 %v1373
    %v3207 = vunpack.c.l.b16 %v1374
    %v3208 = vunpack.c.h.b16 %v1374
    %v3209 = vunpack.c.l.b16 %v1375
    %v3210 = vunpack.c.h.b16 %v1375
    %v3211 = vunpack.c.l.b16 %v1376
    %v3212 = vunpack.c.h.b16 %v1376
    %v3213 = vunpack.c.l.b16 %v1377
    %v3214 = vunpack.c.h.b16 %v1377
    %v3215 = vunpack.c.l.b16 %v1378
    %v3216 = vunpack.c.h.b16 %v1378
    %v3217 = vunpack.c.l.b16 %v1379
    %v3218 = vunpack.c.h.b16 %v1379
    %v3219 = vunpack.c.l.b16 %v1380
    %v3220 = vunpack.c.h.b16 %v1380
    %v3221 = vunpack.c.l.b16 %v1381
    %v3222 = vunpack.c.h.b16 %v1381
    %v3223 = vunpack.c.l.b16 %v1382
    %v3224 = vunpack.c.h.b16 %v1382
    %v3225 = vunpack.c.l.b16 %v1383
    %v3226 = vunpack.c.h.b16 %v1383
    %v3227 = vunpack.c.l.b16 %v1384
    %v3228 = vunpack.c.h.b16 %v1384
    %v3229 = vunpack.c.l.b16 %v1385
    %v3230 = vunpack.c.h.b16 %v1385
    %v3231 = vunpack.c.l.b16 %v1386
    %v3232 = vunpack.c.h.b16 %v1386
    %v3233 = vunpack.c.l.b16 %v1387
    %v3234 = vunpack.c.h.b16 %v1387
    %v3235 = vunpack.c.l.b16 %v1388
    %v3236 = vunpack.c.h.b16 %v1388
    %v3237 = vunpack.c.l.b16 %v1389
    %v3238 = vunpack.c.h.b16 %v1389
    %v3239 = vunpack.c.l.b16 %v1390
    %v3240 = vunpack.c.h.b16 %v1390
    %v3241 = vunpack.c.l.b16 %v1391
    %v3242 = vunpack.c.h.b16 %v1391
    %v3243 = vunpack.c.l.b16 %v1392
    %v3244 = vunpack.c.h.b16 %v1392
    %v3245 = vunpack.c.l.b16 %v1393
    %v3246 = vunpack.c.h.b16 %v1393
    %v3247 = vunpack.c.l.b16 %v1394
    %v3248 = vunpack.c.h.b16 %v1394
    %v3249 = vunpack.c.l.b16 %v1395
    %v3250 = vunpack.c.h.b16 %v1395
    %v3251 = vunpack.c.l.b16 %v1396
    %v3252 = vunpack.c.h.b16 %v1396
    %v3253 = vunpack.c.l.b16 %v1397
    %v3254 = vunpack.c.h.b16 %v1397
    %v3255 = vunpack.c.l.b16 %v1398
    %v3256 = vunpack.c.h.b16 %v1398
    %v3257 = vunpack.c.l.b16 %v1399
    %v3258 = vunpack.c.h.b16 %v1399
    %v3259 = vunpack.c.l.b16 %v1400
    %v3260 = vunpack.c.h.b16 %v1400
    %v3261 = vunpack.c.l.b16 %v1401
    %v3262 = vunpack.c.h.b16 %v1401
    %v3263 = vunpack.c.l.b16 %v1402
    %v3264 = vunpack.c.h.b16 %v1402
    %v3265 = vunpack.c.l.b16 %v1403
    %v3266 = vunpack.c.h.b16 %v1403
    %v3267 = vunpack.c.l.b16 %v1404
    %v3268 = vunpack.c.h.b16 %v1404
    %v3269 = vunpack.c.l.b16 %v1405
    %v3270 = vunpack.c.h.b16 %v1405
    %v3271 = vunpack.c.l.b16 %v1406
    %v3272 = vunpack.c.h.b16 %v1406
    %v3273 = vunpack.c.l.b16 %v1407
    %v3274 = vunpack.c.h.b16 %v1407
    %v3275 = vunpack.c.l.b16 %v1408
    %v3276 = vunpack.c.h.b16 %v1408
    %v3277 = vunpack.c.l.b16 %v1409
    %v3278 = vunpack.c.h.b16 %v1409
    %v3279 = vunpack.c.l.b16 %v1410
    %v3280 = vunpack.c.h.b16 %v1410
    %v3281 = vunpack.c.l.b16 %v1411
    %v3282 = vunpack.c.h.b16 %v1411
    %v3283 = vunpack.c.l.b16 %v1412
    %v3284 = vunpack.c.h.b16 %v1412
    %v3285 = vunpack.c.l.b16 %v1413
    %v3286 = vunpack.c.h.b16 %v1413
    %v3287 = vunpack.c.l.b16 %v1414
    %v3288 = vunpack.c.h.b16 %v1414
    %v3289 = vunpack.c.l.b16 %v1415
    %v3290 = vunpack.c.h.b16 %v1415
    %v3291 = vunpack.c.l.b16 %v1416
    %v3292 = vunpack.c.h.b16 %v1416
    %v3293 = vunpack.c.l.b16 %v1417
    %v3294 = vunpack.c.h.b16 %v1417
    %v3295 = vunpack.c.l.b16 %v1418
    %v3296 = vunpack.c.h.b16 %v1418
    %v3297 = vunpack.c.l.b16 %v1419
    %v3298 = vunpack.c.h.b16 %v1419
    %v3299 = vunpack.c.l.b16 %v1420
    %v3300 = vunpack.c.h.b16 %v1420
    %v3301 = vunpack.c.l.b16 %v1421
    %v3302 = vunpack.c.h.b16 %v1421
    %v3303 = vunpack.c.l.b16 %v1422
    %v3304 = vunpack.c.h.b16 %v1422
    %v3305 = vunpack.c.l.b16 %v1423
    %v3306 = vunpack.c.h.b16 %v1423
    %v3307 = vunpack.c.l.b16 %v1424
    %v3308 = vunpack.c.h.b16 %v1424
    %v3309 = vunpack.c.l.b16 %v1425
    %v3310 = vunpack.c.h.b16 %v1425
    %v3311 = vunpack.c.l.b16 %v1426
    %v3312 = vunpack.c.h.b16 %v1426
    %v3313 = vunpack.c.l.b16 %v1427
    %v3314 = vunpack.c.h.b16 %v1427
    %v3315 = vunpack.c.l.b16 %v1428
    %v3316 = vunpack.c.h.b16 %v1428
    %v3317 = vunpack.c.l.b16 %v1429
    %v3318 = vunpack.c.h.b16 %v1429
    %v3319 = vunpack.c.l.b16 %v1430
    %v3320 = vunpack.c.h.b16 %v1430
    %v3321 = vunpack.c.l.b16 %v1431
    %v3322 = vunpack.c.h.b16 %v1431
    %v3323 = vunpack.c.l.b16 %v1432
    %v3324 = vunpack.c.h.b16 %v1432
    %v3325 = vunpack.c.l.b16 %v1433
    %v3326 = vunpack.c.h.b16 %v1433
    %v3327 = vunpack.c.l.b16 %v1434
    %v3328 = vunpack.c.h.b16 %v1434
    %v3329 = vunpack.c.l.b16 %v1435
    %v3330 = vunpack.c.h.b16 %v1435
    %v3331 = vunpack.c.l.b16 %v1436
    %v3332 = vunpack.c.h.b16 %v1436
    %v3333 = vunpack.c.l.b16 %v1437
    %v3334 = vunpack.c.h.b16 %v1437
    %v3335 = vunpack.c.l.b16 %v1438
    %v3336 = vunpack.c.h.b16 %v1438
    %v3337 = vunpack.c.l.b16 %v1439
    %v3338 = vunpack.c.h.b16 %v1439
    %v3339 = vunpack.c.l.b16 %v1440
    %v3340 = vunpack.c.h.b16 %v1440
    %v3341 = vunpack.c.l.b16 %v1441
    %v3342 = vunpack.c.h.b16 %v1441
    %v3343 = vunpack.c.l.b16 %v1442
    %v3344 = vunpack.c.h.b16 %v1442
    %v3345 = vunpack.c.l.b16 %v1443
    %v3346 = vunpack.c.h.b16 %v1443
    %v3347 = vunpack.c.l.b16 %v1444
    %v3348 = vunpack.c.h.b16 %v1444
    %v3349 = vunpack.c.l.b16 %v1445
    %v3350 = vunpack.c.h.b16 %v1445
    %v3351 = vunpack.c.l.b16 %v1446
    %v3352 = vunpack.c.h.b16 %v1446
    %v3353 = vunpack.c.l.b16 %v1447
    %v3354 = vunpack.c.h.b16 %v1447
    %v3355 = vunpack.c.l.b16 %v1448
    %v3356 = vunpack.c.h.b16 %v1448
    %v3357 = vunpack.c.l.b16 %v1449
    %v3358 = vunpack.c.h.b16 %v1449
    %v3359 = vunpack.c.l.b16 %v1450
    %v3360 = vunpack.c.h.b16 %v1450
    %v3361 = vunpack.c.l.b16 %v1451
    %v3362 = vunpack.c.h.b16 %v1451
    %v3363 = vunpack.c.l.b16 %v1452
    %v3364 = vunpack.c.h.b16 %v1452
    %v3365 = vunpack.c.l.b16 %v1453
    %v3366 = vunpack.c.h.b16 %v1453
    %v3367 = vunpack.c.l.b16 %v1454
    %v3368 = vunpack.c.h.b16 %v1454
    %v3369 = vunpack.c.l.b16 %v1455
    %v3370 = vunpack.c.h.b16 %v1455
    %v3371 = vunpack.c.l.b16 %v1456
    %v3372 = vunpack.c.h.b16 %v1456
    %v3373 = vunpack.c.l.b16 %v1457
    %v3374 = vunpack.c.h.b16 %v1457
    %v3375 = vunpack.c.l.b16 %v1458
    %v3376 = vunpack.c.h.b16 %v1458
    %v3377 = vunpack.c.l.b16 %v1459
    %v3378 = vunpack.c.h.b16 %v1459
    %v3379 = vunpack.c.l.b16 %v1460
    %v3380 = vunpack.c.h.b16 %v1460
    %v3381 = vunpack.c.l.b16 %v1461
    %v3382 = vunpack.c.h.b16 %v1461
    %v3383 = vunpack.c.l.b16 %v1462
    %v3384 = vunpack.c.h.b16 %v1462
    %v3385 = vunpack.c.l.b16 %v1463
    %v3386 = vunpack.c.h.b16 %v1463
    %v3387 = vunpack.c.l.b16 %v1464
    %v3388 = vunpack.c.h.b16 %v1464
    %v3389 = vunpack.c.l.b16 %v1465
    %v3390 = vunpack.c.h.b16 %v1465
    %v3391 = vunpack.c.l.b16 %v1466
    %v3392 = vunpack.c.h.b16 %v1466
    %v3393 = vunpack.c.l.b16 %v1467
    %v3394 = vunpack.c.h.b16 %v1467
    %v3395 = vunpack.c.l.b16 %v1468
    %v3396 = vunpack.c.h.b16 %v1468
    %v3397 = vunpack.c.l.b16 %v1469
    %v3398 = vunpack.c.h.b16 %v1469
    %v3399 = vunpack.c.l.b16 %v1470
    %v3400 = vunpack.c.h.b16 %v1470
    %v3401 = vunpack.c.l.b16 %v1471
    %v3402 = vunpack.c.h.b16 %v1471
    %v3403 = vunpack.c.l.b16 %v1472
    %v3404 = vunpack.c.h.b16 %v1472
    %v3405 = vunpack.c.l.b16 %v1473
    %v3406 = vunpack.c.h.b16 %v1473
    %v3407 = vunpack.c.l.b16 %v1474
    %v3408 = vunpack.c.h.b16 %v1474
    %v3409 = vunpack.c.l.b16 %v1475
    %v3410 = vunpack.c.h.b16 %v1475
    %v3411 = vunpack.c.l.b16 %v1476
    %v3412 = vunpack.c.h.b16 %v1476
    %v3413 = vunpack.c.l.b16 %v1477
    %v3414 = vunpack.c.h.b16 %v1477
    %v3415 = vunpack.c.l.b16 %v1478
    %v3416 = vunpack.c.h.b16 %v1478
    %v3417 = vpack.c.b16 %v2145, %v2137
    %v3418 = vpack.c.b16 %v2146, %v2138
    %v3419 = vpack.c.b16 %v2147, %v2139
    %v3420 = vpack.c.b16 %v2148, %v2140
    %v3421 = vpack.c.b16 %v2149, %v2141
    %v3422 = vpack.c.b16 %v2150, %v2142
    %v3423 = vpack.c.b16 %v2151, %v2143
    %v3424 = vpack.c.b16 %v2152, %v2144
    %v3425 = vpack.c.b16 %v2161, %v2153
    %v3426 = vpack.c.b16 %v2162, %v2154
    %v3427 = vpack.c.b16 %v2163, %v2155
    %v3428 = vpack.c.b16 %v2164, %v2156
    %v3429 = vpack.c.b16 %v2165, %v2157
    %v3430 = vpack.c.b16 %v2166, %v2158
    %v3431 = vpack.c.b16 %v2167, %v2159
    %v3432 = vpack.c.b16 %v2168, %v2160
    %v3433 = vpack.c.b16 %v2177, %v2169
    %v3434 = vpack.c.b16 %v2178, %v2170
    %v3435 = vpack.c.b16 %v2179, %v2171
    %v3436 = vpack.c.b16 %v2180, %v2172
    %v3437 = vpack.c.b16 %v2181, %v2173
    %v3438 = vpack.c.b16 %v2182, %v2174
    %v3439 = vpack.c.b16 %v2183, %v2175
    %v3440 = vpack.c.b16 %v2184, %v2176
    %v3441 = vpack.c.b16 %v2193, %v2185
    %v3442 = vpack.c.b16 %v2194, %v2186
    %v3443 = vpack.c.b16 %v2195, %v2187
    %v3444 = vpack.c.b16 %v2196, %v2188
    %v3445 = vpack.c.b16 %v2197, %v2189
    %v3446 = vpack.c.b16 %v2198, %v2190
    %v3447 = vpack.c.b16 %v2199, %v2191
    %v3448 = vpack.c.b16 %v2200, %v2192
    %v3449 = vpack.c.b16 %v2209, %v2201
    %v3450 = vpack.c.b16 %v2210, %v2202
    %v3451 = vpack.c.b16 %v2211, %v2203
    %v3452 = vpack.c.b16 %v2212, %v2204
    %v3453 = vpack.c.b16 %v2213, %v2205
    %v3454 = vpack.c.b16 %v2214, %v2206
    %v3455 = vpack.c.b16 %v2215, %v2207
    %v3456 = vpack.c.b16 %v2216, %v2208
    %v3457 = vpack.c.b16 %v2225, %v2217
    %v3458 = vpack.c.b16 %v2226, %v2218
    %v3459 = vpack.c.b16 %v2227, %v2219
    %v3460 = vpack.c.b16 %v2228, %v2220
    %v3461 = vpack.c.b16 %v2229, %v2221
    %v3462 = vpack.c.b16 %v2230, %v2222
    %v3463 = vpack.c.b16 %v2231, %v2223
    %v3464 = vpack.c.b16 %v2232, %v2224
    %v3465 = vpack.c.b16 %v2241, %v2233
    %v3466 = vpack.c.b16 %v2242, %v2234
    %v3467 = vpack.c.b16 %v2243, %v2235
    %v3468 = vpack.c.b16 %v2244, %v2236
    %v3469 = vpack.c.b16 %v2245, %v2237
    %v3470 = vpack.c.b16 %v2246, %v2238
    %v3471 = vpack.c.b16 %v2247, %v2239
    %v3472 = vpack.c.b16 %v2248, %v2240
    %v3473 = vpack.c.b16 %v2257, %v2249
    %v3474 = vpack.c.b16 %v2258, %v2250
    %v3475 = vpack.c.b16 %v2259, %v2251
    %v3476 = vpack.c.b16 %v2260, %v2252
    %v3477 = vpack.c.b16 %v2261, %v2253
    %v3478 = vpack.c.b16 %v2262, %v2254
    %v3479 = vpack.c.b16 %v2263, %v2255
    %v3480 = vpack.c.b16 %v2264, %v2256
    %v3481 = vpack.c.b16 %v2273, %v2265
    %v3482 = vpack.c.b16 %v2274, %v2266
    %v3483 = vpack.c.b16 %v2275, %v2267
    %v3484 = vpack.c.b16 %v2276, %v2268
    %v3485 = vpack.c.b16 %v2277, %v2269
    %v3486 = vpack.c.b16 %v2278, %v2270
    %v3487 = vpack.c.b16 %v2279, %v2271
    %v3488 = vpack.c.b16 %v2280, %v2272
    %v3489 = vpack.c.b16 %v2289, %v2281
    %v3490 = vpack.c.b16 %v2290, %v2282
    %v3491 = vpack.c.b16 %v2291, %v2283
    %v3492 = vpack.c.b16 %v2292, %v2284
    %v3493 = vpack.c.b16 %v2293, %v2285
    %v3494 = vpack.c.b16 %v2294, %v2286
    %v3495 = vpack.c.b16 %v2295, %v2287
    %v3496 = vpack.c.b16 %v2296, %v2288
    %v3497 = vpack.c.b16 %v2305, %v2297
    %v3498 = vpack.c.b16 %v2306, %v2298
    %v3499 = vpack.c.b16 %v2307, %v2299
    %v3500 = vpack.c.b16 %v2308, %v2300
    %v3501 = vpack.c.b16 %v2309, %v2301
    %v3502 = vpack.c.b16 %v2310, %v2302
    %v3503 = vpack.c.b16 %v2311, %v2303
    %v3504 = vpack.c.b16 %v2312, %v2304
    %v3505 = vpack.c.b16 %v2321, %v2313
    %v3506 = vpack.c.b16 %v2322, %v2314
    %v3507 = vpack.c.b16 %v2323, %v2315
    %v3508 = vpack.c.b16 %v2324, %v2316
    %v3509 = vpack.c.b16 %v2325, %v2317
    %v3510 = vpack.c.b16 %v2326, %v2318
    %v3511 = vpack.c.b16 %v2327, %v2319
    %v3512 = vpack.c.b16 %v2328, %v2320
    %v3513 = vpack.c.b16 %v2337, %v2329
    %v3514 = vpack.c.b16 %v2338, %v2330
    %v3515 = vpack.c.b16 %v2339, %v2331
    %v3516 = vpack.c.b16 %v2340, %v2332
    %v3517 = vpack.c.b16 %v2341, %v2333
    %v3518 = vpack.c.b16 %v2342, %v2334
    %v3519 = vpack.c.b16 %v2343, %v2335
    %v3520 = vpack.c.b16 %v2344, %v2336
    %v3521 = vpack.c.b16 %v2353, %v2345
    %v3522 = vpack.c.b16 %v2354, %v2346
    %v3523 = vpack.c.b16 %v2355, %v2347
    %v3524 = vpack.c.b16 %v2356, %v2348
    %v3525 = vpack.c.b16 %v2357, %v2349
    %v3526 = vpack.c.b16 %v2358, %v2350
    %v3527 = vpack.c.b16 %v2359, %v2351
    %v3528 = vpack.c.b16 %v2360, %v2352
    %v3529 = vpack.c.b16 %v2369, %v2361
    %v3530 = vpack.c.b16 %v2370, %v2362
    %v3531 = vpack.c.b16 %v2371, %v2363
    %v3532 = vpack.c.b16 %v2372, %v2364
    %v3533 = vpack.c.b16 %v2373, %v2365
    %v3534 = vpack.c.b16 %v2374, %v2366
    %v3535 = vpack.c.b16 %v2375, %v2367
    %v3536 = vpack.c.b16 %v2376, %v2368
    %v3537 = vpack.c.b16 %v2385, %v2377
    %v3538 = vpack.c.b16 %v2386, %v2378
    %v3539 = vpack.c.b16 %v2387, %v2379
    %v3540 = vpack.c.b16 %v2388, %v2380
    %v3541 = vpack.c.b16 %v2389, %v2381
    %v3542 = vpack.c.b16 %v2390, %v2382
    %v3543 = vpack.c.b16 %v2391, %v2383
    %v3544 = vpack.c.b16 %v2392, %v2384
    %v3545 = vpack.c.b16 %v2401, %v2393
    %v3546 = vpack.c.b16 %v2402, %v2394
    %v3547 = vpack.c.b16 %v2403, %v2395
    %v3548 = vpack.c.b16 %v2404, %v2396
    %v3549 = vpack.c.b16 %v2405, %v2397
    %v3550 = vpack.c.b16 %v2406, %v2398
    %v3551 = vpack.c.b16 %v2407, %v2399
    %v3552 = vpack.c.b16 %v2408, %v2400
    %v3553 = vpack.c.b16 %v2417, %v2409
    %v3554 = vpack.c.b16 %v2418, %v2410
    %v3555 = vpack.c.b16 %v2419, %v2411
    %v3556 = vpack.c.b16 %v2420, %v2412
    %v3557 = vpack.c.b16 %v2421, %v2413
    %v3558 = vpack.c.b16 %v2422, %v2414
    %v3559 = vpack.c.b16 %v2423, %v2415
    %v3560 = vpack.c.b16 %v2424, %v2416
    %v3561 = vpack.c.b16 %v2433, %v2425
    %v3562 = vpack.c.b16 %v2434, %v2426
    %v3563 = vpack.c.b16 %v2435, %v2427
    %v3564 = vpack.c.b16 %v2436, %v2428
    %v3565 = vpack.c.b16 %v2437, %v2429
    %v3566 = vpack.c.b16 %v2438, %v2430
    %v3567 = vpack.c.b16 %v2439, %v2431
    %v3568 = vpack.c.b16 %v2440, %v2432
    %v3569 = vpack.c.b16 %v2449, %v2441
    %v3570 = vpack.c.b16 %v2450, %v2442
    %v3571 = vpack.c.b16 %v2451, %v2443
    %v3572 = vpack.c.b16 %v2452, %v2444
    %v3573 = vpack.c.b16 %v2453, %v2445
    %v3574 = vpack.c.b16 %v2454, %v2446
    %v3575 = vpack.c.b16 %v2455, %v2447
    %v3576 = vpack.c.b16 %v2456, %v2448
    %v3577 = vpack.c.b16 %v2465, %v2457
    %v3578 = vpack.c.b16 %v2466, %v2458
    %v3579 = vpack.c.b16 %v2467, %v2459
    %v3580 = vpack.c.b16 %v2468, %v2460
    %v3581 = vpack.c.b16 %v2469, %v2461
    %v3582 = vpack.c.b16 %v2470, %v2462
    %v3583 = vpack.c.b16 %v2471, %v2463
    %v3584 = vpack.c.b16 %v2472, %v2464
    %v3585 = vpack.c.b16 %v2481, %v2473
    %v3586 = vpack.c.b16 %v2482, %v2474
    %v3587 = vpack.c.b16 %v2483, %v2475
    %v3588 = vpack.c.b16 %v2484, %v2476
    %v3589 = vpack.c.b16 %v2485, %v2477
    %v3590 = vpack.c.b16 %v2486, %v2478
    %v3591 = vpack.c.b16 %v2487, %v2479
    %v3592 = vpack.c.b16 %v2488, %v2480
    %v3593 = vpack.c.b16 %v2497, %v2489
    %v3594 = vpack.c.b16 %v2498, %v2490
    %v3595 = vpack.c.b16 %v2499, %v2491
    %v3596 = vpack.c.b16 %v2500, %v2492
    %v3597 = vpack.c.b16 %v2501, %v2493
    %v3598 = vpack.c.b16 %v2502, %v2494
    %v3599 = vpack.c.b16 %v2503, %v2495
    %v3600 = vpack.c.b16 %v2504, %v2496
    %v3601 = vpack.c.b16 %v2513, %v2505
    %v3602 = vpack.c.b16 %v2514, %v2506
    %v3603 = vpack.c.b16 %v2515, %v2507
    %v3604 = vpack.c.b16 %v2516, %v2508
    %v3605 = vpack.c.b16 %v2517, %v2509
    %v3606 = vpack.c.b16 %v2518, %v2510
    %v3607 = vpack.c.b16 %v2519, %v2511
    %v3608 = vpack.c.b16 %v2520, %v2512
    %v3609 = vpack.c.b16 %v2529, %v2521
    %v3610 = vpack.c.b16 %v2530, %v2522
    %v3611 = vpack.c.b16 %v2531, %v2523
    %v3612 = vpack.c.b16 %v2532, %v2524
    %v3613 = vpack.c.b16 %v2533, %v2525
    %v3614 = vpack.c.b16 %v2534, %v2526
    %v3615 = vpack.c.b16 %v2535, %v2527
    %v3616 = vpack.c.b16 %v2536, %v2528
    %v3617 = vpack.c.b16 %v2545, %v2537
    %v3618 = vpack.c.b16 %v2546, %v2538
    %v3619 = vpack.c.b16 %v2547, %v2539
    %v3620 = vpack.c.b16 %v2548, %v2540
    %v3621 = vpack.c.b16 %v2549, %v2541
    %v3622 = vpack.c.b16 %v2550, %v2542
    %v3623 = vpack.c.b16 %v2551, %v2543
    %v3624 = vpack.c.b16 %v2552, %v2544
    %v3625 = vpack.c.b16 %v2561, %v2553
    %v3626 = vpack.c.b16 %v2562, %v2554
    %v3627 = vpack.c.b16 %v2563, %v2555
    %v3628 = vpack.c.b16 %v2564, %v2556
    %v3629 = vpack.c.b16 %v2565, %v2557
    %v3630 = vpack.c.b16 %v2566, %v2558
    %v3631 = vpack.c.b16 %v2567, %v2559
    %v3632 = vpack.c.b16 %v2568, %v2560
    %v3633 = vpack.c.b16 %v2577, %v2569
    %v3634 = vpack.c.b16 %v2578, %v2570
    %v3635 = vpack.c.b16 %v2579, %v2571
    %v3636 = vpack.c.b16 %v2580, %v2572
    %v3637 = vpack.c.b16 %v2581, %v2573
    %v3638 = vpack.c.b16 %v2582, %v2574
    %v3639 = vpack.c.b16 %v2583, %v2575
    %v3640 = vpack.c.b16 %v2584, %v2576
    %v3641 = vpack.c.b16 %v2593, %v2585
    %v3642 = vpack.c.b16 %v2594, %v2586
    %v3643 = vpack.c.b16 %v2595, %v2587
    %v3644 = vpack.c.b16 %v2596, %v2588
    %v3645 = vpack.c.b16 %v2597, %v2589
    %v3646 = vpack.c.b16 %v2598, %v2590
    %v3647 = vpack.c.b16 %v2599, %v2591
    %v3648 = vpack.c.b16 %v2600, %v2592
    %v3649 = vpack.c.b16 %v2609, %v2601
    %v3650 = vpack.c.b16 %v2610, %v2602
    %v3651 = vpack.c.b16 %v2611, %v2603
    %v3652 = vpack.c.b16 %v2612, %v2604
    %v3653 = vpack.c.b16 %v2613, %v2605
    %v3654 = vpack.c.b16 %v2614, %v2606
    %v3655 = vpack.c.b16 %v2615, %v2607
    %v3656 = vpack.c.b16 %v2616, %v2608
    %v3657 = vpack.c.b16 %v2625, %v2617
    %v3658 = vpack.c.b16 %v2626, %v2618
    %v3659 = vpack.c.b16 %v2627, %v2619
    %v3660 = vpack.c.b16 %v2628, %v2620
    %v3661 = vpack.c.b16 %v2629, %v2621
    %v3662 = vpack.c.b16 %v2630, %v2622
    %v3663 = vpack.c.b16 %v2631, %v2623
    %v3664 = vpack.c.b16 %v2632, %v2624
    %v3665 = vpack.c.b16 %v2641, %v2633
    %v3666 = vpack.c.b16 %v2642, %v2634
    %v3667 = vpack.c.b16 %v2643, %v2635
    %v3668 = vpack.c.b16 %v2644, %v2636
    %v3669 = vpack.c.b16 %v2645, %v2637
    %v3670 = vpack.c.b16 %v2646, %v2638
    %v3671 = vpack.c.b16 %v2647, %v2639
    %v3672 = vpack.c.b16 %v2648, %v2640
    %v3673 = vpack.c.b16 %v2657, %v2649
    %v3674 = vpack.c.b16 %v2658, %v2650
    %v3675 = vpack.c.b16 %v2659, %v2651
    %v3676 = vpack.c.b16 %v2660, %v2652
    %v3677 = vpack.c.b16 %v2661, %v2653
    %v3678 = vpack.c.b16 %v2662, %v2654
    %v3679 = vpack.c.b16 %v2663, %v2655
    %v3680 = vpack.c.b16 %v2664, %v2656
    %v3681 = vpack.c.b16 %v2673, %v2665
    %v3682 = vpack.c.b16 %v2674, %v2666
    %v3683 = vpack.c.b16 %v2675, %v2667
    %v3684 = vpack.c.b16 %v2676, %v2668
    %v3685 = vpack.c.b16 %v2677, %v2669
    %v3686 = vpack.c.b16 %v2678, %v2670
    %v3687 = vpack.c.b16 %v2679, %v2671
    %v3688 = vpack.c.b16 %v2680, %v2672
    %v3689 = vpack.c.b16 %v2689, %v2681
    %v3690 = vpack.c.b16 %v2690, %v2682
    %v3691 = vpack.c.b16 %v2691, %v2683
    %v3692 = vpack.c.b16 %v2692, %v2684
    %v3693 = vpack.c.b16 %v2693, %v2685
    %v3694 = vpack.c.b16 %v2694, %v2686
    %v3695 = vpack.c.b16 %v2695, %v2687
    %v3696 = vpack.c.b16 %v2696, %v2688
    %v3697 = vpack.c.b16 %v2705, %v2697
    %v3698 = vpack.c.b16 %v2706, %v2698
    %v3699 = vpack.c.b16 %v2707, %v2699
    %v3700 = vpack.c.b16 %v2708, %v2700
    %v3701 = vpack.c.b16 %v2709, %v2701
    %v3702 = vpack.c.b16 %v2710, %v2702
    %v3703 = vpack.c.b16 %v2711, %v2703
    %v3704 = vpack.c.b16 %v2712, %v2704
    %v3705 = vpack.c.b16 %v2721, %v2713
    %v3706 = vpack.c.b16 %v2722, %v2714
    %v3707 = vpack.c.b16 %v2723, %v2715
    %v3708 = vpack.c.b16 %v2724, %v2716
    %v3709 = vpack.c.b16 %v2725, %v2717
    %v3710 = vpack.c.b16 %v2726, %v2718
    %v3711 = vpack.c.b16 %v2727, %v2719
    %v3712 = vpack.c.b16 %v2728, %v2720
    %v3713 = vpack.c.b16 %v2737, %v2729
    %v3714 = vpack.c.b16 %v2738, %v2730
    %v3715 = vpack.c.b16 %v2739, %v2731
    %v3716 = vpack.c.b16 %v2740, %v2732
    %v3717 = vpack.c.b16 %v2741, %v2733
    %v3718 = vpack.c.b16 %v2742, %v2734
    %v3719 = vpack.c.b16 %v2743, %v2735
    %v3720 = vpack.c.b16 %v2744, %v2736
    %v3721 = vpack.c.b16 %v2753, %v2745
    %v3722 = vpack.c.b16 %v2754, %v2746
    %v3723 = vpack.c.b16 %v2755, %v2747
    %v3724 = vpack.c.b16 %v2756, %v2748
    %v3725 = vpack.c.b16 %v2757, %v2749
    %v3726 = vpack.c.b16 %v2758, %v2750
    %v3727 = vpack.c.b16 %v2759, %v2751
    %v3728 = vpack.c.b16 %v2760, %v2752
    %v3729 = vpack.c.b16 %v2769, %v2761
    %v3730 = vpack.c.b16 %v2770, %v2762
    %v3731 = vpack.c.b16 %v2771, %v2763
    %v3732 = vpack.c.b16 %v2772, %v2764
    %v3733 = vpack.c.b16 %v2773, %v2765
    %v3734 = vpack.c.b16 %v2774, %v2766
    %v3735 = vpack.c.b16 %v2775, %v2767
    %v3736 = vpack.c.b16 %v2776, %v2768
    %v3737 = vpack.c.b16 %v2785, %v2777
    %v3738 = vpack.c.b16 %v2786, %v2778
    %v3739 = vpack.c.b16 %v2787, %v2779
    %v3740 = vpack.c.b16 %v2788, %v2780
    %v3741 = vpack.c.b16 %v2789, %v2781
    %v3742 = vpack.c.b16 %v2790, %v2782
    %v3743 = vpack.c.b16 %v2791, %v2783
    %v3744 = vpack.c.b16 %v2792, %v2784
    %v3745 = vpack.c.b16 %v2801, %v2793
    %v3746 = vpack.c.b16 %v2802, %v2794
    %v3747 = vpack.c.b16 %v2803, %v2795
    %v3748 = vpack.c.b16 %v2804, %v2796
    %v3749 = vpack.c.b16 %v2805, %v2797
    %v3750 = vpack.c.b16 %v2806, %v2798
    %v3751 = vpack.c.b16 %v2807, %v2799
    %v3752 = vpack.c.b16 %v2808, %v2800
    %v3753 = vpack.c.b16 %v2817, %v2809
    %v3754 = vpack.c.b16 %v2818, %v2810
    %v3755 = vpack.c.b16 %v2819, %v2811
    %v3756 = vpack.c.b16 %v2820, %v2812
    %v3757 = vpack.c.b16 %v2821, %v2813
    %v3758 = vpack.c.b16 %v2822, %v2814
    %v3759 = vpack.c.b16 %v2823, %v2815
    %v3760 = vpack.c.b16 %v2824, %v2816
    %v3761 = vpack.c.b16 %v2833, %v2825
    %v3762 = vpack.c.b16 %v2834, %v2826
    %v3763 = vpack.c.b16 %v2835, %v2827
    %v3764 = vpack.c.b16 %v2836, %v2828
    %v3765 = vpack.c.b16 %v2837, %v2829
    %v3766 = vpack.c.b16 %v2838, %v2830
    %v3767 = vpack.c.b16 %v2839, %v2831
    %v3768 = vpack.c.b16 %v2840, %v2832
    %v3769 = vpack.c.b16 %v2849, %v2841
    %v3770 = vpack.c.b16 %v2850, %v2842
    %v3771 = vpack.c.b16 %v2851, %v2843
    %v3772 = vpack.c.b16 %v2852, %v2844
    %v3773 = vpack.c.b16 %v2853, %v2845
    %v3774 = vpack.c.b16 %v2854, %v2846
    %v3775 = vpack.c.b16 %v2855, %v2847
    %v3776 = vpack.c.b16 %v2856, %v2848
    %v3777 = vpack.c.b16 %v2865, %v2857
    %v3778 = vpack.c.b16 %v2866, %v2858
    %v3779 = vpack.c.b16 %v2867, %v2859
    %v3780 = vpack.c.b16 %v2868, %v2860
    %v3781 = vpack.c.b16 %v2869, %v2861
    %v3782 = vpack.c.b16 %v2870, %v2862
    %v3783 = vpack.c.b16 %v2871, %v2863
    %v3784 = vpack.c.b16 %v2872, %v2864
    %v3785 = vpack.c.b16 %v2881, %v2873
    %v3786 = vpack.c.b16 %v2882, %v2874
    %v3787 = vpack.c.b16 %v2883, %v2875
    %v3788 = vpack.c.b16 %v2884, %v2876
    %v3789 = vpack.c.b16 %v2885, %v2877
    %v3790 = vpack.c.b16 %v2886, %v2878
    %v3791 = vpack.c.b16 %v2887, %v2879
    %v3792 = vpack.c.b16 %v2888, %v2880
    %v3793 = vpack.c.b16 %v2897, %v2889
    %v3794 = vpack.c.b16 %v2898, %v2890
    %v3795 = vpack.c.b16 %v2899, %v2891
    %v3796 = vpack.c.b16 %v2900, %v2892
    %v3797 = vpack.c.b16 %v2901, %v2893
    %v3798 = vpack.c.b16 %v2902, %v2894
    %v3799 = vpack.c.b16 %v2903, %v2895
    %v3800 = vpack.c.b16 %v2904, %v2896
    %v3801 = vpack.c.b16 %v2913, %v2905
    %v3802 = vpack.c.b16 %v2914, %v2906
    %v3803 = vpack.c.b16 %v2915, %v2907
    %v3804 = vpack.c.b16 %v2916, %v2908
    %v3805 = vpack.c.b16 %v2917, %v2909
    %v3806 = vpack.c.b16 %v2918, %v2910
    %v3807 = vpack.c.b16 %v2919, %v2911
    %v3808 = vpack.c.b16 %v2920, %v2912
    %v3809 = vpack.c.b16 %v2929, %v2921
    %v3810 = vpack.c.b16 %v2930, %v2922
    %v3811 = vpack.c.b16 %v2931, %v2923
    %v3812 = vpack.c.b16 %v2932, %v2924
    %v3813 = vpack.c.b16 %v2933, %v2925
    %v3814 = vpack.c.b16 %v2934, %v2926
    %v3815 = vpack.c.b16 %v2935, %v2927
    %v3816 = vpack.c.b16 %v2936, %v2928
    %v3817 = vpack.c.b16 %v2945, %v2937
    %v3818 = vpack.c.b16 %v2946, %v2938
    %v3819 = vpack.c.b16 %v2947, %v2939
    %v3820 = vpack.c.b16 %v2948, %v2940
    %v3821 = vpack.c.b16 %v2949, %v2941
    %v3822 = vpack.c.b16 %v2950, %v2942
    %v3823 = vpack.c.b16 %v2951, %v2943
    %v3824 = vpack.c.b16 %v2952, %v2944
    %v3825 = vpack.c.b16 %v2961, %v2953
    %v3826 = vpack.c.b16 %v2962, %v2954
    %v3827 = vpack.c.b16 %v2963, %v2955
    %v3828 = vpack.c.b16 %v2964, %v2956
    %v3829 = vpack.c.b16 %v2965, %v2957
    %v3830 = vpack.c.b16 %v2966, %v2958
    %v3831 = vpack.c.b16 %v2967, %v2959
    %v3832 = vpack.c.b16 %v2968, %v2960
    %v3833 = vpack.c.b16 %v2977, %v2969
    %v3834 = vpack.c.b16 %v2978, %v2970
    %v3835 = vpack.c.b16 %v2979, %v2971
    %v3836 = vpack.c.b16 %v2980, %v2972
    %v3837 = vpack.c.b16 %v2981, %v2973
    %v3838 = vpack.c.b16 %v2982, %v2974
    %v3839 = vpack.c.b16 %v2983, %v2975
    %v3840 = vpack.c.b16 %v2984, %v2976
    %v3841 = vpack.c.b16 %v2993, %v2985
    %v3842 = vpack.c.b16 %v2994, %v2986
    %v3843 = vpack.c.b16 %v2995, %v2987
    %v3844 = vpack.c.b16 %v2996, %v2988
    %v3845 = vpack.c.b16 %v2997, %v2989
    %v3846 = vpack.c.b16 %v2998, %v2990
    %v3847 = vpack.c.b16 %v2999, %v2991
    %v3848 = vpack.c.b16 %v3000, %v2992
    %v3849 = vpack.c.b16 %v3009, %v3001
    %v3850 = vpack.c.b16 %v3010, %v3002
    %v3851 = vpack.c.b16 %v3011, %v3003
    %v3852 = vpack.c.b16 %v3012, %v3004
    %v3853 = vpack.c.b16 %v3013, %v3005
    %v3854 = vpack.c.b16 %v3014, %v3006
    %v3855 = vpack.c.b16 %v3015, %v3007
    %v3856 = vpack.c.b16 %v3016, %v3008
    %v3857 = vpack.c.b16 %v3025, %v3017
    %v3858 = vpack.c.b16 %v3026, %v3018
    %v3859 = vpack.c.b16 %v3027, %v3019
    %v3860 = vpack.c.b16 %v3028, %v3020
    %v3861 = vpack.c.b16 %v3029, %v3021
    %v3862 = vpack.c.b16 %v3030, %v3022
    %v3863 = vpack.c.b16 %v3031, %v3023
    %v3864 = vpack.c.b16 %v3032, %v3024
    %v3865 = vpack.c.b16 %v3041, %v3033
    %v3866 = vpack.c.b16 %v3042, %v3034
    %v3867 = vpack.c.b16 %v3043, %v3035
    %v3868 = vpack.c.b16 %v3044, %v3036
    %v3869 = vpack.c.b16 %v3045, %v3037
    %v3870 = vpack.c.b16 %v3046, %v3038
    %v3871 = vpack.c.b16 %v3047, %v3039
    %v3872 = vpack.c.b16 %v3048, %v3040
    %v3873 = vpack.c.b16 %v3057, %v3049
    %v3874 = vpack.c.b16 %v3058, %v3050
    %v3875 = vpack.c.b16 %v3059, %v3051
    %v3876 = vpack.c.b16 %v3060, %v3052
    %v3877 = vpack.c.b16 %v3061, %v3053
    %v3878 = vpack.c.b16 %v3062, %v3054
    %v3879 = vpack.c.b16 %v3063, %v3055
    %v3880 = vpack.c.b16 %v3064, %v3056
    %v3881 = vpack.c.b16 %v3073, %v3065
    %v3882 = vpack.c.b16 %v3074, %v3066
    %v3883 = vpack.c.b16 %v3075, %v3067
    %v3884 = vpack.c.b16 %v3076, %v3068
    %v3885 = vpack.c.b16 %v3077, %v3069
    %v3886 = vpack.c.b16 %v3078, %v3070
    %v3887 = vpack.c.b16 %v3079, %v3071
    %v3888 = vpack.c.b16 %v3080, %v3072
    %v3889 = vpack.c.b16 %v3089, %v3081
    %v3890 = vpack.c.b16 %v3090, %v3082
    %v3891 = vpack.c.b16 %v3091, %v3083
    %v3892 = vpack.c.b16 %v3092, %v3084
    %v3893 = vpack.c.b16 %v3093, %v3085
    %v3894 = vpack.c.b16 %v3094, %v3086
    %v3895 = vpack.c.b16 %v3095, %v3087
    %v3896 = vpack.c.b16 %v3096, %v3088
    %v3897 = vpack.c.b16 %v3105, %v3097
    %v3898 = vpack.c.b16 %v3106, %v3098
    %v3899 = vpack.c.b16 %v3107, %v3099
    %v3900 = vpack.c.b16 %v3108, %v3100
    %v3901 = vpack.c.b16 %v3109, %v3101
    %v3902 = vpack.c.b16 %v3110, %v3102
    %v3903 = vpack.c.b16 %v3111, %v3103
    %v3904 = vpack.c.b16 %v3112, %v3104
    %v3905 = vpack.c.b16 %v3121, %v3113
    %v3906 = vpack.c.b16 %v3122, %v3114
    %v3907 = vpack.c.b16 %v3123, %v3115
    %v3908 = vpack.c.b16 %v3124, %v3116
    %v3909 = vpack.c.b16 %v3125, %v3117
    %v3910 = vpack.c.b16 %v3126, %v3118
    %v3911 = vpack.c.b16 %v3127, %v3119
    %v3912 = vpack.c.b16 %v3128, %v3120
    %v3913 = vpack.c.b16 %v3137, %v3129
    %v3914 = vpack.c.b16 %v3138, %v3130
    %v3915 = vpack.c.b16 %v3139, %v3131
    %v3916 = vpack.c.b16 %v3140, %v3132
    %v3917 = vpack.c.b16 %v3141, %v3133
    %v3918 = vpack.c.b16 %v3142, %v3134
    %v3919 = vpack.c.b16 %v3143, %v3135
    %v3920 = vpack.c.b16 %v3144, %v3136
    %v3921 = vpack.c.b16 %v3153, %v3145
    %v3922 = vpack.c.b16 %v3154, %v3146
    %v3923 = vpack.c.b16 %v3155, %v3147
    %v3924 = vpack.c.b16 %v3156, %v3148
    %v3925 = vpack.c.b16 %v3157, %v3149
    %v3926 = vpack.c.b16 %v3158, %v3150
    %v3927 = vpack.c.b16 %v3159, %v3151
    %v3928 = vpack.c.b16 %v3160, %v3152
    %v3929 = vpack.c.b16 %v3169, %v3161
    %v3930 = vpack.c.b16 %v3170, %v3162
    %v3931 = vpack.c.b16 %v3171, %v3163
    %v3932 = vpack.c.b16 %v3172, %v3164
    %v3933 = vpack.c.b16 %v3173, %v3165
    %v3934 = vpack.c.b16 %v3174, %v3166
    %v3935 = vpack.c.b16 %v3175, %v3167
    %v3936 = vpack.c.b16 %v3176, %v3168
    %v3937 = vpack.c.b16 %v3185, %v3177
    %v3938 = vpack.c.b16 %v3186, %v3178
    %v3939 = vpack.c.b16 %v3187, %v3179
    %v3940 = vpack.c.b16 %v3188, %v3180
    %v3941 = vpack.c.b16 %v3189, %v3181
    %v3942 = vpack.c.b16 %v3190, %v3182
    %v3943 = vpack.c.b16 %v3191, %v3183
    %v3944 = vpack.c.b16 %v3192, %v3184
    %v3945 = vpack.c.b16 %v3201, %v3193
    %v3946 = vpack.c.b16 %v3202, %v3194
    %v3947 = vpack.c.b16 %v3203, %v3195
    %v3948 = vpack.c.b16 %v3204, %v3196
    %v3949 = vpack.c.b16 %v3205, %v3197
    %v3950 = vpack.c.b16 %v3206, %v3198
    %v3951 = vpack.c.b16 %v3207, %v3199
    %v3952 = vpack.c.b16 %v3208, %v3200
    %v3953 = vpack.c.b16 %v3217, %v3209
    %v3954 = vpack.c.b16 %v3218, %v3210
    %v3955 = vpack.c.b16 %v3219, %v3211
    %v3956 = vpack.c.b16 %v3220, %v3212
    %v3957 = vpack.c.b16 %v3221, %v3213
    %v3958 = vpack.c.b16 %v3222, %v3214
    %v3959 = vpack.c.b16 %v3223, %v3215
    %v3960 = vpack.c.b16 %v3224, %v3216
    %v3961 = vpack.c.b16 %v3233, %v3225
    %v3962 = vpack.c.b16 %v3234, %v3226
    %v3963 = vpack.c.b16 %v3235, %v3227
    %v3964 = vpack.c.b16 %v3236, %v3228
    %v3965 = vpack.c.b16 %v3237, %v3229
    %v3966 = vpack.c.b16 %v3238, %v3230
    %v3967 = vpack.c.b16 %v3239, %v3231
    %v3968 = vpack.c.b16 %v3240, %v3232
    %v3969 = vpack.c.b16 %v3249, %v3241
    %v3970 = vpack.c.b16 %v3250, %v3242
    %v3971 = vpack.c.b16 %v3251, %v3243
    %v3972 = vpack.c.b16 %v3252, %v3244
    %v3973 = vpack.c.b16 %v3253, %v3245
    %v3974 = vpack.c.b16 %v3254, %v3246
    %v3975 = vpack.c.b16 %v3255, %v3247
    %v3976 = vpack.c.b16 %v3256, %v3248
    %v3977 = vpack.c.b16 %v3265, %v3257
    %v3978 = vpack.c.b16 %v3266, %v3258
    %v3979 = vpack.c.b16 %v3267, %v3259
    %v3980 = vpack.c.b16 %v3268, %v3260
    %v3981 = vpack.c.b16 %v3269, %v3261
    %v3982 = vpack.c.b16 %v3270, %v3262
    %v3983 = vpack.c.b16 %v3271, %v3263
    %v3984 = vpack.c.b16 %v3272, %v3264
    %v3985 = vpack.c.b16 %v3281, %v3273
    %v3986 = vpack.c.b16 %v3282, %v3274
    %v3987 = vpack.c.b16 %v3283, %v3275
    %v3988 = vpack.c.b16 %v3284, %v3276
    %v3989 = vpack.c.b16 %v3285, %v3277
    %v3990 = vpack.c.b16 %v3286, %v3278
    %v3991 = vpack.c.b16 %v3287, %v3279
    %v3992 = vpack.c.b16 %v3288, %v3280
    %v3993 = vpack.c.b16 %v3297, %v3289
    %v3994 = vpack.c.b16 %v3298, %v3290
    %v3995 = vpack.c.b16 %v3299, %v3291
    %v3996 = vpack.c.b16 %v3300, %v3292
    %v3997 = vpack.c.b16 %v3301, %v3293
    %v3998 = vpack.c.b16 %v3302, %v3294
    %v3999 = vpack.c.b16 %v3303, %v3295
    %v4000 = vpack.c.b16 %v3304, %v3296
    %v4001 = vpack.c.b16 %v3313, %v3305
    %v4002 = vpack.c.b16 %v3314, %v3306
    %v4003 = vpack.c.b16 %v3315, %v3307
    %v4004 = vpack.c.b16 %v3316, %v3308
    %v4005 = vpack.c.b16 %v3317, %v3309
    %v4006 = vpack.c.b16 %v3318, %v3310
    %v4007 = vpack.c.b16 %v3319, %v3311
    %v4008 = vpack.c.b16 %v3320, %v3312
    %v4009 = vpack.c.b16 %v3329, %v3321
    %v4010 = vpack.c.b16 %v3330, %v3322
    %v4011 = vpack.c.b16 %v3331, %v3323
    %v4012 = vpack.c.b16 %v3332, %v3324
    %v4013 = vpack.c.b16 %v3333, %v3325
    %v4014 = vpack.c.b16 %v3334, %v3326
    %v4015 = vpack.c.b16 %v3335, %v3327
    %v4016 = vpack.c.b16 %v3336, %v3328
    %v4017 = vpack.c.b16 %v3345, %v3337
    %v4018 = vpack.c.b16 %v3346, %v3338
    %v4019 = vpack.c.b16 %v3347, %v3339
    %v4020 = vpack.c.b16 %v3348, %v3340
    %v4021 = vpack.c.b16 %v3349, %v3341
    %v4022 = vpack.c.b16 %v3350, %v3342
    %v4023 = vpack.c.b16 %v3351, %v3343
    %v4024 = vpack.c.b16 %v3352, %v3344
    %v4025 = vpack.c.b16 %v3361, %v3353
    %v4026 = vpack.c.b16 %v3362, %v3354
    %v4027 = vpack.c.b16 %v3363, %v3355
    %v4028 = vpack.c.b16 %v3364, %v3356
    %v4029 = vpack.c.b16 %v3365, %v3357
    %v4030 = vpack.c.b16 %v3366, %v3358
    %v4031 = vpack.c.b16 %v3367, %v3359
    %v4032 = vpack.c.b16 %v3368, %v3360
    %v4033 = vpack.c.b16 %v3377, %v3369
    %v4034 = vpack.c.b16 %v3378, %v3370
    %v4035 = vpack.c.b16 %v3379, %v3371
    %v4036 = vpack.c.b16 %v3380, %v3372
    %v4037 = vpack.c.b16 %v3381, %v3373
    %v4038 = vpack.c.b16 %v3382, %v3374
    %v4039 = vpack.c.b16 %v3383, %v3375
    %v4040 = vpack.c.b16 %v3384, %v3376
    %v4041 = vpack.c.b16 %v3393, %v3385
    %v4042 = vpack.c.b16 %v3394, %v3386
    %v4043 = vpack.c.b16 %v3395, %v3387
    %v4044 = vpack.c.b16 %v3396, %v3388
    %v4045 = vpack.c.b16 %v3397, %v3389
    %v4046 = vpack.c.b16 %v3398, %v3390
    %v4047 = vpack.c.b16 %v3399, %v3391
    %v4048 = vpack.c.b16 %v3400, %v3392
    %v4049 = vpack.c.b16 %v3409, %v3401
    %v4050 = vpack.c.b16 %v3410, %v3402
    %v4051 = vpack.c.b16 %v3411, %v3403
    %v4052 = vpack.c.b16 %v3412, %v3404
    %v4053 = vpack.c.b16 %v3413, %v3405
    %v4054 = vpack.c.b16 %v3414, %v3406
    %v4055 = vpack.c.b16 %v3415, %v3407
    %v4056 = vpack.c.b16 %v3416, %v3408
    %4697 = vmatpush.bf16.msra.mxu0 %v3473
    %4698 = vmatpush.bf16.msra.mxu0 %v3465
    %4699 = vmatpush.bf16.msra.mxu0 %v3457
    %4700 = vmatpush.bf16.msra.mxu0 %v3449
    %4701 = vmatpush.bf16.msra.mxu0 %v3441
    %4702 = vmatpush.bf16.msra.mxu0 %v3433
    %4703 = vmatpush.bf16.msra.mxu0 %v3425
    %4704 = vmatpush.bf16.msra.mxu0 %v3417
    %4705 = vmatmul.bf16.gmra.mxu0 %v829
    %v4706 = vpop.f32.mrf.mxu0
    %v4707 = vadd.f32 %v1481, %v4706
    %v4708 = vpop.f32.mrf.mxu0
    %4709 = vdwg.mxu0
    %4710 = vmatpush.bf16.msra.mxu0 %v3537
    %4711 = vmatpush.bf16.msra.mxu0 %v3529
    %4712 = vmatpush.bf16.msra.mxu0 %v3521
    %4713 = vmatpush.bf16.msra.mxu0 %v3513
    %4714 = vmatpush.bf16.msra.mxu0 %v3505
    %4715 = vmatpush.bf16.msra.mxu0 %v3497
    %4716 = vmatpush.bf16.msra.mxu0 %v3489
    %4717 = vmatpush.bf16.msra.mxu0 %v3481
    %4718 = vmatmul.bf16.gmra.mxu0 %v830
    %v4719 = vpop.f32.mrf.mxu0
    %v4720 = vadd.f32 %v4707, %v4719
    %v4721 = vpop.f32.mrf.mxu0
    %4722 = vdwg.mxu0
    %4723 = vmatpush.bf16.msra.mxu0 %v3601
    %4724 = vmatpush.bf16.msra.mxu0 %v3593
    %4725 = vmatpush.bf16.msra.mxu0 %v3585
    %4726 = vmatpush.bf16.msra.mxu0 %v3577
    %4727 = vmatpush.bf16.msra.mxu0 %v3569
    %4728 = vmatpush.bf16.msra.mxu0 %v3561
    %4729 = vmatpush.bf16.msra.mxu0 %v3553
    %4730 = vmatpush.bf16.msra.mxu0 %v3545
    %4731 = vmatmul.bf16.gmra.mxu0 %v831
    %v4732 = vpop.f32.mrf.mxu0
    %v4733 = vadd.f32 %v4720, %v4732
    %v4734 = vpop.f32.mrf.mxu0
    %4735 = vdwg.mxu0
    %4736 = vmatpush.bf16.msra.mxu0 %v3665
    %4737 = vmatpush.bf16.msra.mxu0 %v3657
    %4738 = vmatpush.bf16.msra.mxu0 %v3649
    %4739 = vmatpush.bf16.msra.mxu0 %v3641
    %4740 = vmatpush.bf16.msra.mxu0 %v3633
    %4741 = vmatpush.bf16.msra.mxu0 %v3625
    %4742 = vmatpush.bf16.msra.mxu0 %v3617
    %4743 = vmatpush.bf16.msra.mxu0 %v3609
    %4744 = vmatmul.bf16.gmra.mxu0 %v832
    %v4745 = vpop.f32.mrf.mxu0
    %v4746 = vadd.f32 %v4733, %v4745
    %v4747 = vpop.f32.mrf.mxu0
    %4748 = vdwg.mxu0
    %4749 = vmatpush.bf16.msra.mxu0 %v3729
    %4750 = vmatpush.bf16.msra.mxu0 %v3721
    %4751 = vmatpush.bf16.msra.mxu0 %v3713
    %4752 = vmatpush.bf16.msra.mxu0 %v3705
    %4753 = vmatpush.bf16.msra.mxu0 %v3697
    %4754 = vmatpush.bf16.msra.mxu0 %v3689
    %4755 = vmatpush.bf16.msra.mxu0 %v3681
    %4756 = vmatpush.bf16.msra.mxu0 %v3673
    %4757 = vmatmul.bf16.gmra.mxu0 %v833
    %v4758 = vpop.f32.mrf.mxu0
    %v4759 = vadd.f32 %v4746, %v4758
    %v4760 = vpop.f32.mrf.mxu0
    %4761 = vdwg.mxu0
    %4762 = vmatpush.bf16.msra.mxu0 %v3793
    %4763 = vmatpush.bf16.msra.mxu0 %v3785
    %4764 = vmatpush.bf16.msra.mxu0 %v3777
    %4765 = vmatpush.bf16.msra.mxu0 %v3769
    %4766 = vmatpush.bf16.msra.mxu0 %v3761
    %4767 = vmatpush.bf16.msra.mxu0 %v3753
    %4768 = vmatpush.bf16.msra.mxu0 %v3745
    %4769 = vmatpush.bf16.msra.mxu0 %v3737
    %4770 = vmatmul.bf16.gmra.mxu0 %v834
    %v4771 = vpop.f32.mrf.mxu0
    %v4772 = vadd.f32 %v4759, %v4771
    %v4773 = vpop.f32.mrf.mxu0
    %4774 = vdwg.mxu0
    %4775 = vmatpush.bf16.msra.mxu0 %v3857
    %4776 = vmatpush.bf16.msra.mxu0 %v3849
    %4777 = vmatpush.bf16.msra.mxu0 %v3841
    %4778 = vmatpush.bf16.msra.mxu0 %v3833
    %4779 = vmatpush.bf16.msra.mxu0 %v3825
    %4780 = vmatpush.bf16.msra.mxu0 %v3817
    %4781 = vmatpush.bf16.msra.mxu0 %v3809
    %4782 = vmatpush.bf16.msra.mxu0 %v3801
    %4783 = vmatmul.bf16.gmra.mxu0 %v835
    %v4784 = vpop.f32.mrf.mxu0
    %v4785 = vadd.f32 %v4772, %v4784
    %v4786 = vpop.f32.mrf.mxu0
    %4787 = vdwg.mxu0
    %4788 = vmatpush.bf16.msra.mxu0 %v3921
    %4789 = vmatpush.bf16.msra.mxu0 %v3913
    %4790 = vmatpush.bf16.msra.mxu0 %v3905
    %4791 = vmatpush.bf16.msra.mxu0 %v3897
    %4792 = vmatpush.bf16.msra.mxu0 %v3889
    %4793 = vmatpush.bf16.msra.mxu0 %v3881
    %4794 = vmatpush.bf16.msra.mxu0 %v3873
    %4795 = vmatpush.bf16.msra.mxu0 %v3865
    %4796 = vmatmul.bf16.gmra.mxu0 %v836
    %v4797 = vpop.f32.mrf.mxu0
    %v4798 = vadd.f32 %v4785, %v4797
    %v4799 = vpop.f32.mrf.mxu0
    %4800 = vdwg.mxu0
    %4801 = vmatpush.bf16.msra.mxu0 %v3985
    %4802 = vmatpush.bf16.msra.mxu0 %v3977
    %4803 = vmatpush.bf16.msra.mxu0 %v3969
    %4804 = vmatpush.bf16.msra.mxu0 %v3961
    %4805 = vmatpush.bf16.msra.mxu0 %v3953
    %4806 = vmatpush.bf16.msra.mxu0 %v3945
    %4807 = vmatpush.bf16.msra.mxu0 %v3937
    %4808 = vmatpush.bf16.msra.mxu0 %v3929
    %4809 = vmatmul.bf16.gmra.mxu0 %v837
    %v4810 = vpop.f32.mrf.mxu0
    %v4811 = vadd.f32 %v4798, %v4810
    %v4812 = vpop.f32.mrf.mxu0
    %4813 = vdwg.mxu0
    %4814 = vmatpush.bf16.msra.mxu0 %v4049
    %4815 = vmatpush.bf16.msra.mxu0 %v4041
    %4816 = vmatpush.bf16.msra.mxu0 %v4033
    %4817 = vmatpush.bf16.msra.mxu0 %v4025
    %4818 = vmatpush.bf16.msra.mxu0 %v4017
    %4819 = vmatpush.bf16.msra.mxu0 %v4009
    %4820 = vmatpush.bf16.msra.mxu0 %v4001
    %4821 = vmatpush.bf16.msra.mxu0 %v3993
    %4822 = vmatmul.bf16.gmra.mxu0 %v838
    %v4823 = vpop.f32.mrf.mxu0
    %v4824 = vadd.f32 %v4811, %v4823
    %v4825 = vpop.f32.mrf.mxu0
    %4826 = vdwg.mxu0
    %4827 = vmatpush.bf16.msra.mxu0 %v3474
    %4828 = vmatpush.bf16.msra.mxu0 %v3466
    %4829 = vmatpush.bf16.msra.mxu0 %v3458
    %4830 = vmatpush.bf16.msra.mxu0 %v3450
    %4831 = vmatpush.bf16.msra.mxu0 %v3442
    %4832 = vmatpush.bf16.msra.mxu0 %v3434
    %4833 = vmatpush.bf16.msra.mxu0 %v3426
    %4834 = vmatpush.bf16.msra.mxu0 %v3418
    %4835 = vmatmul.bf16.gmra.mxu0 %v829
    %v4836 = vpop.f32.mrf.mxu0
    %v4837 = vadd.f32 %v1482, %v4836
    %v4838 = vpop.f32.mrf.mxu0
    %4839 = vdwg.mxu0
    %4840 = vmatpush.bf16.msra.mxu0 %v3538
    %4841 = vmatpush.bf16.msra.mxu0 %v3530
    %4842 = vmatpush.bf16.msra.mxu0 %v3522
    %4843 = vmatpush.bf16.msra.mxu0 %v3514
    %4844 = vmatpush.bf16.msra.mxu0 %v3506
    %4845 = vmatpush.bf16.msra.mxu0 %v3498
    %4846 = vmatpush.bf16.msra.mxu0 %v3490
    %4847 = vmatpush.bf16.msra.mxu0 %v3482
    %4848 = vmatmul.bf16.gmra.mxu0 %v830
    %v4849 = vpop.f32.mrf.mxu0
    %v4850 = vadd.f32 %v4837, %v4849
    %v4851 = vpop.f32.mrf.mxu0
    %4852 = vdwg.mxu0
    %4853 = vmatpush.bf16.msra.mxu0 %v3602
    %4854 = vmatpush.bf16.msra.mxu0 %v3594
    %4855 = vmatpush.bf16.msra.mxu0 %v3586
    %4856 = vmatpush.bf16.msra.mxu0 %v3578
    %4857 = vmatpush.bf16.msra.mxu0 %v3570
    %4858 = vmatpush.bf16.msra.mxu0 %v3562
    %4859 = vmatpush.bf16.msra.mxu0 %v3554
    %4860 = vmatpush.bf16.msra.mxu0 %v3546
    %4861 = vmatmul.bf16.gmra.mxu0 %v831
    %v4862 = vpop.f32.mrf.mxu0
    %v4863 = vadd.f32 %v4850, %v4862
    %v4864 = vpop.f32.mrf.mxu0
    %4865 = vdwg.mxu0
    %4866 = vmatpush.bf16.msra.mxu0 %v3666
    %4867 = vmatpush.bf16.msra.mxu0 %v3658
    %4868 = vmatpush.bf16.msra.mxu0 %v3650
    %4869 = vmatpush.bf16.msra.mxu0 %v3642
    %4870 = vmatpush.bf16.msra.mxu0 %v3634
    %4871 = vmatpush.bf16.msra.mxu0 %v3626
    %4872 = vmatpush.bf16.msra.mxu0 %v3618
    %4873 = vmatpush.bf16.msra.mxu0 %v3610
    %4874 = vmatmul.bf16.gmra.mxu0 %v832
    %v4875 = vpop.f32.mrf.mxu0
    %v4876 = vadd.f32 %v4863, %v4875
    %v4877 = vpop.f32.mrf.mxu0
    %4878 = vdwg.mxu0
    %4879 = vmatpush.bf16.msra.mxu0 %v3730
    %4880 = vmatpush.bf16.msra.mxu0 %v3722
    %4881 = vmatpush.bf16.msra.mxu0 %v3714
    %4882 = vmatpush.bf16.msra.mxu0 %v3706
    %4883 = vmatpush.bf16.msra.mxu0 %v3698
    %4884 = vmatpush.bf16.msra.mxu0 %v3690
    %4885 = vmatpush.bf16.msra.mxu0 %v3682
    %4886 = vmatpush.bf16.msra.mxu0 %v3674
    %4887 = vmatmul.bf16.gmra.mxu0 %v833
    %v4888 = vpop.f32.mrf.mxu0
    %v4889 = vadd.f32 %v4876, %v4888
    %v4890 = vpop.f32.mrf.mxu0
    %4891 = vdwg.mxu0
    %4892 = vmatpush.bf16.msra.mxu0 %v3794
    %4893 = vmatpush.bf16.msra.mxu0 %v3786
    %4894 = vmatpush.bf16.msra.mxu0 %v3778
    %4895 = vmatpush.bf16.msra.mxu0 %v3770
    %4896 = vmatpush.bf16.msra.mxu0 %v3762
    %4897 = vmatpush.bf16.msra.mxu0 %v3754
    %4898 = vmatpush.bf16.msra.mxu0 %v3746
    %4899 = vmatpush.bf16.msra.mxu0 %v3738
    %4900 = vmatmul.bf16.gmra.mxu0 %v834
    %v4901 = vpop.f32.mrf.mxu0
    %v4902 = vadd.f32 %v4889, %v4901
    %v4903 = vpop.f32.mrf.mxu0
    %4904 = vdwg.mxu0
    %4905 = vmatpush.bf16.msra.mxu0 %v3858
    %4906 = vmatpush.bf16.msra.mxu0 %v3850
    %4907 = vmatpush.bf16.msra.mxu0 %v3842
    %4908 = vmatpush.bf16.msra.mxu0 %v3834
    %4909 = vmatpush.bf16.msra.mxu0 %v3826
    %4910 = vmatpush.bf16.msra.mxu0 %v3818
    %4911 = vmatpush.bf16.msra.mxu0 %v3810
    %4912 = vmatpush.bf16.msra.mxu0 %v3802
    %4913 = vmatmul.bf16.gmra.mxu0 %v835
    %v4914 = vpop.f32.mrf.mxu0
    %v4915 = vadd.f32 %v4902, %v4914
    %v4916 = vpop.f32.mrf.mxu0
    %4917 = vdwg.mxu0
    %4918 = vmatpush.bf16.msra.mxu0 %v3922
    %4919 = vmatpush.bf16.msra.mxu0 %v3914
    %4920 = vmatpush.bf16.msra.mxu0 %v3906
    %4921 = vmatpush.bf16.msra.mxu0 %v3898
    %4922 = vmatpush.bf16.msra.mxu0 %v3890
    %4923 = vmatpush.bf16.msra.mxu0 %v3882
    %4924 = vmatpush.bf16.msra.mxu0 %v3874
    %4925 = vmatpush.bf16.msra.mxu0 %v3866
    %4926 = vmatmul.bf16.gmra.mxu0 %v836
    %v4927 = vpop.f32.mrf.mxu0
    %v4928 = vadd.f32 %v4915, %v4927
    %v4929 = vpop.f32.mrf.mxu0
    %4930 = vdwg.mxu0
    %4931 = vmatpush.bf16.msra.mxu0 %v3986
    %4932 = vmatpush.bf16.msra.mxu0 %v3978
    %4933 = vmatpush.bf16.msra.mxu0 %v3970
    %4934 = vmatpush.bf16.msra.mxu0 %v3962
    %4935 = vmatpush.bf16.msra.mxu0 %v3954
    %4936 = vmatpush.bf16.msra.mxu0 %v3946
    %4937 = vmatpush.bf16.msra.mxu0 %v3938
    %4938 = vmatpush.bf16.msra.mxu0 %v3930
    %4939 = vmatmul.bf16.gmra.mxu0 %v837
    %v4940 = vpop.f32.mrf.mxu0
    %v4941 = vadd.f32 %v4928, %v4940
    %v4942 = vpop.f32.mrf.mxu0
    %4943 = vdwg.mxu0
    %4944 = vmatpush.bf16.msra.mxu0 %v4050
    %4945 = vmatpush.bf16.msra.mxu0 %v4042
    %4946 = vmatpush.bf16.msra.mxu0 %v4034
    %4947 = vmatpush.bf16.msra.mxu0 %v4026
    %4948 = vmatpush.bf16.msra.mxu0 %v4018
    %4949 = vmatpush.bf16.msra.mxu0 %v4010
    %4950 = vmatpush.bf16.msra.mxu0 %v4002
    %4951 = vmatpush.bf16.msra.mxu0 %v3994
    %4952 = vmatmul.bf16.gmra.mxu0 %v838
    %v4953 = vpop.f32.mrf.mxu0
    %v4954 = vadd.f32 %v4941, %v4953
    %v4955 = vpop.f32.mrf.mxu0
    %4956 = vdwg.mxu0
    %4957 = vmatpush.bf16.msra.mxu0 %v3475
    %4958 = vmatpush.bf16.msra.mxu0 %v3467
    %4959 = vmatpush.bf16.msra.mxu0 %v3459
    %4960 = vmatpush.bf16.msra.mxu0 %v3451
    %4961 = vmatpush.bf16.msra.mxu0 %v3443
    %4962 = vmatpush.bf16.msra.mxu0 %v3435
    %4963 = vmatpush.bf16.msra.mxu0 %v3427
    %4964 = vmatpush.bf16.msra.mxu0 %v3419
    %4965 = vmatmul.bf16.gmra.mxu0 %v829
    %v4966 = vpop.f32.mrf.mxu0
    %v4967 = vadd.f32 %v1483, %v4966
    %v4968 = vpop.f32.mrf.mxu0
    %4969 = vdwg.mxu0
    %4970 = vmatpush.bf16.msra.mxu0 %v3539
    %4971 = vmatpush.bf16.msra.mxu0 %v3531
    %4972 = vmatpush.bf16.msra.mxu0 %v3523
    %4973 = vmatpush.bf16.msra.mxu0 %v3515
    %4974 = vmatpush.bf16.msra.mxu0 %v3507
    %4975 = vmatpush.bf16.msra.mxu0 %v3499
    %4976 = vmatpush.bf16.msra.mxu0 %v3491
    %4977 = vmatpush.bf16.msra.mxu0 %v3483
    %4978 = vmatmul.bf16.gmra.mxu0 %v830
    %v4979 = vpop.f32.mrf.mxu0
    %v4980 = vadd.f32 %v4967, %v4979
    %v4981 = vpop.f32.mrf.mxu0
    %4982 = vdwg.mxu0
    %4983 = vmatpush.bf16.msra.mxu0 %v3603
    %4984 = vmatpush.bf16.msra.mxu0 %v3595
    %4985 = vmatpush.bf16.msra.mxu0 %v3587
    %4986 = vmatpush.bf16.msra.mxu0 %v3579
    %4987 = vmatpush.bf16.msra.mxu0 %v3571
    %4988 = vmatpush.bf16.msra.mxu0 %v3563
    %4989 = vmatpush.bf16.msra.mxu0 %v3555
    %4990 = vmatpush.bf16.msra.mxu0 %v3547
    %4991 = vmatmul.bf16.gmra.mxu0 %v831
    %v4992 = vpop.f32.mrf.mxu0
    %v4993 = vadd.f32 %v4980, %v4992
    %v4994 = vpop.f32.mrf.mxu0
    %4995 = vdwg.mxu0
    %4996 = vmatpush.bf16.msra.mxu0 %v3667
    %4997 = vmatpush.bf16.msra.mxu0 %v3659
    %4998 = vmatpush.bf16.msra.mxu0 %v3651
    %4999 = vmatpush.bf16.msra.mxu0 %v3643
    %5000 = vmatpush.bf16.msra.mxu0 %v3635
    %5001 = vmatpush.bf16.msra.mxu0 %v3627
    %5002 = vmatpush.bf16.msra.mxu0 %v3619
    %5003 = vmatpush.bf16.msra.mxu0 %v3611
    %5004 = vmatmul.bf16.gmra.mxu0 %v832
    %v5005 = vpop.f32.mrf.mxu0
    %v5006 = vadd.f32 %v4993, %v5005
    %v5007 = vpop.f32.mrf.mxu0
    %5008 = vdwg.mxu0
    %5009 = vmatpush.bf16.msra.mxu0 %v3731
    %5010 = vmatpush.bf16.msra.mxu0 %v3723
    %5011 = vmatpush.bf16.msra.mxu0 %v3715
    %5012 = vmatpush.bf16.msra.mxu0 %v3707
    %5013 = vmatpush.bf16.msra.mxu0 %v3699
    %5014 = vmatpush.bf16.msra.mxu0 %v3691
    %5015 = vmatpush.bf16.msra.mxu0 %v3683
    %5016 = vmatpush.bf16.msra.mxu0 %v3675
    %5017 = vmatmul.bf16.gmra.mxu0 %v833
    %v5018 = vpop.f32.mrf.mxu0
    %v5019 = vadd.f32 %v5006, %v5018
    %v5020 = vpop.f32.mrf.mxu0
    %5021 = vdwg.mxu0
    %5022 = vmatpush.bf16.msra.mxu0 %v3795
    %5023 = vmatpush.bf16.msra.mxu0 %v3787
    %5024 = vmatpush.bf16.msra.mxu0 %v3779
    %5025 = vmatpush.bf16.msra.mxu0 %v3771
    %5026 = vmatpush.bf16.msra.mxu0 %v3763
    %5027 = vmatpush.bf16.msra.mxu0 %v3755
    %5028 = vmatpush.bf16.msra.mxu0 %v3747
    %5029 = vmatpush.bf16.msra.mxu0 %v3739
    %5030 = vmatmul.bf16.gmra.mxu0 %v834
    %v5031 = vpop.f32.mrf.mxu0
    %v5032 = vadd.f32 %v5019, %v5031
    %v5033 = vpop.f32.mrf.mxu0
    %5034 = vdwg.mxu0
    %5035 = vmatpush.bf16.msra.mxu0 %v3859
    %5036 = vmatpush.bf16.msra.mxu0 %v3851
    %5037 = vmatpush.bf16.msra.mxu0 %v3843
    %5038 = vmatpush.bf16.msra.mxu0 %v3835
    %5039 = vmatpush.bf16.msra.mxu0 %v3827
    %5040 = vmatpush.bf16.msra.mxu0 %v3819
    %5041 = vmatpush.bf16.msra.mxu0 %v3811
    %5042 = vmatpush.bf16.msra.mxu0 %v3803
    %5043 = vmatmul.bf16.gmra.mxu0 %v835
    %v5044 = vpop.f32.mrf.mxu0
    %v5045 = vadd.f32 %v5032, %v5044
    %v5046 = vpop.f32.mrf.mxu0
    %5047 = vdwg.mxu0
    %5048 = vmatpush.bf16.msra.mxu0 %v3923
    %5049 = vmatpush.bf16.msra.mxu0 %v3915
    %5050 = vmatpush.bf16.msra.mxu0 %v3907
    %5051 = vmatpush.bf16.msra.mxu0 %v3899
    %5052 = vmatpush.bf16.msra.mxu0 %v3891
    %5053 = vmatpush.bf16.msra.mxu0 %v3883
    %5054 = vmatpush.bf16.msra.mxu0 %v3875
    %5055 = vmatpush.bf16.msra.mxu0 %v3867
    %5056 = vmatmul.bf16.gmra.mxu0 %v836
    %v5057 = vpop.f32.mrf.mxu0
    %v5058 = vadd.f32 %v5045, %v5057
    %v5059 = vpop.f32.mrf.mxu0
    %5060 = vdwg.mxu0
    %5061 = vmatpush.bf16.msra.mxu0 %v3987
    %5062 = vmatpush.bf16.msra.mxu0 %v3979
    %5063 = vmatpush.bf16.msra.mxu0 %v3971
    %5064 = vmatpush.bf16.msra.mxu0 %v3963
    %5065 = vmatpush.bf16.msra.mxu0 %v3955
    %5066 = vmatpush.bf16.msra.mxu0 %v3947
    %5067 = vmatpush.bf16.msra.mxu0 %v3939
    %5068 = vmatpush.bf16.msra.mxu0 %v3931
    %5069 = vmatmul.bf16.gmra.mxu0 %v837
    %v5070 = vpop.f32.mrf.mxu0
    %v5071 = vadd.f32 %v5058, %v5070
    %v5072 = vpop.f32.mrf.mxu0
    %5073 = vdwg.mxu0
    %5074 = vmatpush.bf16.msra.mxu0 %v4051
    %5075 = vmatpush.bf16.msra.mxu0 %v4043
    %5076 = vmatpush.bf16.msra.mxu0 %v4035
    %5077 = vmatpush.bf16.msra.mxu0 %v4027
    %5078 = vmatpush.bf16.msra.mxu0 %v4019
    %5079 = vmatpush.bf16.msra.mxu0 %v4011
    %5080 = vmatpush.bf16.msra.mxu0 %v4003
    %5081 = vmatpush.bf16.msra.mxu0 %v3995
    %5082 = vmatmul.bf16.gmra.mxu0 %v838
    %v5083 = vpop.f32.mrf.mxu0
    %v5084 = vadd.f32 %v5071, %v5083
    %v5085 = vpop.f32.mrf.mxu0
    %5086 = vdwg.mxu0
    %5087 = vmatpush.bf16.msra.mxu0 %v3476
    %5088 = vmatpush.bf16.msra.mxu0 %v3468
    %5089 = vmatpush.bf16.msra.mxu0 %v3460
    %5090 = vmatpush.bf16.msra.mxu0 %v3452
    %5091 = vmatpush.bf16.msra.mxu0 %v3444
    %5092 = vmatpush.bf16.msra.mxu0 %v3436
    %5093 = vmatpush.bf16.msra.mxu0 %v3428
    %5094 = vmatpush.bf16.msra.mxu0 %v3420
    %5095 = vmatmul.bf16.gmra.mxu0 %v829
    %v5096 = vpop.f32.mrf.mxu0
    %v5097 = vadd.f32 %v1484, %v5096
    %v5098 = vpop.f32.mrf.mxu0
    %5099 = vdwg.mxu0
    %5100 = vmatpush.bf16.msra.mxu0 %v3540
    %5101 = vmatpush.bf16.msra.mxu0 %v3532
    %5102 = vmatpush.bf16.msra.mxu0 %v3524
    %5103 = vmatpush.bf16.msra.mxu0 %v3516
    %5104 = vmatpush.bf16.msra.mxu0 %v3508
    %5105 = vmatpush.bf16.msra.mxu0 %v3500
    %5106 = vmatpush.bf16.msra.mxu0 %v3492
    %5107 = vmatpush.bf16.msra.mxu0 %v3484
    %5108 = vmatmul.bf16.gmra.mxu0 %v830
    %v5109 = vpop.f32.mrf.mxu0
    %v5110 = vadd.f32 %v5097, %v5109
    %v5111 = vpop.f32.mrf.mxu0
    %5112 = vdwg.mxu0
    %5113 = vmatpush.bf16.msra.mxu0 %v3604
    %5114 = vmatpush.bf16.msra.mxu0 %v3596
    %5115 = vmatpush.bf16.msra.mxu0 %v3588
    %5116 = vmatpush.bf16.msra.mxu0 %v3580
    %5117 = vmatpush.bf16.msra.mxu0 %v3572
    %5118 = vmatpush.bf16.msra.mxu0 %v3564
    %5119 = vmatpush.bf16.msra.mxu0 %v3556
    %5120 = vmatpush.bf16.msra.mxu0 %v3548
    %5121 = vmatmul.bf16.gmra.mxu0 %v831
    %v5122 = vpop.f32.mrf.mxu0
    %v5123 = vadd.f32 %v5110, %v5122
    %v5124 = vpop.f32.mrf.mxu0
    %5125 = vdwg.mxu0
    %5126 = vmatpush.bf16.msra.mxu0 %v3668
    %5127 = vmatpush.bf16.msra.mxu0 %v3660
    %5128 = vmatpush.bf16.msra.mxu0 %v3652
    %5129 = vmatpush.bf16.msra.mxu0 %v3644
    %5130 = vmatpush.bf16.msra.mxu0 %v3636
    %5131 = vmatpush.bf16.msra.mxu0 %v3628
    %5132 = vmatpush.bf16.msra.mxu0 %v3620
    %5133 = vmatpush.bf16.msra.mxu0 %v3612
    %5134 = vmatmul.bf16.gmra.mxu0 %v832
    %v5135 = vpop.f32.mrf.mxu0
    %v5136 = vadd.f32 %v5123, %v5135
    %v5137 = vpop.f32.mrf.mxu0
    %5138 = vdwg.mxu0
    %5139 = vmatpush.bf16.msra.mxu0 %v3732
    %5140 = vmatpush.bf16.msra.mxu0 %v3724
    %5141 = vmatpush.bf16.msra.mxu0 %v3716
    %5142 = vmatpush.bf16.msra.mxu0 %v3708
    %5143 = vmatpush.bf16.msra.mxu0 %v3700
    %5144 = vmatpush.bf16.msra.mxu0 %v3692
    %5145 = vmatpush.bf16.msra.mxu0 %v3684
    %5146 = vmatpush.bf16.msra.mxu0 %v3676
    %5147 = vmatmul.bf16.gmra.mxu0 %v833
    %v5148 = vpop.f32.mrf.mxu0
    %v5149 = vadd.f32 %v5136, %v5148
    %v5150 = vpop.f32.mrf.mxu0
    %5151 = vdwg.mxu0
    %5152 = vmatpush.bf16.msra.mxu0 %v3796
    %5153 = vmatpush.bf16.msra.mxu0 %v3788
    %5154 = vmatpush.bf16.msra.mxu0 %v3780
    %5155 = vmatpush.bf16.msra.mxu0 %v3772
    %5156 = vmatpush.bf16.msra.mxu0 %v3764
    %5157 = vmatpush.bf16.msra.mxu0 %v3756
    %5158 = vmatpush.bf16.msra.mxu0 %v3748
    %5159 = vmatpush.bf16.msra.mxu0 %v3740
    %5160 = vmatmul.bf16.gmra.mxu0 %v834
    %v5161 = vpop.f32.mrf.mxu0
    %v5162 = vadd.f32 %v5149, %v5161
    %v5163 = vpop.f32.mrf.mxu0
    %5164 = vdwg.mxu0
    %5165 = vmatpush.bf16.msra.mxu0 %v3860
    %5166 = vmatpush.bf16.msra.mxu0 %v3852
    %5167 = vmatpush.bf16.msra.mxu0 %v3844
    %5168 = vmatpush.bf16.msra.mxu0 %v3836
    %5169 = vmatpush.bf16.msra.mxu0 %v3828
    %5170 = vmatpush.bf16.msra.mxu0 %v3820
    %5171 = vmatpush.bf16.msra.mxu0 %v3812
    %5172 = vmatpush.bf16.msra.mxu0 %v3804
    %5173 = vmatmul.bf16.gmra.mxu0 %v835
    %v5174 = vpop.f32.mrf.mxu0
    %v5175 = vadd.f32 %v5162, %v5174
    %v5176 = vpop.f32.mrf.mxu0
    %5177 = vdwg.mxu0
    %5178 = vmatpush.bf16.msra.mxu0 %v3924
    %5179 = vmatpush.bf16.msra.mxu0 %v3916
    %5180 = vmatpush.bf16.msra.mxu0 %v3908
    %5181 = vmatpush.bf16.msra.mxu0 %v3900
    %5182 = vmatpush.bf16.msra.mxu0 %v3892
    %5183 = vmatpush.bf16.msra.mxu0 %v3884
    %5184 = vmatpush.bf16.msra.mxu0 %v3876
    %5185 = vmatpush.bf16.msra.mxu0 %v3868
    %5186 = vmatmul.bf16.gmra.mxu0 %v836
    %v5187 = vpop.f32.mrf.mxu0
    %v5188 = vadd.f32 %v5175, %v5187
    %v5189 = vpop.f32.mrf.mxu0
    %5190 = vdwg.mxu0
    %5191 = vmatpush.bf16.msra.mxu0 %v3988
    %5192 = vmatpush.bf16.msra.mxu0 %v3980
    %5193 = vmatpush.bf16.msra.mxu0 %v3972
    %5194 = vmatpush.bf16.msra.mxu0 %v3964
    %5195 = vmatpush.bf16.msra.mxu0 %v3956
    %5196 = vmatpush.bf16.msra.mxu0 %v3948
    %5197 = vmatpush.bf16.msra.mxu0 %v3940
    %5198 = vmatpush.bf16.msra.mxu0 %v3932
    %5199 = vmatmul.bf16.gmra.mxu0 %v837
    %v5200 = vpop.f32.mrf.mxu0
    %v5201 = vadd.f32 %v5188, %v5200
    %v5202 = vpop.f32.mrf.mxu0
    %5203 = vdwg.mxu0
    %5204 = vmatpush.bf16.msra.mxu0 %v4052
    %5205 = vmatpush.bf16.msra.mxu0 %v4044
    %5206 = vmatpush.bf16.msra.mxu0 %v4036
    %5207 = vmatpush.bf16.msra.mxu0 %v4028
    %5208 = vmatpush.bf16.msra.mxu0 %v4020
    %5209 = vmatpush.bf16.msra.mxu0 %v4012
    %5210 = vmatpush.bf16.msra.mxu0 %v4004
    %5211 = vmatpush.bf16.msra.mxu0 %v3996
    %5212 = vmatmul.bf16.gmra.mxu0 %v838
    %v5213 = vpop.f32.mrf.mxu0
    %v5214 = vadd.f32 %v5201, %v5213
    %v5215 = vpop.f32.mrf.mxu0
    %5216 = vdwg.mxu0
    %5217 = vmatpush.bf16.msra.mxu0 %v3477
    %5218 = vmatpush.bf16.msra.mxu0 %v3469
    %5219 = vmatpush.bf16.msra.mxu0 %v3461
    %5220 = vmatpush.bf16.msra.mxu0 %v3453
    %5221 = vmatpush.bf16.msra.mxu0 %v3445
    %5222 = vmatpush.bf16.msra.mxu0 %v3437
    %5223 = vmatpush.bf16.msra.mxu0 %v3429
    %5224 = vmatpush.bf16.msra.mxu0 %v3421
    %5225 = vmatmul.bf16.gmra.mxu0 %v829
    %v5226 = vpop.f32.mrf.mxu0
    %v5227 = vadd.f32 %v1485, %v5226
    %v5228 = vpop.f32.mrf.mxu0
    %5229 = vdwg.mxu0
    %5230 = vmatpush.bf16.msra.mxu0 %v3541
    %5231 = vmatpush.bf16.msra.mxu0 %v3533
    %5232 = vmatpush.bf16.msra.mxu0 %v3525
    %5233 = vmatpush.bf16.msra.mxu0 %v3517
    %5234 = vmatpush.bf16.msra.mxu0 %v3509
    %5235 = vmatpush.bf16.msra.mxu0 %v3501
    %5236 = vmatpush.bf16.msra.mxu0 %v3493
    %5237 = vmatpush.bf16.msra.mxu0 %v3485
    %5238 = vmatmul.bf16.gmra.mxu0 %v830
    %v5239 = vpop.f32.mrf.mxu0
    %v5240 = vadd.f32 %v5227, %v5239
    %v5241 = vpop.f32.mrf.mxu0
    %5242 = vdwg.mxu0
    %5243 = vmatpush.bf16.msra.mxu0 %v3605
    %5244 = vmatpush.bf16.msra.mxu0 %v3597
    %5245 = vmatpush.bf16.msra.mxu0 %v3589
    %5246 = vmatpush.bf16.msra.mxu0 %v3581
    %5247 = vmatpush.bf16.msra.mxu0 %v3573
    %5248 = vmatpush.bf16.msra.mxu0 %v3565
    %5249 = vmatpush.bf16.msra.mxu0 %v3557
    %5250 = vmatpush.bf16.msra.mxu0 %v3549
    %5251 = vmatmul.bf16.gmra.mxu0 %v831
    %v5252 = vpop.f32.mrf.mxu0
    %v5253 = vadd.f32 %v5240, %v5252
    %v5254 = vpop.f32.mrf.mxu0
    %5255 = vdwg.mxu0
    %5256 = vmatpush.bf16.msra.mxu0 %v3669
    %5257 = vmatpush.bf16.msra.mxu0 %v3661
    %5258 = vmatpush.bf16.msra.mxu0 %v3653
    %5259 = vmatpush.bf16.msra.mxu0 %v3645
    %5260 = vmatpush.bf16.msra.mxu0 %v3637
    %5261 = vmatpush.bf16.msra.mxu0 %v3629
    %5262 = vmatpush.bf16.msra.mxu0 %v3621
    %5263 = vmatpush.bf16.msra.mxu0 %v3613
    %5264 = vmatmul.bf16.gmra.mxu0 %v832
    %v5265 = vpop.f32.mrf.mxu0
    %v5266 = vadd.f32 %v5253, %v5265
    %v5267 = vpop.f32.mrf.mxu0
    %5268 = vdwg.mxu0
    %5269 = vmatpush.bf16.msra.mxu0 %v3733
    %5270 = vmatpush.bf16.msra.mxu0 %v3725
    %5271 = vmatpush.bf16.msra.mxu0 %v3717
    %5272 = vmatpush.bf16.msra.mxu0 %v3709
    %5273 = vmatpush.bf16.msra.mxu0 %v3701
    %5274 = vmatpush.bf16.msra.mxu0 %v3693
    %5275 = vmatpush.bf16.msra.mxu0 %v3685
    %5276 = vmatpush.bf16.msra.mxu0 %v3677
    %5277 = vmatmul.bf16.gmra.mxu0 %v833
    %v5278 = vpop.f32.mrf.mxu0
    %v5279 = vadd.f32 %v5266, %v5278
    %v5280 = vpop.f32.mrf.mxu0
    %5281 = vdwg.mxu0
    %5282 = vmatpush.bf16.msra.mxu0 %v3797
    %5283 = vmatpush.bf16.msra.mxu0 %v3789
    %5284 = vmatpush.bf16.msra.mxu0 %v3781
    %5285 = vmatpush.bf16.msra.mxu0 %v3773
    %5286 = vmatpush.bf16.msra.mxu0 %v3765
    %5287 = vmatpush.bf16.msra.mxu0 %v3757
    %5288 = vmatpush.bf16.msra.mxu0 %v3749
    %5289 = vmatpush.bf16.msra.mxu0 %v3741
    %5290 = vmatmul.bf16.gmra.mxu0 %v834
    %v5291 = vpop.f32.mrf.mxu0
    %v5292 = vadd.f32 %v5279, %v5291
    %v5293 = vpop.f32.mrf.mxu0
    %5294 = vdwg.mxu0
    %5295 = vmatpush.bf16.msra.mxu0 %v3861
    %5296 = vmatpush.bf16.msra.mxu0 %v3853
    %5297 = vmatpush.bf16.msra.mxu0 %v3845
    %5298 = vmatpush.bf16.msra.mxu0 %v3837
    %5299 = vmatpush.bf16.msra.mxu0 %v3829
    %5300 = vmatpush.bf16.msra.mxu0 %v3821
    %5301 = vmatpush.bf16.msra.mxu0 %v3813
    %5302 = vmatpush.bf16.msra.mxu0 %v3805
    %5303 = vmatmul.bf16.gmra.mxu0 %v835
    %v5304 = vpop.f32.mrf.mxu0
    %v5305 = vadd.f32 %v5292, %v5304
    %v5306 = vpop.f32.mrf.mxu0
    %5307 = vdwg.mxu0
    %5308 = vmatpush.bf16.msra.mxu0 %v3925
    %5309 = vmatpush.bf16.msra.mxu0 %v3917
    %5310 = vmatpush.bf16.msra.mxu0 %v3909
    %5311 = vmatpush.bf16.msra.mxu0 %v3901
    %5312 = vmatpush.bf16.msra.mxu0 %v3893
    %5313 = vmatpush.bf16.msra.mxu0 %v3885
    %5314 = vmatpush.bf16.msra.mxu0 %v3877
    %5315 = vmatpush.bf16.msra.mxu0 %v3869
    %5316 = vmatmul.bf16.gmra.mxu0 %v836
    %v5317 = vpop.f32.mrf.mxu0
    %v5318 = vadd.f32 %v5305, %v5317
    %v5319 = vpop.f32.mrf.mxu0
    %5320 = vdwg.mxu0
    %5321 = vmatpush.bf16.msra.mxu0 %v3989
    %5322 = vmatpush.bf16.msra.mxu0 %v3981
    %5323 = vmatpush.bf16.msra.mxu0 %v3973
    %5324 = vmatpush.bf16.msra.mxu0 %v3965
    %5325 = vmatpush.bf16.msra.mxu0 %v3957
    %5326 = vmatpush.bf16.msra.mxu0 %v3949
    %5327 = vmatpush.bf16.msra.mxu0 %v3941
    %5328 = vmatpush.bf16.msra.mxu0 %v3933
    %5329 = vmatmul.bf16.gmra.mxu0 %v837
    %v5330 = vpop.f32.mrf.mxu0
    %v5331 = vadd.f32 %v5318, %v5330
    %v5332 = vpop.f32.mrf.mxu0
    %5333 = vdwg.mxu0
    %5334 = vmatpush.bf16.msra.mxu0 %v4053
    %5335 = vmatpush.bf16.msra.mxu0 %v4045
    %5336 = vmatpush.bf16.msra.mxu0 %v4037
    %5337 = vmatpush.bf16.msra.mxu0 %v4029
    %5338 = vmatpush.bf16.msra.mxu0 %v4021
    %5339 = vmatpush.bf16.msra.mxu0 %v4013
    %5340 = vmatpush.bf16.msra.mxu0 %v4005
    %5341 = vmatpush.bf16.msra.mxu0 %v3997
    %5342 = vmatmul.bf16.gmra.mxu0 %v838
    %v5343 = vpop.f32.mrf.mxu0
    %v5344 = vadd.f32 %v5331, %v5343
    %v5345 = vpop.f32.mrf.mxu0
    %5346 = vdwg.mxu0
    %5347 = vmatpush.bf16.msra.mxu0 %v3478
    %5348 = vmatpush.bf16.msra.mxu0 %v3470
    %5349 = vmatpush.bf16.msra.mxu0 %v3462
    %5350 = vmatpush.bf16.msra.mxu0 %v3454
    %5351 = vmatpush.bf16.msra.mxu0 %v3446
    %5352 = vmatpush.bf16.msra.mxu0 %v3438
    %5353 = vmatpush.bf16.msra.mxu0 %v3430
    %5354 = vmatpush.bf16.msra.mxu0 %v3422
    %5355 = vmatmul.bf16.gmra.mxu0 %v829
    %v5356 = vpop.f32.mrf.mxu0
    %v5357 = vadd.f32 %v1486, %v5356
    %v5358 = vpop.f32.mrf.mxu0
    %5359 = vdwg.mxu0
    %5360 = vmatpush.bf16.msra.mxu0 %v3542
    %5361 = vmatpush.bf16.msra.mxu0 %v3534
    %5362 = vmatpush.bf16.msra.mxu0 %v3526
    %5363 = vmatpush.bf16.msra.mxu0 %v3518
    %5364 = vmatpush.bf16.msra.mxu0 %v3510
    %5365 = vmatpush.bf16.msra.mxu0 %v3502
    %5366 = vmatpush.bf16.msra.mxu0 %v3494
    %5367 = vmatpush.bf16.msra.mxu0 %v3486
    %5368 = vmatmul.bf16.gmra.mxu0 %v830
    %v5369 = vpop.f32.mrf.mxu0
    %v5370 = vadd.f32 %v5357, %v5369
    %v5371 = vpop.f32.mrf.mxu0
    %5372 = vdwg.mxu0
    %5373 = vmatpush.bf16.msra.mxu0 %v3606
    %5374 = vmatpush.bf16.msra.mxu0 %v3598
    %5375 = vmatpush.bf16.msra.mxu0 %v3590
    %5376 = vmatpush.bf16.msra.mxu0 %v3582
    %5377 = vmatpush.bf16.msra.mxu0 %v3574
    %5378 = vmatpush.bf16.msra.mxu0 %v3566
    %5379 = vmatpush.bf16.msra.mxu0 %v3558
    %5380 = vmatpush.bf16.msra.mxu0 %v3550
    %5381 = vmatmul.bf16.gmra.mxu0 %v831
    %v5382 = vpop.f32.mrf.mxu0
    %v5383 = vadd.f32 %v5370, %v5382
    %v5384 = vpop.f32.mrf.mxu0
    %5385 = vdwg.mxu0
    %5386 = vmatpush.bf16.msra.mxu0 %v3670
    %5387 = vmatpush.bf16.msra.mxu0 %v3662
    %5388 = vmatpush.bf16.msra.mxu0 %v3654
    %5389 = vmatpush.bf16.msra.mxu0 %v3646
    %5390 = vmatpush.bf16.msra.mxu0 %v3638
    %5391 = vmatpush.bf16.msra.mxu0 %v3630
    %5392 = vmatpush.bf16.msra.mxu0 %v3622
    %5393 = vmatpush.bf16.msra.mxu0 %v3614
    %5394 = vmatmul.bf16.gmra.mxu0 %v832
    %v5395 = vpop.f32.mrf.mxu0
    %v5396 = vadd.f32 %v5383, %v5395
    %v5397 = vpop.f32.mrf.mxu0
    %5398 = vdwg.mxu0
    %5399 = vmatpush.bf16.msra.mxu0 %v3734
    %5400 = vmatpush.bf16.msra.mxu0 %v3726
    %5401 = vmatpush.bf16.msra.mxu0 %v3718
    %5402 = vmatpush.bf16.msra.mxu0 %v3710
    %5403 = vmatpush.bf16.msra.mxu0 %v3702
    %5404 = vmatpush.bf16.msra.mxu0 %v3694
    %5405 = vmatpush.bf16.msra.mxu0 %v3686
    %5406 = vmatpush.bf16.msra.mxu0 %v3678
    %5407 = vmatmul.bf16.gmra.mxu0 %v833
    %v5408 = vpop.f32.mrf.mxu0
    %v5409 = vadd.f32 %v5396, %v5408
    %v5410 = vpop.f32.mrf.mxu0
    %5411 = vdwg.mxu0
    %5412 = vmatpush.bf16.msra.mxu0 %v3798
    %5413 = vmatpush.bf16.msra.mxu0 %v3790
    %5414 = vmatpush.bf16.msra.mxu0 %v3782
    %5415 = vmatpush.bf16.msra.mxu0 %v3774
    %5416 = vmatpush.bf16.msra.mxu0 %v3766
    %5417 = vmatpush.bf16.msra.mxu0 %v3758
    %5418 = vmatpush.bf16.msra.mxu0 %v3750
    %5419 = vmatpush.bf16.msra.mxu0 %v3742
    %5420 = vmatmul.bf16.gmra.mxu0 %v834
    %v5421 = vpop.f32.mrf.mxu0
    %v5422 = vadd.f32 %v5409, %v5421
    %v5423 = vpop.f32.mrf.mxu0
    %5424 = vdwg.mxu0
    %5425 = vmatpush.bf16.msra.mxu0 %v3862
    %5426 = vmatpush.bf16.msra.mxu0 %v3854
    %5427 = vmatpush.bf16.msra.mxu0 %v3846
    %5428 = vmatpush.bf16.msra.mxu0 %v3838
    %5429 = vmatpush.bf16.msra.mxu0 %v3830
    %5430 = vmatpush.bf16.msra.mxu0 %v3822
    %5431 = vmatpush.bf16.msra.mxu0 %v3814
    %5432 = vmatpush.bf16.msra.mxu0 %v3806
    %5433 = vmatmul.bf16.gmra.mxu0 %v835
    %v5434 = vpop.f32.mrf.mxu0
    %v5435 = vadd.f32 %v5422, %v5434
    %v5436 = vpop.f32.mrf.mxu0
    %5437 = vdwg.mxu0
    %5438 = vmatpush.bf16.msra.mxu0 %v3926
    %5439 = vmatpush.bf16.msra.mxu0 %v3918
    %5440 = vmatpush.bf16.msra.mxu0 %v3910
    %5441 = vmatpush.bf16.msra.mxu0 %v3902
    %5442 = vmatpush.bf16.msra.mxu0 %v3894
    %5443 = vmatpush.bf16.msra.mxu0 %v3886
    %5444 = vmatpush.bf16.msra.mxu0 %v3878
    %5445 = vmatpush.bf16.msra.mxu0 %v3870
    %5446 = vmatmul.bf16.gmra.mxu0 %v836
    %v5447 = vpop.f32.mrf.mxu0
    %v5448 = vadd.f32 %v5435, %v5447
    %v5449 = vpop.f32.mrf.mxu0
    %5450 = vdwg.mxu0
    %5451 = vmatpush.bf16.msra.mxu0 %v3990
    %5452 = vmatpush.bf16.msra.mxu0 %v3982
    %5453 = vmatpush.bf16.msra.mxu0 %v3974
    %5454 = vmatpush.bf16.msra.mxu0 %v3966
    %5455 = vmatpush.bf16.msra.mxu0 %v3958
    %5456 = vmatpush.bf16.msra.mxu0 %v3950
    %5457 = vmatpush.bf16.msra.mxu0 %v3942
    %5458 = vmatpush.bf16.msra.mxu0 %v3934
    %5459 = vmatmul.bf16.gmra.mxu0 %v837
    %v5460 = vpop.f32.mrf.mxu0
    %v5461 = vadd.f32 %v5448, %v5460
    %v5462 = vpop.f32.mrf.mxu0
    %5463 = vdwg.mxu0
    %5464 = vmatpush.bf16.msra.mxu0 %v4054
    %5465 = vmatpush.bf16.msra.mxu0 %v4046
    %5466 = vmatpush.bf16.msra.mxu0 %v4038
    %5467 = vmatpush.bf16.msra.mxu0 %v4030
    %5468 = vmatpush.bf16.msra.mxu0 %v4022
    %5469 = vmatpush.bf16.msra.mxu0 %v4014
    %5470 = vmatpush.bf16.msra.mxu0 %v4006
    %5471 = vmatpush.bf16.msra.mxu0 %v3998
    %5472 = vmatmul.bf16.gmra.mxu0 %v838
    %v5473 = vpop.f32.mrf.mxu0
    %v5474 = vadd.f32 %v5461, %v5473
    %v5475 = vpop.f32.mrf.mxu0
    %5476 = vdwg.mxu0
    %5477 = vmatpush.bf16.msra.mxu0 %v3479
    %5478 = vmatpush.bf16.msra.mxu0 %v3471
    %5479 = vmatpush.bf16.msra.mxu0 %v3463
    %5480 = vmatpush.bf16.msra.mxu0 %v3455
    %5481 = vmatpush.bf16.msra.mxu0 %v3447
    %5482 = vmatpush.bf16.msra.mxu0 %v3439
    %5483 = vmatpush.bf16.msra.mxu0 %v3431
    %5484 = vmatpush.bf16.msra.mxu0 %v3423
    %5485 = vmatmul.bf16.gmra.mxu0 %v829
    %v5486 = vpop.f32.mrf.mxu0
    %v5487 = vadd.f32 %v1487, %v5486
    %v5488 = vpop.f32.mrf.mxu0
    %5489 = vdwg.mxu0
    %5490 = vmatpush.bf16.msra.mxu0 %v3543
    %5491 = vmatpush.bf16.msra.mxu0 %v3535
    %5492 = vmatpush.bf16.msra.mxu0 %v3527
    %5493 = vmatpush.bf16.msra.mxu0 %v3519
    %5494 = vmatpush.bf16.msra.mxu0 %v3511
    %5495 = vmatpush.bf16.msra.mxu0 %v3503
    %5496 = vmatpush.bf16.msra.mxu0 %v3495
    %5497 = vmatpush.bf16.msra.mxu0 %v3487
    %5498 = vmatmul.bf16.gmra.mxu0 %v830
    %v5499 = vpop.f32.mrf.mxu0
    %v5500 = vadd.f32 %v5487, %v5499
    %v5501 = vpop.f32.mrf.mxu0
    %5502 = vdwg.mxu0
    %5503 = vmatpush.bf16.msra.mxu0 %v3607
    %5504 = vmatpush.bf16.msra.mxu0 %v3599
    %5505 = vmatpush.bf16.msra.mxu0 %v3591
    %5506 = vmatpush.bf16.msra.mxu0 %v3583
    %5507 = vmatpush.bf16.msra.mxu0 %v3575
    %5508 = vmatpush.bf16.msra.mxu0 %v3567
    %5509 = vmatpush.bf16.msra.mxu0 %v3559
    %5510 = vmatpush.bf16.msra.mxu0 %v3551
    %5511 = vmatmul.bf16.gmra.mxu0 %v831
    %v5512 = vpop.f32.mrf.mxu0
    %v5513 = vadd.f32 %v5500, %v5512
    %v5514 = vpop.f32.mrf.mxu0
    %5515 = vdwg.mxu0
    %5516 = vmatpush.bf16.msra.mxu0 %v3671
    %5517 = vmatpush.bf16.msra.mxu0 %v3663
    %5518 = vmatpush.bf16.msra.mxu0 %v3655
    %5519 = vmatpush.bf16.msra.mxu0 %v3647
    %5520 = vmatpush.bf16.msra.mxu0 %v3639
    %5521 = vmatpush.bf16.msra.mxu0 %v3631
    %5522 = vmatpush.bf16.msra.mxu0 %v3623
    %5523 = vmatpush.bf16.msra.mxu0 %v3615
    %5524 = vmatmul.bf16.gmra.mxu0 %v832
    %v5525 = vpop.f32.mrf.mxu0
    %v5526 = vadd.f32 %v5513, %v5525
    %v5527 = vpop.f32.mrf.mxu0
    %5528 = vdwg.mxu0
    %5529 = vmatpush.bf16.msra.mxu0 %v3735
    %5530 = vmatpush.bf16.msra.mxu0 %v3727
    %5531 = vmatpush.bf16.msra.mxu0 %v3719
    %5532 = vmatpush.bf16.msra.mxu0 %v3711
    %5533 = vmatpush.bf16.msra.mxu0 %v3703
    %5534 = vmatpush.bf16.msra.mxu0 %v3695
    %5535 = vmatpush.bf16.msra.mxu0 %v3687
    %5536 = vmatpush.bf16.msra.mxu0 %v3679
    %5537 = vmatmul.bf16.gmra.mxu0 %v833
    %v5538 = vpop.f32.mrf.mxu0
    %v5539 = vadd.f32 %v5526, %v5538
    %v5540 = vpop.f32.mrf.mxu0
    %5541 = vdwg.mxu0
    %5542 = vmatpush.bf16.msra.mxu0 %v3799
    %5543 = vmatpush.bf16.msra.mxu0 %v3791
    %5544 = vmatpush.bf16.msra.mxu0 %v3783
    %5545 = vmatpush.bf16.msra.mxu0 %v3775
    %5546 = vmatpush.bf16.msra.mxu0 %v3767
    %5547 = vmatpush.bf16.msra.mxu0 %v3759
    %5548 = vmatpush.bf16.msra.mxu0 %v3751
    %5549 = vmatpush.bf16.msra.mxu0 %v3743
    %5550 = vmatmul.bf16.gmra.mxu0 %v834
    %v5551 = vpop.f32.mrf.mxu0
    %v5552 = vadd.f32 %v5539, %v5551
    %v5553 = vpop.f32.mrf.mxu0
    %5554 = vdwg.mxu0
    %5555 = vmatpush.bf16.msra.mxu0 %v3863
    %5556 = vmatpush.bf16.msra.mxu0 %v3855
    %5557 = vmatpush.bf16.msra.mxu0 %v3847
    %5558 = vmatpush.bf16.msra.mxu0 %v3839
    %5559 = vmatpush.bf16.msra.mxu0 %v3831
    %5560 = vmatpush.bf16.msra.mxu0 %v3823
    %5561 = vmatpush.bf16.msra.mxu0 %v3815
    %5562 = vmatpush.bf16.msra.mxu0 %v3807
    %5563 = vmatmul.bf16.gmra.mxu0 %v835
    %v5564 = vpop.f32.mrf.mxu0
    %v5565 = vadd.f32 %v5552, %v5564
    %v5566 = vpop.f32.mrf.mxu0
    %5567 = vdwg.mxu0
    %5568 = vmatpush.bf16.msra.mxu0 %v3927
    %5569 = vmatpush.bf16.msra.mxu0 %v3919
    %5570 = vmatpush.bf16.msra.mxu0 %v3911
    %5571 = vmatpush.bf16.msra.mxu0 %v3903
    %5572 = vmatpush.bf16.msra.mxu0 %v3895
    %5573 = vmatpush.bf16.msra.mxu0 %v3887
    %5574 = vmatpush.bf16.msra.mxu0 %v3879
    %5575 = vmatpush.bf16.msra.mxu0 %v3871
    %5576 = vmatmul.bf16.gmra.mxu0 %v836
    %v5577 = vpop.f32.mrf.mxu0
    %v5578 = vadd.f32 %v5565, %v5577
    %v5579 = vpop.f32.mrf.mxu0
    %5580 = vdwg.mxu0
    %5581 = vmatpush.bf16.msra.mxu0 %v3991
    %5582 = vmatpush.bf16.msra.mxu0 %v3983
    %5583 = vmatpush.bf16.msra.mxu0 %v3975
    %5584 = vmatpush.bf16.msra.mxu0 %v3967
    %5585 = vmatpush.bf16.msra.mxu0 %v3959
    %5586 = vmatpush.bf16.msra.mxu0 %v3951
    %5587 = vmatpush.bf16.msra.mxu0 %v3943
    %5588 = vmatpush.bf16.msra.mxu0 %v3935
    %5589 = vmatmul.bf16.gmra.mxu0 %v837
    %v5590 = vpop.f32.mrf.mxu0
    %v5591 = vadd.f32 %v5578, %v5590
    %v5592 = vpop.f32.mrf.mxu0
    %5593 = vdwg.mxu0
    %5594 = vmatpush.bf16.msra.mxu0 %v4055
    %5595 = vmatpush.bf16.msra.mxu0 %v4047
    %5596 = vmatpush.bf16.msra.mxu0 %v4039
    %5597 = vmatpush.bf16.msra.mxu0 %v4031
    %5598 = vmatpush.bf16.msra.mxu0 %v4023
    %5599 = vmatpush.bf16.msra.mxu0 %v4015
    %5600 = vmatpush.bf16.msra.mxu0 %v4007
    %5601 = vmatpush.bf16.msra.mxu0 %v3999
    %5602 = vmatmul.bf16.gmra.mxu0 %v838
    %v5603 = vpop.f32.mrf.mxu0
    %v5604 = vadd.f32 %v5591, %v5603
    %v5605 = vpop.f32.mrf.mxu0
    %5606 = vdwg.mxu0
    %5607 = vmatpush.bf16.msra.mxu0 %v3480
    %5608 = vmatpush.bf16.msra.mxu0 %v3472
    %5609 = vmatpush.bf16.msra.mxu0 %v3464
    %5610 = vmatpush.bf16.msra.mxu0 %v3456
    %5611 = vmatpush.bf16.msra.mxu0 %v3448
    %5612 = vmatpush.bf16.msra.mxu0 %v3440
    %5613 = vmatpush.bf16.msra.mxu0 %v3432
    %5614 = vmatpush.bf16.msra.mxu0 %v3424
    %5615 = vmatmul.bf16.gmra.mxu0 %v829
    %v5616 = vpop.f32.mrf.mxu0
    %v5617 = vadd.f32 %v1488, %v5616
    %v5618 = vpop.f32.mrf.mxu0
    %5619 = vdwg.mxu0
    %5620 = vmatpush.bf16.msra.mxu0 %v3544
    %5621 = vmatpush.bf16.msra.mxu0 %v3536
    %5622 = vmatpush.bf16.msra.mxu0 %v3528
    %5623 = vmatpush.bf16.msra.mxu0 %v3520
    %5624 = vmatpush.bf16.msra.mxu0 %v3512
    %5625 = vmatpush.bf16.msra.mxu0 %v3504
    %5626 = vmatpush.bf16.msra.mxu0 %v3496
    %5627 = vmatpush.bf16.msra.mxu0 %v3488
    %5628 = vmatmul.bf16.gmra.mxu0 %v830
    %v5629 = vpop.f32.mrf.mxu0
    %v5630 = vadd.f32 %v5617, %v5629
    %v5631 = vpop.f32.mrf.mxu0
    %5632 = vdwg.mxu0
    %5633 = vmatpush.bf16.msra.mxu0 %v3608
    %5634 = vmatpush.bf16.msra.mxu0 %v3600
    %5635 = vmatpush.bf16.msra.mxu0 %v3592
    %5636 = vmatpush.bf16.msra.mxu0 %v3584
    %5637 = vmatpush.bf16.msra.mxu0 %v3576
    %5638 = vmatpush.bf16.msra.mxu0 %v3568
    %5639 = vmatpush.bf16.msra.mxu0 %v3560
    %5640 = vmatpush.bf16.msra.mxu0 %v3552
    %5641 = vmatmul.bf16.gmra.mxu0 %v831
    %v5642 = vpop.f32.mrf.mxu0
    %v5643 = vadd.f32 %v5630, %v5642
    %v5644 = vpop.f32.mrf.mxu0
    %5645 = vdwg.mxu0
    %5646 = vmatpush.bf16.msra.mxu0 %v3672
    %5647 = vmatpush.bf16.msra.mxu0 %v3664
    %5648 = vmatpush.bf16.msra.mxu0 %v3656
    %5649 = vmatpush.bf16.msra.mxu0 %v3648
    %5650 = vmatpush.bf16.msra.mxu0 %v3640
    %5651 = vmatpush.bf16.msra.mxu0 %v3632
    %5652 = vmatpush.bf16.msra.mxu0 %v3624
    %5653 = vmatpush.bf16.msra.mxu0 %v3616
    %5654 = vmatmul.bf16.gmra.mxu0 %v832
    %v5655 = vpop.f32.mrf.mxu0
    %v5656 = vadd.f32 %v5643, %v5655
    %v5657 = vpop.f32.mrf.mxu0
    %5658 = vdwg.mxu0
    %5659 = vmatpush.bf16.msra.mxu0 %v3736
    %5660 = vmatpush.bf16.msra.mxu0 %v3728
    %5661 = vmatpush.bf16.msra.mxu0 %v3720
    %5662 = vmatpush.bf16.msra.mxu0 %v3712
    %5663 = vmatpush.bf16.msra.mxu0 %v3704
    %5664 = vmatpush.bf16.msra.mxu0 %v3696
    %5665 = vmatpush.bf16.msra.mxu0 %v3688
    %5666 = vmatpush.bf16.msra.mxu0 %v3680
    %5667 = vmatmul.bf16.gmra.mxu0 %v833
    %v5668 = vpop.f32.mrf.mxu0
    %v5669 = vadd.f32 %v5656, %v5668
    %v5670 = vpop.f32.mrf.mxu0
    %5671 = vdwg.mxu0
    %5672 = vmatpush.bf16.msra.mxu0 %v3800
    %5673 = vmatpush.bf16.msra.mxu0 %v3792
    %5674 = vmatpush.bf16.msra.mxu0 %v3784
    %5675 = vmatpush.bf16.msra.mxu0 %v3776
    %5676 = vmatpush.bf16.msra.mxu0 %v3768
    %5677 = vmatpush.bf16.msra.mxu0 %v3760
    %5678 = vmatpush.bf16.msra.mxu0 %v3752
    %5679 = vmatpush.bf16.msra.mxu0 %v3744
    %5680 = vmatmul.bf16.gmra.mxu0 %v834
    %v5681 = vpop.f32.mrf.mxu0
    %v5682 = vadd.f32 %v5669, %v5681
    %v5683 = vpop.f32.mrf.mxu0
    %5684 = vdwg.mxu0
    %5685 = vmatpush.bf16.msra.mxu0 %v3864
    %5686 = vmatpush.bf16.msra.mxu0 %v3856
    %5687 = vmatpush.bf16.msra.mxu0 %v3848
    %5688 = vmatpush.bf16.msra.mxu0 %v3840
    %5689 = vmatpush.bf16.msra.mxu0 %v3832
    %5690 = vmatpush.bf16.msra.mxu0 %v3824
    %5691 = vmatpush.bf16.msra.mxu0 %v3816
    %5692 = vmatpush.bf16.msra.mxu0 %v3808
    %5693 = vmatmul.bf16.gmra.mxu0 %v835
    %v5694 = vpop.f32.mrf.mxu0
    %v5695 = vadd.f32 %v5682, %v5694
    %v5696 = vpop.f32.mrf.mxu0
    %5697 = vdwg.mxu0
    %5698 = vmatpush.bf16.msra.mxu0 %v3928
    %5699 = vmatpush.bf16.msra.mxu0 %v3920
    %5700 = vmatpush.bf16.msra.mxu0 %v3912
    %5701 = vmatpush.bf16.msra.mxu0 %v3904
    %5702 = vmatpush.bf16.msra.mxu0 %v3896
    %5703 = vmatpush.bf16.msra.mxu0 %v3888
    %5704 = vmatpush.bf16.msra.mxu0 %v3880
    %5705 = vmatpush.bf16.msra.mxu0 %v3872
    %5706 = vmatmul.bf16.gmra.mxu0 %v836
    %v5707 = vpop.f32.mrf.mxu0
    %v5708 = vadd.f32 %v5695, %v5707
    %v5709 = vpop.f32.mrf.mxu0
    %5710 = vdwg.mxu0
    %5711 = vmatpush.bf16.msra.mxu0 %v3992
    %5712 = vmatpush.bf16.msra.mxu0 %v3984
    %5713 = vmatpush.bf16.msra.mxu0 %v3976
    %5714 = vmatpush.bf16.msra.mxu0 %v3968
    %5715 = vmatpush.bf16.msra.mxu0 %v3960
    %5716 = vmatpush.bf16.msra.mxu0 %v3952
    %5717 = vmatpush.bf16.msra.mxu0 %v3944
    %5718 = vmatpush.bf16.msra.mxu0 %v3936
    %5719 = vmatmul.bf16.gmra.mxu0 %v837
    %v5720 = vpop.f32.mrf.mxu0
    %v5721 = vadd.f32 %v5708, %v5720
    %v5722 = vpop.f32.mrf.mxu0
    %5723 = vdwg.mxu0
    %5724 = vmatpush.bf16.msra.mxu0 %v4056
    %5725 = vmatpush.bf16.msra.mxu0 %v4048
    %5726 = vmatpush.bf16.msra.mxu0 %v4040
    %5727 = vmatpush.bf16.msra.mxu0 %v4032
    %5728 = vmatpush.bf16.msra.mxu0 %v4024
    %5729 = vmatpush.bf16.msra.mxu0 %v4016
    %5730 = vmatpush.bf16.msra.mxu0 %v4008
    %5731 = vmatpush.bf16.msra.mxu0 %v4000
    %5732 = vmatmul.bf16.gmra.mxu0 %v838
    %v5733 = vpop.f32.mrf.mxu0
    %v5734 = vadd.f32 %v5721, %v5733
    %v5735 = vpop.f32.mrf.mxu0
    %5736 = vdwg.mxu0
    %v5737 = vmax.f32 %v4824, 0.0
    %v5738 = vmax.f32 %v4954, 0.0
    %v5739 = vmax.f32 %v5084, 0.0
    %v5740 = vmax.f32 %v5214, 0.0
    %v5741 = vmax.f32 %v5344, 0.0
    %v5742 = vmax.f32 %v5474, 0.0
    %v5743 = vmax.f32 %v5604, 0.0
    %v5744 = vmax.f32 %v5734, 0.0
    %v5745 = vpack.c.bf16 %v5737, %v5737
    %v5746 = vpack.c.bf16 %v5738, %v5738
    %v5747 = vpack.c.bf16 %v5739, %v5739
    %v5748 = vpack.c.bf16 %v5740, %v5740
    %v5749 = vpack.c.bf16 %v5741, %v5741
    %v5750 = vpack.c.bf16 %v5742, %v5742
    %v5751 = vpack.c.bf16 %v5743, %v5743
    %v5752 = vpack.c.bf16 %v5744, %v5744
    %v5753 = vld [vmem:[#allocation9] sm:$0xff]
    %v5754 = vld [vmem:[#allocation9 + $0x8] sm:$0xff]
    %v5755 = vld [vmem:[#allocation9 + $0x10] sm:$0xf]
    %v5756 = vld [vmem:[#allocation9 + $0x14] sm:$0xff]
    %v5757 = vld [vmem:[#allocation9 + $0x1c] sm:$0xff]
    %v5758 = vld [vmem:[#allocation9 + $0x24] sm:$0xf]
    %v5759 = vld [vmem:[#allocation9 + $0x28] sm:$0xff]
    %v5760 = vld [vmem:[#allocation9 + $0x30] sm:$0xff]
    %v5761 = vld [vmem:[#allocation9 + $0x38] sm:$0xf]
    %v5762 = vld [vmem:[#allocation9 + $0x3c] sm:$0xff]
    %v5763 = vld [vmem:[#allocation9 + $0x44] sm:$0xff]
    %v5764 = vld [vmem:[#allocation9 + $0x4c] sm:$0xf]
    %v5765 = vld [vmem:[#allocation9 + $0x50] sm:$0xff]
    %v5766 = vld [vmem:[#allocation9 + $0x58] sm:$0xff]
    %v5767 = vld [vmem:[#allocation9 + $0x60] sm:$0xf]
    %v5768 = vld [vmem:[#allocation9 + $0x64] sm:$0xff]
    %v5769 = vld [vmem:[#allocation9 + $0x6c] sm:$0xff]
    %v5770 = vld [vmem:[#allocation9 + $0x74] sm:$0xf]
    %v5771 = vld [vmem:[#allocation9 + $0x78] sm:$0xff]
    %v5772 = vld [vmem:[#allocation9 + $0x80] sm:$0xff]
    %v5773 = vld [vmem:[#allocation9 + $0x88] sm:$0xf]
    %v5774 = vld [vmem:[#allocation9 + $0x8c] sm:$0xff]
    %v5775 = vld [vmem:[#allocation9 + $0x94] sm:$0xff]
    %v5776 = vld [vmem:[#allocation9 + $0x9c] sm:$0xf]
    %v5777 = vld [vmem:[#allocation9 + $0xa0] sm:$0xff]
    %v5778 = vld [vmem:[#allocation9 + $0xa8] sm:$0xff]
    %v5779 = vld [vmem:[#allocation9 + $0xb0] sm:$0xf]
    %v5780 = vld [vmem:[#allocation9 + $0xb4] sm:$0xff]
    %v5781 = vld [vmem:[#allocation9 + $0xbc] sm:$0xff]
    %v5782 = vld [vmem:[#allocation9 + $0xc4] sm:$0xf]
    %v5783 = vld [vmem:[#allocation9 + $0xc8] sm:$0xff]
    %v5784 = vld [vmem:[#allocation9 + $0xd0] sm:$0xff]
    %v5785 = vld [vmem:[#allocation9 + $0xd8] sm:$0xf]
    %v5786 = vld [vmem:[#allocation9 + $0xdc] sm:$0xff]
    %v5787 = vld [vmem:[#allocation9 + $0xe4] sm:$0xff]
    %v5788 = vld [vmem:[#allocation9 + $0xec] sm:$0xf]
    %v5789 = vld [vmem:[#allocation9 + $0xf0] sm:$0xff]
    %v5790 = vld [vmem:[#allocation9 + $0xf8] sm:$0xff]
    %v5791 = vld [vmem:[#allocation9 + $0x100] sm:$0xf]
    %v5792 = vld [vmem:[#allocation9 + $0x104] sm:$0xff]
    %v5793 = vld [vmem:[#allocation9 + $0x10c] sm:$0xff]
    %v5794 = vld [vmem:[#allocation9 + $0x114] sm:$0xf]
    %v5795 = vld [vmem:[#allocation9 + $0x118] sm:$0xff]
    %v5796 = vld [vmem:[#allocation9 + $0x120] sm:$0xff]
    %v5797 = vld [vmem:[#allocation9 + $0x128] sm:$0xf]
    %v5798 = vld [vmem:[#allocation9 + $0x12c] sm:$0xff]
    %v5799 = vld [vmem:[#allocation9 + $0x134] sm:$0xff]
    %v5800 = vld [vmem:[#allocation9 + $0x13c] sm:$0xf]
    %v5801 = vld [vmem:[#allocation9 + $0x140] sm:$0xff]
    %v5802 = vld [vmem:[#allocation9 + $0x148] sm:$0xff]
    %v5803 = vld [vmem:[#allocation9 + $0x150] sm:$0xf]
    %v5804 = vld [vmem:[#allocation9 + $0x154] sm:$0xff]
    %v5805 = vld [vmem:[#allocation9 + $0x15c] sm:$0xff]
    %v5806 = vld [vmem:[#allocation9 + $0x164] sm:$0xf]
    %v5807 = vld [vmem:[#allocation9 + $0x168] sm:$0xff]
    %v5808 = vld [vmem:[#allocation9 + $0x170] sm:$0xff]
    %v5809 = vld [vmem:[#allocation9 + $0x178] sm:$0xf]
    %v5810 = vld [vmem:[#allocation9 + $0x17c] sm:$0xff]
    %v5811 = vld [vmem:[#allocation9 + $0x184] sm:$0xff]
    %v5812 = vld [vmem:[#allocation9 + $0x18c] sm:$0xf]
    %v5813 = vld [vmem:[#allocation9 + $0x190] sm:$0xff]
    %v5814 = vld [vmem:[#allocation9 + $0x198] sm:$0xff]
    %v5815 = vld [vmem:[#allocation9 + $0x1a0] sm:$0xf]
    %v5816 = vld [vmem:[#allocation9 + $0x1a4] sm:$0xff]
    %v5817 = vld [vmem:[#allocation9 + $0x1ac] sm:$0xff]
    %v5818 = vld [vmem:[#allocation9 + $0x1b4] sm:$0xf]
    %v5819 = vld [vmem:[#allocation9 + $0x1b8] sm:$0xff]
    %v5820 = vld [vmem:[#allocation9 + $0x1c0] sm:$0xff]
    %v5821 = vld [vmem:[#allocation9 + $0x1c8] sm:$0xf]
    %v5822 = vld [vmem:[#allocation9 + $0x1cc] sm:$0xff]
    %v5823 = vld [vmem:[#allocation9 + $0x1d4] sm:$0xff]
    %v5824 = vld [vmem:[#allocation9 + $0x1dc] sm:$0xf]
    %v5825 = vld [vmem:[#allocation9 + $0x1e0] sm:$0xff]
    %v5826 = vld [vmem:[#allocation9 + $0x1e8] sm:$0xff]
    %v5827 = vld [vmem:[#allocation9 + $0x1f0] sm:$0xf]
    %v5828 = vld [vmem:[#allocation9 + $0x1f4] sm:$0xff]
    %v5829 = vld [vmem:[#allocation9 + $0x1fc] sm:$0xff]
    %v5830 = vld [vmem:[#allocation9 + $0x204] sm:$0xf]
    %v5831 = vld [vmem:[#allocation9 + $0x208] sm:$0xff]
    %v5832 = vld [vmem:[#allocation9 + $0x210] sm:$0xff]
    %v5833 = vld [vmem:[#allocation9 + $0x218] sm:$0xf]
    %v5834 = vld [vmem:[#allocation9 + $0x21c] sm:$0xff]
    %v5835 = vld [vmem:[#allocation9 + $0x224] sm:$0xff]
    %v5836 = vld [vmem:[#allocation9 + $0x22c] sm:$0xf]
    %v5837 = vld [vmem:[#allocation9 + $0x230] sm:$0xff]
    %v5838 = vld [vmem:[#allocation9 + $0x238] sm:$0xff]
    %v5839 = vld [vmem:[#allocation9 + $0x240] sm:$0xf]
    %v5840 = vld [vmem:[#allocation9 + $0x244] sm:$0xff]
    %v5841 = vld [vmem:[#allocation9 + $0x24c] sm:$0xff]
    %v5842 = vld [vmem:[#allocation9 + $0x254] sm:$0xf]
    %v5843 = vld [vmem:[#allocation9 + $0x258] sm:$0xff]
    %v5844 = vld [vmem:[#allocation9 + $0x260] sm:$0xff]
    %v5845 = vld [vmem:[#allocation9 + $0x268] sm:$0xf]
    %v5846 = vld [vmem:[#allocation9 + $0x26c] sm:$0xff]
    %v5847 = vld [vmem:[#allocation9 + $0x274] sm:$0xff]
    %v5848 = vld [vmem:[#allocation9 + $0x27c] sm:$0xf]
    %v5849 = vld [vmem:[#allocation9 + $0x280] sm:$0xff]
    %v5850 = vld [vmem:[#allocation9 + $0x288] sm:$0xff]
    %v5851 = vld [vmem:[#allocation9 + $0x290] sm:$0xf]
    %v5852 = vld [vmem:[#allocation9 + $0x294] sm:$0xff]
    %v5853 = vld [vmem:[#allocation9 + $0x29c] sm:$0xff]
    %v5854 = vld [vmem:[#allocation9 + $0x2a4] sm:$0xf]
    %v5855 = vld [vmem:[#allocation9 + $0x2a8] sm:$0xff]
    %v5856 = vld [vmem:[#allocation9 + $0x2b0] sm:$0xff]
    %v5857 = vld [vmem:[#allocation9 + $0x2b8] sm:$0xf]
    %v5858 = vld [vmem:[#allocation9 + $0x2bc] sm:$0xff]
    %v5859 = vld [vmem:[#allocation9 + $0x2c4] sm:$0xff]
    %v5860 = vld [vmem:[#allocation9 + $0x2cc] sm:$0xf]
    %v5861 = vld [vmem:[#allocation9 + $0x2d0] sm:$0xff]
    %v5862 = vld [vmem:[#allocation9 + $0x2d8] sm:$0xff]
    %v5863 = vld [vmem:[#allocation9 + $0x2e0] sm:$0xf]
    %v5864 = vld [vmem:[#allocation9 + $0x2e4] sm:$0xff]
    %v5865 = vld [vmem:[#allocation9 + $0x2ec] sm:$0xff]
    %v5866 = vld [vmem:[#allocation9 + $0x2f4] sm:$0xf]
    %v5867 = vld [vmem:[#allocation9 + $0x2f8] sm:$0xff]
    %v5868 = vld [vmem:[#allocation9 + $0x300] sm:$0xff]
    %v5869 = vld [vmem:[#allocation9 + $0x308] sm:$0xf]
    %v5870 = vld [vmem:[#allocation9 + $0x30c] sm:$0xff]
    %v5871 = vld [vmem:[#allocation9 + $0x314] sm:$0xff]
    %v5872 = vld [vmem:[#allocation9 + $0x31c] sm:$0xf]
    %v5873 = vld [vmem:[#allocation9 + $0x320] sm:$0xff]
    %v5874 = vld [vmem:[#allocation9 + $0x328] sm:$0xff]
    %v5875 = vld [vmem:[#allocation9 + $0x330] sm:$0xf]
    %v5876 = vld [vmem:[#allocation9 + $0x334] sm:$0xff]
    %v5877 = vld [vmem:[#allocation9 + $0x33c] sm:$0xff]
    %v5878 = vld [vmem:[#allocation9 + $0x344] sm:$0xf]
    %v5879 = vld [vmem:[#allocation9 + $0x348] sm:$0xff]
    %v5880 = vld [vmem:[#allocation9 + $0x350] sm:$0xff]
    %v5881 = vld [vmem:[#allocation9 + $0x358] sm:$0xf]
    %v5882 = vld [vmem:[#allocation9 + $0x35c] sm:$0xff]
    %v5883 = vld [vmem:[#allocation9 + $0x364] sm:$0xff]
    %v5884 = vld [vmem:[#allocation9 + $0x36c] sm:$0xf]
    %v5885 = vld [vmem:[#allocation9 + $0x370] sm:$0xff]
    %v5886 = vld [vmem:[#allocation9 + $0x378] sm:$0xff]
    %v5887 = vld [vmem:[#allocation9 + $0x380] sm:$0xf]
    %v5888 = vld [vmem:[#allocation9 + $0x384] sm:$0xff]
    %v5889 = vld [vmem:[#allocation9 + $0x38c] sm:$0xff]
    %v5890 = vld [vmem:[#allocation9 + $0x394] sm:$0xf]
    %v5891 = vld [vmem:[#allocation9 + $0x398] sm:$0xff]
    %v5892 = vld [vmem:[#allocation9 + $0x3a0] sm:$0xff]
    %v5893 = vld [vmem:[#allocation9 + $0x3a8] sm:$0xf]
    %v5894 = vld [vmem:[#allocation9 + $0x3ac] sm:$0xff]
    %v5895 = vld [vmem:[#allocation9 + $0x3b4] sm:$0xff]
    %v5896 = vld [vmem:[#allocation9 + $0x3bc] sm:$0xf]
    %v5897 = vld [vmem:[#allocation9 + $0x3c0] sm:$0xff]
    %v5898 = vld [vmem:[#allocation9 + $0x3c8] sm:$0xff]
    %v5899 = vld [vmem:[#allocation9 + $0x3d0] sm:$0xf]
    %v5900 = vld [vmem:[#allocation9 + $0x3d4] sm:$0xff]
    %v5901 = vld [vmem:[#allocation9 + $0x3dc] sm:$0xff]
    %v5902 = vld [vmem:[#allocation9 + $0x3e4] sm:$0xf]
    %v5903 = vld [vmem:[#allocation9 + $0x3e8] sm:$0xff]
    %v5904 = vld [vmem:[#allocation9 + $0x3f0] sm:$0xff]
    %v5905 = vld [vmem:[#allocation9 + $0x3f8] sm:$0xf]
    %v5906 = vld [vmem:[#allocation9 + $0x3fc] sm:$0xff]
    %v5907 = vld [vmem:[#allocation9 + $0x404] sm:$0xff]
    %v5908 = vld [vmem:[#allocation9 + $0x40c] sm:$0xf]
    %v5909 = vld [vmem:[#allocation9 + $0x410] sm:$0xff]
    %v5910 = vld [vmem:[#allocation9 + $0x418] sm:$0xff]
    %v5911 = vld [vmem:[#allocation9 + $0x420] sm:$0xf]
    %v5912 = vld [vmem:[#allocation9 + $0x424] sm:$0xff]
    %v5913 = vld [vmem:[#allocation9 + $0x42c] sm:$0xff]
    %v5914 = vld [vmem:[#allocation9 + $0x434] sm:$0xf]
    %v5915 = vld [vmem:[#allocation9 + $0x438] sm:$0xff]
    %v5916 = vld [vmem:[#allocation9 + $0x440] sm:$0xff]
    %v5917 = vld [vmem:[#allocation9 + $0x448] sm:$0xf]
    %v5918 = vld [vmem:[#allocation9 + $0x44c] sm:$0xff]
    %v5919 = vld [vmem:[#allocation9 + $0x454] sm:$0xff]
    %v5920 = vld [vmem:[#allocation9 + $0x45c] sm:$0xf]
    %v5921 = vld [vmem:[#allocation9 + $0x460] sm:$0xff]
    %v5922 = vld [vmem:[#allocation9 + $0x468] sm:$0xff]
    %v5923 = vld [vmem:[#allocation9 + $0x470] sm:$0xf]
    %v5924 = vld [vmem:[#allocation9 + $0x474] sm:$0xff]
    %v5925 = vld [vmem:[#allocation9 + $0x47c] sm:$0xff]
    %v5926 = vld [vmem:[#allocation9 + $0x484] sm:$0xf]
    %v5927 = vld [vmem:[#allocation9 + $0x488] sm:$0xff]
    %v5928 = vld [vmem:[#allocation9 + $0x490] sm:$0xff]
    %v5929 = vld [vmem:[#allocation9 + $0x498] sm:$0xf]
    %v5930 = vld [vmem:[#allocation9 + $0x49c] sm:$0xff]
    %v5931 = vld [vmem:[#allocation9 + $0x4a4] sm:$0xff]
    %v5932 = vld [vmem:[#allocation9 + $0x4ac] sm:$0xf]
    %v5933 = vld [vmem:[#allocation9 + $0x4b0] sm:$0xff]
    %v5934 = vld [vmem:[#allocation9 + $0x4b8] sm:$0xff]
    %v5935 = vld [vmem:[#allocation9 + $0x4c0] sm:$0xf]
    %v5936 = vld [vmem:[#allocation9 + $0x4c4] sm:$0xff]
    %v5937 = vld [vmem:[#allocation9 + $0x4cc] sm:$0xff]
    %v5938 = vld [vmem:[#allocation9 + $0x4d4] sm:$0xf]
    %v5939 = vld [vmem:[#allocation9 + $0x4d8] sm:$0xff]
    %v5940 = vld [vmem:[#allocation9 + $0x4e0] sm:$0xff]
    %v5941 = vld [vmem:[#allocation9 + $0x4e8] sm:$0xf]
    %v5942 = vld [vmem:[#allocation9 + $0x4ec] sm:$0xff]
    %v5943 = vld [vmem:[#allocation9 + $0x4f4] sm:$0xff]
    %v5944 = vld [vmem:[#allocation9 + $0x4fc] sm:$0xf]
    %v5945 = vld [vmem:[#allocation9 + $0x500] sm:$0xff]
    %v5946 = vld [vmem:[#allocation9 + $0x508] sm:$0xff]
    %v5947 = vld [vmem:[#allocation9 + $0x510] sm:$0xf]
    %v5948 = vld [vmem:[#allocation9 + $0x514] sm:$0xff]
    %v5949 = vld [vmem:[#allocation9 + $0x51c] sm:$0xff]
    %v5950 = vld [vmem:[#allocation9 + $0x524] sm:$0xf]
    %v5951 = vld [vmem:[#allocation9 + $0x528] sm:$0xff]
    %v5952 = vld [vmem:[#allocation9 + $0x530] sm:$0xff]
    %v5953 = vld [vmem:[#allocation9 + $0x538] sm:$0xf]
    %v5954 = vld [vmem:[#allocation9 + $0x53c] sm:$0xff]
    %v5955 = vld [vmem:[#allocation9 + $0x544] sm:$0xff]
    %v5956 = vld [vmem:[#allocation9 + $0x54c] sm:$0xf]
    %v5957 = vld [vmem:[#allocation9 + $0x550] sm:$0xff]
    %v5958 = vld [vmem:[#allocation9 + $0x558] sm:$0xff]
    %v5959 = vld [vmem:[#allocation9 + $0x560] sm:$0xf]
    %v5960 = vld [vmem:[#allocation9 + $0x564] sm:$0xff]
    %v5961 = vld [vmem:[#allocation9 + $0x56c] sm:$0xff]
    %v5962 = vld [vmem:[#allocation9 + $0x574] sm:$0xf]
    %v5963 = vld [vmem:[#allocation9 + $0x578] sm:$0xff]
    %v5964 = vld [vmem:[#allocation9 + $0x580] sm:$0xff]
    %v5965 = vld [vmem:[#allocation9 + $0x588] sm:$0xf]
    %v5966 = vld [vmem:[#allocation9 + $0x58c] sm:$0xff]
    %v5967 = vld [vmem:[#allocation9 + $0x594] sm:$0xff]
    %v5968 = vld [vmem:[#allocation9 + $0x59c] sm:$0xf]
    %v5969 = vld [vmem:[#allocation9 + $0x5a0] sm:$0xff]
    %v5970 = vld [vmem:[#allocation9 + $0x5a8] sm:$0xff]
    %v5971 = vld [vmem:[#allocation9 + $0x5b0] sm:$0xf]
    %v5972 = vld [vmem:[#allocation9 + $0x5b4] sm:$0xff]
    %v5973 = vld [vmem:[#allocation9 + $0x5bc] sm:$0xff]
    %v5974 = vld [vmem:[#allocation9 + $0x5c4] sm:$0xf]
    %v5975 = vld [vmem:[#allocation9 + $0x5c8] sm:$0xff]
    %v5976 = vld [vmem:[#allocation9 + $0x5d0] sm:$0xff]
    %v5977 = vld [vmem:[#allocation9 + $0x5d8] sm:$0xf]
    %v5978 = vld [vmem:[#allocation9 + $0x5dc] sm:$0xff]
    %v5979 = vld [vmem:[#allocation9 + $0x5e4] sm:$0xff]
    %v5980 = vld [vmem:[#allocation9 + $0x5ec] sm:$0xf]
    %v5981 = vld [vmem:[#allocation9 + $0x5f0] sm:$0xff]
    %v5982 = vld [vmem:[#allocation9 + $0x5f8] sm:$0xff]
    %v5983 = vld [vmem:[#allocation9 + $0x600] sm:$0xf]
    %v5984 = vld [vmem:[#allocation9 + $0x604] sm:$0xff]
    %v5985 = vld [vmem:[#allocation9 + $0x60c] sm:$0xff]
    %v5986 = vld [vmem:[#allocation9 + $0x614] sm:$0xf]
    %v5987 = vld [vmem:[#allocation9 + $0x618] sm:$0xff]
    %v5988 = vld [vmem:[#allocation9 + $0x620] sm:$0xff]
    %v5989 = vld [vmem:[#allocation9 + $0x628] sm:$0xf]
    %v5990 = vld [vmem:[#allocation9 + $0x62c] sm:$0xff]
    %v5991 = vld [vmem:[#allocation9 + $0x634] sm:$0xff]
    %v5992 = vld [vmem:[#allocation9 + $0x63c] sm:$0xf]
    %v5993 = vld [vmem:[#allocation9 + $0x640] sm:$0xff]
    %v5994 = vld [vmem:[#allocation9 + $0x648] sm:$0xff]
    %v5995 = vld [vmem:[#allocation9 + $0x650] sm:$0xf]
    %v5996 = vld [vmem:[#allocation9 + $0x654] sm:$0xff]
    %v5997 = vld [vmem:[#allocation9 + $0x65c] sm:$0xff]
    %v5998 = vld [vmem:[#allocation9 + $0x664] sm:$0xf]
    %v5999 = vld [vmem:[#allocation9 + $0x668] sm:$0xff]
    %v6000 = vld [vmem:[#allocation9 + $0x670] sm:$0xff]
    %v6001 = vld [vmem:[#allocation9 + $0x678] sm:$0xf]
    %v6002 = vld [vmem:[#allocation9 + $0x67c] sm:$0xff]
    %v6003 = vld [vmem:[#allocation9 + $0x684] sm:$0xff]
    %v6004 = vld [vmem:[#allocation9 + $0x68c] sm:$0xf]
    %v6005 = vld [vmem:[#allocation9 + $0x690] sm:$0xff]
    %v6006 = vld [vmem:[#allocation9 + $0x698] sm:$0xff]
    %v6007 = vld [vmem:[#allocation9 + $0x6a0] sm:$0xf]
    %v6008 = vld [vmem:[#allocation9 + $0x6a4] sm:$0xff]
    %v6009 = vld [vmem:[#allocation9 + $0x6ac] sm:$0xff]
    %v6010 = vld [vmem:[#allocation9 + $0x6b4] sm:$0xf]
    %v6011 = vld [vmem:[#allocation9 + $0x6b8] sm:$0xff]
    %v6012 = vld [vmem:[#allocation9 + $0x6c0] sm:$0xff]
    %v6013 = vld [vmem:[#allocation9 + $0x6c8] sm:$0xf]
    %v6014 = vld [vmem:[#allocation9 + $0x6cc] sm:$0xff]
    %v6015 = vld [vmem:[#allocation9 + $0x6d4] sm:$0xff]
    %v6016 = vld [vmem:[#allocation9 + $0x6dc] sm:$0xf]
    %v6017 = vld [vmem:[#allocation9 + $0x6e0] sm:$0xff]
    %v6018 = vld [vmem:[#allocation9 + $0x6e8] sm:$0xff]
    %v6019 = vld [vmem:[#allocation9 + $0x6f0] sm:$0xf]
    %v6020 = vld [vmem:[#allocation9 + $0x6f4] sm:$0xff]
    %v6021 = vld [vmem:[#allocation9 + $0x6fc] sm:$0xff]
    %v6022 = vld [vmem:[#allocation9 + $0x704] sm:$0xf]
    %v6023 = vld [vmem:[#allocation9 + $0x708] sm:$0xff]
    %v6024 = vld [vmem:[#allocation9 + $0x710] sm:$0xff]
    %v6025 = vld [vmem:[#allocation9 + $0x718] sm:$0xf]
    %v6026 = vld [vmem:[#allocation9 + $0x71c] sm:$0xff]
    %v6027 = vld [vmem:[#allocation9 + $0x724] sm:$0xff]
    %v6028 = vld [vmem:[#allocation9 + $0x72c] sm:$0xf]
    %v6029 = vld [vmem:[#allocation9 + $0x730] sm:$0xff]
    %v6030 = vld [vmem:[#allocation9 + $0x738] sm:$0xff]
    %v6031 = vld [vmem:[#allocation9 + $0x740] sm:$0xf]
    %v6032 = vld [vmem:[#allocation9 + $0x744] sm:$0xff]
    %v6033 = vld [vmem:[#allocation9 + $0x74c] sm:$0xff]
    %v6034 = vld [vmem:[#allocation9 + $0x754] sm:$0xf]
    %v6035 = vld [vmem:[#allocation9 + $0x758] sm:$0xff]
    %v6036 = vld [vmem:[#allocation9 + $0x760] sm:$0xff]
    %v6037 = vld [vmem:[#allocation9 + $0x768] sm:$0xf]
    %v6038 = vld [vmem:[#allocation9 + $0x76c] sm:$0xff]
    %v6039 = vld [vmem:[#allocation9 + $0x774] sm:$0xff]
    %v6040 = vld [vmem:[#allocation9 + $0x77c] sm:$0xf]
    %v6041 = vld [vmem:[#allocation9 + $0x780] sm:$0xff]
    %v6042 = vld [vmem:[#allocation9 + $0x788] sm:$0xff]
    %v6043 = vld [vmem:[#allocation9 + $0x790] sm:$0xf]
    %v6044 = vld [vmem:[#allocation9 + $0x794] sm:$0xff]
    %v6045 = vld [vmem:[#allocation9 + $0x79c] sm:$0xff]
    %v6046 = vld [vmem:[#allocation9 + $0x7a4] sm:$0xf]
    %v6047 = vld [vmem:[#allocation9 + $0x7a8] sm:$0xff]
    %v6048 = vld [vmem:[#allocation9 + $0x7b0] sm:$0xff]
    %v6049 = vld [vmem:[#allocation9 + $0x7b8] sm:$0xf]
    %v6050 = vld [vmem:[#allocation9 + $0x7bc] sm:$0xff]
    %v6051 = vld [vmem:[#allocation9 + $0x7c4] sm:$0xff]
    %v6052 = vld [vmem:[#allocation9 + $0x7cc] sm:$0xf]
    %v6053 = vld [vmem:[#allocation9 + $0x7d0] sm:$0xff]
    %v6054 = vld [vmem:[#allocation9 + $0x7d8] sm:$0xff]
    %v6055 = vld [vmem:[#allocation9 + $0x7e0] sm:$0xf]
    %v6056 = vld [vmem:[#allocation9 + $0x7e4] sm:$0xff]
    %v6057 = vld [vmem:[#allocation9 + $0x7ec] sm:$0xff]
    %v6058 = vld [vmem:[#allocation9 + $0x7f4] sm:$0xf]
    %v6059 = vld [vmem:[#allocation9 + $0x7f8] sm:$0xff]
    %v6060 = vld [vmem:[#allocation9 + $0x800] sm:$0xff]
    %v6061 = vld [vmem:[#allocation9 + $0x808] sm:$0xf]
    %v6062 = vld [vmem:[#allocation9 + $0x80c] sm:$0xff]
    %v6063 = vld [vmem:[#allocation9 + $0x814] sm:$0xff]
    %v6064 = vld [vmem:[#allocation9 + $0x81c] sm:$0xf]
    %v6065 = vld [vmem:[#allocation9 + $0x820] sm:$0xff]
    %v6066 = vld [vmem:[#allocation9 + $0x828] sm:$0xff]
    %v6067 = vld [vmem:[#allocation9 + $0x830] sm:$0xf]
    %v6068 = vld [vmem:[#allocation9 + $0x834] sm:$0xff]
    %v6069 = vld [vmem:[#allocation9 + $0x83c] sm:$0xff]
    %v6070 = vld [vmem:[#allocation9 + $0x844] sm:$0xf]
    %v6071 = vld [vmem:[#allocation9 + $0x848] sm:$0xff]
    %v6072 = vld [vmem:[#allocation9 + $0x850] sm:$0xff]
    %v6073 = vld [vmem:[#allocation9 + $0x858] sm:$0xf]
    %v6074 = vld [vmem:[#allocation9 + $0x85c] sm:$0xff]
    %v6075 = vld [vmem:[#allocation9 + $0x864] sm:$0xff]
    %v6076 = vld [vmem:[#allocation9 + $0x86c] sm:$0xf]
    %v6077 = vld [vmem:[#allocation9 + $0x870] sm:$0xff]
    %v6078 = vld [vmem:[#allocation9 + $0x878] sm:$0xff]
    %v6079 = vld [vmem:[#allocation9 + $0x880] sm:$0xf]
    %v6080 = vld [vmem:[#allocation9 + $0x884] sm:$0xff]
    %v6081 = vld [vmem:[#allocation9 + $0x88c] sm:$0xff]
    %v6082 = vld [vmem:[#allocation9 + $0x894] sm:$0xf]
    %v6083 = vld [vmem:[#allocation9 + $0x898] sm:$0xff]
    %v6084 = vld [vmem:[#allocation9 + $0x8a0] sm:$0xff]
    %v6085 = vld [vmem:[#allocation9 + $0x8a8] sm:$0xf]
    %v6086 = vld [vmem:[#allocation9 + $0x8ac] sm:$0xff]
    %v6087 = vld [vmem:[#allocation9 + $0x8b4] sm:$0xff]
    %v6088 = vld [vmem:[#allocation9 + $0x8bc] sm:$0xf]
    %v6089 = vld [vmem:[#allocation9 + $0x8c0] sm:$0xff]
    %v6090 = vld [vmem:[#allocation9 + $0x8c8] sm:$0xff]
    %v6091 = vld [vmem:[#allocation9 + $0x8d0] sm:$0xf]
    %v6092 = vld [vmem:[#allocation9 + $0x8d4] sm:$0xff]
    %v6093 = vld [vmem:[#allocation9 + $0x8dc] sm:$0xff]
    %v6094 = vld [vmem:[#allocation9 + $0x8e4] sm:$0xf]
    %v6095 = vld [vmem:[#allocation9 + $0x8e8] sm:$0xff]
    %v6096 = vld [vmem:[#allocation9 + $0x8f0] sm:$0xff]
    %v6097 = vld [vmem:[#allocation9 + $0x8f8] sm:$0xf]
    %v6098 = vld [vmem:[#allocation9 + $0x8fc] sm:$0xff]
    %v6099 = vld [vmem:[#allocation9 + $0x904] sm:$0xff]
    %v6100 = vld [vmem:[#allocation9 + $0x90c] sm:$0xf]
    %v6101 = vld [vmem:[#allocation9 + $0x910] sm:$0xff]
    %v6102 = vld [vmem:[#allocation9 + $0x918] sm:$0xff]
    %v6103 = vld [vmem:[#allocation9 + $0x920] sm:$0xf]
    %v6104 = vld [vmem:[#allocation9 + $0x924] sm:$0xff]
    %v6105 = vld [vmem:[#allocation9 + $0x92c] sm:$0xff]
    %v6106 = vld [vmem:[#allocation9 + $0x934] sm:$0xf]
    %v6107 = vld [vmem:[#allocation9 + $0x938] sm:$0xff]
    %v6108 = vld [vmem:[#allocation9 + $0x940] sm:$0xff]
    %v6109 = vld [vmem:[#allocation9 + $0x948] sm:$0xf]
    %v6110 = vld [vmem:[#allocation9 + $0x94c] sm:$0xff]
    %v6111 = vld [vmem:[#allocation9 + $0x954] sm:$0xff]
    %v6112 = vld [vmem:[#allocation9 + $0x95c] sm:$0xf]
    %v6113 = vld [vmem:[#allocation9 + $0x960] sm:$0xff]
    %v6114 = vld [vmem:[#allocation9 + $0x968] sm:$0xff]
    %v6115 = vld [vmem:[#allocation9 + $0x970] sm:$0xf]
    %v6116 = vld [vmem:[#allocation9 + $0x974] sm:$0xff]
    %v6117 = vld [vmem:[#allocation9 + $0x97c] sm:$0xff]
    %v6118 = vld [vmem:[#allocation9 + $0x984] sm:$0xf]
    %v6119 = vld [vmem:[#allocation9 + $0x988] sm:$0xff]
    %v6120 = vld [vmem:[#allocation9 + $0x990] sm:$0xff]
    %v6121 = vld [vmem:[#allocation9 + $0x998] sm:$0xf]
    %v6122 = vld [vmem:[#allocation9 + $0x99c] sm:$0xff]
    %v6123 = vld [vmem:[#allocation9 + $0x9a4] sm:$0xff]
    %v6124 = vld [vmem:[#allocation9 + $0x9ac] sm:$0xf]
    %v6125 = vld [vmem:[#allocation9 + $0x9b0] sm:$0xff]
    %v6126 = vld [vmem:[#allocation9 + $0x9b8] sm:$0xff]
    %v6127 = vld [vmem:[#allocation9 + $0x9c0] sm:$0xf]
    %v6128 = vld [vmem:[#allocation9 + $0x9c4] sm:$0xff]
    %v6129 = vld [vmem:[#allocation9 + $0x9cc] sm:$0xff]
    %v6130 = vld [vmem:[#allocation9 + $0x9d4] sm:$0xf]
    %v6131 = vld [vmem:[#allocation9 + $0x9d8] sm:$0xff]
    %v6132 = vld [vmem:[#allocation9 + $0x9e0] sm:$0xff]
    %v6133 = vld [vmem:[#allocation9 + $0x9e8] sm:$0xf]
    %v6134 = vld [vmem:[#allocation9 + $0x9ec] sm:$0xff]
    %v6135 = vld [vmem:[#allocation9 + $0x9f4] sm:$0xff]
    %v6136 = vld [vmem:[#allocation9 + $0x9fc] sm:$0xf]
    %v6137 = vld [vmem:[#allocation10] sm:$0x1f]
    %v6139 = vperm.slane %v6137, 0
    %v6140 = vperm.slane %v6137, 1
    %v6141 = vperm.slane %v6137, 2
    %v6142 = vperm.slane %v6137, 3
    %v6143 = vperm.slane %v6137, 4
    %v6533 = vunpack.c.l.b16 %v5753
    %v6534 = vunpack.c.h.b16 %v5753
    %v6535 = vunpack.c.l.b16 %v5754
    %v6536 = vunpack.c.h.b16 %v5754
    %v6537 = vunpack.c.l.b16 %v5755
    %v6538 = vunpack.c.l.b16 %v5756
    %v6539 = vunpack.c.h.b16 %v5756
    %v6540 = vunpack.c.l.b16 %v5757
    %v6541 = vunpack.c.h.b16 %v5757
    %v6542 = vunpack.c.l.b16 %v5758
    %v6543 = vunpack.c.l.b16 %v5759
    %v6544 = vunpack.c.h.b16 %v5759
    %v6545 = vunpack.c.l.b16 %v5760
    %v6546 = vunpack.c.h.b16 %v5760
    %v6547 = vunpack.c.l.b16 %v5761
    %v6548 = vunpack.c.l.b16 %v5762
    %v6549 = vunpack.c.h.b16 %v5762
    %v6550 = vunpack.c.l.b16 %v5763
    %v6551 = vunpack.c.h.b16 %v5763
    %v6552 = vunpack.c.l.b16 %v5764
    %v6553 = vunpack.c.l.b16 %v5765
    %v6554 = vunpack.c.h.b16 %v5765
    %v6555 = vunpack.c.l.b16 %v5766
    %v6556 = vunpack.c.h.b16 %v5766
    %v6557 = vunpack.c.l.b16 %v5767
    %v6558 = vunpack.c.l.b16 %v5768
    %v6559 = vunpack.c.h.b16 %v5768
    %v6560 = vunpack.c.l.b16 %v5769
    %v6561 = vunpack.c.h.b16 %v5769
    %v6562 = vunpack.c.l.b16 %v5770
    %v6563 = vunpack.c.l.b16 %v5771
    %v6564 = vunpack.c.h.b16 %v5771
    %v6565 = vunpack.c.l.b16 %v5772
    %v6566 = vunpack.c.h.b16 %v5772
    %v6567 = vunpack.c.l.b16 %v5773
    %v6568 = vunpack.c.l.b16 %v5774
    %v6569 = vunpack.c.h.b16 %v5774
    %v6570 = vunpack.c.l.b16 %v5775
    %v6571 = vunpack.c.h.b16 %v5775
    %v6572 = vunpack.c.l.b16 %v5776
    %v6573 = vunpack.c.l.b16 %v5777
    %v6574 = vunpack.c.h.b16 %v5777
    %v6575 = vunpack.c.l.b16 %v5778
    %v6576 = vunpack.c.h.b16 %v5778
    %v6577 = vunpack.c.l.b16 %v5779
    %v6578 = vunpack.c.l.b16 %v5780
    %v6579 = vunpack.c.h.b16 %v5780
    %v6580 = vunpack.c.l.b16 %v5781
    %v6581 = vunpack.c.h.b16 %v5781
    %v6582 = vunpack.c.l.b16 %v5782
    %v6583 = vunpack.c.l.b16 %v5783
    %v6584 = vunpack.c.h.b16 %v5783
    %v6585 = vunpack.c.l.b16 %v5784
    %v6586 = vunpack.c.h.b16 %v5784
    %v6587 = vunpack.c.l.b16 %v5785
    %v6588 = vunpack.c.l.b16 %v5786
    %v6589 = vunpack.c.h.b16 %v5786
    %v6590 = vunpack.c.l.b16 %v5787
    %v6591 = vunpack.c.h.b16 %v5787
    %v6592 = vunpack.c.l.b16 %v5788
    %v6593 = vunpack.c.l.b16 %v5789
    %v6594 = vunpack.c.h.b16 %v5789
    %v6595 = vunpack.c.l.b16 %v5790
    %v6596 = vunpack.c.h.b16 %v5790
    %v6597 = vunpack.c.l.b16 %v5791
    %v6598 = vunpack.c.l.b16 %v5792
    %v6599 = vunpack.c.h.b16 %v5792
    %v6600 = vunpack.c.l.b16 %v5793
    %v6601 = vunpack.c.h.b16 %v5793
    %v6602 = vunpack.c.l.b16 %v5794
    %v6603 = vunpack.c.l.b16 %v5795
    %v6604 = vunpack.c.h.b16 %v5795
    %v6605 = vunpack.c.l.b16 %v5796
    %v6606 = vunpack.c.h.b16 %v5796
    %v6607 = vunpack.c.l.b16 %v5797
    %v6608 = vunpack.c.l.b16 %v5798
    %v6609 = vunpack.c.h.b16 %v5798
    %v6610 = vunpack.c.l.b16 %v5799
    %v6611 = vunpack.c.h.b16 %v5799
    %v6612 = vunpack.c.l.b16 %v5800
    %v6613 = vunpack.c.l.b16 %v5801
    %v6614 = vunpack.c.h.b16 %v5801
    %v6615 = vunpack.c.l.b16 %v5802
    %v6616 = vunpack.c.h.b16 %v5802
    %v6617 = vunpack.c.l.b16 %v5803
    %v6618 = vunpack.c.l.b16 %v5804
    %v6619 = vunpack.c.h.b16 %v5804
    %v6620 = vunpack.c.l.b16 %v5805
    %v6621 = vunpack.c.h.b16 %v5805
    %v6622 = vunpack.c.l.b16 %v5806
    %v6623 = vunpack.c.l.b16 %v5807
    %v6624 = vunpack.c.h.b16 %v5807
    %v6625 = vunpack.c.l.b16 %v5808
    %v6626 = vunpack.c.h.b16 %v5808
    %v6627 = vunpack.c.l.b16 %v5809
    %v6628 = vunpack.c.l.b16 %v5810
    %v6629 = vunpack.c.h.b16 %v5810
    %v6630 = vunpack.c.l.b16 %v5811
    %v6631 = vunpack.c.h.b16 %v5811
    %v6632 = vunpack.c.l.b16 %v5812
    %v6633 = vunpack.c.l.b16 %v5813
    %v6634 = vunpack.c.h.b16 %v5813
    %v6635 = vunpack.c.l.b16 %v5814
    %v6636 = vunpack.c.h.b16 %v5814
    %v6637 = vunpack.c.l.b16 %v5815
    %v6638 = vunpack.c.l.b16 %v5816
    %v6639 = vunpack.c.h.b16 %v5816
    %v6640 = vunpack.c.l.b16 %v5817
    %v6641 = vunpack.c.h.b16 %v5817
    %v6642 = vunpack.c.l.b16 %v5818
    %v6643 = vunpack.c.l.b16 %v5819
    %v6644 = vunpack.c.h.b16 %v5819
    %v6645 = vunpack.c.l.b16 %v5820
    %v6646 = vunpack.c.h.b16 %v5820
    %v6647 = vunpack.c.l.b16 %v5821
    %v6648 = vunpack.c.l.b16 %v5822
    %v6649 = vunpack.c.h.b16 %v5822
    %v6650 = vunpack.c.l.b16 %v5823
    %v6651 = vunpack.c.h.b16 %v5823
    %v6652 = vunpack.c.l.b16 %v5824
    %v6653 = vunpack.c.l.b16 %v5825
    %v6654 = vunpack.c.h.b16 %v5825
    %v6655 = vunpack.c.l.b16 %v5826
    %v6656 = vunpack.c.h.b16 %v5826
    %v6657 = vunpack.c.l.b16 %v5827
    %v6658 = vunpack.c.l.b16 %v5828
    %v6659 = vunpack.c.h.b16 %v5828
    %v6660 = vunpack.c.l.b16 %v5829
    %v6661 = vunpack.c.h.b16 %v5829
    %v6662 = vunpack.c.l.b16 %v5830
    %v6663 = vunpack.c.l.b16 %v5831
    %v6664 = vunpack.c.h.b16 %v5831
    %v6665 = vunpack.c.l.b16 %v5832
    %v6666 = vunpack.c.h.b16 %v5832
    %v6667 = vunpack.c.l.b16 %v5833
    %v6668 = vunpack.c.l.b16 %v5834
    %v6669 = vunpack.c.h.b16 %v5834
    %v6670 = vunpack.c.l.b16 %v5835
    %v6671 = vunpack.c.h.b16 %v5835
    %v6672 = vunpack.c.l.b16 %v5836
    %v6673 = vunpack.c.l.b16 %v5837
    %v6674 = vunpack.c.h.b16 %v5837
    %v6675 = vunpack.c.l.b16 %v5838
    %v6676 = vunpack.c.h.b16 %v5838
    %v6677 = vunpack.c.l.b16 %v5839
    %v6678 = vunpack.c.l.b16 %v5840
    %v6679 = vunpack.c.h.b16 %v5840
    %v6680 = vunpack.c.l.b16 %v5841
    %v6681 = vunpack.c.h.b16 %v5841
    %v6682 = vunpack.c.l.b16 %v5842
    %v6683 = vunpack.c.l.b16 %v5843
    %v6684 = vunpack.c.h.b16 %v5843
    %v6685 = vunpack.c.l.b16 %v5844
    %v6686 = vunpack.c.h.b16 %v5844
    %v6687 = vunpack.c.l.b16 %v5845
    %v6688 = vunpack.c.l.b16 %v5846
    %v6689 = vunpack.c.h.b16 %v5846
    %v6690 = vunpack.c.l.b16 %v5847
    %v6691 = vunpack.c.h.b16 %v5847
    %v6692 = vunpack.c.l.b16 %v5848
    %v6693 = vunpack.c.l.b16 %v5849
    %v6694 = vunpack.c.h.b16 %v5849
    %v6695 = vunpack.c.l.b16 %v5850
    %v6696 = vunpack.c.h.b16 %v5850
    %v6697 = vunpack.c.l.b16 %v5851
    %v6698 = vunpack.c.l.b16 %v5852
    %v6699 = vunpack.c.h.b16 %v5852
    %v6700 = vunpack.c.l.b16 %v5853
    %v6701 = vunpack.c.h.b16 %v5853
    %v6702 = vunpack.c.l.b16 %v5854
    %v6703 = vunpack.c.l.b16 %v5855
    %v6704 = vunpack.c.h.b16 %v5855
    %v6705 = vunpack.c.l.b16 %v5856
    %v6706 = vunpack.c.h.b16 %v5856
    %v6707 = vunpack.c.l.b16 %v5857
    %v6708 = vunpack.c.l.b16 %v5858
    %v6709 = vunpack.c.h.b16 %v5858
    %v6710 = vunpack.c.l.b16 %v5859
    %v6711 = vunpack.c.h.b16 %v5859
    %v6712 = vunpack.c.l.b16 %v5860
    %v6713 = vunpack.c.l.b16 %v5861
    %v6714 = vunpack.c.h.b16 %v5861
    %v6715 = vunpack.c.l.b16 %v5862
    %v6716 = vunpack.c.h.b16 %v5862
    %v6717 = vunpack.c.l.b16 %v5863
    %v6718 = vunpack.c.l.b16 %v5864
    %v6719 = vunpack.c.h.b16 %v5864
    %v6720 = vunpack.c.l.b16 %v5865
    %v6721 = vunpack.c.h.b16 %v5865
    %v6722 = vunpack.c.l.b16 %v5866
    %v6723 = vunpack.c.l.b16 %v5867
    %v6724 = vunpack.c.h.b16 %v5867
    %v6725 = vunpack.c.l.b16 %v5868
    %v6726 = vunpack.c.h.b16 %v5868
    %v6727 = vunpack.c.l.b16 %v5869
    %v6728 = vunpack.c.l.b16 %v5870
    %v6729 = vunpack.c.h.b16 %v5870
    %v6730 = vunpack.c.l.b16 %v5871
    %v6731 = vunpack.c.h.b16 %v5871
    %v6732 = vunpack.c.l.b16 %v5872
    %v6733 = vunpack.c.l.b16 %v5873
    %v6734 = vunpack.c.h.b16 %v5873
    %v6735 = vunpack.c.l.b16 %v5874
    %v6736 = vunpack.c.h.b16 %v5874
    %v6737 = vunpack.c.l.b16 %v5875
    %v6738 = vunpack.c.l.b16 %v5876
    %v6739 = vunpack.c.h.b16 %v5876
    %v6740 = vunpack.c.l.b16 %v5877
    %v6741 = vunpack.c.h.b16 %v5877
    %v6742 = vunpack.c.l.b16 %v5878
    %v6743 = vunpack.c.l.b16 %v5879
    %v6744 = vunpack.c.h.b16 %v5879
    %v6745 = vunpack.c.l.b16 %v5880
    %v6746 = vunpack.c.h.b16 %v5880
    %v6747 = vunpack.c.l.b16 %v5881
    %v6748 = vunpack.c.l.b16 %v5882
    %v6749 = vunpack.c.h.b16 %v5882
    %v6750 = vunpack.c.l.b16 %v5883
    %v6751 = vunpack.c.h.b16 %v5883
    %v6752 = vunpack.c.l.b16 %v5884
    %v6753 = vunpack.c.l.b16 %v5885
    %v6754 = vunpack.c.h.b16 %v5885
    %v6755 = vunpack.c.l.b16 %v5886
    %v6756 = vunpack.c.h.b16 %v5886
    %v6757 = vunpack.c.l.b16 %v5887
    %v6758 = vunpack.c.l.b16 %v5888
    %v6759 = vunpack.c.h.b16 %v5888
    %v6760 = vunpack.c.l.b16 %v5889
    %v6761 = vunpack.c.h.b16 %v5889
    %v6762 = vunpack.c.l.b16 %v5890
    %v6763 = vunpack.c.l.b16 %v5891
    %v6764 = vunpack.c.h.b16 %v5891
    %v6765 = vunpack.c.l.b16 %v5892
    %v6766 = vunpack.c.h.b16 %v5892
    %v6767 = vunpack.c.l.b16 %v5893
    %v6768 = vunpack.c.l.b16 %v5894
    %v6769 = vunpack.c.h.b16 %v5894
    %v6770 = vunpack.c.l.b16 %v5895
    %v6771 = vunpack.c.h.b16 %v5895
    %v6772 = vunpack.c.l.b16 %v5896
    %v6773 = vunpack.c.l.b16 %v5897
    %v6774 = vunpack.c.h.b16 %v5897
    %v6775 = vunpack.c.l.b16 %v5898
    %v6776 = vunpack.c.h.b16 %v5898
    %v6777 = vunpack.c.l.b16 %v5899
    %v6778 = vunpack.c.l.b16 %v5900
    %v6779 = vunpack.c.h.b16 %v5900
    %v6780 = vunpack.c.l.b16 %v5901
    %v6781 = vunpack.c.h.b16 %v5901
    %v6782 = vunpack.c.l.b16 %v5902
    %v6783 = vunpack.c.l.b16 %v5903
    %v6784 = vunpack.c.h.b16 %v5903
    %v6785 = vunpack.c.l.b16 %v5904
    %v6786 = vunpack.c.h.b16 %v5904
    %v6787 = vunpack.c.l.b16 %v5905
    %v6788 = vunpack.c.l.b16 %v5906
    %v6789 = vunpack.c.h.b16 %v5906
    %v6790 = vunpack.c.l.b16 %v5907
    %v6791 = vunpack.c.h.b16 %v5907
    %v6792 = vunpack.c.l.b16 %v5908
    %v6793 = vunpack.c.l.b16 %v5909
    %v6794 = vunpack.c.h.b16 %v5909
    %v6795 = vunpack.c.l.b16 %v5910
    %v6796 = vunpack.c.h.b16 %v5910
    %v6797 = vunpack.c.l.b16 %v5911
    %v6798 = vunpack.c.l.b16 %v5912
    %v6799 = vunpack.c.h.b16 %v5912
    %v6800 = vunpack.c.l.b16 %v5913
    %v6801 = vunpack.c.h.b16 %v5913
    %v6802 = vunpack.c.l.b16 %v5914
    %v6803 = vunpack.c.l.b16 %v5915
    %v6804 = vunpack.c.h.b16 %v5915
    %v6805 = vunpack.c.l.b16 %v5916
    %v6806 = vunpack.c.h.b16 %v5916
    %v6807 = vunpack.c.l.b16 %v5917
    %v6808 = vunpack.c.l.b16 %v5918
    %v6809 = vunpack.c.h.b16 %v5918
    %v6810 = vunpack.c.l.b16 %v5919
    %v6811 = vunpack.c.h.b16 %v5919
    %v6812 = vunpack.c.l.b16 %v5920
    %v6813 = vunpack.c.l.b16 %v5921
    %v6814 = vunpack.c.h.b16 %v5921
    %v6815 = vunpack.c.l.b16 %v5922
    %v6816 = vunpack.c.h.b16 %v5922
    %v6817 = vunpack.c.l.b16 %v5923
    %v6818 = vunpack.c.l.b16 %v5924
    %v6819 = vunpack.c.h.b16 %v5924
    %v6820 = vunpack.c.l.b16 %v5925
    %v6821 = vunpack.c.h.b16 %v5925
    %v6822 = vunpack.c.l.b16 %v5926
    %v6823 = vunpack.c.l.b16 %v5927
    %v6824 = vunpack.c.h.b16 %v5927
    %v6825 = vunpack.c.l.b16 %v5928
    %v6826 = vunpack.c.h.b16 %v5928
    %v6827 = vunpack.c.l.b16 %v5929
    %v6828 = vunpack.c.l.b16 %v5930
    %v6829 = vunpack.c.h.b16 %v5930
    %v6830 = vunpack.c.l.b16 %v5931
    %v6831 = vunpack.c.h.b16 %v5931
    %v6832 = vunpack.c.l.b16 %v5932
    %v6833 = vunpack.c.l.b16 %v5933
    %v6834 = vunpack.c.h.b16 %v5933
    %v6835 = vunpack.c.l.b16 %v5934
    %v6836 = vunpack.c.h.b16 %v5934
    %v6837 = vunpack.c.l.b16 %v5935
    %v6838 = vunpack.c.l.b16 %v5936
    %v6839 = vunpack.c.h.b16 %v5936
    %v6840 = vunpack.c.l.b16 %v5937
    %v6841 = vunpack.c.h.b16 %v5937
    %v6842 = vunpack.c.l.b16 %v5938
    %v6843 = vunpack.c.l.b16 %v5939
    %v6844 = vunpack.c.h.b16 %v5939
    %v6845 = vunpack.c.l.b16 %v5940
    %v6846 = vunpack.c.h.b16 %v5940
    %v6847 = vunpack.c.l.b16 %v5941
    %v6848 = vunpack.c.l.b16 %v5942
    %v6849 = vunpack.c.h.b16 %v5942
    %v6850 = vunpack.c.l.b16 %v5943
    %v6851 = vunpack.c.h.b16 %v5943
    %v6852 = vunpack.c.l.b16 %v5944
    %v6853 = vunpack.c.l.b16 %v5945
    %v6854 = vunpack.c.h.b16 %v5945
    %v6855 = vunpack.c.l.b16 %v5946
    %v6856 = vunpack.c.h.b16 %v5946
    %v6857 = vunpack.c.l.b16 %v5947
    %v6858 = vunpack.c.l.b16 %v5948
    %v6859 = vunpack.c.h.b16 %v5948
    %v6860 = vunpack.c.l.b16 %v5949
    %v6861 = vunpack.c.h.b16 %v5949
    %v6862 = vunpack.c.l.b16 %v5950
    %v6863 = vunpack.c.l.b16 %v5951
    %v6864 = vunpack.c.h.b16 %v5951
    %v6865 = vunpack.c.l.b16 %v5952
    %v6866 = vunpack.c.h.b16 %v5952
    %v6867 = vunpack.c.l.b16 %v5953
    %v6868 = vunpack.c.l.b16 %v5954
    %v6869 = vunpack.c.h.b16 %v5954
    %v6870 = vunpack.c.l.b16 %v5955
    %v6871 = vunpack.c.h.b16 %v5955
    %v6872 = vunpack.c.l.b16 %v5956
    %v6873 = vunpack.c.l.b16 %v5957
    %v6874 = vunpack.c.h.b16 %v5957
    %v6875 = vunpack.c.l.b16 %v5958
    %v6876 = vunpack.c.h.b16 %v5958
    %v6877 = vunpack.c.l.b16 %v5959
    %v6878 = vunpack.c.l.b16 %v5960
    %v6879 = vunpack.c.h.b16 %v5960
    %v6880 = vunpack.c.l.b16 %v5961
    %v6881 = vunpack.c.h.b16 %v5961
    %v6882 = vunpack.c.l.b16 %v5962
    %v6883 = vunpack.c.l.b16 %v5963
    %v6884 = vunpack.c.h.b16 %v5963
    %v6885 = vunpack.c.l.b16 %v5964
    %v6886 = vunpack.c.h.b16 %v5964
    %v6887 = vunpack.c.l.b16 %v5965
    %v6888 = vunpack.c.l.b16 %v5966
    %v6889 = vunpack.c.h.b16 %v5966
    %v6890 = vunpack.c.l.b16 %v5967
    %v6891 = vunpack.c.h.b16 %v5967
    %v6892 = vunpack.c.l.b16 %v5968
    %v6893 = vunpack.c.l.b16 %v5969
    %v6894 = vunpack.c.h.b16 %v5969
    %v6895 = vunpack.c.l.b16 %v5970
    %v6896 = vunpack.c.h.b16 %v5970
    %v6897 = vunpack.c.l.b16 %v5971
    %v6898 = vunpack.c.l.b16 %v5972
    %v6899 = vunpack.c.h.b16 %v5972
    %v6900 = vunpack.c.l.b16 %v5973
    %v6901 = vunpack.c.h.b16 %v5973
    %v6902 = vunpack.c.l.b16 %v5974
    %v6903 = vunpack.c.l.b16 %v5975
    %v6904 = vunpack.c.h.b16 %v5975
    %v6905 = vunpack.c.l.b16 %v5976
    %v6906 = vunpack.c.h.b16 %v5976
    %v6907 = vunpack.c.l.b16 %v5977
    %v6908 = vunpack.c.l.b16 %v5978
    %v6909 = vunpack.c.h.b16 %v5978
    %v6910 = vunpack.c.l.b16 %v5979
    %v6911 = vunpack.c.h.b16 %v5979
    %v6912 = vunpack.c.l.b16 %v5980
    %v6913 = vunpack.c.l.b16 %v5981
    %v6914 = vunpack.c.h.b16 %v5981
    %v6915 = vunpack.c.l.b16 %v5982
    %v6916 = vunpack.c.h.b16 %v5982
    %v6917 = vunpack.c.l.b16 %v5983
    %v6918 = vunpack.c.l.b16 %v5984
    %v6919 = vunpack.c.h.b16 %v5984
    %v6920 = vunpack.c.l.b16 %v5985
    %v6921 = vunpack.c.h.b16 %v5985
    %v6922 = vunpack.c.l.b16 %v5986
    %v6923 = vunpack.c.l.b16 %v5987
    %v6924 = vunpack.c.h.b16 %v5987
    %v6925 = vunpack.c.l.b16 %v5988
    %v6926 = vunpack.c.h.b16 %v5988
    %v6927 = vunpack.c.l.b16 %v5989
    %v6928 = vunpack.c.l.b16 %v5990
    %v6929 = vunpack.c.h.b16 %v5990
    %v6930 = vunpack.c.l.b16 %v5991
    %v6931 = vunpack.c.h.b16 %v5991
    %v6932 = vunpack.c.l.b16 %v5992
    %v6933 = vunpack.c.l.b16 %v5993
    %v6934 = vunpack.c.h.b16 %v5993
    %v6935 = vunpack.c.l.b16 %v5994
    %v6936 = vunpack.c.h.b16 %v5994
    %v6937 = vunpack.c.l.b16 %v5995
    %v6938 = vunpack.c.l.b16 %v5996
    %v6939 = vunpack.c.h.b16 %v5996
    %v6940 = vunpack.c.l.b16 %v5997
    %v6941 = vunpack.c.h.b16 %v5997
    %v6942 = vunpack.c.l.b16 %v5998
    %v6943 = vunpack.c.l.b16 %v5999
    %v6944 = vunpack.c.h.b16 %v5999
    %v6945 = vunpack.c.l.b16 %v6000
    %v6946 = vunpack.c.h.b16 %v6000
    %v6947 = vunpack.c.l.b16 %v6001
    %v6948 = vunpack.c.l.b16 %v6002
    %v6949 = vunpack.c.h.b16 %v6002
    %v6950 = vunpack.c.l.b16 %v6003
    %v6951 = vunpack.c.h.b16 %v6003
    %v6952 = vunpack.c.l.b16 %v6004
    %v6953 = vunpack.c.l.b16 %v6005
    %v6954 = vunpack.c.h.b16 %v6005
    %v6955 = vunpack.c.l.b16 %v6006
    %v6956 = vunpack.c.h.b16 %v6006
    %v6957 = vunpack.c.l.b16 %v6007
    %v6958 = vunpack.c.l.b16 %v6008
    %v6959 = vunpack.c.h.b16 %v6008
    %v6960 = vunpack.c.l.b16 %v6009
    %v6961 = vunpack.c.h.b16 %v6009
    %v6962 = vunpack.c.l.b16 %v6010
    %v6963 = vunpack.c.l.b16 %v6011
    %v6964 = vunpack.c.h.b16 %v6011
    %v6965 = vunpack.c.l.b16 %v6012
    %v6966 = vunpack.c.h.b16 %v6012
    %v6967 = vunpack.c.l.b16 %v6013
    %v6968 = vunpack.c.l.b16 %v6014
    %v6969 = vunpack.c.h.b16 %v6014
    %v6970 = vunpack.c.l.b16 %v6015
    %v6971 = vunpack.c.h.b16 %v6015
    %v6972 = vunpack.c.l.b16 %v6016
    %v6973 = vunpack.c.l.b16 %v6017
    %v6974 = vunpack.c.h.b16 %v6017
    %v6975 = vunpack.c.l.b16 %v6018
    %v6976 = vunpack.c.h.b16 %v6018
    %v6977 = vunpack.c.l.b16 %v6019
    %v6978 = vunpack.c.l.b16 %v6020
    %v6979 = vunpack.c.h.b16 %v6020
    %v6980 = vunpack.c.l.b16 %v6021
    %v6981 = vunpack.c.h.b16 %v6021
    %v6982 = vunpack.c.l.b16 %v6022
    %v6983 = vunpack.c.l.b16 %v6023
    %v6984 = vunpack.c.h.b16 %v6023
    %v6985 = vunpack.c.l.b16 %v6024
    %v6986 = vunpack.c.h.b16 %v6024
    %v6987 = vunpack.c.l.b16 %v6025
    %v6988 = vunpack.c.l.b16 %v6026
    %v6989 = vunpack.c.h.b16 %v6026
    %v6990 = vunpack.c.l.b16 %v6027
    %v6991 = vunpack.c.h.b16 %v6027
    %v6992 = vunpack.c.l.b16 %v6028
    %v6993 = vunpack.c.l.b16 %v6029
    %v6994 = vunpack.c.h.b16 %v6029
    %v6995 = vunpack.c.l.b16 %v6030
    %v6996 = vunpack.c.h.b16 %v6030
    %v6997 = vunpack.c.l.b16 %v6031
    %v6998 = vunpack.c.l.b16 %v6032
    %v6999 = vunpack.c.h.b16 %v6032
    %v7000 = vunpack.c.l.b16 %v6033
    %v7001 = vunpack.c.h.b16 %v6033
    %v7002 = vunpack.c.l.b16 %v6034
    %v7003 = vunpack.c.l.b16 %v6035
    %v7004 = vunpack.c.h.b16 %v6035
    %v7005 = vunpack.c.l.b16 %v6036
    %v7006 = vunpack.c.h.b16 %v6036
    %v7007 = vunpack.c.l.b16 %v6037
    %v7008 = vunpack.c.l.b16 %v6038
    %v7009 = vunpack.c.h.b16 %v6038
    %v7010 = vunpack.c.l.b16 %v6039
    %v7011 = vunpack.c.h.b16 %v6039
    %v7012 = vunpack.c.l.b16 %v6040
    %v7013 = vunpack.c.l.b16 %v6041
    %v7014 = vunpack.c.h.b16 %v6041
    %v7015 = vunpack.c.l.b16 %v6042
    %v7016 = vunpack.c.h.b16 %v6042
    %v7017 = vunpack.c.l.b16 %v6043
    %v7018 = vunpack.c.l.b16 %v6044
    %v7019 = vunpack.c.h.b16 %v6044
    %v7020 = vunpack.c.l.b16 %v6045
    %v7021 = vunpack.c.h.b16 %v6045
    %v7022 = vunpack.c.l.b16 %v6046
    %v7023 = vunpack.c.l.b16 %v6047
    %v7024 = vunpack.c.h.b16 %v6047
    %v7025 = vunpack.c.l.b16 %v6048
    %v7026 = vunpack.c.h.b16 %v6048
    %v7027 = vunpack.c.l.b16 %v6049
    %v7028 = vunpack.c.l.b16 %v6050
    %v7029 = vunpack.c.h.b16 %v6050
    %v7030 = vunpack.c.l.b16 %v6051
    %v7031 = vunpack.c.h.b16 %v6051
    %v7032 = vunpack.c.l.b16 %v6052
    %v7033 = vunpack.c.l.b16 %v6053
    %v7034 = vunpack.c.h.b16 %v6053
    %v7035 = vunpack.c.l.b16 %v6054
    %v7036 = vunpack.c.h.b16 %v6054
    %v7037 = vunpack.c.l.b16 %v6055
    %v7038 = vunpack.c.l.b16 %v6056
    %v7039 = vunpack.c.h.b16 %v6056
    %v7040 = vunpack.c.l.b16 %v6057
    %v7041 = vunpack.c.h.b16 %v6057
    %v7042 = vunpack.c.l.b16 %v6058
    %v7043 = vunpack.c.l.b16 %v6059
    %v7044 = vunpack.c.h.b16 %v6059
    %v7045 = vunpack.c.l.b16 %v6060
    %v7046 = vunpack.c.h.b16 %v6060
    %v7047 = vunpack.c.l.b16 %v6061
    %v7048 = vunpack.c.l.b16 %v6062
    %v7049 = vunpack.c.h.b16 %v6062
    %v7050 = vunpack.c.l.b16 %v6063
    %v7051 = vunpack.c.h.b16 %v6063
    %v7052 = vunpack.c.l.b16 %v6064
    %v7053 = vunpack.c.l.b16 %v6065
    %v7054 = vunpack.c.h.b16 %v6065
    %v7055 = vunpack.c.l.b16 %v6066
    %v7056 = vunpack.c.h.b16 %v6066
    %v7057 = vunpack.c.l.b16 %v6067
    %v7058 = vunpack.c.l.b16 %v6068
    %v7059 = vunpack.c.h.b16 %v6068
    %v7060 = vunpack.c.l.b16 %v6069
    %v7061 = vunpack.c.h.b16 %v6069
    %v7062 = vunpack.c.l.b16 %v6070
    %v7063 = vunpack.c.l.b16 %v6071
    %v7064 = vunpack.c.h.b16 %v6071
    %v7065 = vunpack.c.l.b16 %v6072
    %v7066 = vunpack.c.h.b16 %v6072
    %v7067 = vunpack.c.l.b16 %v6073
    %v7068 = vunpack.c.l.b16 %v6074
    %v7069 = vunpack.c.h.b16 %v6074
    %v7070 = vunpack.c.l.b16 %v6075
    %v7071 = vunpack.c.h.b16 %v6075
    %v7072 = vunpack.c.l.b16 %v6076
    %v7073 = vunpack.c.l.b16 %v6077
    %v7074 = vunpack.c.h.b16 %v6077
    %v7075 = vunpack.c.l.b16 %v6078
    %v7076 = vunpack.c.h.b16 %v6078
    %v7077 = vunpack.c.l.b16 %v6079
    %v7078 = vunpack.c.l.b16 %v6080
    %v7079 = vunpack.c.h.b16 %v6080
    %v7080 = vunpack.c.l.b16 %v6081
    %v7081 = vunpack.c.h.b16 %v6081
    %v7082 = vunpack.c.l.b16 %v6082
    %v7083 = vunpack.c.l.b16 %v6083
    %v7084 = vunpack.c.h.b16 %v6083
    %v7085 = vunpack.c.l.b16 %v6084
    %v7086 = vunpack.c.h.b16 %v6084
    %v7087 = vunpack.c.l.b16 %v6085
    %v7088 = vunpack.c.l.b16 %v6086
    %v7089 = vunpack.c.h.b16 %v6086
    %v7090 = vunpack.c.l.b16 %v6087
    %v7091 = vunpack.c.h.b16 %v6087
    %v7092 = vunpack.c.l.b16 %v6088
    %v7093 = vunpack.c.l.b16 %v6089
    %v7094 = vunpack.c.h.b16 %v6089
    %v7095 = vunpack.c.l.b16 %v6090
    %v7096 = vunpack.c.h.b16 %v6090
    %v7097 = vunpack.c.l.b16 %v6091
    %v7098 = vunpack.c.l.b16 %v6092
    %v7099 = vunpack.c.h.b16 %v6092
    %v7100 = vunpack.c.l.b16 %v6093
    %v7101 = vunpack.c.h.b16 %v6093
    %v7102 = vunpack.c.l.b16 %v6094
    %v7103 = vunpack.c.l.b16 %v6095
    %v7104 = vunpack.c.h.b16 %v6095
    %v7105 = vunpack.c.l.b16 %v6096
    %v7106 = vunpack.c.h.b16 %v6096
    %v7107 = vunpack.c.l.b16 %v6097
    %v7108 = vunpack.c.l.b16 %v6098
    %v7109 = vunpack.c.h.b16 %v6098
    %v7110 = vunpack.c.l.b16 %v6099
    %v7111 = vunpack.c.h.b16 %v6099
    %v7112 = vunpack.c.l.b16 %v6100
    %v7113 = vunpack.c.l.b16 %v6101
    %v7114 = vunpack.c.h.b16 %v6101
    %v7115 = vunpack.c.l.b16 %v6102
    %v7116 = vunpack.c.h.b16 %v6102
    %v7117 = vunpack.c.l.b16 %v6103
    %v7118 = vunpack.c.l.b16 %v6104
    %v7119 = vunpack.c.h.b16 %v6104
    %v7120 = vunpack.c.l.b16 %v6105
    %v7121 = vunpack.c.h.b16 %v6105
    %v7122 = vunpack.c.l.b16 %v6106
    %v7123 = vunpack.c.l.b16 %v6107
    %v7124 = vunpack.c.h.b16 %v6107
    %v7125 = vunpack.c.l.b16 %v6108
    %v7126 = vunpack.c.h.b16 %v6108
    %v7127 = vunpack.c.l.b16 %v6109
    %v7128 = vunpack.c.l.b16 %v6110
    %v7129 = vunpack.c.h.b16 %v6110
    %v7130 = vunpack.c.l.b16 %v6111
    %v7131 = vunpack.c.h.b16 %v6111
    %v7132 = vunpack.c.l.b16 %v6112
    %v7133 = vunpack.c.l.b16 %v6113
    %v7134 = vunpack.c.h.b16 %v6113
    %v7135 = vunpack.c.l.b16 %v6114
    %v7136 = vunpack.c.h.b16 %v6114
    %v7137 = vunpack.c.l.b16 %v6115
    %v7138 = vunpack.c.l.b16 %v6116
    %v7139 = vunpack.c.h.b16 %v6116
    %v7140 = vunpack.c.l.b16 %v6117
    %v7141 = vunpack.c.h.b16 %v6117
    %v7142 = vunpack.c.l.b16 %v6118
    %v7143 = vunpack.c.l.b16 %v6119
    %v7144 = vunpack.c.h.b16 %v6119
    %v7145 = vunpack.c.l.b16 %v6120
    %v7146 = vunpack.c.h.b16 %v6120
    %v7147 = vunpack.c.l.b16 %v6121
    %v7148 = vunpack.c.l.b16 %v6122
    %v7149 = vunpack.c.h.b16 %v6122
    %v7150 = vunpack.c.l.b16 %v6123
    %v7151 = vunpack.c.h.b16 %v6123
    %v7152 = vunpack.c.l.b16 %v6124
    %v7153 = vunpack.c.l.b16 %v6125
    %v7154 = vunpack.c.h.b16 %v6125
    %v7155 = vunpack.c.l.b16 %v6126
    %v7156 = vunpack.c.h.b16 %v6126
    %v7157 = vunpack.c.l.b16 %v6127
    %v7158 = vunpack.c.l.b16 %v6128
    %v7159 = vunpack.c.h.b16 %v6128
    %v7160 = vunpack.c.l.b16 %v6129
    %v7161 = vunpack.c.h.b16 %v6129
    %v7162 = vunpack.c.l.b16 %v6130
    %v7163 = vunpack.c.l.b16 %v6131
    %v7164 = vunpack.c.h.b16 %v6131
    %v7165 = vunpack.c.l.b16 %v6132
    %v7166 = vunpack.c.h.b16 %v6132
    %v7167 = vunpack.c.l.b16 %v6133
    %v7168 = vunpack.c.l.b16 %v6134
    %v7169 = vunpack.c.h.b16 %v6134
    %v7170 = vunpack.c.l.b16 %v6135
    %v7171 = vunpack.c.h.b16 %v6135
    %v7172 = vunpack.c.l.b16 %v6136
    %v7173 = vpack.c.b16 %v6538, %v6533
    %v7174 = vpack.c.b16 %v6539, %v6534
    %v7175 = vpack.c.b16 %v6540, %v6535
    %v7176 = vpack.c.b16 %v6541, %v6536
    %v7177 = vpack.c.b16 %v6542, %v6537
    %v7178 = vpack.c.b16 %v6548, %v6543
    %v7179 = vpack.c.b16 %v6549, %v6544
    %v7180 = vpack.c.b16 %v6550, %v6545
    %v7181 = vpack.c.b16 %v6551, %v6546
    %v7182 = vpack.c.b16 %v6552, %v6547
    %v7183 = vpack.c.b16 %v6558, %v6553
    %v7184 = vpack.c.b16 %v6559, %v6554
    %v7185 = vpack.c.b16 %v6560, %v6555
    %v7186 = vpack.c.b16 %v6561, %v6556
    %v7187 = vpack.c.b16 %v6562, %v6557
    %v7188 = vpack.c.b16 %v6568, %v6563
    %v7189 = vpack.c.b16 %v6569, %v6564
    %v7190 = vpack.c.b16 %v6570, %v6565
    %v7191 = vpack.c.b16 %v6571, %v6566
    %v7192 = vpack.c.b16 %v6572, %v6567
    %v7193 = vpack.c.b16 %v6578, %v6573
    %v7194 = vpack.c.b16 %v6579, %v6574
    %v7195 = vpack.c.b16 %v6580, %v6575
    %v7196 = vpack.c.b16 %v6581, %v6576
    %v7197 = vpack.c.b16 %v6582, %v6577
    %v7198 = vpack.c.b16 %v6588, %v6583
    %v7199 = vpack.c.b16 %v6589, %v6584
    %v7200 = vpack.c.b16 %v6590, %v6585
    %v7201 = vpack.c.b16 %v6591, %v6586
    %v7202 = vpack.c.b16 %v6592, %v6587
    %v7203 = vpack.c.b16 %v6598, %v6593
    %v7204 = vpack.c.b16 %v6599, %v6594
    %v7205 = vpack.c.b16 %v6600, %v6595
    %v7206 = vpack.c.b16 %v6601, %v6596
    %v7207 = vpack.c.b16 %v6602, %v6597
    %v7208 = vpack.c.b16 %v6608, %v6603
    %v7209 = vpack.c.b16 %v6609, %v6604
    %v7210 = vpack.c.b16 %v6610, %v6605
    %v7211 = vpack.c.b16 %v6611, %v6606
    %v7212 = vpack.c.b16 %v6612, %v6607
    %v7213 = vpack.c.b16 %v6618, %v6613
    %v7214 = vpack.c.b16 %v6619, %v6614
    %v7215 = vpack.c.b16 %v6620, %v6615
    %v7216 = vpack.c.b16 %v6621, %v6616
    %v7217 = vpack.c.b16 %v6622, %v6617
    %v7218 = vpack.c.b16 %v6628, %v6623
    %v7219 = vpack.c.b16 %v6629, %v6624
    %v7220 = vpack.c.b16 %v6630, %v6625
    %v7221 = vpack.c.b16 %v6631, %v6626
    %v7222 = vpack.c.b16 %v6632, %v6627
    %v7223 = vpack.c.b16 %v6638, %v6633
    %v7224 = vpack.c.b16 %v6639, %v6634
    %v7225 = vpack.c.b16 %v6640, %v6635
    %v7226 = vpack.c.b16 %v6641, %v6636
    %v7227 = vpack.c.b16 %v6642, %v6637
    %v7228 = vpack.c.b16 %v6648, %v6643
    %v7229 = vpack.c.b16 %v6649, %v6644
    %v7230 = vpack.c.b16 %v6650, %v6645
    %v7231 = vpack.c.b16 %v6651, %v6646
    %v7232 = vpack.c.b16 %v6652, %v6647
    %v7233 = vpack.c.b16 %v6658, %v6653
    %v7234 = vpack.c.b16 %v6659, %v6654
    %v7235 = vpack.c.b16 %v6660, %v6655
    %v7236 = vpack.c.b16 %v6661, %v6656
    %v7237 = vpack.c.b16 %v6662, %v6657
    %v7238 = vpack.c.b16 %v6668, %v6663
    %v7239 = vpack.c.b16 %v6669, %v6664
    %v7240 = vpack.c.b16 %v6670, %v6665
    %v7241 = vpack.c.b16 %v6671, %v6666
    %v7242 = vpack.c.b16 %v6672, %v6667
    %v7243 = vpack.c.b16 %v6678, %v6673
    %v7244 = vpack.c.b16 %v6679, %v6674
    %v7245 = vpack.c.b16 %v6680, %v6675
    %v7246 = vpack.c.b16 %v6681, %v6676
    %v7247 = vpack.c.b16 %v6682, %v6677
    %v7248 = vpack.c.b16 %v6688, %v6683
    %v7249 = vpack.c.b16 %v6689, %v6684
    %v7250 = vpack.c.b16 %v6690, %v6685
    %v7251 = vpack.c.b16 %v6691, %v6686
    %v7252 = vpack.c.b16 %v6692, %v6687
    %v7253 = vpack.c.b16 %v6698, %v6693
    %v7254 = vpack.c.b16 %v6699, %v6694
    %v7255 = vpack.c.b16 %v6700, %v6695
    %v7256 = vpack.c.b16 %v6701, %v6696
    %v7257 = vpack.c.b16 %v6702, %v6697
    %v7258 = vpack.c.b16 %v6708, %v6703
    %v7259 = vpack.c.b16 %v6709, %v6704
    %v7260 = vpack.c.b16 %v6710, %v6705
    %v7261 = vpack.c.b16 %v6711, %v6706
    %v7262 = vpack.c.b16 %v6712, %v6707
    %v7263 = vpack.c.b16 %v6718, %v6713
    %v7264 = vpack.c.b16 %v6719, %v6714
    %v7265 = vpack.c.b16 %v6720, %v6715
    %v7266 = vpack.c.b16 %v6721, %v6716
    %v7267 = vpack.c.b16 %v6722, %v6717
    %v7268 = vpack.c.b16 %v6728, %v6723
    %v7269 = vpack.c.b16 %v6729, %v6724
    %v7270 = vpack.c.b16 %v6730, %v6725
    %v7271 = vpack.c.b16 %v6731, %v6726
    %v7272 = vpack.c.b16 %v6732, %v6727
    %v7273 = vpack.c.b16 %v6738, %v6733
    %v7274 = vpack.c.b16 %v6739, %v6734
    %v7275 = vpack.c.b16 %v6740, %v6735
    %v7276 = vpack.c.b16 %v6741, %v6736
    %v7277 = vpack.c.b16 %v6742, %v6737
    %v7278 = vpack.c.b16 %v6748, %v6743
    %v7279 = vpack.c.b16 %v6749, %v6744
    %v7280 = vpack.c.b16 %v6750, %v6745
    %v7281 = vpack.c.b16 %v6751, %v6746
    %v7282 = vpack.c.b16 %v6752, %v6747
    %v7283 = vpack.c.b16 %v6758, %v6753
    %v7284 = vpack.c.b16 %v6759, %v6754
    %v7285 = vpack.c.b16 %v6760, %v6755
    %v7286 = vpack.c.b16 %v6761, %v6756
    %v7287 = vpack.c.b16 %v6762, %v6757
    %v7288 = vpack.c.b16 %v6768, %v6763
    %v7289 = vpack.c.b16 %v6769, %v6764
    %v7290 = vpack.c.b16 %v6770, %v6765
    %v7291 = vpack.c.b16 %v6771, %v6766
    %v7292 = vpack.c.b16 %v6772, %v6767
    %v7293 = vpack.c.b16 %v6778, %v6773
    %v7294 = vpack.c.b16 %v6779, %v6774
    %v7295 = vpack.c.b16 %v6780, %v6775
    %v7296 = vpack.c.b16 %v6781, %v6776
    %v7297 = vpack.c.b16 %v6782, %v6777
    %v7298 = vpack.c.b16 %v6788, %v6783
    %v7299 = vpack.c.b16 %v6789, %v6784
    %v7300 = vpack.c.b16 %v6790, %v6785
    %v7301 = vpack.c.b16 %v6791, %v6786
    %v7302 = vpack.c.b16 %v6792, %v6787
    %v7303 = vpack.c.b16 %v6798, %v6793
    %v7304 = vpack.c.b16 %v6799, %v6794
    %v7305 = vpack.c.b16 %v6800, %v6795
    %v7306 = vpack.c.b16 %v6801, %v6796
    %v7307 = vpack.c.b16 %v6802, %v6797
    %v7308 = vpack.c.b16 %v6808, %v6803
    %v7309 = vpack.c.b16 %v6809, %v6804
    %v7310 = vpack.c.b16 %v6810, %v6805
    %v7311 = vpack.c.b16 %v6811, %v6806
    %v7312 = vpack.c.b16 %v6812, %v6807
    %v7313 = vpack.c.b16 %v6818, %v6813
    %v7314 = vpack.c.b16 %v6819, %v6814
    %v7315 = vpack.c.b16 %v6820, %v6815
    %v7316 = vpack.c.b16 %v6821, %v6816
    %v7317 = vpack.c.b16 %v6822, %v6817
    %v7318 = vpack.c.b16 %v6828, %v6823
    %v7319 = vpack.c.b16 %v6829, %v6824
    %v7320 = vpack.c.b16 %v6830, %v6825
    %v7321 = vpack.c.b16 %v6831, %v6826
    %v7322 = vpack.c.b16 %v6832, %v6827
    %v7323 = vpack.c.b16 %v6838, %v6833
    %v7324 = vpack.c.b16 %v6839, %v6834
    %v7325 = vpack.c.b16 %v6840, %v6835
    %v7326 = vpack.c.b16 %v6841, %v6836
    %v7327 = vpack.c.b16 %v6842, %v6837
    %v7328 = vpack.c.b16 %v6848, %v6843
    %v7329 = vpack.c.b16 %v6849, %v6844
    %v7330 = vpack.c.b16 %v6850, %v6845
    %v7331 = vpack.c.b16 %v6851, %v6846
    %v7332 = vpack.c.b16 %v6852, %v6847
    %v7333 = vpack.c.b16 %v6858, %v6853
    %v7334 = vpack.c.b16 %v6859, %v6854
    %v7335 = vpack.c.b16 %v6860, %v6855
    %v7336 = vpack.c.b16 %v6861, %v6856
    %v7337 = vpack.c.b16 %v6862, %v6857
    %v7338 = vpack.c.b16 %v6868, %v6863
    %v7339 = vpack.c.b16 %v6869, %v6864
    %v7340 = vpack.c.b16 %v6870, %v6865
    %v7341 = vpack.c.b16 %v6871, %v6866
    %v7342 = vpack.c.b16 %v6872, %v6867
    %v7343 = vpack.c.b16 %v6878, %v6873
    %v7344 = vpack.c.b16 %v6879, %v6874
    %v7345 = vpack.c.b16 %v6880, %v6875
    %v7346 = vpack.c.b16 %v6881, %v6876
    %v7347 = vpack.c.b16 %v6882, %v6877
    %v7348 = vpack.c.b16 %v6888, %v6883
    %v7349 = vpack.c.b16 %v6889, %v6884
    %v7350 = vpack.c.b16 %v6890, %v6885
    %v7351 = vpack.c.b16 %v6891, %v6886
    %v7352 = vpack.c.b16 %v6892, %v6887
    %v7353 = vpack.c.b16 %v6898, %v6893
    %v7354 = vpack.c.b16 %v6899, %v6894
    %v7355 = vpack.c.b16 %v6900, %v6895
    %v7356 = vpack.c.b16 %v6901, %v6896
    %v7357 = vpack.c.b16 %v6902, %v6897
    %v7358 = vpack.c.b16 %v6908, %v6903
    %v7359 = vpack.c.b16 %v6909, %v6904
    %v7360 = vpack.c.b16 %v6910, %v6905
    %v7361 = vpack.c.b16 %v6911, %v6906
    %v7362 = vpack.c.b16 %v6912, %v6907
    %v7363 = vpack.c.b16 %v6918, %v6913
    %v7364 = vpack.c.b16 %v6919, %v6914
    %v7365 = vpack.c.b16 %v6920, %v6915
    %v7366 = vpack.c.b16 %v6921, %v6916
    %v7367 = vpack.c.b16 %v6922, %v6917
    %v7368 = vpack.c.b16 %v6928, %v6923
    %v7369 = vpack.c.b16 %v6929, %v6924
    %v7370 = vpack.c.b16 %v6930, %v6925
    %v7371 = vpack.c.b16 %v6931, %v6926
    %v7372 = vpack.c.b16 %v6932, %v6927
    %v7373 = vpack.c.b16 %v6938, %v6933
    %v7374 = vpack.c.b16 %v6939, %v6934
    %v7375 = vpack.c.b16 %v6940, %v6935
    %v7376 = vpack.c.b16 %v6941, %v6936
    %v7377 = vpack.c.b16 %v6942, %v6937
    %v7378 = vpack.c.b16 %v6948, %v6943
    %v7379 = vpack.c.b16 %v6949, %v6944
    %v7380 = vpack.c.b16 %v6950, %v6945
    %v7381 = vpack.c.b16 %v6951, %v6946
    %v7382 = vpack.c.b16 %v6952, %v6947
    %v7383 = vpack.c.b16 %v6958, %v6953
    %v7384 = vpack.c.b16 %v6959, %v6954
    %v7385 = vpack.c.b16 %v6960, %v6955
    %v7386 = vpack.c.b16 %v6961, %v6956
    %v7387 = vpack.c.b16 %v6962, %v6957
    %v7388 = vpack.c.b16 %v6968, %v6963
    %v7389 = vpack.c.b16 %v6969, %v6964
    %v7390 = vpack.c.b16 %v6970, %v6965
    %v7391 = vpack.c.b16 %v6971, %v6966
    %v7392 = vpack.c.b16 %v6972, %v6967
    %v7393 = vpack.c.b16 %v6978, %v6973
    %v7394 = vpack.c.b16 %v6979, %v6974
    %v7395 = vpack.c.b16 %v6980, %v6975
    %v7396 = vpack.c.b16 %v6981, %v6976
    %v7397 = vpack.c.b16 %v6982, %v6977
    %v7398 = vpack.c.b16 %v6988, %v6983
    %v7399 = vpack.c.b16 %v6989, %v6984
    %v7400 = vpack.c.b16 %v6990, %v6985
    %v7401 = vpack.c.b16 %v6991, %v6986
    %v7402 = vpack.c.b16 %v6992, %v6987
    %v7403 = vpack.c.b16 %v6998, %v6993
    %v7404 = vpack.c.b16 %v6999, %v6994
    %v7405 = vpack.c.b16 %v7000, %v6995
    %v7406 = vpack.c.b16 %v7001, %v6996
    %v7407 = vpack.c.b16 %v7002, %v6997
    %v7408 = vpack.c.b16 %v7008, %v7003
    %v7409 = vpack.c.b16 %v7009, %v7004
    %v7410 = vpack.c.b16 %v7010, %v7005
    %v7411 = vpack.c.b16 %v7011, %v7006
    %v7412 = vpack.c.b16 %v7012, %v7007
    %v7413 = vpack.c.b16 %v7018, %v7013
    %v7414 = vpack.c.b16 %v7019, %v7014
    %v7415 = vpack.c.b16 %v7020, %v7015
    %v7416 = vpack.c.b16 %v7021, %v7016
    %v7417 = vpack.c.b16 %v7022, %v7017
    %v7418 = vpack.c.b16 %v7028, %v7023
    %v7419 = vpack.c.b16 %v7029, %v7024
    %v7420 = vpack.c.b16 %v7030, %v7025
    %v7421 = vpack.c.b16 %v7031, %v7026
    %v7422 = vpack.c.b16 %v7032, %v7027
    %v7423 = vpack.c.b16 %v7038, %v7033
    %v7424 = vpack.c.b16 %v7039, %v7034
    %v7425 = vpack.c.b16 %v7040, %v7035
    %v7426 = vpack.c.b16 %v7041, %v7036
    %v7427 = vpack.c.b16 %v7042, %v7037
    %v7428 = vpack.c.b16 %v7048, %v7043
    %v7429 = vpack.c.b16 %v7049, %v7044
    %v7430 = vpack.c.b16 %v7050, %v7045
    %v7431 = vpack.c.b16 %v7051, %v7046
    %v7432 = vpack.c.b16 %v7052, %v7047
    %v7433 = vpack.c.b16 %v7058, %v7053
    %v7434 = vpack.c.b16 %v7059, %v7054
    %v7435 = vpack.c.b16 %v7060, %v7055
    %v7436 = vpack.c.b16 %v7061, %v7056
    %v7437 = vpack.c.b16 %v7062, %v7057
    %v7438 = vpack.c.b16 %v7068, %v7063
    %v7439 = vpack.c.b16 %v7069, %v7064
    %v7440 = vpack.c.b16 %v7070, %v7065
    %v7441 = vpack.c.b16 %v7071, %v7066
    %v7442 = vpack.c.b16 %v7072, %v7067
    %v7443 = vpack.c.b16 %v7078, %v7073
    %v7444 = vpack.c.b16 %v7079, %v7074
    %v7445 = vpack.c.b16 %v7080, %v7075
    %v7446 = vpack.c.b16 %v7081, %v7076
    %v7447 = vpack.c.b16 %v7082, %v7077
    %v7448 = vpack.c.b16 %v7088, %v7083
    %v7449 = vpack.c.b16 %v7089, %v7084
    %v7450 = vpack.c.b16 %v7090, %v7085
    %v7451 = vpack.c.b16 %v7091, %v7086
    %v7452 = vpack.c.b16 %v7092, %v7087
    %v7453 = vpack.c.b16 %v7098, %v7093
    %v7454 = vpack.c.b16 %v7099, %v7094
    %v7455 = vpack.c.b16 %v7100, %v7095
    %v7456 = vpack.c.b16 %v7101, %v7096
    %v7457 = vpack.c.b16 %v7102, %v7097
    %v7458 = vpack.c.b16 %v7108, %v7103
    %v7459 = vpack.c.b16 %v7109, %v7104
    %v7460 = vpack.c.b16 %v7110, %v7105
    %v7461 = vpack.c.b16 %v7111, %v7106
    %v7462 = vpack.c.b16 %v7112, %v7107
    %v7463 = vpack.c.b16 %v7118, %v7113
    %v7464 = vpack.c.b16 %v7119, %v7114
    %v7465 = vpack.c.b16 %v7120, %v7115
    %v7466 = vpack.c.b16 %v7121, %v7116
    %v7467 = vpack.c.b16 %v7122, %v7117
    %v7468 = vpack.c.b16 %v7128, %v7123
    %v7469 = vpack.c.b16 %v7129, %v7124
    %v7470 = vpack.c.b16 %v7130, %v7125
    %v7471 = vpack.c.b16 %v7131, %v7126
    %v7472 = vpack.c.b16 %v7132, %v7127
    %v7473 = vpack.c.b16 %v7138, %v7133
    %v7474 = vpack.c.b16 %v7139, %v7134
    %v7475 = vpack.c.b16 %v7140, %v7135
    %v7476 = vpack.c.b16 %v7141, %v7136
    %v7477 = vpack.c.b16 %v7142, %v7137
    %v7478 = vpack.c.b16 %v7148, %v7143
    %v7479 = vpack.c.b16 %v7149, %v7144
    %v7480 = vpack.c.b16 %v7150, %v7145
    %v7481 = vpack.c.b16 %v7151, %v7146
    %v7482 = vpack.c.b16 %v7152, %v7147
    %v7483 = vpack.c.b16 %v7158, %v7153
    %v7484 = vpack.c.b16 %v7159, %v7154
    %v7485 = vpack.c.b16 %v7160, %v7155
    %v7486 = vpack.c.b16 %v7161, %v7156
    %v7487 = vpack.c.b16 %v7162, %v7157
    %v7488 = vpack.c.b16 %v7168, %v7163
    %v7489 = vpack.c.b16 %v7169, %v7164
    %v7490 = vpack.c.b16 %v7170, %v7165
    %v7491 = vpack.c.b16 %v7171, %v7166
    %v7492 = vpack.c.b16 %v7172, %v7167
    %7813 = vmatpush.bf16.msra.mxu0 %v7208
    %7814 = vmatpush.bf16.msra.mxu0 %v7203
    %7815 = vmatpush.bf16.msra.mxu0 %v7198
    %7816 = vmatpush.bf16.msra.mxu0 %v7193
    %7817 = vmatpush.bf16.msra.mxu0 %v7188
    %7818 = vmatpush.bf16.msra.mxu0 %v7183
    %7819 = vmatpush.bf16.msra.mxu0 %v7178
    %7820 = vmatpush.bf16.msra.mxu0 %v7173
    %7821 = vmatmul.bf16.gmra.mxu0 %v5745
    %v7822 = vpop.f32.mrf.mxu0
    %v7823 = vadd.f32 %v6139, %v7822
    %v7824 = vpop.f32.mrf.mxu0
    %7825 = vdwg.mxu0
    %7826 = vmatpush.bf16.msra.mxu0 %v7248
    %7827 = vmatpush.bf16.msra.mxu0 %v7243
    %7828 = vmatpush.bf16.msra.mxu0 %v7238
    %7829 = vmatpush.bf16.msra.mxu0 %v7233
    %7830 = vmatpush.bf16.msra.mxu0 %v7228
    %7831 = vmatpush.bf16.msra.mxu0 %v7223
    %7832 = vmatpush.bf16.msra.mxu0 %v7218
    %7833 = vmatpush.bf16.msra.mxu0 %v7213
    %7834 = vmatmul.bf16.gmra.mxu0 %v5746
    %v7835 = vpop.f32.mrf.mxu0
    %v7836 = vadd.f32 %v7823, %v7835
    %v7837 = vpop.f32.mrf.mxu0
    %7838 = vdwg.mxu0
    %7839 = vmatpush.bf16.msra.mxu0 %v7288
    %7840 = vmatpush.bf16.msra.mxu0 %v7283
    %7841 = vmatpush.bf16.msra.mxu0 %v7278
    %7842 = vmatpush.bf16.msra.mxu0 %v7273
    %7843 = vmatpush.bf16.msra.mxu0 %v7268
    %7844 = vmatpush.bf16.msra.mxu0 %v7263
    %7845 = vmatpush.bf16.msra.mxu0 %v7258
    %7846 = vmatpush.bf16.msra.mxu0 %v7253
    %7847 = vmatmul.bf16.gmra.mxu0 %v5747
    %v7848 = vpop.f32.mrf.mxu0
    %v7849 = vadd.f32 %v7836, %v7848
    %v7850 = vpop.f32.mrf.mxu0
    %7851 = vdwg.mxu0
    %7852 = vmatpush.bf16.msra.mxu0 %v7328
    %7853 = vmatpush.bf16.msra.mxu0 %v7323
    %7854 = vmatpush.bf16.msra.mxu0 %v7318
    %7855 = vmatpush.bf16.msra.mxu0 %v7313
    %7856 = vmatpush.bf16.msra.mxu0 %v7308
    %7857 = vmatpush.bf16.msra.mxu0 %v7303
    %7858 = vmatpush.bf16.msra.mxu0 %v7298
    %7859 = vmatpush.bf16.msra.mxu0 %v7293
    %7860 = vmatmul.bf16.gmra.mxu0 %v5748
    %v7861 = vpop.f32.mrf.mxu0
    %v7862 = vadd.f32 %v7849, %v7861
    %v7863 = vpop.f32.mrf.mxu0
    %7864 = vdwg.mxu0
    %7865 = vmatpush.bf16.msra.mxu0 %v7368
    %7866 = vmatpush.bf16.msra.mxu0 %v7363
    %7867 = vmatpush.bf16.msra.mxu0 %v7358
    %7868 = vmatpush.bf16.msra.mxu0 %v7353
    %7869 = vmatpush.bf16.msra.mxu0 %v7348
    %7870 = vmatpush.bf16.msra.mxu0 %v7343
    %7871 = vmatpush.bf16.msra.mxu0 %v7338
    %7872 = vmatpush.bf16.msra.mxu0 %v7333
    %7873 = vmatmul.bf16.gmra.mxu0 %v5749
    %v7874 = vpop.f32.mrf.mxu0
    %v7875 = vadd.f32 %v7862, %v7874
    %v7876 = vpop.f32.mrf.mxu0
    %7877 = vdwg.mxu0
    %7878 = vmatpush.bf16.msra.mxu0 %v7408
    %7879 = vmatpush.bf16.msra.mxu0 %v7403
    %7880 = vmatpush.bf16.msra.mxu0 %v7398
    %7881 = vmatpush.bf16.msra.mxu0 %v7393
    %7882 = vmatpush.bf16.msra.mxu0 %v7388
    %7883 = vmatpush.bf16.msra.mxu0 %v7383
    %7884 = vmatpush.bf16.msra.mxu0 %v7378
    %7885 = vmatpush.bf16.msra.mxu0 %v7373
    %7886 = vmatmul.bf16.gmra.mxu0 %v5750
    %v7887 = vpop.f32.mrf.mxu0
    %v7888 = vadd.f32 %v7875, %v7887
    %v7889 = vpop.f32.mrf.mxu0
    %7890 = vdwg.mxu0
    %7891 = vmatpush.bf16.msra.mxu0 %v7448
    %7892 = vmatpush.bf16.msra.mxu0 %v7443
    %7893 = vmatpush.bf16.msra.mxu0 %v7438
    %7894 = vmatpush.bf16.msra.mxu0 %v7433
    %7895 = vmatpush.bf16.msra.mxu0 %v7428
    %7896 = vmatpush.bf16.msra.mxu0 %v7423
    %7897 = vmatpush.bf16.msra.mxu0 %v7418
    %7898 = vmatpush.bf16.msra.mxu0 %v7413
    %7899 = vmatmul.bf16.gmra.mxu0 %v5751
    %v7900 = vpop.f32.mrf.mxu0
    %v7901 = vadd.f32 %v7888, %v7900
    %v7902 = vpop.f32.mrf.mxu0
    %7903 = vdwg.mxu0
    %7904 = vmatpush.bf16.msra.mxu0 %v7488
    %7905 = vmatpush.bf16.msra.mxu0 %v7483
    %7906 = vmatpush.bf16.msra.mxu0 %v7478
    %7907 = vmatpush.bf16.msra.mxu0 %v7473
    %7908 = vmatpush.bf16.msra.mxu0 %v7468
    %7909 = vmatpush.bf16.msra.mxu0 %v7463
    %7910 = vmatpush.bf16.msra.mxu0 %v7458
    %7911 = vmatpush.bf16.msra.mxu0 %v7453
    %7912 = vmatmul.bf16.gmra.mxu0 %v5752
    %v7913 = vpop.f32.mrf.mxu0
    %v7914 = vadd.f32 %v7901, %v7913
    %v7915 = vpop.f32.mrf.mxu0
    %7916 = vdwg.mxu0
    %7917 = vmatpush.bf16.msra.mxu0 %v7209
    %7918 = vmatpush.bf16.msra.mxu0 %v7204
    %7919 = vmatpush.bf16.msra.mxu0 %v7199
    %7920 = vmatpush.bf16.msra.mxu0 %v7194
    %7921 = vmatpush.bf16.msra.mxu0 %v7189
    %7922 = vmatpush.bf16.msra.mxu0 %v7184
    %7923 = vmatpush.bf16.msra.mxu0 %v7179
    %7924 = vmatpush.bf16.msra.mxu0 %v7174
    %7925 = vmatmul.bf16.gmra.mxu0 %v5745
    %v7926 = vpop.f32.mrf.mxu0
    %v7927 = vadd.f32 %v6140, %v7926
    %v7928 = vpop.f32.mrf.mxu0
    %7929 = vdwg.mxu0
    %7930 = vmatpush.bf16.msra.mxu0 %v7249
    %7931 = vmatpush.bf16.msra.mxu0 %v7244
    %7932 = vmatpush.bf16.msra.mxu0 %v7239
    %7933 = vmatpush.bf16.msra.mxu0 %v7234
    %7934 = vmatpush.bf16.msra.mxu0 %v7229
    %7935 = vmatpush.bf16.msra.mxu0 %v7224
    %7936 = vmatpush.bf16.msra.mxu0 %v7219
    %7937 = vmatpush.bf16.msra.mxu0 %v7214
    %7938 = vmatmul.bf16.gmra.mxu0 %v5746
    %v7939 = vpop.f32.mrf.mxu0
    %v7940 = vadd.f32 %v7927, %v7939
    %v7941 = vpop.f32.mrf.mxu0
    %7942 = vdwg.mxu0
    %7943 = vmatpush.bf16.msra.mxu0 %v7289
    %7944 = vmatpush.bf16.msra.mxu0 %v7284
    %7945 = vmatpush.bf16.msra.mxu0 %v7279
    %7946 = vmatpush.bf16.msra.mxu0 %v7274
    %7947 = vmatpush.bf16.msra.mxu0 %v7269
    %7948 = vmatpush.bf16.msra.mxu0 %v7264
    %7949 = vmatpush.bf16.msra.mxu0 %v7259
    %7950 = vmatpush.bf16.msra.mxu0 %v7254
    %7951 = vmatmul.bf16.gmra.mxu0 %v5747
    %v7952 = vpop.f32.mrf.mxu0
    %v7953 = vadd.f32 %v7940, %v7952
    %v7954 = vpop.f32.mrf.mxu0
    %7955 = vdwg.mxu0
    %7956 = vmatpush.bf16.msra.mxu0 %v7329
    %7957 = vmatpush.bf16.msra.mxu0 %v7324
    %7958 = vmatpush.bf16.msra.mxu0 %v7319
    %7959 = vmatpush.bf16.msra.mxu0 %v7314
    %7960 = vmatpush.bf16.msra.mxu0 %v7309
    %7961 = vmatpush.bf16.msra.mxu0 %v7304
    %7962 = vmatpush.bf16.msra.mxu0 %v7299
    %7963 = vmatpush.bf16.msra.mxu0 %v7294
    %7964 = vmatmul.bf16.gmra.mxu0 %v5748
    %v7965 = vpop.f32.mrf.mxu0
    %v7966 = vadd.f32 %v7953, %v7965
    %v7967 = vpop.f32.mrf.mxu0
    %7968 = vdwg.mxu0
    %7969 = vmatpush.bf16.msra.mxu0 %v7369
    %7970 = vmatpush.bf16.msra.mxu0 %v7364
    %7971 = vmatpush.bf16.msra.mxu0 %v7359
    %7972 = vmatpush.bf16.msra.mxu0 %v7354
    %7973 = vmatpush.bf16.msra.mxu0 %v7349
    %7974 = vmatpush.bf16.msra.mxu0 %v7344
    %7975 = vmatpush.bf16.msra.mxu0 %v7339
    %7976 = vmatpush.bf16.msra.mxu0 %v7334
    %7977 = vmatmul.bf16.gmra.mxu0 %v5749
    %v7978 = vpop.f32.mrf.mxu0
    %v7979 = vadd.f32 %v7966, %v7978
    %v7980 = vpop.f32.mrf.mxu0
    %7981 = vdwg.mxu0
    %7982 = vmatpush.bf16.msra.mxu0 %v7409
    %7983 = vmatpush.bf16.msra.mxu0 %v7404
    %7984 = vmatpush.bf16.msra.mxu0 %v7399
    %7985 = vmatpush.bf16.msra.mxu0 %v7394
    %7986 = vmatpush.bf16.msra.mxu0 %v7389
    %7987 = vmatpush.bf16.msra.mxu0 %v7384
    %7988 = vmatpush.bf16.msra.mxu0 %v7379
    %7989 = vmatpush.bf16.msra.mxu0 %v7374
    %7990 = vmatmul.bf16.gmra.mxu0 %v5750
    %v7991 = vpop.f32.mrf.mxu0
    %v7992 = vadd.f32 %v7979, %v7991
    %v7993 = vpop.f32.mrf.mxu0
    %7994 = vdwg.mxu0
    %7995 = vmatpush.bf16.msra.mxu0 %v7449
    %7996 = vmatpush.bf16.msra.mxu0 %v7444
    %7997 = vmatpush.bf16.msra.mxu0 %v7439
    %7998 = vmatpush.bf16.msra.mxu0 %v7434
    %7999 = vmatpush.bf16.msra.mxu0 %v7429
    %8000 = vmatpush.bf16.msra.mxu0 %v7424
    %8001 = vmatpush.bf16.msra.mxu0 %v7419
    %8002 = vmatpush.bf16.msra.mxu0 %v7414
    %8003 = vmatmul.bf16.gmra.mxu0 %v5751
    %v8004 = vpop.f32.mrf.mxu0
    %v8005 = vadd.f32 %v7992, %v8004
    %v8006 = vpop.f32.mrf.mxu0
    %8007 = vdwg.mxu0
    %8008 = vmatpush.bf16.msra.mxu0 %v7489
    %8009 = vmatpush.bf16.msra.mxu0 %v7484
    %8010 = vmatpush.bf16.msra.mxu0 %v7479
    %8011 = vmatpush.bf16.msra.mxu0 %v7474
    %8012 = vmatpush.bf16.msra.mxu0 %v7469
    %8013 = vmatpush.bf16.msra.mxu0 %v7464
    %8014 = vmatpush.bf16.msra.mxu0 %v7459
    %8015 = vmatpush.bf16.msra.mxu0 %v7454
    %8016 = vmatmul.bf16.gmra.mxu0 %v5752
    %v8017 = vpop.f32.mrf.mxu0
    %v8018 = vadd.f32 %v8005, %v8017
    %v8019 = vpop.f32.mrf.mxu0
    %8020 = vdwg.mxu0
    %8021 = vmatpush.bf16.msra.mxu0 %v7210
    %8022 = vmatpush.bf16.msra.mxu0 %v7205
    %8023 = vmatpush.bf16.msra.mxu0 %v7200
    %8024 = vmatpush.bf16.msra.mxu0 %v7195
    %8025 = vmatpush.bf16.msra.mxu0 %v7190
    %8026 = vmatpush.bf16.msra.mxu0 %v7185
    %8027 = vmatpush.bf16.msra.mxu0 %v7180
    %8028 = vmatpush.bf16.msra.mxu0 %v7175
    %8029 = vmatmul.bf16.gmra.mxu0 %v5745
    %v8030 = vpop.f32.mrf.mxu0
    %v8031 = vadd.f32 %v6141, %v8030
    %v8032 = vpop.f32.mrf.mxu0
    %8033 = vdwg.mxu0
    %8034 = vmatpush.bf16.msra.mxu0 %v7250
    %8035 = vmatpush.bf16.msra.mxu0 %v7245
    %8036 = vmatpush.bf16.msra.mxu0 %v7240
    %8037 = vmatpush.bf16.msra.mxu0 %v7235
    %8038 = vmatpush.bf16.msra.mxu0 %v7230
    %8039 = vmatpush.bf16.msra.mxu0 %v7225
    %8040 = vmatpush.bf16.msra.mxu0 %v7220
    %8041 = vmatpush.bf16.msra.mxu0 %v7215
    %8042 = vmatmul.bf16.gmra.mxu0 %v5746
    %v8043 = vpop.f32.mrf.mxu0
    %v8044 = vadd.f32 %v8031, %v8043
    %v8045 = vpop.f32.mrf.mxu0
    %8046 = vdwg.mxu0
    %8047 = vmatpush.bf16.msra.mxu0 %v7290
    %8048 = vmatpush.bf16.msra.mxu0 %v7285
    %8049 = vmatpush.bf16.msra.mxu0 %v7280
    %8050 = vmatpush.bf16.msra.mxu0 %v7275
    %8051 = vmatpush.bf16.msra.mxu0 %v7270
    %8052 = vmatpush.bf16.msra.mxu0 %v7265
    %8053 = vmatpush.bf16.msra.mxu0 %v7260
    %8054 = vmatpush.bf16.msra.mxu0 %v7255
    %8055 = vmatmul.bf16.gmra.mxu0 %v5747
    %v8056 = vpop.f32.mrf.mxu0
    %v8057 = vadd.f32 %v8044, %v8056
    %v8058 = vpop.f32.mrf.mxu0
    %8059 = vdwg.mxu0
    %8060 = vmatpush.bf16.msra.mxu0 %v7330
    %8061 = vmatpush.bf16.msra.mxu0 %v7325
    %8062 = vmatpush.bf16.msra.mxu0 %v7320
    %8063 = vmatpush.bf16.msra.mxu0 %v7315
    %8064 = vmatpush.bf16.msra.mxu0 %v7310
    %8065 = vmatpush.bf16.msra.mxu0 %v7305
    %8066 = vmatpush.bf16.msra.mxu0 %v7300
    %8067 = vmatpush.bf16.msra.mxu0 %v7295
    %8068 = vmatmul.bf16.gmra.mxu0 %v5748
    %v8069 = vpop.f32.mrf.mxu0
    %v8070 = vadd.f32 %v8057, %v8069
    %v8071 = vpop.f32.mrf.mxu0
    %8072 = vdwg.mxu0
    %8073 = vmatpush.bf16.msra.mxu0 %v7370
    %8074 = vmatpush.bf16.msra.mxu0 %v7365
    %8075 = vmatpush.bf16.msra.mxu0 %v7360
    %8076 = vmatpush.bf16.msra.mxu0 %v7355
    %8077 = vmatpush.bf16.msra.mxu0 %v7350
    %8078 = vmatpush.bf16.msra.mxu0 %v7345
    %8079 = vmatpush.bf16.msra.mxu0 %v7340
    %8080 = vmatpush.bf16.msra.mxu0 %v7335
    %8081 = vmatmul.bf16.gmra.mxu0 %v5749
    %v8082 = vpop.f32.mrf.mxu0
    %v8083 = vadd.f32 %v8070, %v8082
    %v8084 = vpop.f32.mrf.mxu0
    %8085 = vdwg.mxu0
    %8086 = vmatpush.bf16.msra.mxu0 %v7410
    %8087 = vmatpush.bf16.msra.mxu0 %v7405
    %8088 = vmatpush.bf16.msra.mxu0 %v7400
    %8089 = vmatpush.bf16.msra.mxu0 %v7395
    %8090 = vmatpush.bf16.msra.mxu0 %v7390
    %8091 = vmatpush.bf16.msra.mxu0 %v7385
    %8092 = vmatpush.bf16.msra.mxu0 %v7380
    %8093 = vmatpush.bf16.msra.mxu0 %v7375
    %8094 = vmatmul.bf16.gmra.mxu0 %v5750
    %v8095 = vpop.f32.mrf.mxu0
    %v8096 = vadd.f32 %v8083, %v8095
    %v8097 = vpop.f32.mrf.mxu0
    %8098 = vdwg.mxu0
    %8099 = vmatpush.bf16.msra.mxu0 %v7450
    %8100 = vmatpush.bf16.msra.mxu0 %v7445
    %8101 = vmatpush.bf16.msra.mxu0 %v7440
    %8102 = vmatpush.bf16.msra.mxu0 %v7435
    %8103 = vmatpush.bf16.msra.mxu0 %v7430
    %8104 = vmatpush.bf16.msra.mxu0 %v7425
    %8105 = vmatpush.bf16.msra.mxu0 %v7420
    %8106 = vmatpush.bf16.msra.mxu0 %v7415
    %8107 = vmatmul.bf16.gmra.mxu0 %v5751
    %v8108 = vpop.f32.mrf.mxu0
    %v8109 = vadd.f32 %v8096, %v8108
    %v8110 = vpop.f32.mrf.mxu0
    %8111 = vdwg.mxu0
    %8112 = vmatpush.bf16.msra.mxu0 %v7490
    %8113 = vmatpush.bf16.msra.mxu0 %v7485
    %8114 = vmatpush.bf16.msra.mxu0 %v7480
    %8115 = vmatpush.bf16.msra.mxu0 %v7475
    %8116 = vmatpush.bf16.msra.mxu0 %v7470
    %8117 = vmatpush.bf16.msra.mxu0 %v7465
    %8118 = vmatpush.bf16.msra.mxu0 %v7460
    %8119 = vmatpush.bf16.msra.mxu0 %v7455
    %8120 = vmatmul.bf16.gmra.mxu0 %v5752
    %v8121 = vpop.f32.mrf.mxu0
    %v8122 = vadd.f32 %v8109, %v8121
    %v8123 = vpop.f32.mrf.mxu0
    %8124 = vdwg.mxu0
    %8125 = vmatpush.bf16.msra.mxu0 %v7211
    %8126 = vmatpush.bf16.msra.mxu0 %v7206
    %8127 = vmatpush.bf16.msra.mxu0 %v7201
    %8128 = vmatpush.bf16.msra.mxu0 %v7196
    %8129 = vmatpush.bf16.msra.mxu0 %v7191
    %8130 = vmatpush.bf16.msra.mxu0 %v7186
    %8131 = vmatpush.bf16.msra.mxu0 %v7181
    %8132 = vmatpush.bf16.msra.mxu0 %v7176
    %8133 = vmatmul.bf16.gmra.mxu0 %v5745
    %v8134 = vpop.f32.mrf.mxu0
    %v8135 = vadd.f32 %v6142, %v8134
    %v8136 = vpop.f32.mrf.mxu0
    %8137 = vdwg.mxu0
    %8138 = vmatpush.bf16.msra.mxu0 %v7251
    %8139 = vmatpush.bf16.msra.mxu0 %v7246
    %8140 = vmatpush.bf16.msra.mxu0 %v7241
    %8141 = vmatpush.bf16.msra.mxu0 %v7236
    %8142 = vmatpush.bf16.msra.mxu0 %v7231
    %8143 = vmatpush.bf16.msra.mxu0 %v7226
    %8144 = vmatpush.bf16.msra.mxu0 %v7221
    %8145 = vmatpush.bf16.msra.mxu0 %v7216
    %8146 = vmatmul.bf16.gmra.mxu0 %v5746
    %v8147 = vpop.f32.mrf.mxu0
    %v8148 = vadd.f32 %v8135, %v8147
    %v8149 = vpop.f32.mrf.mxu0
    %8150 = vdwg.mxu0
    %8151 = vmatpush.bf16.msra.mxu0 %v7291
    %8152 = vmatpush.bf16.msra.mxu0 %v7286
    %8153 = vmatpush.bf16.msra.mxu0 %v7281
    %8154 = vmatpush.bf16.msra.mxu0 %v7276
    %8155 = vmatpush.bf16.msra.mxu0 %v7271
    %8156 = vmatpush.bf16.msra.mxu0 %v7266
    %8157 = vmatpush.bf16.msra.mxu0 %v7261
    %8158 = vmatpush.bf16.msra.mxu0 %v7256
    %8159 = vmatmul.bf16.gmra.mxu0 %v5747
    %v8160 = vpop.f32.mrf.mxu0
    %v8161 = vadd.f32 %v8148, %v8160
    %v8162 = vpop.f32.mrf.mxu0
    %8163 = vdwg.mxu0
    %8164 = vmatpush.bf16.msra.mxu0 %v7331
    %8165 = vmatpush.bf16.msra.mxu0 %v7326
    %8166 = vmatpush.bf16.msra.mxu0 %v7321
    %8167 = vmatpush.bf16.msra.mxu0 %v7316
    %8168 = vmatpush.bf16.msra.mxu0 %v7311
    %8169 = vmatpush.bf16.msra.mxu0 %v7306
    %8170 = vmatpush.bf16.msra.mxu0 %v7301
    %8171 = vmatpush.bf16.msra.mxu0 %v7296
    %8172 = vmatmul.bf16.gmra.mxu0 %v5748
    %v8173 = vpop.f32.mrf.mxu0
    %v8174 = vadd.f32 %v8161, %v8173
    %v8175 = vpop.f32.mrf.mxu0
    %8176 = vdwg.mxu0
    %8177 = vmatpush.bf16.msra.mxu0 %v7371
    %8178 = vmatpush.bf16.msra.mxu0 %v7366
    %8179 = vmatpush.bf16.msra.mxu0 %v7361
    %8180 = vmatpush.bf16.msra.mxu0 %v7356
    %8181 = vmatpush.bf16.msra.mxu0 %v7351
    %8182 = vmatpush.bf16.msra.mxu0 %v7346
    %8183 = vmatpush.bf16.msra.mxu0 %v7341
    %8184 = vmatpush.bf16.msra.mxu0 %v7336
    %8185 = vmatmul.bf16.gmra.mxu0 %v5749
    %v8186 = vpop.f32.mrf.mxu0
    %v8187 = vadd.f32 %v8174, %v8186
    %v8188 = vpop.f32.mrf.mxu0
    %8189 = vdwg.mxu0
    %8190 = vmatpush.bf16.msra.mxu0 %v7411
    %8191 = vmatpush.bf16.msra.mxu0 %v7406
    %8192 = vmatpush.bf16.msra.mxu0 %v7401
    %8193 = vmatpush.bf16.msra.mxu0 %v7396
    %8194 = vmatpush.bf16.msra.mxu0 %v7391
    %8195 = vmatpush.bf16.msra.mxu0 %v7386
    %8196 = vmatpush.bf16.msra.mxu0 %v7381
    %8197 = vmatpush.bf16.msra.mxu0 %v7376
    %8198 = vmatmul.bf16.gmra.mxu0 %v5750
    %v8199 = vpop.f32.mrf.mxu0
    %v8200 = vadd.f32 %v8187, %v8199
    %v8201 = vpop.f32.mrf.mxu0
    %8202 = vdwg.mxu0
    %8203 = vmatpush.bf16.msra.mxu0 %v7451
    %8204 = vmatpush.bf16.msra.mxu0 %v7446
    %8205 = vmatpush.bf16.msra.mxu0 %v7441
    %8206 = vmatpush.bf16.msra.mxu0 %v7436
    %8207 = vmatpush.bf16.msra.mxu0 %v7431
    %8208 = vmatpush.bf16.msra.mxu0 %v7426
    %8209 = vmatpush.bf16.msra.mxu0 %v7421
    %8210 = vmatpush.bf16.msra.mxu0 %v7416
    %8211 = vmatmul.bf16.gmra.mxu0 %v5751
    %v8212 = vpop.f32.mrf.mxu0
    %v8213 = vadd.f32 %v8200, %v8212
    %v8214 = vpop.f32.mrf.mxu0
    %8215 = vdwg.mxu0
    %8216 = vmatpush.bf16.msra.mxu0 %v7491
    %8217 = vmatpush.bf16.msra.mxu0 %v7486
    %8218 = vmatpush.bf16.msra.mxu0 %v7481
    %8219 = vmatpush.bf16.msra.mxu0 %v7476
    %8220 = vmatpush.bf16.msra.mxu0 %v7471
    %8221 = vmatpush.bf16.msra.mxu0 %v7466
    %8222 = vmatpush.bf16.msra.mxu0 %v7461
    %8223 = vmatpush.bf16.msra.mxu0 %v7456
    %8224 = vmatmul.bf16.gmra.mxu0 %v5752
    %v8225 = vpop.f32.mrf.mxu0
    %v8226 = vadd.f32 %v8213, %v8225
    %v8227 = vpop.f32.mrf.mxu0
    %8228 = vdwg.mxu0
    %8229 = vmatpush.bf16.msra.mxu0 %v7212
    %8230 = vmatpush.bf16.msra.mxu0 %v7207
    %8231 = vmatpush.bf16.msra.mxu0 %v7202
    %8232 = vmatpush.bf16.msra.mxu0 %v7197
    %8233 = vmatpush.bf16.msra.mxu0 %v7192
    %8234 = vmatpush.bf16.msra.mxu0 %v7187
    %8235 = vmatpush.bf16.msra.mxu0 %v7182
    %8236 = vmatpush.bf16.msra.mxu0 %v7177
    %8237 = vmatmul.bf16.gmra.mxu0 %v5745
    %v8238 = vpop.f32.mrf.mxu0
    %v8239 = vadd.f32 %v6143, %v8238
    %v8240 = vpop.f32.mrf.mxu0
    %8241 = vdwg.mxu0
    %8242 = vmatpush.bf16.msra.mxu0 %v7252
    %8243 = vmatpush.bf16.msra.mxu0 %v7247
    %8244 = vmatpush.bf16.msra.mxu0 %v7242
    %8245 = vmatpush.bf16.msra.mxu0 %v7237
    %8246 = vmatpush.bf16.msra.mxu0 %v7232
    %8247 = vmatpush.bf16.msra.mxu0 %v7227
    %8248 = vmatpush.bf16.msra.mxu0 %v7222
    %8249 = vmatpush.bf16.msra.mxu0 %v7217
    %8250 = vmatmul.bf16.gmra.mxu0 %v5746
    %v8251 = vpop.f32.mrf.mxu0
    %v8252 = vadd.f32 %v8239, %v8251
    %v8253 = vpop.f32.mrf.mxu0
    %8254 = vdwg.mxu0
    %8255 = vmatpush.bf16.msra.mxu0 %v7292
    %8256 = vmatpush.bf16.msra.mxu0 %v7287
    %8257 = vmatpush.bf16.msra.mxu0 %v7282
    %8258 = vmatpush.bf16.msra.mxu0 %v7277
    %8259 = vmatpush.bf16.msra.mxu0 %v7272
    %8260 = vmatpush.bf16.msra.mxu0 %v7267
    %8261 = vmatpush.bf16.msra.mxu0 %v7262
    %8262 = vmatpush.bf16.msra.mxu0 %v7257
    %8263 = vmatmul.bf16.gmra.mxu0 %v5747
    %v8264 = vpop.f32.mrf.mxu0
    %v8265 = vadd.f32 %v8252, %v8264
    %v8266 = vpop.f32.mrf.mxu0
    %8267 = vdwg.mxu0
    %8268 = vmatpush.bf16.msra.mxu0 %v7332
    %8269 = vmatpush.bf16.msra.mxu0 %v7327
    %8270 = vmatpush.bf16.msra.mxu0 %v7322
    %8271 = vmatpush.bf16.msra.mxu0 %v7317
    %8272 = vmatpush.bf16.msra.mxu0 %v7312
    %8273 = vmatpush.bf16.msra.mxu0 %v7307
    %8274 = vmatpush.bf16.msra.mxu0 %v7302
    %8275 = vmatpush.bf16.msra.mxu0 %v7297
    %8276 = vmatmul.bf16.gmra.mxu0 %v5748
    %v8277 = vpop.f32.mrf.mxu0
    %v8278 = vadd.f32 %v8265, %v8277
    %v8279 = vpop.f32.mrf.mxu0
    %8280 = vdwg.mxu0
    %8281 = vmatpush.bf16.msra.mxu0 %v7372
    %8282 = vmatpush.bf16.msra.mxu0 %v7367
    %8283 = vmatpush.bf16.msra.mxu0 %v7362
    %8284 = vmatpush.bf16.msra.mxu0 %v7357
    %8285 = vmatpush.bf16.msra.mxu0 %v7352
    %8286 = vmatpush.bf16.msra.mxu0 %v7347
    %8287 = vmatpush.bf16.msra.mxu0 %v7342
    %8288 = vmatpush.bf16.msra.mxu0 %v7337
    %8289 = vmatmul.bf16.gmra.mxu0 %v5749
    %v8290 = vpop.f32.mrf.mxu0
    %v8291 = vadd.f32 %v8278, %v8290
    %v8292 = vpop.f32.mrf.mxu0
    %8293 = vdwg.mxu0
    %8294 = vmatpush.bf16.msra.mxu0 %v7412
    %8295 = vmatpush.bf16.msra.mxu0 %v7407
    %8296 = vmatpush.bf16.msra.mxu0 %v7402
    %8297 = vmatpush.bf16.msra.mxu0 %v7397
    %8298 = vmatpush.bf16.msra.mxu0 %v7392
    %8299 = vmatpush.bf16.msra.mxu0 %v7387
    %8300 = vmatpush.bf16.msra.mxu0 %v7382
    %8301 = vmatpush.bf16.msra.mxu0 %v7377
    %8302 = vmatmul.bf16.gmra.mxu0 %v5750
    %v8303 = vpop.f32.mrf.mxu0
    %v8304 = vadd.f32 %v8291, %v8303
    %v8305 = vpop.f32.mrf.mxu0
    %8306 = vdwg.mxu0
    %8307 = vmatpush.bf16.msra.mxu0 %v7452
    %8308 = vmatpush.bf16.msra.mxu0 %v7447
    %8309 = vmatpush.bf16.msra.mxu0 %v7442
    %8310 = vmatpush.bf16.msra.mxu0 %v7437
    %8311 = vmatpush.bf16.msra.mxu0 %v7432
    %8312 = vmatpush.bf16.msra.mxu0 %v7427
    %8313 = vmatpush.bf16.msra.mxu0 %v7422
    %8314 = vmatpush.bf16.msra.mxu0 %v7417
    %8315 = vmatmul.bf16.gmra.mxu0 %v5751
    %v8316 = vpop.f32.mrf.mxu0
    %v8317 = vadd.f32 %v8304, %v8316
    %v8318 = vpop.f32.mrf.mxu0
    %8319 = vdwg.mxu0
    %8320 = vmatpush.bf16.msra.mxu0 %v7492
    %8321 = vmatpush.bf16.msra.mxu0 %v7487
    %8322 = vmatpush.bf16.msra.mxu0 %v7482
    %8323 = vmatpush.bf16.msra.mxu0 %v7477
    %8324 = vmatpush.bf16.msra.mxu0 %v7472
    %8325 = vmatpush.bf16.msra.mxu0 %v7467
    %8326 = vmatpush.bf16.msra.mxu0 %v7462
    %8327 = vmatpush.bf16.msra.mxu0 %v7457
    %8328 = vmatmul.bf16.gmra.mxu0 %v5752
    %v8329 = vpop.f32.mrf.mxu0
    %v8330 = vadd.f32 %v8317, %v8329
    %v8331 = vpop.f32.mrf.mxu0
    %8332 = vdwg.mxu0
    %v8333 = vmax.f32 %v7914, 0.0
    %v8334 = vmax.f32 %v8018, 0.0
    %v8335 = vmax.f32 %v8122, 0.0
    %v8336 = vmax.f32 %v8226, 0.0
    %v8337 = vmax.f32 %v8330, 0.0
    %v8338 = vpack.c.bf16 %v8333, %v8333
    %v8339 = vpack.c.bf16 %v8334, %v8334
    %v8340 = vpack.c.bf16 %v8335, %v8335
    %v8341 = vpack.c.bf16 %v8336, %v8336
    %v8342 = vpack.c.bf16 %v8337, %v8337
    %v8343 = vld [vmem:[#allocation12] sm:$0xff]
    %v8344 = vld [vmem:[#allocation12 + $0x8] sm:$0xf]
    %v8345 = vld [vmem:[#allocation12 + $0xc] sm:$0xff]
    %v8346 = vld [vmem:[#allocation12 + $0x14] sm:$0xf]
    %v8347 = vld [vmem:[#allocation12 + $0x18] sm:$0xff]
    %v8348 = vld [vmem:[#allocation12 + $0x20] sm:$0xf]
    %v8349 = vld [vmem:[#allocation12 + $0x24] sm:$0xff]
    %v8350 = vld [vmem:[#allocation12 + $0x2c] sm:$0xf]
    %v8351 = vld [vmem:[#allocation12 + $0x30] sm:$0xff]
    %v8352 = vld [vmem:[#allocation12 + $0x38] sm:$0xf]
    %v8353 = vld [vmem:[#allocation12 + $0x3c] sm:$0xff]
    %v8354 = vld [vmem:[#allocation12 + $0x44] sm:$0xf]
    %v8355 = vld [vmem:[#allocation12 + $0x48] sm:$0xff]
    %v8356 = vld [vmem:[#allocation12 + $0x50] sm:$0xf]
    %v8357 = vld [vmem:[#allocation12 + $0x54] sm:$0xff]
    %v8358 = vld [vmem:[#allocation12 + $0x5c] sm:$0xf]
    %v8359 = vld [vmem:[#allocation12 + $0x60] sm:$0xff]
    %v8360 = vld [vmem:[#allocation12 + $0x68] sm:$0xf]
    %v8361 = vld [vmem:[#allocation12 + $0x6c] sm:$0xff]
    %v8362 = vld [vmem:[#allocation12 + $0x74] sm:$0xf]
    %v8363 = vld [vmem:[#allocation12 + $0x78] sm:$0xff]
    %v8364 = vld [vmem:[#allocation12 + $0x80] sm:$0xf]
    %v8365 = vld [vmem:[#allocation12 + $0x84] sm:$0xff]
    %v8366 = vld [vmem:[#allocation12 + $0x8c] sm:$0xf]
    %v8367 = vld [vmem:[#allocation12 + $0x90] sm:$0xff]
    %v8368 = vld [vmem:[#allocation12 + $0x98] sm:$0xf]
    %v8369 = vld [vmem:[#allocation12 + $0x9c] sm:$0xff]
    %v8370 = vld [vmem:[#allocation12 + $0xa4] sm:$0xf]
    %v8371 = vld [vmem:[#allocation12 + $0xa8] sm:$0xff]
    %v8372 = vld [vmem:[#allocation12 + $0xb0] sm:$0xf]
    %v8373 = vld [vmem:[#allocation12 + $0xb4] sm:$0xff]
    %v8374 = vld [vmem:[#allocation12 + $0xbc] sm:$0xf]
    %v8375 = vld [vmem:[#allocation12 + $0xc0] sm:$0xff]
    %v8376 = vld [vmem:[#allocation12 + $0xc8] sm:$0xf]
    %v8377 = vld [vmem:[#allocation12 + $0xcc] sm:$0xff]
    %v8378 = vld [vmem:[#allocation12 + $0xd4] sm:$0xf]
    %v8379 = vld [vmem:[#allocation12 + $0xd8] sm:$0xff]
    %v8380 = vld [vmem:[#allocation12 + $0xe0] sm:$0xf]
    %v8381 = vld [vmem:[#allocation12 + $0xe4] sm:$0xff]
    %v8382 = vld [vmem:[#allocation12 + $0xec] sm:$0xf]
    %v8383 = vld [vmem:[#allocation12 + $0xf0] sm:$0xff]
    %v8384 = vld [vmem:[#allocation12 + $0xf8] sm:$0xf]
    %v8385 = vld [vmem:[#allocation12 + $0xfc] sm:$0xff]
    %v8386 = vld [vmem:[#allocation12 + $0x104] sm:$0xf]
    %v8387 = vld [vmem:[#allocation12 + $0x108] sm:$0xff]
    %v8388 = vld [vmem:[#allocation12 + $0x110] sm:$0xf]
    %v8389 = vld [vmem:[#allocation12 + $0x114] sm:$0xff]
    %v8390 = vld [vmem:[#allocation12 + $0x11c] sm:$0xf]
    %v8391 = vld [vmem:[#allocation12 + $0x120] sm:$0xff]
    %v8392 = vld [vmem:[#allocation12 + $0x128] sm:$0xf]
    %v8393 = vld [vmem:[#allocation12 + $0x12c] sm:$0xff]
    %v8394 = vld [vmem:[#allocation12 + $0x134] sm:$0xf]
    %v8395 = vld [vmem:[#allocation12 + $0x138] sm:$0xff]
    %v8396 = vld [vmem:[#allocation12 + $0x140] sm:$0xf]
    %v8397 = vld [vmem:[#allocation12 + $0x144] sm:$0xff]
    %v8398 = vld [vmem:[#allocation12 + $0x14c] sm:$0xf]
    %v8399 = vld [vmem:[#allocation12 + $0x150] sm:$0xff]
    %v8400 = vld [vmem:[#allocation12 + $0x158] sm:$0xf]
    %v8401 = vld [vmem:[#allocation12 + $0x15c] sm:$0xff]
    %v8402 = vld [vmem:[#allocation12 + $0x164] sm:$0xf]
    %v8403 = vld [vmem:[#allocation12 + $0x168] sm:$0xff]
    %v8404 = vld [vmem:[#allocation12 + $0x170] sm:$0xf]
    %v8405 = vld [vmem:[#allocation12 + $0x174] sm:$0xff]
    %v8406 = vld [vmem:[#allocation12 + $0x17c] sm:$0xf]
    %v8407 = vld [vmem:[#allocation12 + $0x180] sm:$0xff]
    %v8408 = vld [vmem:[#allocation12 + $0x188] sm:$0xf]
    %v8409 = vld [vmem:[#allocation12 + $0x18c] sm:$0xff]
    %v8410 = vld [vmem:[#allocation12 + $0x194] sm:$0xf]
    %v8411 = vld [vmem:[#allocation12 + $0x198] sm:$0xff]
    %v8412 = vld [vmem:[#allocation12 + $0x1a0] sm:$0xf]
    %v8413 = vld [vmem:[#allocation12 + $0x1a4] sm:$0xff]
    %v8414 = vld [vmem:[#allocation12 + $0x1ac] sm:$0xf]
    %v8415 = vld [vmem:[#allocation12 + $0x1b0] sm:$0xff]
    %v8416 = vld [vmem:[#allocation12 + $0x1b8] sm:$0xf]
    %v8417 = vld [vmem:[#allocation12 + $0x1bc] sm:$0xff]
    %v8418 = vld [vmem:[#allocation12 + $0x1c4] sm:$0xf]
    %v8419 = vld [vmem:[#allocation12 + $0x1c8] sm:$0xff]
    %v8420 = vld [vmem:[#allocation12 + $0x1d0] sm:$0xf]
    %v8421 = vld [vmem:[#allocation12 + $0x1d4] sm:$0xff]
    %v8422 = vld [vmem:[#allocation12 + $0x1dc] sm:$0xf]
    %v8423 = vld [vmem:[#allocation12 + $0x1e0] sm:$0xff]
    %v8424 = vld [vmem:[#allocation12 + $0x1e8] sm:$0xf]
    %v8425 = vld [vmem:[#allocation12 + $0x1ec] sm:$0xff]
    %v8426 = vld [vmem:[#allocation12 + $0x1f4] sm:$0xf]
    %v8427 = vld [vmem:[#allocation12 + $0x1f8] sm:$0xff]
    %v8428 = vld [vmem:[#allocation12 + $0x200] sm:$0xf]
    %v8429 = vld [vmem:[#allocation12 + $0x204] sm:$0xff]
    %v8430 = vld [vmem:[#allocation12 + $0x20c] sm:$0xf]
    %v8431 = vld [vmem:[#allocation12 + $0x210] sm:$0xff]
    %v8432 = vld [vmem:[#allocation12 + $0x218] sm:$0xf]
    %v8433 = vld [vmem:[#allocation12 + $0x21c] sm:$0xff]
    %v8434 = vld [vmem:[#allocation12 + $0x224] sm:$0xf]
    %v8435 = vld [vmem:[#allocation12 + $0x228] sm:$0xff]
    %v8436 = vld [vmem:[#allocation12 + $0x230] sm:$0xf]
    %v8437 = vld [vmem:[#allocation12 + $0x234] sm:$0xff]
    %v8438 = vld [vmem:[#allocation12 + $0x23c] sm:$0xf]
    %v8439 = vld [vmem:[#allocation12 + $0x240] sm:$0xff]
    %v8440 = vld [vmem:[#allocation12 + $0x248] sm:$0xf]
    %v8441 = vld [vmem:[#allocation12 + $0x24c] sm:$0xff]
    %v8442 = vld [vmem:[#allocation12 + $0x254] sm:$0xf]
    %v8443 = vld [vmem:[#allocation12 + $0x258] sm:$0xff]
    %v8444 = vld [vmem:[#allocation12 + $0x260] sm:$0xf]
    %v8445 = vld [vmem:[#allocation12 + $0x264] sm:$0xff]
    %v8446 = vld [vmem:[#allocation12 + $0x26c] sm:$0xf]
    %v8447 = vld [vmem:[#allocation12 + $0x270] sm:$0xff]
    %v8448 = vld [vmem:[#allocation12 + $0x278] sm:$0xf]
    %v8449 = vld [vmem:[#allocation12 + $0x27c] sm:$0xff]
    %v8450 = vld [vmem:[#allocation12 + $0x284] sm:$0xf]
    %v8451 = vld [vmem:[#allocation12 + $0x288] sm:$0xff]
    %v8452 = vld [vmem:[#allocation12 + $0x290] sm:$0xf]
    %v8453 = vld [vmem:[#allocation12 + $0x294] sm:$0xff]
    %v8454 = vld [vmem:[#allocation12 + $0x29c] sm:$0xf]
    %v8455 = vld [vmem:[#allocation12 + $0x2a0] sm:$0xff]
    %v8456 = vld [vmem:[#allocation12 + $0x2a8] sm:$0xf]
    %v8457 = vld [vmem:[#allocation12 + $0x2ac] sm:$0xff]
    %v8458 = vld [vmem:[#allocation12 + $0x2b4] sm:$0xf]
    %v8459 = vld [vmem:[#allocation12 + $0x2b8] sm:$0xff]
    %v8460 = vld [vmem:[#allocation12 + $0x2c0] sm:$0xf]
    %v8461 = vld [vmem:[#allocation12 + $0x2c4] sm:$0xff]
    %v8462 = vld [vmem:[#allocation12 + $0x2cc] sm:$0xf]
    %v8463 = vld [vmem:[#allocation12 + $0x2d0] sm:$0xff]
    %v8464 = vld [vmem:[#allocation12 + $0x2d8] sm:$0xf]
    %v8465 = vld [vmem:[#allocation12 + $0x2dc] sm:$0xff]
    %v8466 = vld [vmem:[#allocation12 + $0x2e4] sm:$0xf]
    %v8467 = vld [vmem:[#allocation12 + $0x2e8] sm:$0xff]
    %v8468 = vld [vmem:[#allocation12 + $0x2f0] sm:$0xf]
    %v8469 = vld [vmem:[#allocation12 + $0x2f4] sm:$0xff]
    %v8470 = vld [vmem:[#allocation12 + $0x2fc] sm:$0xf]
    %v8471 = vld [vmem:[#allocation12 + $0x300] sm:$0xff]
    %v8472 = vld [vmem:[#allocation12 + $0x308] sm:$0xf]
    %v8473 = vld [vmem:[#allocation12 + $0x30c] sm:$0xff]
    %v8474 = vld [vmem:[#allocation12 + $0x314] sm:$0xf]
    %v8475 = vld [vmem:[#allocation12 + $0x318] sm:$0xff]
    %v8476 = vld [vmem:[#allocation12 + $0x320] sm:$0xf]
    %v8477 = vld [vmem:[#allocation12 + $0x324] sm:$0xff]
    %v8478 = vld [vmem:[#allocation12 + $0x32c] sm:$0xf]
    %v8479 = vld [vmem:[#allocation12 + $0x330] sm:$0xff]
    %v8480 = vld [vmem:[#allocation12 + $0x338] sm:$0xf]
    %v8481 = vld [vmem:[#allocation12 + $0x33c] sm:$0xff]
    %v8482 = vld [vmem:[#allocation12 + $0x344] sm:$0xf]
    %v8483 = vld [vmem:[#allocation12 + $0x348] sm:$0xff]
    %v8484 = vld [vmem:[#allocation12 + $0x350] sm:$0xf]
    %v8485 = vld [vmem:[#allocation12 + $0x354] sm:$0xff]
    %v8486 = vld [vmem:[#allocation12 + $0x35c] sm:$0xf]
    %v8487 = vld [vmem:[#allocation12 + $0x360] sm:$0xff]
    %v8488 = vld [vmem:[#allocation12 + $0x368] sm:$0xf]
    %v8489 = vld [vmem:[#allocation12 + $0x36c] sm:$0xff]
    %v8490 = vld [vmem:[#allocation12 + $0x374] sm:$0xf]
    %v8491 = vld [vmem:[#allocation12 + $0x378] sm:$0xff]
    %v8492 = vld [vmem:[#allocation12 + $0x380] sm:$0xf]
    %v8493 = vld [vmem:[#allocation12 + $0x384] sm:$0xff]
    %v8494 = vld [vmem:[#allocation12 + $0x38c] sm:$0xf]
    %v8495 = vld [vmem:[#allocation12 + $0x390] sm:$0xff]
    %v8496 = vld [vmem:[#allocation12 + $0x398] sm:$0xf]
    %v8497 = vld [vmem:[#allocation12 + $0x39c] sm:$0xff]
    %v8498 = vld [vmem:[#allocation12 + $0x3a4] sm:$0xf]
    %v8499 = vld [vmem:[#allocation12 + $0x3a8] sm:$0xff]
    %v8500 = vld [vmem:[#allocation12 + $0x3b0] sm:$0xf]
    %v8501 = vld [vmem:[#allocation12 + $0x3b4] sm:$0xff]
    %v8502 = vld [vmem:[#allocation12 + $0x3bc] sm:$0xf]
    %v8503 = vld [vmem:[#allocation13] sm:$0x7]
    %v8505 = vperm.slane %v8503, 0
    %v8506 = vperm.slane %v8503, 1
    %v8507 = vperm.slane %v8503, 2
    %v8671 = vunpack.c.l.b16 %v8343
    %v8672 = vunpack.c.h.b16 %v8343
    %v8673 = vunpack.c.l.b16 %v8344
    %v8674 = vunpack.c.l.b16 %v8345
    %v8675 = vunpack.c.h.b16 %v8345
    %v8676 = vunpack.c.l.b16 %v8346
    %v8677 = vunpack.c.l.b16 %v8347
    %v8678 = vunpack.c.h.b16 %v8347
    %v8679 = vunpack.c.l.b16 %v8348
    %v8680 = vunpack.c.l.b16 %v8349
    %v8681 = vunpack.c.h.b16 %v8349
    %v8682 = vunpack.c.l.b16 %v8350
    %v8683 = vunpack.c.l.b16 %v8351
    %v8684 = vunpack.c.h.b16 %v8351
    %v8685 = vunpack.c.l.b16 %v8352
    %v8686 = vunpack.c.l.b16 %v8353
    %v8687 = vunpack.c.h.b16 %v8353
    %v8688 = vunpack.c.l.b16 %v8354
    %v8689 = vunpack.c.l.b16 %v8355
    %v8690 = vunpack.c.h.b16 %v8355
    %v8691 = vunpack.c.l.b16 %v8356
    %v8692 = vunpack.c.l.b16 %v8357
    %v8693 = vunpack.c.h.b16 %v8357
    %v8694 = vunpack.c.l.b16 %v8358
    %v8695 = vunpack.c.l.b16 %v8359
    %v8696 = vunpack.c.h.b16 %v8359
    %v8697 = vunpack.c.l.b16 %v8360
    %v8698 = vunpack.c.l.b16 %v8361
    %v8699 = vunpack.c.h.b16 %v8361
    %v8700 = vunpack.c.l.b16 %v8362
    %v8701 = vunpack.c.l.b16 %v8363
    %v8702 = vunpack.c.h.b16 %v8363
    %v8703 = vunpack.c.l.b16 %v8364
    %v8704 = vunpack.c.l.b16 %v8365
    %v8705 = vunpack.c.h.b16 %v8365
    %v8706 = vunpack.c.l.b16 %v8366
    %v8707 = vunpack.c.l.b16 %v8367
    %v8708 = vunpack.c.h.b16 %v8367
    %v8709 = vunpack.c.l.b16 %v8368
    %v8710 = vunpack.c.l.b16 %v8369
    %v8711 = vunpack.c.h.b16 %v8369
    %v8712 = vunpack.c.l.b16 %v8370
    %v8713 = vunpack.c.l.b16 %v8371
    %v8714 = vunpack.c.h.b16 %v8371
    %v8715 = vunpack.c.l.b16 %v8372
    %v8716 = vunpack.c.l.b16 %v8373
    %v8717 = vunpack.c.h.b16 %v8373
    %v8718 = vunpack.c.l.b16 %v8374
    %v8719 = vunpack.c.l.b16 %v8375
    %v8720 = vunpack.c.h.b16 %v8375
    %v8721 = vunpack.c.l.b16 %v8376
    %v8722 = vunpack.c.l.b16 %v8377
    %v8723 = vunpack.c.h.b16 %v8377
    %v8724 = vunpack.c.l.b16 %v8378
    %v8725 = vunpack.c.l.b16 %v8379
    %v8726 = vunpack.c.h.b16 %v8379
    %v8727 = vunpack.c.l.b16 %v8380
    %v8728 = vunpack.c.l.b16 %v8381
    %v8729 = vunpack.c.h.b16 %v8381
    %v8730 = vunpack.c.l.b16 %v8382
    %v8731 = vunpack.c.l.b16 %v8383
    %v8732 = vunpack.c.h.b16 %v8383
    %v8733 = vunpack.c.l.b16 %v8384
    %v8734 = vunpack.c.l.b16 %v8385
    %v8735 = vunpack.c.h.b16 %v8385
    %v8736 = vunpack.c.l.b16 %v8386
    %v8737 = vunpack.c.l.b16 %v8387
    %v8738 = vunpack.c.h.b16 %v8387
    %v8739 = vunpack.c.l.b16 %v8388
    %v8740 = vunpack.c.l.b16 %v8389
    %v8741 = vunpack.c.h.b16 %v8389
    %v8742 = vunpack.c.l.b16 %v8390
    %v8743 = vunpack.c.l.b16 %v8391
    %v8744 = vunpack.c.h.b16 %v8391
    %v8745 = vunpack.c.l.b16 %v8392
    %v8746 = vunpack.c.l.b16 %v8393
    %v8747 = vunpack.c.h.b16 %v8393
    %v8748 = vunpack.c.l.b16 %v8394
    %v8749 = vunpack.c.l.b16 %v8395
    %v8750 = vunpack.c.h.b16 %v8395
    %v8751 = vunpack.c.l.b16 %v8396
    %v8752 = vunpack.c.l.b16 %v8397
    %v8753 = vunpack.c.h.b16 %v8397
    %v8754 = vunpack.c.l.b16 %v8398
    %v8755 = vunpack.c.l.b16 %v8399
    %v8756 = vunpack.c.h.b16 %v8399
    %v8757 = vunpack.c.l.b16 %v8400
    %v8758 = vunpack.c.l.b16 %v8401
    %v8759 = vunpack.c.h.b16 %v8401
    %v8760 = vunpack.c.l.b16 %v8402
    %v8761 = vunpack.c.l.b16 %v8403
    %v8762 = vunpack.c.h.b16 %v8403
    %v8763 = vunpack.c.l.b16 %v8404
    %v8764 = vunpack.c.l.b16 %v8405
    %v8765 = vunpack.c.h.b16 %v8405
    %v8766 = vunpack.c.l.b16 %v8406
    %v8767 = vunpack.c.l.b16 %v8407
    %v8768 = vunpack.c.h.b16 %v8407
    %v8769 = vunpack.c.l.b16 %v8408
    %v8770 = vunpack.c.l.b16 %v8409
    %v8771 = vunpack.c.h.b16 %v8409
    %v8772 = vunpack.c.l.b16 %v8410
    %v8773 = vunpack.c.l.b16 %v8411
    %v8774 = vunpack.c.h.b16 %v8411
    %v8775 = vunpack.c.l.b16 %v8412
    %v8776 = vunpack.c.l.b16 %v8413
    %v8777 = vunpack.c.h.b16 %v8413
    %v8778 = vunpack.c.l.b16 %v8414
    %v8779 = vunpack.c.l.b16 %v8415
    %v8780 = vunpack.c.h.b16 %v8415
    %v8781 = vunpack.c.l.b16 %v8416
    %v8782 = vunpack.c.l.b16 %v8417
    %v8783 = vunpack.c.h.b16 %v8417
    %v8784 = vunpack.c.l.b16 %v8418
    %v8785 = vunpack.c.l.b16 %v8419
    %v8786 = vunpack.c.h.b16 %v8419
    %v8787 = vunpack.c.l.b16 %v8420
    %v8788 = vunpack.c.l.b16 %v8421
    %v8789 = vunpack.c.h.b16 %v8421
    %v8790 = vunpack.c.l.b16 %v8422
    %v8791 = vunpack.c.l.b16 %v8423
    %v8792 = vunpack.c.h.b16 %v8423
    %v8793 = vunpack.c.l.b16 %v8424
    %v8794 = vunpack.c.l.b16 %v8425
    %v8795 = vunpack.c.h.b16 %v8425
    %v8796 = vunpack.c.l.b16 %v8426
    %v8797 = vunpack.c.l.b16 %v8427
    %v8798 = vunpack.c.h.b16 %v8427
    %v8799 = vunpack.c.l.b16 %v8428
    %v8800 = vunpack.c.l.b16 %v8429
    %v8801 = vunpack.c.h.b16 %v8429
    %v8802 = vunpack.c.l.b16 %v8430
    %v8803 = vunpack.c.l.b16 %v8431
    %v8804 = vunpack.c.h.b16 %v8431
    %v8805 = vunpack.c.l.b16 %v8432
    %v8806 = vunpack.c.l.b16 %v8433
    %v8807 = vunpack.c.h.b16 %v8433
    %v8808 = vunpack.c.l.b16 %v8434
    %v8809 = vunpack.c.l.b16 %v8435
    %v8810 = vunpack.c.h.b16 %v8435
    %v8811 = vunpack.c.l.b16 %v8436
    %v8812 = vunpack.c.l.b16 %v8437
    %v8813 = vunpack.c.h.b16 %v8437
    %v8814 = vunpack.c.l.b16 %v8438
    %v8815 = vunpack.c.l.b16 %v8439
    %v8816 = vunpack.c.h.b16 %v8439
    %v8817 = vunpack.c.l.b16 %v8440
    %v8818 = vunpack.c.l.b16 %v8441
    %v8819 = vunpack.c.h.b16 %v8441
    %v8820 = vunpack.c.l.b16 %v8442
    %v8821 = vunpack.c.l.b16 %v8443
    %v8822 = vunpack.c.h.b16 %v8443
    %v8823 = vunpack.c.l.b16 %v8444
    %v8824 = vunpack.c.l.b16 %v8445
    %v8825 = vunpack.c.h.b16 %v8445
    %v8826 = vunpack.c.l.b16 %v8446
    %v8827 = vunpack.c.l.b16 %v8447
    %v8828 = vunpack.c.h.b16 %v8447
    %v8829 = vunpack.c.l.b16 %v8448
    %v8830 = vunpack.c.l.b16 %v8449
    %v8831 = vunpack.c.h.b16 %v8449
    %v8832 = vunpack.c.l.b16 %v8450
    %v8833 = vunpack.c.l.b16 %v8451
    %v8834 = vunpack.c.h.b16 %v8451
    %v8835 = vunpack.c.l.b16 %v8452
    %v8836 = vunpack.c.l.b16 %v8453
    %v8837 = vunpack.c.h.b16 %v8453
    %v8838 = vunpack.c.l.b16 %v8454
    %v8839 = vunpack.c.l.b16 %v8455
    %v8840 = vunpack.c.h.b16 %v8455
    %v8841 = vunpack.c.l.b16 %v8456
    %v8842 = vunpack.c.l.b16 %v8457
    %v8843 = vunpack.c.h.b16 %v8457
    %v8844 = vunpack.c.l.b16 %v8458
    %v8845 = vunpack.c.l.b16 %v8459
    %v8846 = vunpack.c.h.b16 %v8459
    %v8847 = vunpack.c.l.b16 %v8460
    %v8848 = vunpack.c.l.b16 %v8461
    %v8849 = vunpack.c.h.b16 %v8461
    %v8850 = vunpack.c.l.b16 %v8462
    %v8851 = vunpack.c.l.b16 %v8463
    %v8852 = vunpack.c.h.b16 %v8463
    %v8853 = vunpack.c.l.b16 %v8464
    %v8854 = vunpack.c.l.b16 %v8465
    %v8855 = vunpack.c.h.b16 %v8465
    %v8856 = vunpack.c.l.b16 %v8466
    %v8857 = vunpack.c.l.b16 %v8467
    %v8858 = vunpack.c.h.b16 %v8467
    %v8859 = vunpack.c.l.b16 %v8468
    %v8860 = vunpack.c.l.b16 %v8469
    %v8861 = vunpack.c.h.b16 %v8469
    %v8862 = vunpack.c.l.b16 %v8470
    %v8863 = vunpack.c.l.b16 %v8471
    %v8864 = vunpack.c.h.b16 %v8471
    %v8865 = vunpack.c.l.b16 %v8472
    %v8866 = vunpack.c.l.b16 %v8473
    %v8867 = vunpack.c.h.b16 %v8473
    %v8868 = vunpack.c.l.b16 %v8474
    %v8869 = vunpack.c.l.b16 %v8475
    %v8870 = vunpack.c.h.b16 %v8475
    %v8871 = vunpack.c.l.b16 %v8476
    %v8872 = vunpack.c.l.b16 %v8477
    %v8873 = vunpack.c.h.b16 %v8477
    %v8874 = vunpack.c.l.b16 %v8478
    %v8875 = vunpack.c.l.b16 %v8479
    %v8876 = vunpack.c.h.b16 %v8479
    %v8877 = vunpack.c.l.b16 %v8480
    %v8878 = vunpack.c.l.b16 %v8481
    %v8879 = vunpack.c.h.b16 %v8481
    %v8880 = vunpack.c.l.b16 %v8482
    %v8881 = vunpack.c.l.b16 %v8483
    %v8882 = vunpack.c.h.b16 %v8483
    %v8883 = vunpack.c.l.b16 %v8484
    %v8884 = vunpack.c.l.b16 %v8485
    %v8885 = vunpack.c.h.b16 %v8485
    %v8886 = vunpack.c.l.b16 %v8486
    %v8887 = vunpack.c.l.b16 %v8487
    %v8888 = vunpack.c.h.b16 %v8487
    %v8889 = vunpack.c.l.b16 %v8488
    %v8890 = vunpack.c.l.b16 %v8489
    %v8891 = vunpack.c.h.b16 %v8489
    %v8892 = vunpack.c.l.b16 %v8490
    %v8893 = vunpack.c.l.b16 %v8491
    %v8894 = vunpack.c.h.b16 %v8491
    %v8895 = vunpack.c.l.b16 %v8492
    %v8896 = vunpack.c.l.b16 %v8493
    %v8897 = vunpack.c.h.b16 %v8493
    %v8898 = vunpack.c.l.b16 %v8494
    %v8899 = vunpack.c.l.b16 %v8495
    %v8900 = vunpack.c.h.b16 %v8495
    %v8901 = vunpack.c.l.b16 %v8496
    %v8902 = vunpack.c.l.b16 %v8497
    %v8903 = vunpack.c.h.b16 %v8497
    %v8904 = vunpack.c.l.b16 %v8498
    %v8905 = vunpack.c.l.b16 %v8499
    %v8906 = vunpack.c.h.b16 %v8499
    %v8907 = vunpack.c.l.b16 %v8500
    %v8908 = vunpack.c.l.b16 %v8501
    %v8909 = vunpack.c.h.b16 %v8501
    %v8910 = vunpack.c.l.b16 %v8502
    %v8911 = vpack.c.b16 %v8674, %v8671
    %v8912 = vpack.c.b16 %v8675, %v8672
    %v8913 = vpack.c.b16 %v8676, %v8673
    %v8914 = vpack.c.b16 %v8680, %v8677
    %v8915 = vpack.c.b16 %v8681, %v8678
    %v8916 = vpack.c.b16 %v8682, %v8679
    %v8917 = vpack.c.b16 %v8686, %v8683
    %v8918 = vpack.c.b16 %v8687, %v8684
    %v8919 = vpack.c.b16 %v8688, %v8685
    %v8920 = vpack.c.b16 %v8692, %v8689
    %v8921 = vpack.c.b16 %v8693, %v8690
    %v8922 = vpack.c.b16 %v8694, %v8691
    %v8923 = vpack.c.b16 %v8698, %v8695
    %v8924 = vpack.c.b16 %v8699, %v8696
    %v8925 = vpack.c.b16 %v8700, %v8697
    %v8926 = vpack.c.b16 %v8704, %v8701
    %v8927 = vpack.c.b16 %v8705, %v8702
    %v8928 = vpack.c.b16 %v8706, %v8703
    %v8929 = vpack.c.b16 %v8710, %v8707
    %v8930 = vpack.c.b16 %v8711, %v8708
    %v8931 = vpack.c.b16 %v8712, %v8709
    %v8932 = vpack.c.b16 %v8716, %v8713
    %v8933 = vpack.c.b16 %v8717, %v8714
    %v8934 = vpack.c.b16 %v8718, %v8715
    %v8935 = vpack.c.b16 %v8722, %v8719
    %v8936 = vpack.c.b16 %v8723, %v8720
    %v8937 = vpack.c.b16 %v8724, %v8721
    %v8938 = vpack.c.b16 %v8728, %v8725
    %v8939 = vpack.c.b16 %v8729, %v8726
    %v8940 = vpack.c.b16 %v8730, %v8727
    %v8941 = vpack.c.b16 %v8734, %v8731
    %v8942 = vpack.c.b16 %v8735, %v8732
    %v8943 = vpack.c.b16 %v8736, %v8733
    %v8944 = vpack.c.b16 %v8740, %v8737
    %v8945 = vpack.c.b16 %v8741, %v8738
    %v8946 = vpack.c.b16 %v8742, %v8739
    %v8947 = vpack.c.b16 %v8746, %v8743
    %v8948 = vpack.c.b16 %v8747, %v8744
    %v8949 = vpack.c.b16 %v8748, %v8745
    %v8950 = vpack.c.b16 %v8752, %v8749
    %v8951 = vpack.c.b16 %v8753, %v8750
    %v8952 = vpack.c.b16 %v8754, %v8751
    %v8953 = vpack.c.b16 %v8758, %v8755
    %v8954 = vpack.c.b16 %v8759, %v8756
    %v8955 = vpack.c.b16 %v8760, %v8757
    %v8956 = vpack.c.b16 %v8764, %v8761
    %v8957 = vpack.c.b16 %v8765, %v8762
    %v8958 = vpack.c.b16 %v8766, %v8763
    %v8959 = vpack.c.b16 %v8770, %v8767
    %v8960 = vpack.c.b16 %v8771, %v8768
    %v8961 = vpack.c.b16 %v8772, %v8769
    %v8962 = vpack.c.b16 %v8776, %v8773
    %v8963 = vpack.c.b16 %v8777, %v8774
    %v8964 = vpack.c.b16 %v8778, %v8775
    %v8965 = vpack.c.b16 %v8782, %v8779
    %v8966 = vpack.c.b16 %v8783, %v8780
    %v8967 = vpack.c.b16 %v8784, %v8781
    %v8968 = vpack.c.b16 %v8788, %v8785
    %v8969 = vpack.c.b16 %v8789, %v8786
    %v8970 = vpack.c.b16 %v8790, %v8787
    %v8971 = vpack.c.b16 %v8794, %v8791
    %v8972 = vpack.c.b16 %v8795, %v8792
    %v8973 = vpack.c.b16 %v8796, %v8793
    %v8974 = vpack.c.b16 %v8800, %v8797
    %v8975 = vpack.c.b16 %v8801, %v8798
    %v8976 = vpack.c.b16 %v8802, %v8799
    %v8977 = vpack.c.b16 %v8806, %v8803
    %v8978 = vpack.c.b16 %v8807, %v8804
    %v8979 = vpack.c.b16 %v8808, %v8805
    %v8980 = vpack.c.b16 %v8812, %v8809
    %v8981 = vpack.c.b16 %v8813, %v8810
    %v8982 = vpack.c.b16 %v8814, %v8811
    %v8983 = vpack.c.b16 %v8818, %v8815
    %v8984 = vpack.c.b16 %v8819, %v8816
    %v8985 = vpack.c.b16 %v8820, %v8817
    %v8986 = vpack.c.b16 %v8824, %v8821
    %v8987 = vpack.c.b16 %v8825, %v8822
    %v8988 = vpack.c.b16 %v8826, %v8823
    %v8989 = vpack.c.b16 %v8830, %v8827
    %v8990 = vpack.c.b16 %v8831, %v8828
    %v8991 = vpack.c.b16 %v8832, %v8829
    %v8992 = vpack.c.b16 %v8836, %v8833
    %v8993 = vpack.c.b16 %v8837, %v8834
    %v8994 = vpack.c.b16 %v8838, %v8835
    %v8995 = vpack.c.b16 %v8842, %v8839
    %v8996 = vpack.c.b16 %v8843, %v8840
    %v8997 = vpack.c.b16 %v8844, %v8841
    %v8998 = vpack.c.b16 %v8848, %v8845
    %v8999 = vpack.c.b16 %v8849, %v8846
    %v9000 = vpack.c.b16 %v8850, %v8847
    %v9001 = vpack.c.b16 %v8854, %v8851
    %v9002 = vpack.c.b16 %v8855, %v8852
    %v9003 = vpack.c.b16 %v8856, %v8853
    %v9004 = vpack.c.b16 %v8860, %v8857
    %v9005 = vpack.c.b16 %v8861, %v8858
    %v9006 = vpack.c.b16 %v8862, %v8859
    %v9007 = vpack.c.b16 %v8866, %v8863
    %v9008 = vpack.c.b16 %v8867, %v8864
    %v9009 = vpack.c.b16 %v8868, %v8865
    %v9010 = vpack.c.b16 %v8872, %v8869
    %v9011 = vpack.c.b16 %v8873, %v8870
    %v9012 = vpack.c.b16 %v8874, %v8871
    %v9013 = vpack.c.b16 %v8878, %v8875
    %v9014 = vpack.c.b16 %v8879, %v8876
    %v9015 = vpack.c.b16 %v8880, %v8877
    %v9016 = vpack.c.b16 %v8884, %v8881
    %v9017 = vpack.c.b16 %v8885, %v8882
    %v9018 = vpack.c.b16 %v8886, %v8883
    %v9019 = vpack.c.b16 %v8890, %v8887
    %v9020 = vpack.c.b16 %v8891, %v8888
    %v9021 = vpack.c.b16 %v8892, %v8889
    %v9022 = vpack.c.b16 %v8896, %v8893
    %v9023 = vpack.c.b16 %v8897, %v8894
    %v9024 = vpack.c.b16 %v8898, %v8895
    %v9025 = vpack.c.b16 %v8902, %v8899
    %v9026 = vpack.c.b16 %v8903, %v8900
    %v9027 = vpack.c.b16 %v8904, %v8901
    %v9028 = vpack.c.b16 %v8908, %v8905
    %v9029 = vpack.c.b16 %v8909, %v8906
    %v9030 = vpack.c.b16 %v8910, %v8907
    %9151 = vmatpush.bf16.msra.mxu0 %v8932
    %9152 = vmatpush.bf16.msra.mxu0 %v8929
    %9153 = vmatpush.bf16.msra.mxu0 %v8926
    %9154 = vmatpush.bf16.msra.mxu0 %v8923
    %9155 = vmatpush.bf16.msra.mxu0 %v8920
    %9156 = vmatpush.bf16.msra.mxu0 %v8917
    %9157 = vmatpush.bf16.msra.mxu0 %v8914
    %9158 = vmatpush.bf16.msra.mxu0 %v8911
    %9159 = vmatmul.bf16.gmra.mxu0 %v8338
    %v9160 = vpop.f32.mrf.mxu0
    %v9161 = vadd.f32 %v8505, %v9160
    %v9162 = vpop.f32.mrf.mxu0
    %9163 = vdwg.mxu0
    %9164 = vmatpush.bf16.msra.mxu0 %v8956
    %9165 = vmatpush.bf16.msra.mxu0 %v8953
    %9166 = vmatpush.bf16.msra.mxu0 %v8950
    %9167 = vmatpush.bf16.msra.mxu0 %v8947
    %9168 = vmatpush.bf16.msra.mxu0 %v8944
    %9169 = vmatpush.bf16.msra.mxu0 %v8941
    %9170 = vmatpush.bf16.msra.mxu0 %v8938
    %9171 = vmatpush.bf16.msra.mxu0 %v8935
    %9172 = vmatmul.bf16.gmra.mxu0 %v8339
    %v9173 = vpop.f32.mrf.mxu0
    %v9174 = vadd.f32 %v9161, %v9173
    %v9175 = vpop.f32.mrf.mxu0
    %9176 = vdwg.mxu0
    %9177 = vmatpush.bf16.msra.mxu0 %v8980
    %9178 = vmatpush.bf16.msra.mxu0 %v8977
    %9179 = vmatpush.bf16.msra.mxu0 %v8974
    %9180 = vmatpush.bf16.msra.mxu0 %v8971
    %9181 = vmatpush.bf16.msra.mxu0 %v8968
    %9182 = vmatpush.bf16.msra.mxu0 %v8965
    %9183 = vmatpush.bf16.msra.mxu0 %v8962
    %9184 = vmatpush.bf16.msra.mxu0 %v8959
    %9185 = vmatmul.bf16.gmra.mxu0 %v8340
    %v9186 = vpop.f32.mrf.mxu0
    %v9187 = vadd.f32 %v9174, %v9186
    %v9188 = vpop.f32.mrf.mxu0
    %9189 = vdwg.mxu0
    %9190 = vmatpush.bf16.msra.mxu0 %v9004
    %9191 = vmatpush.bf16.msra.mxu0 %v9001
    %9192 = vmatpush.bf16.msra.mxu0 %v8998
    %9193 = vmatpush.bf16.msra.mxu0 %v8995
    %9194 = vmatpush.bf16.msra.mxu0 %v8992
    %9195 = vmatpush.bf16.msra.mxu0 %v8989
    %9196 = vmatpush.bf16.msra.mxu0 %v8986
    %9197 = vmatpush.bf16.msra.mxu0 %v8983
    %9198 = vmatmul.bf16.gmra.mxu0 %v8341
    %v9199 = vpop.f32.mrf.mxu0
    %v9200 = vadd.f32 %v9187, %v9199
    %v9201 = vpop.f32.mrf.mxu0
    %9202 = vdwg.mxu0
    %9203 = vmatpush.bf16.msra.mxu0 %v9028
    %9204 = vmatpush.bf16.msra.mxu0 %v9025
    %9205 = vmatpush.bf16.msra.mxu0 %v9022
    %9206 = vmatpush.bf16.msra.mxu0 %v9019
    %9207 = vmatpush.bf16.msra.mxu0 %v9016
    %9208 = vmatpush.bf16.msra.mxu0 %v9013
    %9209 = vmatpush.bf16.msra.mxu0 %v9010
    %9210 = vmatpush.bf16.msra.mxu0 %v9007
    %9211 = vmatmul.bf16.gmra.mxu0 %v8342
    %v9212 = vpop.f32.mrf.mxu0
    %v9213 = vadd.f32 %v9200, %v9212
    %v9214 = vpop.f32.mrf.mxu0
    %9215 = vdwg.mxu0
    %9216 = vmatpush.bf16.msra.mxu0 %v8933
    %9217 = vmatpush.bf16.msra.mxu0 %v8930
    %9218 = vmatpush.bf16.msra.mxu0 %v8927
    %9219 = vmatpush.bf16.msra.mxu0 %v8924
    %9220 = vmatpush.bf16.msra.mxu0 %v8921
    %9221 = vmatpush.bf16.msra.mxu0 %v8918
    %9222 = vmatpush.bf16.msra.mxu0 %v8915
    %9223 = vmatpush.bf16.msra.mxu0 %v8912
    %9224 = vmatmul.bf16.gmra.mxu0 %v8338
    %v9225 = vpop.f32.mrf.mxu0
    %v9226 = vadd.f32 %v8506, %v9225
    %v9227 = vpop.f32.mrf.mxu0
    %9228 = vdwg.mxu0
    %9229 = vmatpush.bf16.msra.mxu0 %v8957
    %9230 = vmatpush.bf16.msra.mxu0 %v8954
    %9231 = vmatpush.bf16.msra.mxu0 %v8951
    %9232 = vmatpush.bf16.msra.mxu0 %v8948
    %9233 = vmatpush.bf16.msra.mxu0 %v8945
    %9234 = vmatpush.bf16.msra.mxu0 %v8942
    %9235 = vmatpush.bf16.msra.mxu0 %v8939
    %9236 = vmatpush.bf16.msra.mxu0 %v8936
    %9237 = vmatmul.bf16.gmra.mxu0 %v8339
    %v9238 = vpop.f32.mrf.mxu0
    %v9239 = vadd.f32 %v9226, %v9238
    %v9240 = vpop.f32.mrf.mxu0
    %9241 = vdwg.mxu0
    %9242 = vmatpush.bf16.msra.mxu0 %v8981
    %9243 = vmatpush.bf16.msra.mxu0 %v8978
    %9244 = vmatpush.bf16.msra.mxu0 %v8975
    %9245 = vmatpush.bf16.msra.mxu0 %v8972
    %9246 = vmatpush.bf16.msra.mxu0 %v8969
    %9247 = vmatpush.bf16.msra.mxu0 %v8966
    %9248 = vmatpush.bf16.msra.mxu0 %v8963
    %9249 = vmatpush.bf16.msra.mxu0 %v8960
    %9250 = vmatmul.bf16.gmra.mxu0 %v8340
    %v9251 = vpop.f32.mrf.mxu0
    %v9252 = vadd.f32 %v9239, %v9251
    %v9253 = vpop.f32.mrf.mxu0
    %9254 = vdwg.mxu0
    %9255 = vmatpush.bf16.msra.mxu0 %v9005
    %9256 = vmatpush.bf16.msra.mxu0 %v9002
    %9257 = vmatpush.bf16.msra.mxu0 %v8999
    %9258 = vmatpush.bf16.msra.mxu0 %v8996
    %9259 = vmatpush.bf16.msra.mxu0 %v8993
    %9260 = vmatpush.bf16.msra.mxu0 %v8990
    %9261 = vmatpush.bf16.msra.mxu0 %v8987
    %9262 = vmatpush.bf16.msra.mxu0 %v8984
    %9263 = vmatmul.bf16.gmra.mxu0 %v8341
    %v9264 = vpop.f32.mrf.mxu0
    %v9265 = vadd.f32 %v9252, %v9264
    %v9266 = vpop.f32.mrf.mxu0
    %9267 = vdwg.mxu0
    %9268 = vmatpush.bf16.msra.mxu0 %v9029
    %9269 = vmatpush.bf16.msra.mxu0 %v9026
    %9270 = vmatpush.bf16.msra.mxu0 %v9023
    %9271 = vmatpush.bf16.msra.mxu0 %v9020
    %9272 = vmatpush.bf16.msra.mxu0 %v9017
    %9273 = vmatpush.bf16.msra.mxu0 %v9014
    %9274 = vmatpush.bf16.msra.mxu0 %v9011
    %9275 = vmatpush.bf16.msra.mxu0 %v9008
    %9276 = vmatmul.bf16.gmra.mxu0 %v8342
    %v9277 = vpop.f32.mrf.mxu0
    %v9278 = vadd.f32 %v9265, %v9277
    %v9279 = vpop.f32.mrf.mxu0
    %9280 = vdwg.mxu0
    %9281 = vmatpush.bf16.msra.mxu0 %v8934
    %9282 = vmatpush.bf16.msra.mxu0 %v8931
    %9283 = vmatpush.bf16.msra.mxu0 %v8928
    %9284 = vmatpush.bf16.msra.mxu0 %v8925
    %9285 = vmatpush.bf16.msra.mxu0 %v8922
    %9286 = vmatpush.bf16.msra.mxu0 %v8919
    %9287 = vmatpush.bf16.msra.mxu0 %v8916
    %9288 = vmatpush.bf16.msra.mxu0 %v8913
    %9289 = vmatmul.bf16.gmra.mxu0 %v8338
    %v9290 = vpop.f32.mrf.mxu0
    %v9291 = vadd.f32 %v8507, %v9290
    %v9292 = vpop.f32.mrf.mxu0
    %9293 = vdwg.mxu0
    %9294 = vmatpush.bf16.msra.mxu0 %v8958
    %9295 = vmatpush.bf16.msra.mxu0 %v8955
    %9296 = vmatpush.bf16.msra.mxu0 %v8952
    %9297 = vmatpush.bf16.msra.mxu0 %v8949
    %9298 = vmatpush.bf16.msra.mxu0 %v8946
    %9299 = vmatpush.bf16.msra.mxu0 %v8943
    %9300 = vmatpush.bf16.msra.mxu0 %v8940
    %9301 = vmatpush.bf16.msra.mxu0 %v8937
    %9302 = vmatmul.bf16.gmra.mxu0 %v8339
    %v9303 = vpop.f32.mrf.mxu0
    %v9304 = vadd.f32 %v9291, %v9303
    %v9305 = vpop.f32.mrf.mxu0
    %9306 = vdwg.mxu0
    %9307 = vmatpush.bf16.msra.mxu0 %v8982
    %9308 = vmatpush.bf16.msra.mxu0 %v8979
    %9309 = vmatpush.bf16.msra.mxu0 %v8976
    %9310 = vmatpush.bf16.msra.mxu0 %v8973
    %9311 = vmatpush.bf16.msra.mxu0 %v8970
    %9312 = vmatpush.bf16.msra.mxu0 %v8967
    %9313 = vmatpush.bf16.msra.mxu0 %v8964
    %9314 = vmatpush.bf16.msra.mxu0 %v8961
    %9315 = vmatmul.bf16.gmra.mxu0 %v8340
    %v9316 = vpop.f32.mrf.mxu0
    %v9317 = vadd.f32 %v9304, %v9316
    %v9318 = vpop.f32.mrf.mxu0
    %9319 = vdwg.mxu0
    %9320 = vmatpush.bf16.msra.mxu0 %v9006
    %9321 = vmatpush.bf16.msra.mxu0 %v9003
    %9322 = vmatpush.bf16.msra.mxu0 %v9000
    %9323 = vmatpush.bf16.msra.mxu0 %v8997
    %9324 = vmatpush.bf16.msra.mxu0 %v8994
    %9325 = vmatpush.bf16.msra.mxu0 %v8991
    %9326 = vmatpush.bf16.msra.mxu0 %v8988
    %9327 = vmatpush.bf16.msra.mxu0 %v8985
    %9328 = vmatmul.bf16.gmra.mxu0 %v8341
    %v9329 = vpop.f32.mrf.mxu0
    %v9330 = vadd.f32 %v9317, %v9329
    %v9331 = vpop.f32.mrf.mxu0
    %9332 = vdwg.mxu0
    %9333 = vmatpush.bf16.msra.mxu0 %v9030
    %9334 = vmatpush.bf16.msra.mxu0 %v9027
    %9335 = vmatpush.bf16.msra.mxu0 %v9024
    %9336 = vmatpush.bf16.msra.mxu0 %v9021
    %9337 = vmatpush.bf16.msra.mxu0 %v9018
    %9338 = vmatpush.bf16.msra.mxu0 %v9015
    %9339 = vmatpush.bf16.msra.mxu0 %v9012
    %9340 = vmatpush.bf16.msra.mxu0 %v9009
    %9341 = vmatmul.bf16.gmra.mxu0 %v8342
    %v9342 = vpop.f32.mrf.mxu0
    %v9343 = vadd.f32 %v9330, %v9342
    %v9344 = vpop.f32.mrf.mxu0
    %9345 = vdwg.mxu0
    %v9346 = vmax.f32 %v9213, 0.0
    %v9347 = vmax.f32 %v9278, 0.0
    %v9348 = vmax.f32 %v9343, 0.0
    %v9349 = vpack.c.bf16 %v9346, %v9346
    %v9350 = vpack.c.bf16 %v9347, %v9347
    %v9351 = vpack.c.bf16 %v9348, %v9348
    %v9352 = vld [vmem:[#allocation15] sm:$0xf]
    %v9353 = vld [vmem:[#allocation15 + $0x4] sm:$0xf]
    %v9354 = vld [vmem:[#allocation15 + $0x8] sm:$0xf]
    %v9355 = vld [vmem:[#allocation15 + $0xc] sm:$0xf]
    %v9356 = vld [vmem:[#allocation15 + $0x10] sm:$0xf]
    %v9357 = vld [vmem:[#allocation15 + $0x14] sm:$0xf]
    %v9358 = vld [vmem:[#allocation15 + $0x18] sm:$0xf]
    %v9359 = vld [vmem:[#allocation15 + $0x1c] sm:$0xf]
    %v9360 = vld [vmem:[#allocation15 + $0x20] sm:$0xf]
    %v9361 = vld [vmem:[#allocation15 + $0x24] sm:$0xf]
    %v9362 = vld [vmem:[#allocation15 + $0x28] sm:$0xf]
    %v9363 = vld [vmem:[#allocation15 + $0x2c] sm:$0xf]
    %v9364 = vld [vmem:[#allocation15 + $0x30] sm:$0xf]
    %v9365 = vld [vmem:[#allocation15 + $0x34] sm:$0xf]
    %v9366 = vld [vmem:[#allocation15 + $0x38] sm:$0xf]
    %v9367 = vld [vmem:[#allocation15 + $0x3c] sm:$0xf]
    %v9368 = vld [vmem:[#allocation15 + $0x40] sm:$0xf]
    %v9369 = vld [vmem:[#allocation15 + $0x44] sm:$0xf]
    %v9370 = vld [vmem:[#allocation15 + $0x48] sm:$0xf]
    %v9371 = vld [vmem:[#allocation15 + $0x4c] sm:$0xf]
    %v9372 = vld [vmem:[#allocation15 + $0x50] sm:$0xf]
    %v9373 = vld [vmem:[#allocation15 + $0x54] sm:$0xf]
    %v9374 = vld [vmem:[#allocation15 + $0x58] sm:$0xf]
    %v9375 = vld [vmem:[#allocation15 + $0x5c] sm:$0xf]
    %v9376 = vld [vmem:[#allocation15 + $0x60] sm:$0xf]
    %v9377 = vld [vmem:[#allocation15 + $0x64] sm:$0xf]
    %v9378 = vld [vmem:[#allocation15 + $0x68] sm:$0xf]
    %v9379 = vld [vmem:[#allocation15 + $0x6c] sm:$0xf]
    %v9380 = vld [vmem:[#allocation15 + $0x70] sm:$0xf]
    %v9381 = vld [vmem:[#allocation15 + $0x74] sm:$0xf]
    %v9382 = vld [vmem:[#allocation15 + $0x78] sm:$0xf]
    %v9383 = vld [vmem:[#allocation15 + $0x7c] sm:$0xf]
    %v9384 = vld [vmem:[#allocation15 + $0x80] sm:$0xf]
    %v9385 = vld [vmem:[#allocation15 + $0x84] sm:$0xf]
    %v9386 = vld [vmem:[#allocation15 + $0x88] sm:$0xf]
    %v9387 = vld [vmem:[#allocation15 + $0x8c] sm:$0xf]
    %v9388 = vld [vmem:[#allocation15 + $0x90] sm:$0xf]
    %v9389 = vld [vmem:[#allocation15 + $0x94] sm:$0xf]
    %v9390 = vld [vmem:[#allocation15 + $0x98] sm:$0xf]
    %v9391 = vld [vmem:[#allocation15 + $0x9c] sm:$0xf]
    %v9392 = vld [vmem:[#allocation15 + $0xa0] sm:$0xf]
    %v9393 = vld [vmem:[#allocation15 + $0xa4] sm:$0xf]
    %v9394 = vld [vmem:[#allocation15 + $0xa8] sm:$0xf]
    %v9395 = vld [vmem:[#allocation15 + $0xac] sm:$0xf]
    %v9396 = vld [vmem:[#allocation15 + $0xb0] sm:$0xf]
    %v9397 = vld [vmem:[#allocation15 + $0xb4] sm:$0xf]
    %v9398 = vld [vmem:[#allocation15 + $0xb8] sm:$0xf]
    %v9399 = vld [vmem:[#allocation15 + $0xbc] sm:$0xf]
    %v9400 = vld [vmem:[#allocation16] sm:$0x1]
    %v9402 = vperm.slane %v9400, 0
    %v9452 = vunpack.c.l.b16 %v9352
    %v9453 = vunpack.c.l.b16 %v9353
    %v9454 = vunpack.c.l.b16 %v9354
    %v9455 = vunpack.c.l.b16 %v9355
    %v9456 = vunpack.c.l.b16 %v9356
    %v9457 = vunpack.c.l.b16 %v9357
    %v9458 = vunpack.c.l.b16 %v9358
    %v9459 = vunpack.c.l.b16 %v9359
    %v9460 = vunpack.c.l.b16 %v9360
    %v9461 = vunpack.c.l.b16 %v9361
    %v9462 = vunpack.c.l.b16 %v9362
    %v9463 = vunpack.c.l.b16 %v9363
    %v9464 = vunpack.c.l.b16 %v9364
    %v9465 = vunpack.c.l.b16 %v9365
    %v9466 = vunpack.c.l.b16 %v9366
    %v9467 = vunpack.c.l.b16 %v9367
    %v9468 = vunpack.c.l.b16 %v9368
    %v9469 = vunpack.c.l.b16 %v9369
    %v9470 = vunpack.c.l.b16 %v9370
    %v9471 = vunpack.c.l.b16 %v9371
    %v9472 = vunpack.c.l.b16 %v9372
    %v9473 = vunpack.c.l.b16 %v9373
    %v9474 = vunpack.c.l.b16 %v9374
    %v9475 = vunpack.c.l.b16 %v9375
    %v9476 = vunpack.c.l.b16 %v9376
    %v9477 = vunpack.c.l.b16 %v9377
    %v9478 = vunpack.c.l.b16 %v9378
    %v9479 = vunpack.c.l.b16 %v9379
    %v9480 = vunpack.c.l.b16 %v9380
    %v9481 = vunpack.c.l.b16 %v9381
    %v9482 = vunpack.c.l.b16 %v9382
    %v9483 = vunpack.c.l.b16 %v9383
    %v9484 = vunpack.c.l.b16 %v9384
    %v9485 = vunpack.c.l.b16 %v9385
    %v9486 = vunpack.c.l.b16 %v9386
    %v9487 = vunpack.c.l.b16 %v9387
    %v9488 = vunpack.c.l.b16 %v9388
    %v9489 = vunpack.c.l.b16 %v9389
    %v9490 = vunpack.c.l.b16 %v9390
    %v9491 = vunpack.c.l.b16 %v9391
    %v9492 = vunpack.c.l.b16 %v9392
    %v9493 = vunpack.c.l.b16 %v9393
    %v9494 = vunpack.c.l.b16 %v9394
    %v9495 = vunpack.c.l.b16 %v9395
    %v9496 = vunpack.c.l.b16 %v9396
    %v9497 = vunpack.c.l.b16 %v9397
    %v9498 = vunpack.c.l.b16 %v9398
    %v9499 = vunpack.c.l.b16 %v9399
    %v9500 = vpack.c.b16 %v9453, %v9452
    %v9501 = vpack.c.b16 %v9455, %v9454
    %v9502 = vpack.c.b16 %v9457, %v9456
    %v9503 = vpack.c.b16 %v9459, %v9458
    %v9504 = vpack.c.b16 %v9461, %v9460
    %v9505 = vpack.c.b16 %v9463, %v9462
    %v9506 = vpack.c.b16 %v9465, %v9464
    %v9507 = vpack.c.b16 %v9467, %v9466
    %v9508 = vpack.c.b16 %v9469, %v9468
    %v9509 = vpack.c.b16 %v9471, %v9470
    %v9510 = vpack.c.b16 %v9473, %v9472
    %v9511 = vpack.c.b16 %v9475, %v9474
    %v9512 = vpack.c.b16 %v9477, %v9476
    %v9513 = vpack.c.b16 %v9479, %v9478
    %v9514 = vpack.c.b16 %v9481, %v9480
    %v9515 = vpack.c.b16 %v9483, %v9482
    %v9516 = vpack.c.b16 %v9485, %v9484
    %v9517 = vpack.c.b16 %v9487, %v9486
    %v9518 = vpack.c.b16 %v9489, %v9488
    %v9519 = vpack.c.b16 %v9491, %v9490
    %v9520 = vpack.c.b16 %v9493, %v9492
    %v9521 = vpack.c.b16 %v9495, %v9494
    %v9522 = vpack.c.b16 %v9497, %v9496
    %v9523 = vpack.c.b16 %v9499, %v9498
    %9548 = vmatpush.bf16.msra.mxu0 %v9507
    %9549 = vmatpush.bf16.msra.mxu0 %v9506
    %9550 = vmatpush.bf16.msra.mxu0 %v9505
    %9551 = vmatpush.bf16.msra.mxu0 %v9504
    %9552 = vmatpush.bf16.msra.mxu0 %v9503
    %9553 = vmatpush.bf16.msra.mxu0 %v9502
    %9554 = vmatpush.bf16.msra.mxu0 %v9501
    %9555 = vmatpush.bf16.msra.mxu0 %v9500
    %9556 = vmatmul.bf16.gmra.mxu0 %v9349
    %v9557 = vpop.f32.mrf.mxu0
    %v9558 = vadd.f32 %v9402, %v9557
    %v9559 = vpop.f32.mrf.mxu0
    %9560 = vdwg.mxu0
    %9561 = vmatpush.bf16.msra.mxu0 %v9515
    %9562 = vmatpush.bf16.msra.mxu0 %v9514
    %9563 = vmatpush.bf16.msra.mxu0 %v9513
    %9564 = vmatpush.bf16.msra.mxu0 %v9512
    %9565 = vmatpush.bf16.msra.mxu0 %v9511
    %9566 = vmatpush.bf16.msra.mxu0 %v9510
    %9567 = vmatpush.bf16.msra.mxu0 %v9509
    %9568 = vmatpush.bf16.msra.mxu0 %v9508
    %9569 = vmatmul.bf16.gmra.mxu0 %v9350
    %v9570 = vpop.f32.mrf.mxu0
    %v9571 = vadd.f32 %v9558, %v9570
    %v9572 = vpop.f32.mrf.mxu0
    %9573 = vdwg.mxu0
    %9574 = vmatpush.bf16.msra.mxu0 %v9523
    %9575 = vmatpush.bf16.msra.mxu0 %v9522
    %9576 = vmatpush.bf16.msra.mxu0 %v9521
    %9577 = vmatpush.bf16.msra.mxu0 %v9520
    %9578 = vmatpush.bf16.msra.mxu0 %v9519
    %9579 = vmatpush.bf16.msra.mxu0 %v9518
    %9580 = vmatpush.bf16.msra.mxu0 %v9517
    %9581 = vmatpush.bf16.msra.mxu0 %v9516
    %9582 = vmatmul.bf16.gmra.mxu0 %v9351
    %v9583 = vpop.f32.mrf.mxu0
    %v9584 = vadd.f32 %v9571, %v9583
    %v9585 = vpop.f32.mrf.mxu0
    %9586 = vdwg.mxu0
    %9587 = vst [vmem:[%s11] sm:$0xff] %v9584
    // Predicated region
    $region86: #{qnet_forward.1} parent=1 // pred_check
      _
    $region87: #{qnet_forward.1} parent=1 // pred_check_branch
      %9589 = sbr.rel (0) target = $region89
    $region88: #{qnet_forward.1} parent=1 // pred_region
      _
    $region89: #{qnet_forward.1} parent=1 // pred_fallthru
      _
    // Predicated region
    $region90: #{qnet_forward.1} parent=1 // pred_check
      _
    $region91: #{qnet_forward.1} parent=1 // pred_check_branch
      %9591 = sbr.rel (0) target = $region93
    $region92: #{qnet_forward.1} parent=1 // pred_region
      _
    $region93: #{qnet_forward.1} parent=1 // pred_fallthru
      _
    %9592 = vsyncpa [#allocation3], 1
    %9593 = vsyncpa [#allocation5], 1
    %9594 = vsyncpa [#allocation8], 1
    %9595 = vsyncpa [#allocation11], 1
    %9596 = vsyncpa [#allocation14], 1
    %9597 = vsyncpa [#allocation17], 1

</llo_original>
